<compile_context>
chip_gen: v7x
topology: tpu7x:2x2x1
jax: 0.10.0
libtpu: 0.0.40
codegen_flags: <defaults>
</compile_context>

<pallas_src>
import jax
import jax.numpy as jnp
import numpy as np
from jax import lax
from jax.experimental import pallas as pl
from jax.experimental.pallas import tpu as pltpu


# ------------------------------------------------------------------ kernel ---

def _lenet_kernel(x_ref, w1_ref, b1_ref, selr_ref, selc_ref, w2t_ref, b2_ref,
                  s2_ref, fc1w_ref, fc1b_ref, fc2w_ref, fc2b_ref, fc3w_ref,
                  fc3b_ref, out_ref, a1_ref, fcin_ref):
    f32 = jnp.float32
    x = x_ref[0]                                           # (32, 32)

    # ---- conv1 (1->6, 3x3, VALID) + ReLU  +  maxpool1 (2x2, stride 2) -------
    # 9 shifted views of the input, shared by all 6 output channels.
    shifts = [x[ki:ki + 30, kj:kj + 30] for ki in range(3) for kj in range(3)]
    selr = selr_ref[...]                                   # (15, 29) 0/1
    selc = selc_ref[...]                                   # (29, 15) 0/1
    for oc in range(6):
        acc = jnp.zeros((30, 30), f32)
        for t in range(9):
            acc = acc + w1_ref[pl.ds(oc, 1), pl.ds(t, 1)] * shifts[t]
        y = jnp.maximum(acc + b1_ref[pl.ds(oc, 1), :], 0.0)          # (30, 30)
        # 2x2 window max at every position, then pick even rows/cols via
        # tiny selection matmuls (stride-2 downsample without strided slices).
        win = jnp.maximum(jnp.maximum(y[0:29, 0:29], y[0:29, 1:30]),
                          jnp.maximum(y[1:30, 0:29], y[1:30, 1:30]))  # (29, 29)
        pooled = jnp.dot(jnp.dot(selr, win, preferred_element_type=f32),
                         selc, preferred_element_type=f32)            # (15, 15)
        # Flatten this channel into row `oc` of the (6, 225) activation
        # (row stride 15) via static VMEM-scratch writes.
        for i in range(15):
            a1_ref[pl.ds(oc, 1), pl.ds(15 * i, 15)] = pooled[i:i + 1, :]

    # ---- conv2 (6->16, 5x5, VALID) + ReLU on the lane-flattened activation --
    a1 = a1_ref[...]                                       # (6, 225)
    acc2 = jnp.zeros((16, 161), f32)
    for ki in range(5):
        for kj in range(5):
            off = ki * 15 + kj
            acc2 = acc2 + jnp.dot(w2t_ref[ki * 5 + kj], a1[:, off:off + 161],
                                  preferred_element_type=f32)
    y2 = jnp.maximum(acc2 + b2_ref[...], 0.0)              # (16, 161)
    # (columns j in [11, 15) of each flattened row are garbage; pool2 below
    #  never reads them.)

    # ---- maxpool2 (2x2, stride 2): tap-max + selection matmul ---------------
    t2 = jnp.maximum(jnp.maximum(y2[:, 0:129], y2[:, 1:130]),
                     jnp.maximum(y2[:, 15:144], y2[:, 16:145]))       # (16, 129)
    p2 = jnp.dot(t2, s2_ref[...], preferred_element_type=f32)         # (16, 25)

    # ---- flatten (c, h, w) -> (1, 400) in PyTorch .view order ---------------
    for c in range(16):
        fcin_ref[pl.ds(0, 1), pl.ds(25 * c, 25)] = p2[c:c + 1, :]
    xf = fcin_ref[...]                                     # (1, 400)

    # ---- fc1 -> fc2 -> fc3 (no activations, as in the reference module) -----
    h = jnp.dot(xf, fc1w_ref[...], preferred_element_type=f32) + fc1b_ref[...]
    h = jnp.dot(h, fc2w_ref[...], preferred_element_type=f32) + fc2b_ref[...]
    h = jnp.dot(h, fc3w_ref[...], preferred_element_type=f32) + fc3b_ref[...]
    out_ref[0] = h.astype(out_ref.dtype)                   # (1, 10)


# --------------------------------------------------------------- wrappers ---

def _selection_constants():
    # Stride-2 row / column pickers for pool1 (exact 0/1 matrices).
    selr = np.zeros((15, 29), np.float32)
    selr[np.arange(15), 2 * np.arange(15)] = 1.0
    selc = np.zeros((29, 15), np.float32)
    selc[2 * np.arange(15), np.arange(15)] = 1.0
    # Flattened-domain downsampler for pool2 (row stride 15 -> (5,5) grid).
    s2 = np.zeros((129, 25), np.float32)
    for i in range(5):
        for j in range(5):
            s2[30 * i + 2 * j, 5 * i + j] = 1.0
    return selr, selc, s2


def prepare_params(p):
    """One-time (outside jit) rearrangement of parameters into kernel layout."""
    selr, selc, s2 = _selection_constants()
    return {
        "w1": p["conv1_w"].reshape(6, 9),                       # (oc, ki*3+kj)
        "b1": p["conv1_b"].reshape(6, 1),
        "selr": jnp.asarray(selr),
        "selc": jnp.asarray(selc),
        "w2t": jnp.transpose(p["conv2_w"].reshape(16, 6, 25), (2, 0, 1)),  # (25,16,6)
        "b2": p["conv2_b"].reshape(16, 1),
        "s2": jnp.asarray(s2),
        "fc1_w": p["fc1_w"].T, "fc1_b": p["fc1_b"].reshape(1, -1),
        "fc2_w": p["fc2_w"].T, "fc2_b": p["fc2_b"].reshape(1, -1),
        "fc3_w": p["fc3_w"].T, "fc3_b": p["fc3_b"].reshape(1, -1),
    }


def _full_spec(a):
    nd = a.ndim
    return pl.BlockSpec(a.shape, lambda i, nd=nd: (0,) * nd)


def lenet_forward(x, kp):
    n = x.shape[0]
    x3 = x.reshape(n, 32, 32)                               # free reshape
    args = [x3, kp["w1"], kp["b1"], kp["selr"], kp["selc"], kp["w2t"],
            kp["b2"], kp["s2"], kp["fc1_w"], kp["fc1_b"], kp["fc2_w"],
            kp["fc2_b"], kp["fc3_w"], kp["fc3_b"]]
    in_specs = [pl.BlockSpec((1, 32, 32), lambda i: (i, 0, 0))]
    in_specs += [_full_spec(a) for a in args[1:]]
    out = pl.pallas_call(
        _lenet_kernel,
        out_shape=jax.ShapeDtypeStruct((n, 1, 10), jnp.float32),
        grid=(n,),
        in_specs=in_specs,
        out_specs=pl.BlockSpec((1, 1, 10), lambda i: (i, 0, 0)),
        scratch_shapes=[pltpu.VMEM((6, 225), jnp.float32),    # flattened pool1 out
                        pltpu.VMEM((1, 400), jnp.float32)],   # flattened FC input
        compiler_params=pltpu.CompilerParams(
            dimension_semantics=("parallel",)),
    )(*args)
    return out.reshape(n, 10)


# ------------------------------------------------------------------ model ---

def init_params(key):
    # PyTorch-default-like init: U(-1/sqrt(fan_in), 1/sqrt(fan_in)).
    def uniform(k, shape, fan_in):
        bound = 1.0 / np.sqrt(fan_in)
        return jax.random.uniform(k, shape, jnp.float32, -bound, bound)

    ks = jax.random.split(key, 10)
    return {
        "conv1_w": uniform(ks[0], (6, 1, 3, 3), 1 * 3 * 3),
        "conv1_b": uniform(ks[1], (6,), 1 * 3 * 3),
        "conv2_w": uniform(ks[2], (16, 6, 5, 5), 6 * 5 * 5),
        "conv2_b": uniform(ks[3], (16,), 6 * 5 * 5),
        "fc1_w": uniform(ks[4], (120, 16 * 5 * 5), 16 * 5 * 5),
        "fc1_b": uniform(ks[5], (120,), 16 * 5 * 5),
        "fc2_w": uniform(ks[6], (84, 120), 120),
        "fc2_b": uniform(ks[7], (84,), 120),
        "fc3_w": uniform(ks[8], (10, 84), 84),
        "fc3_b": uniform(ks[9], (10,), 84),
    }


def lenet_ref(x, p):
    # Pure-JAX reference of the PyTorch module.
    def conv(x, w, b):
        y = lax.conv_general_dilated(x, w, (1, 1), "VALID",
                                     dimension_numbers=("NCHW", "OIHW", "NCHW"),
                                     precision=lax.Precision.HIGHEST)
        return jax.nn.relu(y + b.reshape(1, -1, 1, 1))

    def pool(x):
        return lax.reduce_window(x, -jnp.inf, lax.max,
                                 (1, 1, 2, 2), (1, 1, 2, 2), "VALID")

    out = pool(conv(x, p["conv1_w"], p["conv1_b"]))
    out = pool(conv(out, p["conv2_w"], p["conv2_b"]))
    out = out.reshape(out.shape[0], -1)
    for w, b in [(p["fc1_w"], p["fc1_b"]),
                 (p["fc2_w"], p["fc2_b"]),
                 (p["fc3_w"], p["fc3_b"])]:
        out = out @ w.T + b
    return out


if __name__ == "__main__":
    key = jax.random.PRNGKey(0)
    pkey, xkey = jax.random.split(key)
    params = init_params(pkey)
    kparams = prepare_params(params)          # one-time, outside jit

    # LeNet's 16*5*5 FC input implies 1x32x32 images; batch = 2.
    x = jax.random.normal(xkey, (2, 1, 32, 32), jnp.float32)

    fwd = jax.jit(lenet_forward)
    out = jax.block_until_ready(fwd(x, kparams))
    assert out.shape == (2, 10), out.shape

    ref = lenet_ref(x, params)
    np.testing.assert_allclose(np.asarray(out), np.asarray(ref),
                               rtol=2e-2, atol=2e-2)
    print("KERNEL_OK")
</pallas_src>

<mosaic_0001>
module attributes {stable_mosaic.version = 11 : i64} {
  func.func @_lenet_kernel(%arg0: i32, %arg1: memref<1x32x32xf32, #tpu.memory_space<vmem>>, %arg2: memref<6x9xf32, #tpu.memory_space<vmem>>, %arg3: memref<6x1xf32, #tpu.memory_space<vmem>>, %arg4: memref<15x29xf32, #tpu.memory_space<vmem>>, %arg5: memref<29x15xf32, #tpu.memory_space<vmem>>, %arg6: memref<25x16x6xf32, #tpu.memory_space<vmem>>, %arg7: memref<16x1xf32, #tpu.memory_space<vmem>>, %arg8: memref<129x25xf32, #tpu.memory_space<vmem>>, %arg9: memref<400x120xf32, #tpu.memory_space<vmem>>, %arg10: memref<1x120xf32, #tpu.memory_space<vmem>>, %arg11: memref<120x84xf32, #tpu.memory_space<vmem>>, %arg12: memref<1x84xf32, #tpu.memory_space<vmem>>, %arg13: memref<84x10xf32, #tpu.memory_space<vmem>>, %arg14: memref<1x10xf32, #tpu.memory_space<vmem>>, %arg15: memref<1x1x10xf32, #tpu.memory_space<vmem>>, %arg16: memref<6x225xf32, #tpu.memory_space<vmem>>, %arg17: memref<1x400xf32, #tpu.memory_space<vmem>>) attributes {dimension_semantics = [#tpu.dimension_semantics<parallel>], iteration_bounds = array<i64: 2>, scalar_prefetch = 0 : i64, scratch_operands = 2 : i64, tpu.core_type = #tpu.core_type<tc>, window_params = [{transform_indices = @transform_0, window_bounds = array<i64: 1, 32, 32>}, {pipeline_mode = #tpu.pipeline_mode<synchronous>, transform_indices = @transform_1, window_bounds = array<i64: 6, 9>}, {pipeline_mode = #tpu.pipeline_mode<synchronous>, transform_indices = @transform_2, window_bounds = array<i64: 6, 1>}, {pipeline_mode = #tpu.pipeline_mode<synchronous>, transform_indices = @transform_3, window_bounds = array<i64: 15, 29>}, {pipeline_mode = #tpu.pipeline_mode<synchronous>, transform_indices = @transform_4, window_bounds = array<i64: 29, 15>}, {pipeline_mode = #tpu.pipeline_mode<synchronous>, transform_indices = @transform_5, window_bounds = array<i64: 25, 16, 6>}, {pipeline_mode = #tpu.pipeline_mode<synchronous>, transform_indices = @transform_6, window_bounds = array<i64: 16, 1>}, {pipeline_mode = #tpu.pipeline_mode<synchronous>, transform_indices = @transform_7, window_bounds = array<i64: 129, 25>}, {pipeline_mode = #tpu.pipeline_mode<synchronous>, transform_indices = @transform_8, window_bounds = array<i64: 400, 120>}, {pipeline_mode = #tpu.pipeline_mode<synchronous>, transform_indices = @transform_9, window_bounds = array<i64: 1, 120>}, {pipeline_mode = #tpu.pipeline_mode<synchronous>, transform_indices = @transform_10, window_bounds = array<i64: 120, 84>}, {pipeline_mode = #tpu.pipeline_mode<synchronous>, transform_indices = @transform_11, window_bounds = array<i64: 1, 84>}, {pipeline_mode = #tpu.pipeline_mode<synchronous>, transform_indices = @transform_12, window_bounds = array<i64: 84, 10>}, {pipeline_mode = #tpu.pipeline_mode<synchronous>, transform_indices = @transform_13, window_bounds = array<i64: 1, 10>}, {transform_indices = @transform_14, window_bounds = array<i64: 1, 1, 10>}]} {
    %c0 = arith.constant 0 : index
    %c0_0 = arith.constant 0 : index
    %c0_1 = arith.constant 0 : index
    %0 = vector.load %arg1[%c0, %c0_0, %c0_1] : memref<1x32x32xf32, #tpu.memory_space<vmem>>, vector<1x32x32xf32>
    %1 = vector.shape_cast %0 : vector<1x32x32xf32> to vector<32x32xf32>
    %2 = vector.extract_strided_slice %1 {offsets = [0, 0], sizes = [30, 30], strides = [1, 1]} : vector<32x32xf32> to vector<30x30xf32>
    %3 = vector.extract_strided_slice %1 {offsets = [0, 1], sizes = [30, 30], strides = [1, 1]} : vector<32x32xf32> to vector<30x30xf32>
    %4 = vector.extract_strided_slice %1 {offsets = [0, 2], sizes = [30, 30], strides = [1, 1]} : vector<32x32xf32> to vector<30x30xf32>
    %5 = vector.extract_strided_slice %1 {offsets = [1, 0], sizes = [30, 30], strides = [1, 1]} : vector<32x32xf32> to vector<30x30xf32>
    %6 = vector.extract_strided_slice %1 {offsets = [1, 1], sizes = [30, 30], strides = [1, 1]} : vector<32x32xf32> to vector<30x30xf32>
    %7 = vector.extract_strided_slice %1 {offsets = [1, 2], sizes = [30, 30], strides = [1, 1]} : vector<32x32xf32> to vector<30x30xf32>
    %8 = vector.extract_strided_slice %1 {offsets = [2, 0], sizes = [30, 30], strides = [1, 1]} : vector<32x32xf32> to vector<30x30xf32>
    %9 = vector.extract_strided_slice %1 {offsets = [2, 1], sizes = [30, 30], strides = [1, 1]} : vector<32x32xf32> to vector<30x30xf32>
    %10 = vector.extract_strided_slice %1 {offsets = [2, 2], sizes = [30, 30], strides = [1, 1]} : vector<32x32xf32> to vector<30x30xf32>
    %c0_2 = arith.constant 0 : index
    %c0_3 = arith.constant 0 : index
    %11 = vector.load %arg4[%c0_2, %c0_3] : memref<15x29xf32, #tpu.memory_space<vmem>>, vector<15x29xf32>
    %c0_4 = arith.constant 0 : index
    %c0_5 = arith.constant 0 : index
    %12 = vector.load %arg5[%c0_4, %c0_5] : memref<29x15xf32, #tpu.memory_space<vmem>>, vector<29x15xf32>
    %cst = arith.constant 0.000000e+00 : f32
    %13 = vector.broadcast %cst : f32 to vector<30x30xf32>
    %c0_6 = arith.constant 0 : index
    %c0_7 = arith.constant 0 : index
    %14 = vector.load %arg2[%c0_6, %c0_7] : memref<6x9xf32, #tpu.memory_space<vmem>>, vector<1x1xf32>
    %15 = vector.broadcast %14 : vector<1x1xf32> to vector<30x30xf32>
    %16 = arith.mulf %15, %2 : vector<30x30xf32>
    %17 = arith.addf %13, %16 : vector<30x30xf32>
    %c0_8 = arith.constant 0 : index
    %c1 = arith.constant 1 : index
    %18 = vector.load %arg2[%c0_8, %c1] : memref<6x9xf32, #tpu.memory_space<vmem>>, vector<1x1xf32>
    %19 = vector.broadcast %18 : vector<1x1xf32> to vector<30x30xf32>
    %20 = arith.mulf %19, %3 : vector<30x30xf32>
    %21 = arith.addf %17, %20 : vector<30x30xf32>
    %c0_9 = arith.constant 0 : index
    %c2 = arith.constant 2 : index
    %22 = vector.load %arg2[%c0_9, %c2] : memref<6x9xf32, #tpu.memory_space<vmem>>, vector<1x1xf32>
    %23 = vector.broadcast %22 : vector<1x1xf32> to vector<30x30xf32>
    %24 = arith.mulf %23, %4 : vector<30x30xf32>
    %25 = arith.addf %21, %24 : vector<30x30xf32>
    %c0_10 = arith.constant 0 : index
    %c3 = arith.constant 3 : index
    %26 = vector.load %arg2[%c0_10, %c3] : memref<6x9xf32, #tpu.memory_space<vmem>>, vector<1x1xf32>
    %27 = vector.broadcast %26 : vector<1x1xf32> to vector<30x30xf32>
    %28 = arith.mulf %27, %5 : vector<30x30xf32>
    %29 = arith.addf %25, %28 : vector<30x30xf32>
    %c0_11 = arith.constant 0 : index
    %c4 = arith.constant 4 : index
    %30 = vector.load %arg2[%c0_11, %c4] : memref<6x9xf32, #tpu.memory_space<vmem>>, vector<1x1xf32>
    %31 = vector.broadcast %30 : vector<1x1xf32> to vector<30x30xf32>
    %32 = arith.mulf %31, %6 : vector<30x30xf32>
    %33 = arith.addf %29, %32 : vector<30x30xf32>
    %c0_12 = arith.constant 0 : index
    %c5 = arith.constant 5 : index
    %34 = vector.load %arg2[%c0_12, %c5] : memref<6x9xf32, #tpu.memory_space<vmem>>, vector<1x1xf32>
    %35 = vector.broadcast %34 : vector<1x1xf32> to vector<30x30xf32>
    %36 = arith.mulf %35, %7 : vector<30x30xf32>
    %37 = arith.addf %33, %36 : vector<30x30xf32>
    %c0_13 = arith.constant 0 : index
    %c6 = arith.constant 6 : index
    %38 = vector.load %arg2[%c0_13, %c6] : memref<6x9xf32, #tpu.memory_space<vmem>>, vector<1x1xf32>
    %39 = vector.broadcast %38 : vector<1x1xf32> to vector<30x30xf32>
    %40 = arith.mulf %39, %8 : vector<30x30xf32>
    %41 = arith.addf %37, %40 : vector<30x30xf32>
    %c0_14 = arith.constant 0 : index
    %c7 = arith.constant 7 : index
    %42 = vector.load %arg2[%c0_14, %c7] : memref<6x9xf32, #tpu.memory_space<vmem>>, vector<1x1xf32>
    %43 = vector.broadcast %42 : vector<1x1xf32> to vector<30x30xf32>
    %44 = arith.mulf %43, %9 : vector<30x30xf32>
    %45 = arith.addf %41, %44 : vector<30x30xf32>
    %c0_15 = arith.constant 0 : index
    %c8 = arith.constant 8 : index
    %46 = vector.load %arg2[%c0_15, %c8] : memref<6x9xf32, #tpu.memory_space<vmem>>, vector<1x1xf32>
    %47 = vector.broadcast %46 : vector<1x1xf32> to vector<30x30xf32>
    %48 = arith.mulf %47, %10 : vector<30x30xf32>
    %49 = arith.addf %45, %48 : vector<30x30xf32>
    %c0_16 = arith.constant 0 : index
    %c0_17 = arith.constant 0 : index
    %50 = vector.load %arg3[%c0_16, %c0_17] : memref<6x1xf32, #tpu.memory_space<vmem>>, vector<1x1xf32>
    %51 = vector.broadcast %50 : vector<1x1xf32> to vector<30x30xf32>
    %52 = arith.addf %49, %51 : vector<30x30xf32>
    %cst_18 = arith.constant 0.000000e+00 : f32
    %53 = vector.broadcast %cst_18 : f32 to vector<30x30xf32>
    %54 = arith.maximumf %52, %53 : vector<30x30xf32>
    %55 = vector.extract_strided_slice %54 {offsets = [0, 0], sizes = [29, 29], strides = [1, 1]} : vector<30x30xf32> to vector<29x29xf32>
    %56 = vector.extract_strided_slice %54 {offsets = [0, 1], sizes = [29, 29], strides = [1, 1]} : vector<30x30xf32> to vector<29x29xf32>
    %57 = arith.maximumf %55, %56 : vector<29x29xf32>
    %58 = vector.extract_strided_slice %54 {offsets = [1, 0], sizes = [29, 29], strides = [1, 1]} : vector<30x30xf32> to vector<29x29xf32>
    %59 = vector.extract_strided_slice %54 {offsets = [1, 1], sizes = [29, 29], strides = [1, 1]} : vector<30x30xf32> to vector<29x29xf32>
    %60 = arith.maximumf %58, %59 : vector<29x29xf32>
    %61 = arith.maximumf %57, %60 : vector<29x29xf32>
    %cst_19 = arith.constant dense<0.000000e+00> : vector<15x29xf32>
    %62 = tpu.matmul %11, %61, %cst_19 {dimension_numbers = #tpu.dot_dimension_numbers<[1], [0], [0], [1], [0, 0, 1, 1], [], []>} : vector<15x29xf32>, vector<29x29xf32>, vector<15x29xf32> -> vector<15x29xf32>
    %cst_20 = arith.constant dense<0.000000e+00> : vector<15x15xf32>
    %63 = tpu.matmul %62, %12, %cst_20 {dimension_numbers = #tpu.dot_dimension_numbers<[1], [0], [0], [1], [0, 0, 1, 1], [], []>} : vector<15x29xf32>, vector<29x15xf32>, vector<15x15xf32> -> vector<15x15xf32>
    %64 = vector.extract_strided_slice %63 {offsets = [0, 0], sizes = [1, 15], strides = [1, 1]} : vector<15x15xf32> to vector<1x15xf32>
    %c0_21 = arith.constant 0 : index
    %c0_22 = arith.constant 0 : index
    %65 = vector.load %arg16[%c0_21, %c0_22] : memref<6x225xf32, #tpu.memory_space<vmem>>, vector<1x15xf32>
    tpu.vector_store %arg16[%c0_21, %c0_22], %64 {strides = array<i32>} : memref<6x225xf32, #tpu.memory_space<vmem>>, vector<1x15xf32>,
    %66 = vector.extract_strided_slice %63 {offsets = [1, 0], sizes = [1, 15], strides = [1, 1]} : vector<15x15xf32> to vector<1x15xf32>
    %c0_23 = arith.constant 0 : index
    %c15 = arith.constant 15 : index
    %67 = vector.load %arg16[%c0_23, %c15] : memref<6x225xf32, #tpu.memory_space<vmem>>, vector<1x15xf32>
    tpu.vector_store %arg16[%c0_23, %c15], %66 {strides = array<i32>} : memref<6x225xf32, #tpu.memory_space<vmem>>, vector<1x15xf32>,
    %68 = vector.extract_strided_slice %63 {offsets = [2, 0], sizes = [1, 15], strides = [1, 1]} : vector<15x15xf32> to vector<1x15xf32>
    %c0_24 = arith.constant 0 : index
    %c30 = arith.constant 30 : index
    %69 = vector.load %arg16[%c0_24, %c30] : memref<6x225xf32, #tpu.memory_space<vmem>>, vector<1x15xf32>
    tpu.vector_store %arg16[%c0_24, %c30], %68 {strides = array<i32>} : memref<6x225xf32, #tpu.memory_space<vmem>>, vector<1x15xf32>,
    %70 = vector.extract_strided_slice %63 {offsets = [3, 0], sizes = [1, 15], strides = [1, 1]} : vector<15x15xf32> to vector<1x15xf32>
    %c0_25 = arith.constant 0 : index
    %c45 = arith.constant 45 : index
    %71 = vector.load %arg16[%c0_25, %c45] : memref<6x225xf32, #tpu.memory_space<vmem>>, vector<1x15xf32>
    tpu.vector_store %arg16[%c0_25, %c45], %70 {strides = array<i32>} : memref<6x225xf32, #tpu.memory_space<vmem>>, vector<1x15xf32>,
    %72 = vector.extract_strided_slice %63 {offsets = [4, 0], sizes = [1, 15], strides = [1, 1]} : vector<15x15xf32> to vector<1x15xf32>
    %c0_26 = arith.constant 0 : index
    %c60 = arith.constant 60 : index
    %73 = vector.load %arg16[%c0_26, %c60] : memref<6x225xf32, #tpu.memory_space<vmem>>, vector<1x15xf32>
    tpu.vector_store %arg16[%c0_26, %c60], %72 {strides = array<i32>} : memref<6x225xf32, #tpu.memory_space<vmem>>, vector<1x15xf32>,
    %74 = vector.extract_strided_slice %63 {offsets = [5, 0], sizes = [1, 15], strides = [1, 1]} : vector<15x15xf32> to vector<1x15xf32>
    %c0_27 = arith.constant 0 : index
    %c75 = arith.constant 75 : index
    %75 = vector.load %arg16[%c0_27, %c75] : memref<6x225xf32, #tpu.memory_space<vmem>>, vector<1x15xf32>
    tpu.vector_store %arg16[%c0_27, %c75], %74 {strides = array<i32>} : memref<6x225xf32, #tpu.memory_space<vmem>>, vector<1x15xf32>,
    %76 = vector.extract_strided_slice %63 {offsets = [6, 0], sizes = [1, 15], strides = [1, 1]} : vector<15x15xf32> to vector<1x15xf32>
    %c0_28 = arith.constant 0 : index
    %c90 = arith.constant 90 : index
    %77 = vector.load %arg16[%c0_28, %c90] : memref<6x225xf32, #tpu.memory_space<vmem>>, vector<1x15xf32>
    tpu.vector_store %arg16[%c0_28, %c90], %76 {strides = array<i32>} : memref<6x225xf32, #tpu.memory_space<vmem>>, vector<1x15xf32>,
    %78 = vector.extract_strided_slice %63 {offsets = [7, 0], sizes = [1, 15], strides = [1, 1]} : vector<15x15xf32> to vector<1x15xf32>
    %c0_29 = arith.constant 0 : index
    %c105 = arith.constant 105 : index
    %79 = vector.load %arg16[%c0_29, %c105] : memref<6x225xf32, #tpu.memory_space<vmem>>, vector<1x15xf32>
    tpu.vector_store %arg16[%c0_29, %c105], %78 {strides = array<i32>} : memref<6x225xf32, #tpu.memory_space<vmem>>, vector<1x15xf32>,
    %80 = vector.extract_strided_slice %63 {offsets = [8, 0], sizes = [1, 15], strides = [1, 1]} : vector<15x15xf32> to vector<1x15xf32>
    %c0_30 = arith.constant 0 : index
    %c120 = arith.constant 120 : index
    %81 = vector.load %arg16[%c0_30, %c120] : memref<6x225xf32, #tpu.memory_space<vmem>>, vector<1x15xf32>
    tpu.vector_store %arg16[%c0_30, %c120], %80 {strides = array<i32>} : memref<6x225xf32, #tpu.memory_space<vmem>>, vector<1x15xf32>,
    %82 = vector.extract_strided_slice %63 {offsets = [9, 0], sizes = [1, 15], strides = [1, 1]} : vector<15x15xf32> to vector<1x15xf32>
    %c0_31 = arith.constant 0 : index
    %c135 = arith.constant 135 : index
    %83 = vector.load %arg16[%c0_31, %c135] : memref<6x225xf32, #tpu.memory_space<vmem>>, vector<1x15xf32>
    tpu.vector_store %arg16[%c0_31, %c135], %82 {strides = array<i32>} : memref<6x225xf32, #tpu.memory_space<vmem>>, vector<1x15xf32>,
    %84 = vector.extract_strided_slice %63 {offsets = [10, 0], sizes = [1, 15], strides = [1, 1]} : vector<15x15xf32> to vector<1x15xf32>
    %c0_32 = arith.constant 0 : index
    %c150 = arith.constant 150 : index
    %85 = vector.load %arg16[%c0_32, %c150] : memref<6x225xf32, #tpu.memory_space<vmem>>, vector<1x15xf32>
    tpu.vector_store %arg16[%c0_32, %c150], %84 {strides = array<i32>} : memref<6x225xf32, #tpu.memory_space<vmem>>, vector<1x15xf32>,
    %86 = vector.extract_strided_slice %63 {offsets = [11, 0], sizes = [1, 15], strides = [1, 1]} : vector<15x15xf32> to vector<1x15xf32>
    %c0_33 = arith.constant 0 : index
    %c165 = arith.constant 165 : index
    %87 = vector.load %arg16[%c0_33, %c165] : memref<6x225xf32, #tpu.memory_space<vmem>>, vector<1x15xf32>
    tpu.vector_store %arg16[%c0_33, %c165], %86 {strides = array<i32>} : memref<6x225xf32, #tpu.memory_space<vmem>>, vector<1x15xf32>,
    %88 = vector.extract_strided_slice %63 {offsets = [12, 0], sizes = [1, 15], strides = [1, 1]} : vector<15x15xf32> to vector<1x15xf32>
    %c0_34 = arith.constant 0 : index
    %c180 = arith.constant 180 : index
    %89 = vector.load %arg16[%c0_34, %c180] : memref<6x225xf32, #tpu.memory_space<vmem>>, vector<1x15xf32>
    tpu.vector_store %arg16[%c0_34, %c180], %88 {strides = array<i32>} : memref<6x225xf32, #tpu.memory_space<vmem>>, vector<1x15xf32>,
    %90 = vector.extract_strided_slice %63 {offsets = [13, 0], sizes = [1, 15], strides = [1, 1]} : vector<15x15xf32> to vector<1x15xf32>
    %c0_35 = arith.constant 0 : index
    %c195 = arith.constant 195 : index
    %91 = vector.load %arg16[%c0_35, %c195] : memref<6x225xf32, #tpu.memory_space<vmem>>, vector<1x15xf32>
    tpu.vector_store %arg16[%c0_35, %c195], %90 {strides = array<i32>} : memref<6x225xf32, #tpu.memory_space<vmem>>, vector<1x15xf32>,
    %92 = vector.extract_strided_slice %63 {offsets = [14, 0], sizes = [1, 15], strides = [1, 1]} : vector<15x15xf32> to vector<1x15xf32>
    %c0_36 = arith.constant 0 : index
    %c210 = arith.constant 210 : index
    %93 = vector.load %arg16[%c0_36, %c210] : memref<6x225xf32, #tpu.memory_space<vmem>>, vector<1x15xf32>
    tpu.vector_store %arg16[%c0_36, %c210], %92 {strides = array<i32>} : memref<6x225xf32, #tpu.memory_space<vmem>>, vector<1x15xf32>,
    %cst_37 = arith.constant 0.000000e+00 : f32
    %94 = vector.broadcast %cst_37 : f32 to vector<30x30xf32>
    %c1_38 = arith.constant 1 : index
    %c0_39 = arith.constant 0 : index
    %95 = vector.load %arg2[%c1_38, %c0_39] : memref<6x9xf32, #tpu.memory_space<vmem>>, vector<1x1xf32>
    %96 = vector.broadcast %95 : vector<1x1xf32> to vector<30x30xf32>
    %97 = arith.mulf %96, %2 : vector<30x30xf32>
    %98 = arith.addf %94, %97 : vector<30x30xf32>
    %c1_40 = arith.constant 1 : index
    %c1_41 = arith.constant 1 : index
    %99 = vector.load %arg2[%c1_40, %c1_41] : memref<6x9xf32, #tpu.memory_space<vmem>>, vector<1x1xf32>
    %100 = vector.broadcast %99 : vector<1x1xf32> to vector<30x30xf32>
    %101 = arith.mulf %100, %3 : vector<30x30xf32>
    %102 = arith.addf %98, %101 : vector<30x30xf32>
    %c1_42 = arith.constant 1 : index
    %c2_43 = arith.constant 2 : index
    %103 = vector.load %arg2[%c1_42, %c2_43] : memref<6x9xf32, #tpu.memory_space<vmem>>, vector<1x1xf32>
    %104 = vector.broadcast %103 : vector<1x1xf32> to vector<30x30xf32>
    %105 = arith.mulf %104, %4 : vector<30x30xf32>
    %106 = arith.addf %102, %105 : vector<30x30xf32>
    %c1_44 = arith.constant 1 : index
    %c3_45 = arith.constant 3 : index
    %107 = vector.load %arg2[%c1_44, %c3_45] : memref<6x9xf32, #tpu.memory_space<vmem>>, vector<1x1xf32>
    %108 = vector.broadcast %107 : vector<1x1xf32> to vector<30x30xf32>
    %109 = arith.mulf %108, %5 : vector<30x30xf32>
    %110 = arith.addf %106, %109 : vector<30x30xf32>
    %c1_46 = arith.constant 1 : index
    %c4_47 = arith.constant 4 : index
    %111 = vector.load %arg2[%c1_46, %c4_47] : memref<6x9xf32, #tpu.memory_space<vmem>>, vector<1x1xf32>
    %112 = vector.broadcast %111 : vector<1x1xf32> to vector<30x30xf32>
    %113 = arith.mulf %112, %6 : vector<30x30xf32>
    %114 = arith.addf %110, %113 : vector<30x30xf32>
    %c1_48 = arith.constant 1 : index
    %c5_49 = arith.constant 5 : index
    %115 = vector.load %arg2[%c1_48, %c5_49] : memref<6x9xf32, #tpu.memory_space<vmem>>, vector<1x1xf32>
    %116 = vector.broadcast %115 : vector<1x1xf32> to vector<30x30xf32>
    %117 = arith.mulf %116, %7 : vector<30x30xf32>
    %118 = arith.addf %114, %117 : vector<30x30xf32>
    %c1_50 = arith.constant 1 : index
    %c6_51 = arith.constant 6 : index
    %119 = vector.load %arg2[%c1_50, %c6_51] : memref<6x9xf32, #tpu.memory_space<vmem>>, vector<1x1xf32>
    %120 = vector.broadcast %119 : vector<1x1xf32> to vector<30x30xf32>
    %121 = arith.mulf %120, %8 : vector<30x30xf32>
    %122 = arith.addf %118, %121 : vector<30x30xf32>
    %c1_52 = arith.constant 1 : index
    %c7_53 = arith.constant 7 : index
    %123 = vector.load %arg2[%c1_52, %c7_53] : memref<6x9xf32, #tpu.memory_space<vmem>>, vector<1x1xf32>
    %124 = vector.broadcast %123 : vector<1x1xf32> to vector<30x30xf32>
    %125 = arith.mulf %124, %9 : vector<30x30xf32>
    %126 = arith.addf %122, %125 : vector<30x30xf32>
    %c1_54 = arith.constant 1 : index
    %c8_55 = arith.constant 8 : index
    %127 = vector.load %arg2[%c1_54, %c8_55] : memref<6x9xf32, #tpu.memory_space<vmem>>, vector<1x1xf32>
    %128 = vector.broadcast %127 : vector<1x1xf32> to vector<30x30xf32>
    %129 = arith.mulf %128, %10 : vector<30x30xf32>
    %130 = arith.addf %126, %129 : vector<30x30xf32>
    %c1_56 = arith.constant 1 : index
    %c0_57 = arith.constant 0 : index
    %131 = vector.load %arg3[%c1_56, %c0_57] : memref<6x1xf32, #tpu.memory_space<vmem>>, vector<1x1xf32>
    %132 = vector.broadcast %131 : vector<1x1xf32> to vector<30x30xf32>
    %133 = arith.addf %130, %132 : vector<30x30xf32>
    %cst_58 = arith.constant 0.000000e+00 : f32
    %134 = vector.broadcast %cst_58 : f32 to vector<30x30xf32>
    %135 = arith.maximumf %133, %134 : vector<30x30xf32>
    %136 = vector.extract_strided_slice %135 {offsets = [0, 0], sizes = [29, 29], strides = [1, 1]} : vector<30x30xf32> to vector<29x29xf32>
    %137 = vector.extract_strided_slice %135 {offsets = [0, 1], sizes = [29, 29], strides = [1, 1]} : vector<30x30xf32> to vector<29x29xf32>
    %138 = arith.maximumf %136, %137 : vector<29x29xf32>
    %139 = vector.extract_strided_slice %135 {offsets = [1, 0], sizes = [29, 29], strides = [1, 1]} : vector<30x30xf32> to vector<29x29xf32>
    %140 = vector.extract_strided_slice %135 {offsets = [1, 1], sizes = [29, 29], strides = [1, 1]} : vector<30x30xf32> to vector<29x29xf32>
    %141 = arith.maximumf %139, %140 : vector<29x29xf32>
    %142 = arith.maximumf %138, %141 : vector<29x29xf32>
    %cst_59 = arith.constant dense<0.000000e+00> : vector<15x29xf32>
    %143 = tpu.matmul %11, %142, %cst_59 {dimension_numbers = #tpu.dot_dimension_numbers<[1], [0], [0], [1], [0, 0, 1, 1], [], []>} : vector<15x29xf32>, vector<29x29xf32>, vector<15x29xf32> -> vector<15x29xf32>
    %cst_60 = arith.constant dense<0.000000e+00> : vector<15x15xf32>
    %144 = tpu.matmul %143, %12, %cst_60 {dimension_numbers = #tpu.dot_dimension_numbers<[1], [0], [0], [1], [0, 0, 1, 1], [], []>} : vector<15x29xf32>, vector<29x15xf32>, vector<15x15xf32> -> vector<15x15xf32>
    %145 = vector.extract_strided_slice %144 {offsets = [0, 0], sizes = [1, 15], strides = [1, 1]} : vector<15x15xf32> to vector<1x15xf32>
    %c1_61 = arith.constant 1 : index
    %c0_62 = arith.constant 0 : index
    %146 = vector.load %arg16[%c1_61, %c0_62] : memref<6x225xf32, #tpu.memory_space<vmem>>, vector<1x15xf32>
    tpu.vector_store %arg16[%c1_61, %c0_62], %145 {strides = array<i32>} : memref<6x225xf32, #tpu.memory_space<vmem>>, vector<1x15xf32>,
    %147 = vector.extract_strided_slice %144 {offsets = [1, 0], sizes = [1, 15], strides = [1, 1]} : vector<15x15xf32> to vector<1x15xf32>
    %c1_63 = arith.constant 1 : index
    %c15_64 = arith.constant 15 : index
    %148 = vector.load %arg16[%c1_63, %c15_64] : memref<6x225xf32, #tpu.memory_space<vmem>>, vector<1x15xf32>
    tpu.vector_store %arg16[%c1_63, %c15_64], %147 {strides = array<i32>} : memref<6x225xf32, #tpu.memory_space<vmem>>, vector<1x15xf32>,
    %149 = vector.extract_strided_slice %144 {offsets = [2, 0], sizes = [1, 15], strides = [1, 1]} : vector<15x15xf32> to vector<1x15xf32>
    %c1_65 = arith.constant 1 : index
    %c30_66 = arith.constant 30 : index
    %150 = vector.load %arg16[%c1_65, %c30_66] : memref<6x225xf32, #tpu.memory_space<vmem>>, vector<1x15xf32>
    tpu.vector_store %arg16[%c1_65, %c30_66], %149 {strides = array<i32>} : memref<6x225xf32, #tpu.memory_space<vmem>>, vector<1x15xf32>,
    %151 = vector.extract_strided_slice %144 {offsets = [3, 0], sizes = [1, 15], strides = [1, 1]} : vector<15x15xf32> to vector<1x15xf32>
    %c1_67 = arith.constant 1 : index
    %c45_68 = arith.constant 45 : index
    %152 = vector.load %arg16[%c1_67, %c45_68] : memref<6x225xf32, #tpu.memory_space<vmem>>, vector<1x15xf32>
    tpu.vector_store %arg16[%c1_67, %c45_68], %151 {strides = array<i32>} : memref<6x225xf32, #tpu.memory_space<vmem>>, vector<1x15xf32>,
    %153 = vector.extract_strided_slice %144 {offsets = [4, 0], sizes = [1, 15], strides = [1, 1]} : vector<15x15xf32> to vector<1x15xf32>
    %c1_69 = arith.constant 1 : index
    %c60_70 = arith.constant 60 : index
    %154 = vector.load %arg16[%c1_69, %c60_70] : memref<6x225xf32, #tpu.memory_space<vmem>>, vector<1x15xf32>
    tpu.vector_store %arg16[%c1_69, %c60_70], %153 {strides = array<i32>} : memref<6x225xf32, #tpu.memory_space<vmem>>, vector<1x15xf32>,
    %155 = vector.extract_strided_slice %144 {offsets = [5, 0], sizes = [1, 15], strides = [1, 1]} : vector<15x15xf32> to vector<1x15xf32>
    %c1_71 = arith.constant 1 : index
    %c75_72 = arith.constant 75 : index
    %156 = vector.load %arg16[%c1_71, %c75_72] : memref<6x225xf32, #tpu.memory_space<vmem>>, vector<1x15xf32>
    tpu.vector_store %arg16[%c1_71, %c75_72], %155 {strides = array<i32>} : memref<6x225xf32, #tpu.memory_space<vmem>>, vector<1x15xf32>,
    %157 = vector.extract_strided_slice %144 {offsets = [6, 0], sizes = [1, 15], strides = [1, 1]} : vector<15x15xf32> to vector<1x15xf32>
    %c1_73 = arith.constant 1 : index
    %c90_74 = arith.constant 90 : index
    %158 = vector.load %arg16[%c1_73, %c90_74] : memref<6x225xf32, #tpu.memory_space<vmem>>, vector<1x15xf32>
    tpu.vector_store %arg16[%c1_73, %c90_74], %157 {strides = array<i32>} : memref<6x225xf32, #tpu.memory_space<vmem>>, vector<1x15xf32>,
    %159 = vector.extract_strided_slice %144 {offsets = [7, 0], sizes = [1, 15], strides = [1, 1]} : vector<15x15xf32> to vector<1x15xf32>
    %c1_75 = arith.constant 1 : index
    %c105_76 = arith.constant 105 : index
    %160 = vector.load %arg16[%c1_75, %c105_76] : memref<6x225xf32, #tpu.memory_space<vmem>>, vector<1x15xf32>
    tpu.vector_store %arg16[%c1_75, %c105_76], %159 {strides = array<i32>} : memref<6x225xf32, #tpu.memory_space<vmem>>, vector<1x15xf32>,
    %161 = vector.extract_strided_slice %144 {offsets = [8, 0], sizes = [1, 15], strides = [1, 1]} : vector<15x15xf32> to vector<1x15xf32>
    %c1_77 = arith.constant 1 : index
    %c120_78 = arith.constant 120 : index
    %162 = vector.load %arg16[%c1_77, %c120_78] : memref<6x225xf32, #tpu.memory_space<vmem>>, vector<1x15xf32>
    tpu.vector_store %arg16[%c1_77, %c120_78], %161 {strides = array<i32>} : memref<6x225xf32, #tpu.memory_space<vmem>>, vector<1x15xf32>,
    %163 = vector.extract_strided_slice %144 {offsets = [9, 0], sizes = [1, 15], strides = [1, 1]} : vector<15x15xf32> to vector<1x15xf32>
    %c1_79 = arith.constant 1 : index
    %c135_80 = arith.constant 135 : index
    %164 = vector.load %arg16[%c1_79, %c135_80] : memref<6x225xf32, #tpu.memory_space<vmem>>, vector<1x15xf32>
    tpu.vector_store %arg16[%c1_79, %c135_80], %163 {strides = array<i32>} : memref<6x225xf32, #tpu.memory_space<vmem>>, vector<1x15xf32>,
    %165 = vector.extract_strided_slice %144 {offsets = [10, 0], sizes = [1, 15], strides = [1, 1]} : vector<15x15xf32> to vector<1x15xf32>
    %c1_81 = arith.constant 1 : index
    %c150_82 = arith.constant 150 : index
    %166 = vector.load %arg16[%c1_81, %c150_82] : memref<6x225xf32, #tpu.memory_space<vmem>>, vector<1x15xf32>
    tpu.vector_store %arg16[%c1_81, %c150_82], %165 {strides = array<i32>} : memref<6x225xf32, #tpu.memory_space<vmem>>, vector<1x15xf32>,
    %167 = vector.extract_strided_slice %144 {offsets = [11, 0], sizes = [1, 15], strides = [1, 1]} : vector<15x15xf32> to vector<1x15xf32>
    %c1_83 = arith.constant 1 : index
    %c165_84 = arith.constant 165 : index
    %168 = vector.load %arg16[%c1_83, %c165_84] : memref<6x225xf32, #tpu.memory_space<vmem>>, vector<1x15xf32>
    tpu.vector_store %arg16[%c1_83, %c165_84], %167 {strides = array<i32>} : memref<6x225xf32, #tpu.memory_space<vmem>>, vector<1x15xf32>,
    %169 = vector.extract_strided_slice %144 {offsets = [12, 0], sizes = [1, 15], strides = [1, 1]} : vector<15x15xf32> to vector<1x15xf32>
    %c1_85 = arith.constant 1 : index
    %c180_86 = arith.constant 180 : index
    %170 = vector.load %arg16[%c1_85, %c180_86] : memref<6x225xf32, #tpu.memory_space<vmem>>, vector<1x15xf32>
    tpu.vector_store %arg16[%c1_85, %c180_86], %169 {strides = array<i32>} : memref<6x225xf32, #tpu.memory_space<vmem>>, vector<1x15xf32>,
    %171 = vector.extract_strided_slice %144 {offsets = [13, 0], sizes = [1, 15], strides = [1, 1]} : vector<15x15xf32> to vector<1x15xf32>
    %c1_87 = arith.constant 1 : index
    %c195_88 = arith.constant 195 : index
    %172 = vector.load %arg16[%c1_87, %c195_88] : memref<6x225xf32, #tpu.memory_space<vmem>>, vector<1x15xf32>
    tpu.vector_store %arg16[%c1_87, %c195_88], %171 {strides = array<i32>} : memref<6x225xf32, #tpu.memory_space<vmem>>, vector<1x15xf32>,
    %173 = vector.extract_strided_slice %144 {offsets = [14, 0], sizes = [1, 15], strides = [1, 1]} : vector<15x15xf32> to vector<1x15xf32>
    %c1_89 = arith.constant 1 : index
    %c210_90 = arith.constant 210 : index
    %174 = vector.load %arg16[%c1_89, %c210_90] : memref<6x225xf32, #tpu.memory_space<vmem>>, vector<1x15xf32>
    tpu.vector_store %arg16[%c1_89, %c210_90], %173 {strides = array<i32>} : memref<6x225xf32, #tpu.memory_space<vmem>>, vector<1x15xf32>,
    %cst_91 = arith.constant 0.000000e+00 : f32
    %175 = vector.broadcast %cst_91 : f32 to vector<30x30xf32>
    %c2_92 = arith.constant 2 : index
    %c0_93 = arith.constant 0 : index
    %176 = vector.load %arg2[%c2_92, %c0_93] : memref<6x9xf32, #tpu.memory_space<vmem>>, vector<1x1xf32>
    %177 = vector.broadcast %176 : vector<1x1xf32> to vector<30x30xf32>
    %178 = arith.mulf %177, %2 : vector<30x30xf32>
    %179 = arith.addf %175, %178 : vector<30x30xf32>
    %c2_94 = arith.constant 2 : index
    %c1_95 = arith.constant 1 : index
    %180 = vector.load %arg2[%c2_94, %c1_95] : memref<6x9xf32, #tpu.memory_space<vmem>>, vector<1x1xf32>
    %181 = vector.broadcast %180 : vector<1x1xf32> to vector<30x30xf32>
    %182 = arith.mulf %181, %3 : vector<30x30xf32>
    %183 = arith.addf %179, %182 : vector<30x30xf32>
    %c2_96 = arith.constant 2 : index
    %c2_97 = arith.constant 2 : index
    %184 = vector.load %arg2[%c2_96, %c2_97] : memref<6x9xf32, #tpu.memory_space<vmem>>, vector<1x1xf32>
    %185 = vector.broadcast %184 : vector<1x1xf32> to vector<30x30xf32>
    %186 = arith.mulf %185, %4 : vector<30x30xf32>
    %187 = arith.addf %183, %186 : vector<30x30xf32>
    %c2_98 = arith.constant 2 : index
    %c3_99 = arith.constant 3 : index
    %188 = vector.load %arg2[%c2_98, %c3_99] : memref<6x9xf32, #tpu.memory_space<vmem>>, vector<1x1xf32>
    %189 = vector.broadcast %188 : vector<1x1xf32> to vector<30x30xf32>
    %190 = arith.mulf %189, %5 : vector<30x30xf32>
    %191 = arith.addf %187, %190 : vector<30x30xf32>
    %c2_100 = arith.constant 2 : index
    %c4_101 = arith.constant 4 : index
    %192 = vector.load %arg2[%c2_100, %c4_101] : memref<6x9xf32, #tpu.memory_space<vmem>>, vector<1x1xf32>
    %193 = vector.broadcast %192 : vector<1x1xf32> to vector<30x30xf32>
    %194 = arith.mulf %193, %6 : vector<30x30xf32>
    %195 = arith.addf %191, %194 : vector<30x30xf32>
    %c2_102 = arith.constant 2 : index
    %c5_103 = arith.constant 5 : index
    %196 = vector.load %arg2[%c2_102, %c5_103] : memref<6x9xf32, #tpu.memory_space<vmem>>, vector<1x1xf32>
    %197 = vector.broadcast %196 : vector<1x1xf32> to vector<30x30xf32>
    %198 = arith.mulf %197, %7 : vector<30x30xf32>
    %199 = arith.addf %195, %198 : vector<30x30xf32>
    %c2_104 = arith.constant 2 : index
    %c6_105 = arith.constant 6 : index
    %200 = vector.load %arg2[%c2_104, %c6_105] : memref<6x9xf32, #tpu.memory_space<vmem>>, vector<1x1xf32>
    %201 = vector.broadcast %200 : vector<1x1xf32> to vector<30x30xf32>
    %202 = arith.mulf %201, %8 : vector<30x30xf32>
    %203 = arith.addf %199, %202 : vector<30x30xf32>
    %c2_106 = arith.constant 2 : index
    %c7_107 = arith.constant 7 : index
    %204 = vector.load %arg2[%c2_106, %c7_107] : memref<6x9xf32, #tpu.memory_space<vmem>>, vector<1x1xf32>
    %205 = vector.broadcast %204 : vector<1x1xf32> to vector<30x30xf32>
    %206 = arith.mulf %205, %9 : vector<30x30xf32>
    %207 = arith.addf %203, %206 : vector<30x30xf32>
    %c2_108 = arith.constant 2 : index
    %c8_109 = arith.constant 8 : index
    %208 = vector.load %arg2[%c2_108, %c8_109] : memref<6x9xf32, #tpu.memory_space<vmem>>, vector<1x1xf32>
    %209 = vector.broadcast %208 : vector<1x1xf32> to vector<30x30xf32>
    %210 = arith.mulf %209, %10 : vector<30x30xf32>
    %211 = arith.addf %207, %210 : vector<30x30xf32>
    %c2_110 = arith.constant 2 : index
    %c0_111 = arith.constant 0 : index
    %212 = vector.load %arg3[%c2_110, %c0_111] : memref<6x1xf32, #tpu.memory_space<vmem>>, vector<1x1xf32>
    %213 = vector.broadcast %212 : vector<1x1xf32> to vector<30x30xf32>
    %214 = arith.addf %211, %213 : vector<30x30xf32>
    %cst_112 = arith.constant 0.000000e+00 : f32
    %215 = vector.broadcast %cst_112 : f32 to vector<30x30xf32>
    %216 = arith.maximumf %214, %215 : vector<30x30xf32>
    %217 = vector.extract_strided_slice %216 {offsets = [0, 0], sizes = [29, 29], strides = [1, 1]} : vector<30x30xf32> to vector<29x29xf32>
    %218 = vector.extract_strided_slice %216 {offsets = [0, 1], sizes = [29, 29], strides = [1, 1]} : vector<30x30xf32> to vector<29x29xf32>
    %219 = arith.maximumf %217, %218 : vector<29x29xf32>
    %220 = vector.extract_strided_slice %216 {offsets = [1, 0], sizes = [29, 29], strides = [1, 1]} : vector<30x30xf32> to vector<29x29xf32>
    %221 = vector.extract_strided_slice %216 {offsets = [1, 1], sizes = [29, 29], strides = [1, 1]} : vector<30x30xf32> to vector<29x29xf32>
    %222 = arith.maximumf %220, %221 : vector<29x29xf32>
    %223 = arith.maximumf %219, %222 : vector<29x29xf32>
    %cst_113 = arith.constant dense<0.000000e+00> : vector<15x29xf32>
    %224 = tpu.matmul %11, %223, %cst_113 {dimension_numbers = #tpu.dot_dimension_numbers<[1], [0], [0], [1], [0, 0, 1, 1], [], []>} : vector<15x29xf32>, vector<29x29xf32>, vector<15x29xf32> -> vector<15x29xf32>
    %cst_114 = arith.constant dense<0.000000e+00> : vector<15x15xf32>
    %225 = tpu.matmul %224, %12, %cst_114 {dimension_numbers = #tpu.dot_dimension_numbers<[1], [0], [0], [1], [0, 0, 1, 1], [], []>} : vector<15x29xf32>, vector<29x15xf32>, vector<15x15xf32> -> vector<15x15xf32>
    %226 = vector.extract_strided_slice %225 {offsets = [0, 0], sizes = [1, 15], strides = [1, 1]} : vector<15x15xf32> to vector<1x15xf32>
    %c2_115 = arith.constant 2 : index
    %c0_116 = arith.constant 0 : index
    %227 = vector.load %arg16[%c2_115, %c0_116] : memref<6x225xf32, #tpu.memory_space<vmem>>, vector<1x15xf32>
    tpu.vector_store %arg16[%c2_115, %c0_116], %226 {strides = array<i32>} : memref<6x225xf32, #tpu.memory_space<vmem>>, vector<1x15xf32>,
    %228 = vector.extract_strided_slice %225 {offsets = [1, 0], sizes = [1, 15], strides = [1, 1]} : vector<15x15xf32> to vector<1x15xf32>
    %c2_117 = arith.constant 2 : index
    %c15_118 = arith.constant 15 : index
    %229 = vector.load %arg16[%c2_117, %c15_118] : memref<6x225xf32, #tpu.memory_space<vmem>>, vector<1x15xf32>
    tpu.vector_store %arg16[%c2_117, %c15_118], %228 {strides = array<i32>} : memref<6x225xf32, #tpu.memory_space<vmem>>, vector<1x15xf32>,
    %230 = vector.extract_strided_slice %225 {offsets = [2, 0], sizes = [1, 15], strides = [1, 1]} : vector<15x15xf32> to vector<1x15xf32>
    %c2_119 = arith.constant 2 : index
    %c30_120 = arith.constant 30 : index
    %231 = vector.load %arg16[%c2_119, %c30_120] : memref<6x225xf32, #tpu.memory_space<vmem>>, vector<1x15xf32>
    tpu.vector_store %arg16[%c2_119, %c30_120], %230 {strides = array<i32>} : memref<6x225xf32, #tpu.memory_space<vmem>>, vector<1x15xf32>,
    %232 = vector.extract_strided_slice %225 {offsets = [3, 0], sizes = [1, 15], strides = [1, 1]} : vector<15x15xf32> to vector<1x15xf32>
    %c2_121 = arith.constant 2 : index
    %c45_122 = arith.constant 45 : index
    %233 = vector.load %arg16[%c2_121, %c45_122] : memref<6x225xf32, #tpu.memory_space<vmem>>, vector<1x15xf32>
    tpu.vector_store %arg16[%c2_121, %c45_122], %232 {strides = array<i32>} : memref<6x225xf32, #tpu.memory_space<vmem>>, vector<1x15xf32>,
    %234 = vector.extract_strided_slice %225 {offsets = [4, 0], sizes = [1, 15], strides = [1, 1]} : vector<15x15xf32> to vector<1x15xf32>
    %c2_123 = arith.constant 2 : index
    %c60_124 = arith.constant 60 : index
    %235 = vector.load %arg16[%c2_123, %c60_124] : memref<6x225xf32, #tpu.memory_space<vmem>>, vector<1x15xf32>
    tpu.vector_store %arg16[%c2_123, %c60_124], %234 {strides = array<i32>} : memref<6x225xf32, #tpu.memory_space<vmem>>, vector<1x15xf32>,
    %236 = vector.extract_strided_slice %225 {offsets = [5, 0], sizes = [1, 15], strides = [1, 1]} : vector<15x15xf32> to vector<1x15xf32>
    %c2_125 = arith.constant 2 : index
    %c75_126 = arith.constant 75 : index
    %237 = vector.load %arg16[%c2_125, %c75_126] : memref<6x225xf32, #tpu.memory_space<vmem>>, vector<1x15xf32>
    tpu.vector_store %arg16[%c2_125, %c75_126], %236 {strides = array<i32>} : memref<6x225xf32, #tpu.memory_space<vmem>>, vector<1x15xf32>,
    %238 = vector.extract_strided_slice %225 {offsets = [6, 0], sizes = [1, 15], strides = [1, 1]} : vector<15x15xf32> to vector<1x15xf32>
    %c2_127 = arith.constant 2 : index
    %c90_128 = arith.constant 90 : index
    %239 = vector.load %arg16[%c2_127, %c90_128] : memref<6x225xf32, #tpu.memory_space<vmem>>, vector<1x15xf32>
    tpu.vector_store %arg16[%c2_127, %c90_128], %238 {strides = array<i32>} : memref<6x225xf32, #tpu.memory_space<vmem>>, vector<1x15xf32>,
    %240 = vector.extract_strided_slice %225 {offsets = [7, 0], sizes = [1, 15], strides = [1, 1]} : vector<15x15xf32> to vector<1x15xf32>
    %c2_129 = arith.constant 2 : index
    %c105_130 = arith.constant 105 : index
    %241 = vector.load %arg16[%c2_129, %c105_130] : memref<6x225xf32, #tpu.memory_space<vmem>>, vector<1x15xf32>
    tpu.vector_store %arg16[%c2_129, %c105_130], %240 {strides = array<i32>} : memref<6x225xf32, #tpu.memory_space<vmem>>, vector<1x15xf32>,
    %242 = vector.extract_strided_slice %225 {offsets = [8, 0], sizes = [1, 15], strides = [1, 1]} : vector<15x15xf32> to vector<1x15xf32>
    %c2_131 = arith.constant 2 : index
    %c120_132 = arith.constant 120 : index
    %243 = vector.load %arg16[%c2_131, %c120_132] : memref<6x225xf32, #tpu.memory_space<vmem>>, vector<1x15xf32>
    tpu.vector_store %arg16[%c2_131, %c120_132], %242 {strides = array<i32>} : memref<6x225xf32, #tpu.memory_space<vmem>>, vector<1x15xf32>,
    %244 = vector.extract_strided_slice %225 {offsets = [9, 0], sizes = [1, 15], strides = [1, 1]} : vector<15x15xf32> to vector<1x15xf32>
    %c2_133 = arith.constant 2 : index
    %c135_134 = arith.constant 135 : index
    %245 = vector.load %arg16[%c2_133, %c135_134] : memref<6x225xf32, #tpu.memory_space<vmem>>, vector<1x15xf32>
    tpu.vector_store %arg16[%c2_133, %c135_134], %244 {strides = array<i32>} : memref<6x225xf32, #tpu.memory_space<vmem>>, vector<1x15xf32>,
    %246 = vector.extract_strided_slice %225 {offsets = [10, 0], sizes = [1, 15], strides = [1, 1]} : vector<15x15xf32> to vector<1x15xf32>
    %c2_135 = arith.constant 2 : index
    %c150_136 = arith.constant 150 : index
    %247 = vector.load %arg16[%c2_135, %c150_136] : memref<6x225xf32, #tpu.memory_space<vmem>>, vector<1x15xf32>
    tpu.vector_store %arg16[%c2_135, %c150_136], %246 {strides = array<i32>} : memref<6x225xf32, #tpu.memory_space<vmem>>, vector<1x15xf32>,
    %248 = vector.extract_strided_slice %225 {offsets = [11, 0], sizes = [1, 15], strides = [1, 1]} : vector<15x15xf32> to vector<1x15xf32>
    %c2_137 = arith.constant 2 : index
    %c165_138 = arith.constant 165 : index
    %249 = vector.load %arg16[%c2_137, %c165_138] : memref<6x225xf32, #tpu.memory_space<vmem>>, vector<1x15xf32>
    tpu.vector_store %arg16[%c2_137, %c165_138], %248 {strides = array<i32>} : memref<6x225xf32, #tpu.memory_space<vmem>>, vector<1x15xf32>,
    %250 = vector.extract_strided_slice %225 {offsets = [12, 0], sizes = [1, 15], strides = [1, 1]} : vector<15x15xf32> to vector<1x15xf32>
    %c2_139 = arith.constant 2 : index
    %c180_140 = arith.constant 180 : index
    %251 = vector.load %arg16[%c2_139, %c180_140] : memref<6x225xf32, #tpu.memory_space<vmem>>, vector<1x15xf32>
    tpu.vector_store %arg16[%c2_139, %c180_140], %250 {strides = array<i32>} : memref<6x225xf32, #tpu.memory_space<vmem>>, vector<1x15xf32>,
    %252 = vector.extract_strided_slice %225 {offsets = [13, 0], sizes = [1, 15], strides = [1, 1]} : vector<15x15xf32> to vector<1x15xf32>
    %c2_141 = arith.constant 2 : index
    %c195_142 = arith.constant 195 : index
    %253 = vector.load %arg16[%c2_141, %c195_142] : memref<6x225xf32, #tpu.memory_space<vmem>>, vector<1x15xf32>
    tpu.vector_store %arg16[%c2_141, %c195_142], %252 {strides = array<i32>} : memref<6x225xf32, #tpu.memory_space<vmem>>, vector<1x15xf32>,
    %254 = vector.extract_strided_slice %225 {offsets = [14, 0], sizes = [1, 15], strides = [1, 1]} : vector<15x15xf32> to vector<1x15xf32>
    %c2_143 = arith.constant 2 : index
    %c210_144 = arith.constant 210 : index
    %255 = vector.load %arg16[%c2_143, %c210_144] : memref<6x225xf32, #tpu.memory_space<vmem>>, vector<1x15xf32>
    tpu.vector_store %arg16[%c2_143, %c210_144], %254 {strides = array<i32>} : memref<6x225xf32, #tpu.memory_space<vmem>>, vector<1x15xf32>,
    %cst_145 = arith.constant 0.000000e+00 : f32
    %256 = vector.broadcast %cst_145 : f32 to vector<30x30xf32>
    %c3_146 = arith.constant 3 : index
    %c0_147 = arith.constant 0 : index
    %257 = vector.load %arg2[%c3_146, %c0_147] : memref<6x9xf32, #tpu.memory_space<vmem>>, vector<1x1xf32>
    %258 = vector.broadcast %257 : vector<1x1xf32> to vector<30x30xf32>
    %259 = arith.mulf %258, %2 : vector<30x30xf32>
    %260 = arith.addf %256, %259 : vector<30x30xf32>
    %c3_148 = arith.constant 3 : index
    %c1_149 = arith.constant 1 : index
    %261 = vector.load %arg2[%c3_148, %c1_149] : memref<6x9xf32, #tpu.memory_space<vmem>>, vector<1x1xf32>
    %262 = vector.broadcast %261 : vector<1x1xf32> to vector<30x30xf32>
    %263 = arith.mulf %262, %3 : vector<30x30xf32>
    %264 = arith.addf %260, %263 : vector<30x30xf32>
    %c3_150 = arith.constant 3 : index
    %c2_151 = arith.constant 2 : index
    %265 = vector.load %arg2[%c3_150, %c2_151] : memref<6x9xf32, #tpu.memory_space<vmem>>, vector<1x1xf32>
    %266 = vector.broadcast %265 : vector<1x1xf32> to vector<30x30xf32>
    %267 = arith.mulf %266, %4 : vector<30x30xf32>
    %268 = arith.addf %264, %267 : vector<30x30xf32>
    %c3_152 = arith.constant 3 : index
    %c3_153 = arith.constant 3 : index
    %269 = vector.load %arg2[%c3_152, %c3_153] : memref<6x9xf32, #tpu.memory_space<vmem>>, vector<1x1xf32>
    %270 = vector.broadcast %269 : vector<1x1xf32> to vector<30x30xf32>
    %271 = arith.mulf %270, %5 : vector<30x30xf32>
    %272 = arith.addf %268, %271 : vector<30x30xf32>
    %c3_154 = arith.constant 3 : index
    %c4_155 = arith.constant 4 : index
    %273 = vector.load %arg2[%c3_154, %c4_155] : memref<6x9xf32, #tpu.memory_space<vmem>>, vector<1x1xf32>
    %274 = vector.broadcast %273 : vector<1x1xf32> to vector<30x30xf32>
    %275 = arith.mulf %274, %6 : vector<30x30xf32>
    %276 = arith.addf %272, %275 : vector<30x30xf32>
    %c3_156 = arith.constant 3 : index
    %c5_157 = arith.constant 5 : index
    %277 = vector.load %arg2[%c3_156, %c5_157] : memref<6x9xf32, #tpu.memory_space<vmem>>, vector<1x1xf32>
    %278 = vector.broadcast %277 : vector<1x1xf32> to vector<30x30xf32>
    %279 = arith.mulf %278, %7 : vector<30x30xf32>
    %280 = arith.addf %276, %279 : vector<30x30xf32>
    %c3_158 = arith.constant 3 : index
    %c6_159 = arith.constant 6 : index
    %281 = vector.load %arg2[%c3_158, %c6_159] : memref<6x9xf32, #tpu.memory_space<vmem>>, vector<1x1xf32>
    %282 = vector.broadcast %281 : vector<1x1xf32> to vector<30x30xf32>
    %283 = arith.mulf %282, %8 : vector<30x30xf32>
    %284 = arith.addf %280, %283 : vector<30x30xf32>
    %c3_160 = arith.constant 3 : index
    %c7_161 = arith.constant 7 : index
    %285 = vector.load %arg2[%c3_160, %c7_161] : memref<6x9xf32, #tpu.memory_space<vmem>>, vector<1x1xf32>
    %286 = vector.broadcast %285 : vector<1x1xf32> to vector<30x30xf32>
    %287 = arith.mulf %286, %9 : vector<30x30xf32>
    %288 = arith.addf %284, %287 : vector<30x30xf32>
    %c3_162 = arith.constant 3 : index
    %c8_163 = arith.constant 8 : index
    %289 = vector.load %arg2[%c3_162, %c8_163] : memref<6x9xf32, #tpu.memory_space<vmem>>, vector<1x1xf32>
    %290 = vector.broadcast %289 : vector<1x1xf32> to vector<30x30xf32>
    %291 = arith.mulf %290, %10 : vector<30x30xf32>
    %292 = arith.addf %288, %291 : vector<30x30xf32>
    %c3_164 = arith.constant 3 : index
    %c0_165 = arith.constant 0 : index
    %293 = vector.load %arg3[%c3_164, %c0_165] : memref<6x1xf32, #tpu.memory_space<vmem>>, vector<1x1xf32>
    %294 = vector.broadcast %293 : vector<1x1xf32> to vector<30x30xf32>
    %295 = arith.addf %292, %294 : vector<30x30xf32>
    %cst_166 = arith.constant 0.000000e+00 : f32
    %296 = vector.broadcast %cst_166 : f32 to vector<30x30xf32>
    %297 = arith.maximumf %295, %296 : vector<30x30xf32>
    %298 = vector.extract_strided_slice %297 {offsets = [0, 0], sizes = [29, 29], strides = [1, 1]} : vector<30x30xf32> to vector<29x29xf32>
    %299 = vector.extract_strided_slice %297 {offsets = [0, 1], sizes = [29, 29], strides = [1, 1]} : vector<30x30xf32> to vector<29x29xf32>
    %300 = arith.maximumf %298, %299 : vector<29x29xf32>
    %301 = vector.extract_strided_slice %297 {offsets = [1, 0], sizes = [29, 29], strides = [1, 1]} : vector<30x30xf32> to vector<29x29xf32>
    %302 = vector.extract_strided_slice %297 {offsets = [1, 1], sizes = [29, 29], strides = [1, 1]} : vector<30x30xf32> to vector<29x29xf32>
    %303 = arith.maximumf %301, %302 : vector<29x29xf32>
    %304 = arith.maximumf %300, %303 : vector<29x29xf32>
    %cst_167 = arith.constant dense<0.000000e+00> : vector<15x29xf32>
    %305 = tpu.matmul %11, %304, %cst_167 {dimension_numbers = #tpu.dot_dimension_numbers<[1], [0], [0], [1], [0, 0, 1, 1], [], []>} : vector<15x29xf32>, vector<29x29xf32>, vector<15x29xf32> -> vector<15x29xf32>
    %cst_168 = arith.constant dense<0.000000e+00> : vector<15x15xf32>
    %306 = tpu.matmul %305, %12, %cst_168 {dimension_numbers = #tpu.dot_dimension_numbers<[1], [0], [0], [1], [0, 0, 1, 1], [], []>} : vector<15x29xf32>, vector<29x15xf32>, vector<15x15xf32> -> vector<15x15xf32>
    %307 = vector.extract_strided_slice %306 {offsets = [0, 0], sizes = [1, 15], strides = [1, 1]} : vector<15x15xf32> to vector<1x15xf32>
    %c3_169 = arith.constant 3 : index
    %c0_170 = arith.constant 0 : index
    %308 = vector.load %arg16[%c3_169, %c0_170] : memref<6x225xf32, #tpu.memory_space<vmem>>, vector<1x15xf32>
    tpu.vector_store %arg16[%c3_169, %c0_170], %307 {strides = array<i32>} : memref<6x225xf32, #tpu.memory_space<vmem>>, vector<1x15xf32>,
    %309 = vector.extract_strided_slice %306 {offsets = [1, 0], sizes = [1, 15], strides = [1, 1]} : vector<15x15xf32> to vector<1x15xf32>
    %c3_171 = arith.constant 3 : index
    %c15_172 = arith.constant 15 : index
    %310 = vector.load %arg16[%c3_171, %c15_172] : memref<6x225xf32, #tpu.memory_space<vmem>>, vector<1x15xf32>
    tpu.vector_store %arg16[%c3_171, %c15_172], %309 {strides = array<i32>} : memref<6x225xf32, #tpu.memory_space<vmem>>, vector<1x15xf32>,
    %311 = vector.extract_strided_slice %306 {offsets = [2, 0], sizes = [1, 15], strides = [1, 1]} : vector<15x15xf32> to vector<1x15xf32>
    %c3_173 = arith.constant 3 : index
    %c30_174 = arith.constant 30 : index
    %312 = vector.load %arg16[%c3_173, %c30_174] : memref<6x225xf32, #tpu.memory_space<vmem>>, vector<1x15xf32>
    tpu.vector_store %arg16[%c3_173, %c30_174], %311 {strides = array<i32>} : memref<6x225xf32, #tpu.memory_space<vmem>>, vector<1x15xf32>,
    %313 = vector.extract_strided_slice %306 {offsets = [3, 0], sizes = [1, 15], strides = [1, 1]} : vector<15x15xf32> to vector<1x15xf32>
    %c3_175 = arith.constant 3 : index
    %c45_176 = arith.constant 45 : index
    %314 = vector.load %arg16[%c3_175, %c45_176] : memref<6x225xf32, #tpu.memory_space<vmem>>, vector<1x15xf32>
    tpu.vector_store %arg16[%c3_175, %c45_176], %313 {strides = array<i32>} : memref<6x225xf32, #tpu.memory_space<vmem>>, vector<1x15xf32>,
    %315 = vector.extract_strided_slice %306 {offsets = [4, 0], sizes = [1, 15], strides = [1, 1]} : vector<15x15xf32> to vector<1x15xf32>
    %c3_177 = arith.constant 3 : index
    %c60_178 = arith.constant 60 : index
    %316 = vector.load %arg16[%c3_177, %c60_178] : memref<6x225xf32, #tpu.memory_space<vmem>>, vector<1x15xf32>
    tpu.vector_store %arg16[%c3_177, %c60_178], %315 {strides = array<i32>} : memref<6x225xf32, #tpu.memory_space<vmem>>, vector<1x15xf32>,
    %317 = vector.extract_strided_slice %306 {offsets = [5, 0], sizes = [1, 15], strides = [1, 1]} : vector<15x15xf32> to vector<1x15xf32>
    %c3_179 = arith.constant 3 : index
    %c75_180 = arith.constant 75 : index
    %318 = vector.load %arg16[%c3_179, %c75_180] : memref<6x225xf32, #tpu.memory_space<vmem>>, vector<1x15xf32>
    tpu.vector_store %arg16[%c3_179, %c75_180], %317 {strides = array<i32>} : memref<6x225xf32, #tpu.memory_space<vmem>>, vector<1x15xf32>,
    %319 = vector.extract_strided_slice %306 {offsets = [6, 0], sizes = [1, 15], strides = [1, 1]} : vector<15x15xf32> to vector<1x15xf32>
    %c3_181 = arith.constant 3 : index
    %c90_182 = arith.constant 90 : index
    %320 = vector.load %arg16[%c3_181, %c90_182] : memref<6x225xf32, #tpu.memory_space<vmem>>, vector<1x15xf32>
    tpu.vector_store %arg16[%c3_181, %c90_182], %319 {strides = array<i32>} : memref<6x225xf32, #tpu.memory_space<vmem>>, vector<1x15xf32>,
    %321 = vector.extract_strided_slice %306 {offsets = [7, 0], sizes = [1, 15], strides = [1, 1]} : vector<15x15xf32> to vector<1x15xf32>
    %c3_183 = arith.constant 3 : index
    %c105_184 = arith.constant 105 : index
    %322 = vector.load %arg16[%c3_183, %c105_184] : memref<6x225xf32, #tpu.memory_space<vmem>>, vector<1x15xf32>
    tpu.vector_store %arg16[%c3_183, %c105_184], %321 {strides = array<i32>} : memref<6x225xf32, #tpu.memory_space<vmem>>, vector<1x15xf32>,
    %323 = vector.extract_strided_slice %306 {offsets = [8, 0], sizes = [1, 15], strides = [1, 1]} : vector<15x15xf32> to vector<1x15xf32>
    %c3_185 = arith.constant 3 : index
    %c120_186 = arith.constant 120 : index
    %324 = vector.load %arg16[%c3_185, %c120_186] : memref<6x225xf32, #tpu.memory_space<vmem>>, vector<1x15xf32>
    tpu.vector_store %arg16[%c3_185, %c120_186], %323 {strides = array<i32>} : memref<6x225xf32, #tpu.memory_space<vmem>>, vector<1x15xf32>,
    %325 = vector.extract_strided_slice %306 {offsets = [9, 0], sizes = [1, 15], strides = [1, 1]} : vector<15x15xf32> to vector<1x15xf32>
    %c3_187 = arith.constant 3 : index
    %c135_188 = arith.constant 135 : index
    %326 = vector.load %arg16[%c3_187, %c135_188] : memref<6x225xf32, #tpu.memory_space<vmem>>, vector<1x15xf32>
    tpu.vector_store %arg16[%c3_187, %c135_188], %325 {strides = array<i32>} : memref<6x225xf32, #tpu.memory_space<vmem>>, vector<1x15xf32>,
    %327 = vector.extract_strided_slice %306 {offsets = [10, 0], sizes = [1, 15], strides = [1, 1]} : vector<15x15xf32> to vector<1x15xf32>
    %c3_189 = arith.constant 3 : index
    %c150_190 = arith.constant 150 : index
    %328 = vector.load %arg16[%c3_189, %c150_190] : memref<6x225xf32, #tpu.memory_space<vmem>>, vector<1x15xf32>
    tpu.vector_store %arg16[%c3_189, %c150_190], %327 {strides = array<i32>} : memref<6x225xf32, #tpu.memory_space<vmem>>, vector<1x15xf32>,
    %329 = vector.extract_strided_slice %306 {offsets = [11, 0], sizes = [1, 15], strides = [1, 1]} : vector<15x15xf32> to vector<1x15xf32>
    %c3_191 = arith.constant 3 : index
    %c165_192 = arith.constant 165 : index
    %330 = vector.load %arg16[%c3_191, %c165_192] : memref<6x225xf32, #tpu.memory_space<vmem>>, vector<1x15xf32>
    tpu.vector_store %arg16[%c3_191, %c165_192], %329 {strides = array<i32>} : memref<6x225xf32, #tpu.memory_space<vmem>>, vector<1x15xf32>,
    %331 = vector.extract_strided_slice %306 {offsets = [12, 0], sizes = [1, 15], strides = [1, 1]} : vector<15x15xf32> to vector<1x15xf32>
    %c3_193 = arith.constant 3 : index
    %c180_194 = arith.constant 180 : index
    %332 = vector.load %arg16[%c3_193, %c180_194] : memref<6x225xf32, #tpu.memory_space<vmem>>, vector<1x15xf32>
    tpu.vector_store %arg16[%c3_193, %c180_194], %331 {strides = array<i32>} : memref<6x225xf32, #tpu.memory_space<vmem>>, vector<1x15xf32>,
    %333 = vector.extract_strided_slice %306 {offsets = [13, 0], sizes = [1, 15], strides = [1, 1]} : vector<15x15xf32> to vector<1x15xf32>
    %c3_195 = arith.constant 3 : index
    %c195_196 = arith.constant 195 : index
    %334 = vector.load %arg16[%c3_195, %c195_196] : memref<6x225xf32, #tpu.memory_space<vmem>>, vector<1x15xf32>
    tpu.vector_store %arg16[%c3_195, %c195_196], %333 {strides = array<i32>} : memref<6x225xf32, #tpu.memory_space<vmem>>, vector<1x15xf32>,
    %335 = vector.extract_strided_slice %306 {offsets = [14, 0], sizes = [1, 15], strides = [1, 1]} : vector<15x15xf32> to vector<1x15xf32>
    %c3_197 = arith.constant 3 : index
    %c210_198 = arith.constant 210 : index
    %336 = vector.load %arg16[%c3_197, %c210_198] : memref<6x225xf32, #tpu.memory_space<vmem>>, vector<1x15xf32>
    tpu.vector_store %arg16[%c3_197, %c210_198], %335 {strides = array<i32>} : memref<6x225xf32, #tpu.memory_space<vmem>>, vector<1x15xf32>,
    %cst_199 = arith.constant 0.000000e+00 : f32
    %337 = vector.broadcast %cst_199 : f32 to vector<30x30xf32>
    %c4_200 = arith.constant 4 : index
    %c0_201 = arith.constant 0 : index
    %338 = vector.load %arg2[%c4_200, %c0_201] : memref<6x9xf32, #tpu.memory_space<vmem>>, vector<1x1xf32>
    %339 = vector.broadcast %338 : vector<1x1xf32> to vector<30x30xf32>
    %340 = arith.mulf %339, %2 : vector<30x30xf32>
    %341 = arith.addf %337, %340 : vector<30x30xf32>
    %c4_202 = arith.constant 4 : index
    %c1_203 = arith.constant 1 : index
    %342 = vector.load %arg2[%c4_202, %c1_203] : memref<6x9xf32, #tpu.memory_space<vmem>>, vector<1x1xf32>
    %343 = vector.broadcast %342 : vector<1x1xf32> to vector<30x30xf32>
    %344 = arith.mulf %343, %3 : vector<30x30xf32>
    %345 = arith.addf %341, %344 : vector<30x30xf32>
    %c4_204 = arith.constant 4 : index
    %c2_205 = arith.constant 2 : index
    %346 = vector.load %arg2[%c4_204, %c2_205] : memref<6x9xf32, #tpu.memory_space<vmem>>, vector<1x1xf32>
    %347 = vector.broadcast %346 : vector<1x1xf32> to vector<30x30xf32>
    %348 = arith.mulf %347, %4 : vector<30x30xf32>
    %349 = arith.addf %345, %348 : vector<30x30xf32>
    %c4_206 = arith.constant 4 : index
    %c3_207 = arith.constant 3 : index
    %350 = vector.load %arg2[%c4_206, %c3_207] : memref<6x9xf32, #tpu.memory_space<vmem>>, vector<1x1xf32>
    %351 = vector.broadcast %350 : vector<1x1xf32> to vector<30x30xf32>
    %352 = arith.mulf %351, %5 : vector<30x30xf32>
    %353 = arith.addf %349, %352 : vector<30x30xf32>
    %c4_208 = arith.constant 4 : index
    %c4_209 = arith.constant 4 : index
    %354 = vector.load %arg2[%c4_208, %c4_209] : memref<6x9xf32, #tpu.memory_space<vmem>>, vector<1x1xf32>
    %355 = vector.broadcast %354 : vector<1x1xf32> to vector<30x30xf32>
    %356 = arith.mulf %355, %6 : vector<30x30xf32>
    %357 = arith.addf %353, %356 : vector<30x30xf32>
    %c4_210 = arith.constant 4 : index
    %c5_211 = arith.constant 5 : index
    %358 = vector.load %arg2[%c4_210, %c5_211] : memref<6x9xf32, #tpu.memory_space<vmem>>, vector<1x1xf32>
    %359 = vector.broadcast %358 : vector<1x1xf32> to vector<30x30xf32>
    %360 = arith.mulf %359, %7 : vector<30x30xf32>
    %361 = arith.addf %357, %360 : vector<30x30xf32>
    %c4_212 = arith.constant 4 : index
    %c6_213 = arith.constant 6 : index
    %362 = vector.load %arg2[%c4_212, %c6_213] : memref<6x9xf32, #tpu.memory_space<vmem>>, vector<1x1xf32>
    %363 = vector.broadcast %362 : vector<1x1xf32> to vector<30x30xf32>
    %364 = arith.mulf %363, %8 : vector<30x30xf32>
    %365 = arith.addf %361, %364 : vector<30x30xf32>
    %c4_214 = arith.constant 4 : index
    %c7_215 = arith.constant 7 : index
    %366 = vector.load %arg2[%c4_214, %c7_215] : memref<6x9xf32, #tpu.memory_space<vmem>>, vector<1x1xf32>
    %367 = vector.broadcast %366 : vector<1x1xf32> to vector<30x30xf32>
    %368 = arith.mulf %367, %9 : vector<30x30xf32>
    %369 = arith.addf %365, %368 : vector<30x30xf32>
    %c4_216 = arith.constant 4 : index
    %c8_217 = arith.constant 8 : index
    %370 = vector.load %arg2[%c4_216, %c8_217] : memref<6x9xf32, #tpu.memory_space<vmem>>, vector<1x1xf32>
    %371 = vector.broadcast %370 : vector<1x1xf32> to vector<30x30xf32>
    %372 = arith.mulf %371, %10 : vector<30x30xf32>
    %373 = arith.addf %369, %372 : vector<30x30xf32>
    %c4_218 = arith.constant 4 : index
    %c0_219 = arith.constant 0 : index
    %374 = vector.load %arg3[%c4_218, %c0_219] : memref<6x1xf32, #tpu.memory_space<vmem>>, vector<1x1xf32>
    %375 = vector.broadcast %374 : vector<1x1xf32> to vector<30x30xf32>
    %376 = arith.addf %373, %375 : vector<30x30xf32>
    %cst_220 = arith.constant 0.000000e+00 : f32
    %377 = vector.broadcast %cst_220 : f32 to vector<30x30xf32>
    %378 = arith.maximumf %376, %377 : vector<30x30xf32>
    %379 = vector.extract_strided_slice %378 {offsets = [0, 0], sizes = [29, 29], strides = [1, 1]} : vector<30x30xf32> to vector<29x29xf32>
    %380 = vector.extract_strided_slice %378 {offsets = [0, 1], sizes = [29, 29], strides = [1, 1]} : vector<30x30xf32> to vector<29x29xf32>
    %381 = arith.maximumf %379, %380 : vector<29x29xf32>
    %382 = vector.extract_strided_slice %378 {offsets = [1, 0], sizes = [29, 29], strides = [1, 1]} : vector<30x30xf32> to vector<29x29xf32>
    %383 = vector.extract_strided_slice %378 {offsets = [1, 1], sizes = [29, 29], strides = [1, 1]} : vector<30x30xf32> to vector<29x29xf32>
    %384 = arith.maximumf %382, %383 : vector<29x29xf32>
    %385 = arith.maximumf %381, %384 : vector<29x29xf32>
    %cst_221 = arith.constant dense<0.000000e+00> : vector<15x29xf32>
    %386 = tpu.matmul %11, %385, %cst_221 {dimension_numbers = #tpu.dot_dimension_numbers<[1], [0], [0], [1], [0, 0, 1, 1], [], []>} : vector<15x29xf32>, vector<29x29xf32>, vector<15x29xf32> -> vector<15x29xf32>
    %cst_222 = arith.constant dense<0.000000e+00> : vector<15x15xf32>
    %387 = tpu.matmul %386, %12, %cst_222 {dimension_numbers = #tpu.dot_dimension_numbers<[1], [0], [0], [1], [0, 0, 1, 1], [], []>} : vector<15x29xf32>, vector<29x15xf32>, vector<15x15xf32> -> vector<15x15xf32>
    %388 = vector.extract_strided_slice %387 {offsets = [0, 0], sizes = [1, 15], strides = [1, 1]} : vector<15x15xf32> to vector<1x15xf32>
    %c4_223 = arith.constant 4 : index
    %c0_224 = arith.constant 0 : index
    %389 = vector.load %arg16[%c4_223, %c0_224] : memref<6x225xf32, #tpu.memory_space<vmem>>, vector<1x15xf32>
    tpu.vector_store %arg16[%c4_223, %c0_224], %388 {strides = array<i32>} : memref<6x225xf32, #tpu.memory_space<vmem>>, vector<1x15xf32>,
    %390 = vector.extract_strided_slice %387 {offsets = [1, 0], sizes = [1, 15], strides = [1, 1]} : vector<15x15xf32> to vector<1x15xf32>
    %c4_225 = arith.constant 4 : index
    %c15_226 = arith.constant 15 : index
    %391 = vector.load %arg16[%c4_225, %c15_226] : memref<6x225xf32, #tpu.memory_space<vmem>>, vector<1x15xf32>
    tpu.vector_store %arg16[%c4_225, %c15_226], %390 {strides = array<i32>} : memref<6x225xf32, #tpu.memory_space<vmem>>, vector<1x15xf32>,
    %392 = vector.extract_strided_slice %387 {offsets = [2, 0], sizes = [1, 15], strides = [1, 1]} : vector<15x15xf32> to vector<1x15xf32>
    %c4_227 = arith.constant 4 : index
    %c30_228 = arith.constant 30 : index
    %393 = vector.load %arg16[%c4_227, %c30_228] : memref<6x225xf32, #tpu.memory_space<vmem>>, vector<1x15xf32>
    tpu.vector_store %arg16[%c4_227, %c30_228], %392 {strides = array<i32>} : memref<6x225xf32, #tpu.memory_space<vmem>>, vector<1x15xf32>,
    %394 = vector.extract_strided_slice %387 {offsets = [3, 0], sizes = [1, 15], strides = [1, 1]} : vector<15x15xf32> to vector<1x15xf32>
    %c4_229 = arith.constant 4 : index
    %c45_230 = arith.constant 45 : index
    %395 = vector.load %arg16[%c4_229, %c45_230] : memref<6x225xf32, #tpu.memory_space<vmem>>, vector<1x15xf32>
    tpu.vector_store %arg16[%c4_229, %c45_230], %394 {strides = array<i32>} : memref<6x225xf32, #tpu.memory_space<vmem>>, vector<1x15xf32>,
    %396 = vector.extract_strided_slice %387 {offsets = [4, 0], sizes = [1, 15], strides = [1, 1]} : vector<15x15xf32> to vector<1x15xf32>
    %c4_231 = arith.constant 4 : index
    %c60_232 = arith.constant 60 : index
    %397 = vector.load %arg16[%c4_231, %c60_232] : memref<6x225xf32, #tpu.memory_space<vmem>>, vector<1x15xf32>
    tpu.vector_store %arg16[%c4_231, %c60_232], %396 {strides = array<i32>} : memref<6x225xf32, #tpu.memory_space<vmem>>, vector<1x15xf32>,
    %398 = vector.extract_strided_slice %387 {offsets = [5, 0], sizes = [1, 15], strides = [1, 1]} : vector<15x15xf32> to vector<1x15xf32>
    %c4_233 = arith.constant 4 : index
    %c75_234 = arith.constant 75 : index
    %399 = vector.load %arg16[%c4_233, %c75_234] : memref<6x225xf32, #tpu.memory_space<vmem>>, vector<1x15xf32>
    tpu.vector_store %arg16[%c4_233, %c75_234], %398 {strides = array<i32>} : memref<6x225xf32, #tpu.memory_space<vmem>>, vector<1x15xf32>,
    %400 = vector.extract_strided_slice %387 {offsets = [6, 0], sizes = [1, 15], strides = [1, 1]} : vector<15x15xf32> to vector<1x15xf32>
    %c4_235 = arith.constant 4 : index
    %c90_236 = arith.constant 90 : index
    %401 = vector.load %arg16[%c4_235, %c90_236] : memref<6x225xf32, #tpu.memory_space<vmem>>, vector<1x15xf32>
    tpu.vector_store %arg16[%c4_235, %c90_236], %400 {strides = array<i32>} : memref<6x225xf32, #tpu.memory_space<vmem>>, vector<1x15xf32>,
    %402 = vector.extract_strided_slice %387 {offsets = [7, 0], sizes = [1, 15], strides = [1, 1]} : vector<15x15xf32> to vector<1x15xf32>
    %c4_237 = arith.constant 4 : index
    %c105_238 = arith.constant 105 : index
    %403 = vector.load %arg16[%c4_237, %c105_238] : memref<6x225xf32, #tpu.memory_space<vmem>>, vector<1x15xf32>
    tpu.vector_store %arg16[%c4_237, %c105_238], %402 {strides = array<i32>} : memref<6x225xf32, #tpu.memory_space<vmem>>, vector<1x15xf32>,
    %404 = vector.extract_strided_slice %387 {offsets = [8, 0], sizes = [1, 15], strides = [1, 1]} : vector<15x15xf32> to vector<1x15xf32>
    %c4_239 = arith.constant 4 : index
    %c120_240 = arith.constant 120 : index
    %405 = vector.load %arg16[%c4_239, %c120_240] : memref<6x225xf32, #tpu.memory_space<vmem>>, vector<1x15xf32>
    tpu.vector_store %arg16[%c4_239, %c120_240], %404 {strides = array<i32>} : memref<6x225xf32, #tpu.memory_space<vmem>>, vector<1x15xf32>,
    %406 = vector.extract_strided_slice %387 {offsets = [9, 0], sizes = [1, 15], strides = [1, 1]} : vector<15x15xf32> to vector<1x15xf32>
    %c4_241 = arith.constant 4 : index
    %c135_242 = arith.constant 135 : index
    %407 = vector.load %arg16[%c4_241, %c135_242] : memref<6x225xf32, #tpu.memory_space<vmem>>, vector<1x15xf32>
    tpu.vector_store %arg16[%c4_241, %c135_242], %406 {strides = array<i32>} : memref<6x225xf32, #tpu.memory_space<vmem>>, vector<1x15xf32>,
    %408 = vector.extract_strided_slice %387 {offsets = [10, 0], sizes = [1, 15], strides = [1, 1]} : vector<15x15xf32> to vector<1x15xf32>
    %c4_243 = arith.constant 4 : index
    %c150_244 = arith.constant 150 : index
    %409 = vector.load %arg16[%c4_243, %c150_244] : memref<6x225xf32, #tpu.memory_space<vmem>>, vector<1x15xf32>
    tpu.vector_store %arg16[%c4_243, %c150_244], %408 {strides = array<i32>} : memref<6x225xf32, #tpu.memory_space<vmem>>, vector<1x15xf32>,
    %410 = vector.extract_strided_slice %387 {offsets = [11, 0], sizes = [1, 15], strides = [1, 1]} : vector<15x15xf32> to vector<1x15xf32>
    %c4_245 = arith.constant 4 : index
    %c165_246 = arith.constant 165 : index
    %411 = vector.load %arg16[%c4_245, %c165_246] : memref<6x225xf32, #tpu.memory_space<vmem>>, vector<1x15xf32>
    tpu.vector_store %arg16[%c4_245, %c165_246], %410 {strides = array<i32>} : memref<6x225xf32, #tpu.memory_space<vmem>>, vector<1x15xf32>,
    %412 = vector.extract_strided_slice %387 {offsets = [12, 0], sizes = [1, 15], strides = [1, 1]} : vector<15x15xf32> to vector<1x15xf32>
    %c4_247 = arith.constant 4 : index
    %c180_248 = arith.constant 180 : index
    %413 = vector.load %arg16[%c4_247, %c180_248] : memref<6x225xf32, #tpu.memory_space<vmem>>, vector<1x15xf32>
    tpu.vector_store %arg16[%c4_247, %c180_248], %412 {strides = array<i32>} : memref<6x225xf32, #tpu.memory_space<vmem>>, vector<1x15xf32>,
    %414 = vector.extract_strided_slice %387 {offsets = [13, 0], sizes = [1, 15], strides = [1, 1]} : vector<15x15xf32> to vector<1x15xf32>
    %c4_249 = arith.constant 4 : index
    %c195_250 = arith.constant 195 : index
    %415 = vector.load %arg16[%c4_249, %c195_250] : memref<6x225xf32, #tpu.memory_space<vmem>>, vector<1x15xf32>
    tpu.vector_store %arg16[%c4_249, %c195_250], %414 {strides = array<i32>} : memref<6x225xf32, #tpu.memory_space<vmem>>, vector<1x15xf32>,
    %416 = vector.extract_strided_slice %387 {offsets = [14, 0], sizes = [1, 15], strides = [1, 1]} : vector<15x15xf32> to vector<1x15xf32>
    %c4_251 = arith.constant 4 : index
    %c210_252 = arith.constant 210 : index
    %417 = vector.load %arg16[%c4_251, %c210_252] : memref<6x225xf32, #tpu.memory_space<vmem>>, vector<1x15xf32>
    tpu.vector_store %arg16[%c4_251, %c210_252], %416 {strides = array<i32>} : memref<6x225xf32, #tpu.memory_space<vmem>>, vector<1x15xf32>,
    %cst_253 = arith.constant 0.000000e+00 : f32
    %418 = vector.broadcast %cst_253 : f32 to vector<30x30xf32>
    %c5_254 = arith.constant 5 : index
    %c0_255 = arith.constant 0 : index
    %419 = vector.load %arg2[%c5_254, %c0_255] : memref<6x9xf32, #tpu.memory_space<vmem>>, vector<1x1xf32>
    %420 = vector.broadcast %419 : vector<1x1xf32> to vector<30x30xf32>
    %421 = arith.mulf %420, %2 : vector<30x30xf32>
    %422 = arith.addf %418, %421 : vector<30x30xf32>
    %c5_256 = arith.constant 5 : index
    %c1_257 = arith.constant 1 : index
    %423 = vector.load %arg2[%c5_256, %c1_257] : memref<6x9xf32, #tpu.memory_space<vmem>>, vector<1x1xf32>
    %424 = vector.broadcast %423 : vector<1x1xf32> to vector<30x30xf32>
    %425 = arith.mulf %424, %3 : vector<30x30xf32>
    %426 = arith.addf %422, %425 : vector<30x30xf32>
    %c5_258 = arith.constant 5 : index
    %c2_259 = arith.constant 2 : index
    %427 = vector.load %arg2[%c5_258, %c2_259] : memref<6x9xf32, #tpu.memory_space<vmem>>, vector<1x1xf32>
    %428 = vector.broadcast %427 : vector<1x1xf32> to vector<30x30xf32>
    %429 = arith.mulf %428, %4 : vector<30x30xf32>
    %430 = arith.addf %426, %429 : vector<30x30xf32>
    %c5_260 = arith.constant 5 : index
    %c3_261 = arith.constant 3 : index
    %431 = vector.load %arg2[%c5_260, %c3_261] : memref<6x9xf32, #tpu.memory_space<vmem>>, vector<1x1xf32>
    %432 = vector.broadcast %431 : vector<1x1xf32> to vector<30x30xf32>
    %433 = arith.mulf %432, %5 : vector<30x30xf32>
    %434 = arith.addf %430, %433 : vector<30x30xf32>
    %c5_262 = arith.constant 5 : index
    %c4_263 = arith.constant 4 : index
    %435 = vector.load %arg2[%c5_262, %c4_263] : memref<6x9xf32, #tpu.memory_space<vmem>>, vector<1x1xf32>
    %436 = vector.broadcast %435 : vector<1x1xf32> to vector<30x30xf32>
    %437 = arith.mulf %436, %6 : vector<30x30xf32>
    %438 = arith.addf %434, %437 : vector<30x30xf32>
    %c5_264 = arith.constant 5 : index
    %c5_265 = arith.constant 5 : index
    %439 = vector.load %arg2[%c5_264, %c5_265] : memref<6x9xf32, #tpu.memory_space<vmem>>, vector<1x1xf32>
    %440 = vector.broadcast %439 : vector<1x1xf32> to vector<30x30xf32>
    %441 = arith.mulf %440, %7 : vector<30x30xf32>
    %442 = arith.addf %438, %441 : vector<30x30xf32>
    %c5_266 = arith.constant 5 : index
    %c6_267 = arith.constant 6 : index
    %443 = vector.load %arg2[%c5_266, %c6_267] : memref<6x9xf32, #tpu.memory_space<vmem>>, vector<1x1xf32>
    %444 = vector.broadcast %443 : vector<1x1xf32> to vector<30x30xf32>
    %445 = arith.mulf %444, %8 : vector<30x30xf32>
    %446 = arith.addf %442, %445 : vector<30x30xf32>
    %c5_268 = arith.constant 5 : index
    %c7_269 = arith.constant 7 : index
    %447 = vector.load %arg2[%c5_268, %c7_269] : memref<6x9xf32, #tpu.memory_space<vmem>>, vector<1x1xf32>
    %448 = vector.broadcast %447 : vector<1x1xf32> to vector<30x30xf32>
    %449 = arith.mulf %448, %9 : vector<30x30xf32>
    %450 = arith.addf %446, %449 : vector<30x30xf32>
    %c5_270 = arith.constant 5 : index
    %c8_271 = arith.constant 8 : index
    %451 = vector.load %arg2[%c5_270, %c8_271] : memref<6x9xf32, #tpu.memory_space<vmem>>, vector<1x1xf32>
    %452 = vector.broadcast %451 : vector<1x1xf32> to vector<30x30xf32>
    %453 = arith.mulf %452, %10 : vector<30x30xf32>
    %454 = arith.addf %450, %453 : vector<30x30xf32>
    %c5_272 = arith.constant 5 : index
    %c0_273 = arith.constant 0 : index
    %455 = vector.load %arg3[%c5_272, %c0_273] : memref<6x1xf32, #tpu.memory_space<vmem>>, vector<1x1xf32>
    %456 = vector.broadcast %455 : vector<1x1xf32> to vector<30x30xf32>
    %457 = arith.addf %454, %456 : vector<30x30xf32>
    %cst_274 = arith.constant 0.000000e+00 : f32
    %458 = vector.broadcast %cst_274 : f32 to vector<30x30xf32>
    %459 = arith.maximumf %457, %458 : vector<30x30xf32>
    %460 = vector.extract_strided_slice %459 {offsets = [0, 0], sizes = [29, 29], strides = [1, 1]} : vector<30x30xf32> to vector<29x29xf32>
    %461 = vector.extract_strided_slice %459 {offsets = [0, 1], sizes = [29, 29], strides = [1, 1]} : vector<30x30xf32> to vector<29x29xf32>
    %462 = arith.maximumf %460, %461 : vector<29x29xf32>
    %463 = vector.extract_strided_slice %459 {offsets = [1, 0], sizes = [29, 29], strides = [1, 1]} : vector<30x30xf32> to vector<29x29xf32>
    %464 = vector.extract_strided_slice %459 {offsets = [1, 1], sizes = [29, 29], strides = [1, 1]} : vector<30x30xf32> to vector<29x29xf32>
    %465 = arith.maximumf %463, %464 : vector<29x29xf32>
    %466 = arith.maximumf %462, %465 : vector<29x29xf32>
    %cst_275 = arith.constant dense<0.000000e+00> : vector<15x29xf32>
    %467 = tpu.matmul %11, %466, %cst_275 {dimension_numbers = #tpu.dot_dimension_numbers<[1], [0], [0], [1], [0, 0, 1, 1], [], []>} : vector<15x29xf32>, vector<29x29xf32>, vector<15x29xf32> -> vector<15x29xf32>
    %cst_276 = arith.constant dense<0.000000e+00> : vector<15x15xf32>
    %468 = tpu.matmul %467, %12, %cst_276 {dimension_numbers = #tpu.dot_dimension_numbers<[1], [0], [0], [1], [0, 0, 1, 1], [], []>} : vector<15x29xf32>, vector<29x15xf32>, vector<15x15xf32> -> vector<15x15xf32>
    %469 = vector.extract_strided_slice %468 {offsets = [0, 0], sizes = [1, 15], strides = [1, 1]} : vector<15x15xf32> to vector<1x15xf32>
    %c5_277 = arith.constant 5 : index
    %c0_278 = arith.constant 0 : index
    %470 = vector.load %arg16[%c5_277, %c0_278] : memref<6x225xf32, #tpu.memory_space<vmem>>, vector<1x15xf32>
    tpu.vector_store %arg16[%c5_277, %c0_278], %469 {strides = array<i32>} : memref<6x225xf32, #tpu.memory_space<vmem>>, vector<1x15xf32>,
    %471 = vector.extract_strided_slice %468 {offsets = [1, 0], sizes = [1, 15], strides = [1, 1]} : vector<15x15xf32> to vector<1x15xf32>
    %c5_279 = arith.constant 5 : index
    %c15_280 = arith.constant 15 : index
    %472 = vector.load %arg16[%c5_279, %c15_280] : memref<6x225xf32, #tpu.memory_space<vmem>>, vector<1x15xf32>
    tpu.vector_store %arg16[%c5_279, %c15_280], %471 {strides = array<i32>} : memref<6x225xf32, #tpu.memory_space<vmem>>, vector<1x15xf32>,
    %473 = vector.extract_strided_slice %468 {offsets = [2, 0], sizes = [1, 15], strides = [1, 1]} : vector<15x15xf32> to vector<1x15xf32>
    %c5_281 = arith.constant 5 : index
    %c30_282 = arith.constant 30 : index
    %474 = vector.load %arg16[%c5_281, %c30_282] : memref<6x225xf32, #tpu.memory_space<vmem>>, vector<1x15xf32>
    tpu.vector_store %arg16[%c5_281, %c30_282], %473 {strides = array<i32>} : memref<6x225xf32, #tpu.memory_space<vmem>>, vector<1x15xf32>,
    %475 = vector.extract_strided_slice %468 {offsets = [3, 0], sizes = [1, 15], strides = [1, 1]} : vector<15x15xf32> to vector<1x15xf32>
    %c5_283 = arith.constant 5 : index
    %c45_284 = arith.constant 45 : index
    %476 = vector.load %arg16[%c5_283, %c45_284] : memref<6x225xf32, #tpu.memory_space<vmem>>, vector<1x15xf32>
    tpu.vector_store %arg16[%c5_283, %c45_284], %475 {strides = array<i32>} : memref<6x225xf32, #tpu.memory_space<vmem>>, vector<1x15xf32>,
    %477 = vector.extract_strided_slice %468 {offsets = [4, 0], sizes = [1, 15], strides = [1, 1]} : vector<15x15xf32> to vector<1x15xf32>
    %c5_285 = arith.constant 5 : index
    %c60_286 = arith.constant 60 : index
    %478 = vector.load %arg16[%c5_285, %c60_286] : memref<6x225xf32, #tpu.memory_space<vmem>>, vector<1x15xf32>
    tpu.vector_store %arg16[%c5_285, %c60_286], %477 {strides = array<i32>} : memref<6x225xf32, #tpu.memory_space<vmem>>, vector<1x15xf32>,
    %479 = vector.extract_strided_slice %468 {offsets = [5, 0], sizes = [1, 15], strides = [1, 1]} : vector<15x15xf32> to vector<1x15xf32>
    %c5_287 = arith.constant 5 : index
    %c75_288 = arith.constant 75 : index
    %480 = vector.load %arg16[%c5_287, %c75_288] : memref<6x225xf32, #tpu.memory_space<vmem>>, vector<1x15xf32>
    tpu.vector_store %arg16[%c5_287, %c75_288], %479 {strides = array<i32>} : memref<6x225xf32, #tpu.memory_space<vmem>>, vector<1x15xf32>,
    %481 = vector.extract_strided_slice %468 {offsets = [6, 0], sizes = [1, 15], strides = [1, 1]} : vector<15x15xf32> to vector<1x15xf32>
    %c5_289 = arith.constant 5 : index
    %c90_290 = arith.constant 90 : index
    %482 = vector.load %arg16[%c5_289, %c90_290] : memref<6x225xf32, #tpu.memory_space<vmem>>, vector<1x15xf32>
    tpu.vector_store %arg16[%c5_289, %c90_290], %481 {strides = array<i32>} : memref<6x225xf32, #tpu.memory_space<vmem>>, vector<1x15xf32>,
    %483 = vector.extract_strided_slice %468 {offsets = [7, 0], sizes = [1, 15], strides = [1, 1]} : vector<15x15xf32> to vector<1x15xf32>
    %c5_291 = arith.constant 5 : index
    %c105_292 = arith.constant 105 : index
    %484 = vector.load %arg16[%c5_291, %c105_292] : memref<6x225xf32, #tpu.memory_space<vmem>>, vector<1x15xf32>
    tpu.vector_store %arg16[%c5_291, %c105_292], %483 {strides = array<i32>} : memref<6x225xf32, #tpu.memory_space<vmem>>, vector<1x15xf32>,
    %485 = vector.extract_strided_slice %468 {offsets = [8, 0], sizes = [1, 15], strides = [1, 1]} : vector<15x15xf32> to vector<1x15xf32>
    %c5_293 = arith.constant 5 : index
    %c120_294 = arith.constant 120 : index
    %486 = vector.load %arg16[%c5_293, %c120_294] : memref<6x225xf32, #tpu.memory_space<vmem>>, vector<1x15xf32>
    tpu.vector_store %arg16[%c5_293, %c120_294], %485 {strides = array<i32>} : memref<6x225xf32, #tpu.memory_space<vmem>>, vector<1x15xf32>,
    %487 = vector.extract_strided_slice %468 {offsets = [9, 0], sizes = [1, 15], strides = [1, 1]} : vector<15x15xf32> to vector<1x15xf32>
    %c5_295 = arith.constant 5 : index
    %c135_296 = arith.constant 135 : index
    %488 = vector.load %arg16[%c5_295, %c135_296] : memref<6x225xf32, #tpu.memory_space<vmem>>, vector<1x15xf32>
    tpu.vector_store %arg16[%c5_295, %c135_296], %487 {strides = array<i32>} : memref<6x225xf32, #tpu.memory_space<vmem>>, vector<1x15xf32>,
    %489 = vector.extract_strided_slice %468 {offsets = [10, 0], sizes = [1, 15], strides = [1, 1]} : vector<15x15xf32> to vector<1x15xf32>
    %c5_297 = arith.constant 5 : index
    %c150_298 = arith.constant 150 : index
    %490 = vector.load %arg16[%c5_297, %c150_298] : memref<6x225xf32, #tpu.memory_space<vmem>>, vector<1x15xf32>
    tpu.vector_store %arg16[%c5_297, %c150_298], %489 {strides = array<i32>} : memref<6x225xf32, #tpu.memory_space<vmem>>, vector<1x15xf32>,
    %491 = vector.extract_strided_slice %468 {offsets = [11, 0], sizes = [1, 15], strides = [1, 1]} : vector<15x15xf32> to vector<1x15xf32>
    %c5_299 = arith.constant 5 : index
    %c165_300 = arith.constant 165 : index
    %492 = vector.load %arg16[%c5_299, %c165_300] : memref<6x225xf32, #tpu.memory_space<vmem>>, vector<1x15xf32>
    tpu.vector_store %arg16[%c5_299, %c165_300], %491 {strides = array<i32>} : memref<6x225xf32, #tpu.memory_space<vmem>>, vector<1x15xf32>,
    %493 = vector.extract_strided_slice %468 {offsets = [12, 0], sizes = [1, 15], strides = [1, 1]} : vector<15x15xf32> to vector<1x15xf32>
    %c5_301 = arith.constant 5 : index
    %c180_302 = arith.constant 180 : index
    %494 = vector.load %arg16[%c5_301, %c180_302] : memref<6x225xf32, #tpu.memory_space<vmem>>, vector<1x15xf32>
    tpu.vector_store %arg16[%c5_301, %c180_302], %493 {strides = array<i32>} : memref<6x225xf32, #tpu.memory_space<vmem>>, vector<1x15xf32>,
    %495 = vector.extract_strided_slice %468 {offsets = [13, 0], sizes = [1, 15], strides = [1, 1]} : vector<15x15xf32> to vector<1x15xf32>
    %c5_303 = arith.constant 5 : index
    %c195_304 = arith.constant 195 : index
    %496 = vector.load %arg16[%c5_303, %c195_304] : memref<6x225xf32, #tpu.memory_space<vmem>>, vector<1x15xf32>
    tpu.vector_store %arg16[%c5_303, %c195_304], %495 {strides = array<i32>} : memref<6x225xf32, #tpu.memory_space<vmem>>, vector<1x15xf32>,
    %497 = vector.extract_strided_slice %468 {offsets = [14, 0], sizes = [1, 15], strides = [1, 1]} : vector<15x15xf32> to vector<1x15xf32>
    %c5_305 = arith.constant 5 : index
    %c210_306 = arith.constant 210 : index
    %498 = vector.load %arg16[%c5_305, %c210_306] : memref<6x225xf32, #tpu.memory_space<vmem>>, vector<1x15xf32>
    tpu.vector_store %arg16[%c5_305, %c210_306], %497 {strides = array<i32>} : memref<6x225xf32, #tpu.memory_space<vmem>>, vector<1x15xf32>,
    %c0_307 = arith.constant 0 : index
    %c0_308 = arith.constant 0 : index
    %499 = vector.load %arg16[%c0_307, %c0_308] : memref<6x225xf32, #tpu.memory_space<vmem>>, vector<6x225xf32>
    %cst_309 = arith.constant 0.000000e+00 : f32
    %500 = vector.broadcast %cst_309 : f32 to vector<16x161xf32>
    %c0_310 = arith.constant 0 : index
    %c0_311 = arith.constant 0 : index
    %c0_312 = arith.constant 0 : index
    %501 = vector.load %arg6[%c0_310, %c0_311, %c0_312] : memref<25x16x6xf32, #tpu.memory_space<vmem>>, vector<1x16x6xf32>
    %502 = vector.shape_cast %501 : vector<1x16x6xf32> to vector<16x6xf32>
    %503 = vector.extract_strided_slice %499 {offsets = [0, 0], sizes = [6, 161], strides = [1, 1]} : vector<6x225xf32> to vector<6x161xf32>
    %cst_313 = arith.constant dense<0.000000e+00> : vector<16x161xf32>
    %504 = tpu.matmul %502, %503, %cst_313 {dimension_numbers = #tpu.dot_dimension_numbers<[1], [0], [0], [1], [0, 0, 1, 1], [], []>} : vector<16x6xf32>, vector<6x161xf32>, vector<16x161xf32> -> vector<16x161xf32>
    %505 = arith.addf %500, %504 : vector<16x161xf32>
    %c1_314 = arith.constant 1 : index
    %c0_315 = arith.constant 0 : index
    %c0_316 = arith.constant 0 : index
    %506 = vector.load %arg6[%c1_314, %c0_315, %c0_316] : memref<25x16x6xf32, #tpu.memory_space<vmem>>, vector<1x16x6xf32>
    %507 = vector.shape_cast %506 : vector<1x16x6xf32> to vector<16x6xf32>
    %508 = vector.extract_strided_slice %499 {offsets = [0, 1], sizes = [6, 161], strides = [1, 1]} : vector<6x225xf32> to vector<6x161xf32>
    %cst_317 = arith.constant dense<0.000000e+00> : vector<16x161xf32>
    %509 = tpu.matmul %507, %508, %cst_317 {dimension_numbers = #tpu.dot_dimension_numbers<[1], [0], [0], [1], [0, 0, 1, 1], [], []>} : vector<16x6xf32>, vector<6x161xf32>, vector<16x161xf32> -> vector<16x161xf32>
    %510 = arith.addf %505, %509 : vector<16x161xf32>
    %c2_318 = arith.constant 2 : index
    %c0_319 = arith.constant 0 : index
    %c0_320 = arith.constant 0 : index
    %511 = vector.load %arg6[%c2_318, %c0_319, %c0_320] : memref<25x16x6xf32, #tpu.memory_space<vmem>>, vector<1x16x6xf32>
    %512 = vector.shape_cast %511 : vector<1x16x6xf32> to vector<16x6xf32>
    %513 = vector.extract_strided_slice %499 {offsets = [0, 2], sizes = [6, 161], strides = [1, 1]} : vector<6x225xf32> to vector<6x161xf32>
    %cst_321 = arith.constant dense<0.000000e+00> : vector<16x161xf32>
    %514 = tpu.matmul %512, %513, %cst_321 {dimension_numbers = #tpu.dot_dimension_numbers<[1], [0], [0], [1], [0, 0, 1, 1], [], []>} : vector<16x6xf32>, vector<6x161xf32>, vector<16x161xf32> -> vector<16x161xf32>
    %515 = arith.addf %510, %514 : vector<16x161xf32>
    %c3_322 = arith.constant 3 : index
    %c0_323 = arith.constant 0 : index
    %c0_324 = arith.constant 0 : index
    %516 = vector.load %arg6[%c3_322, %c0_323, %c0_324] : memref<25x16x6xf32, #tpu.memory_space<vmem>>, vector<1x16x6xf32>
    %517 = vector.shape_cast %516 : vector<1x16x6xf32> to vector<16x6xf32>
    %518 = vector.extract_strided_slice %499 {offsets = [0, 3], sizes = [6, 161], strides = [1, 1]} : vector<6x225xf32> to vector<6x161xf32>
    %cst_325 = arith.constant dense<0.000000e+00> : vector<16x161xf32>
    %519 = tpu.matmul %517, %518, %cst_325 {dimension_numbers = #tpu.dot_dimension_numbers<[1], [0], [0], [1], [0, 0, 1, 1], [], []>} : vector<16x6xf32>, vector<6x161xf32>, vector<16x161xf32> -> vector<16x161xf32>
    %520 = arith.addf %515, %519 : vector<16x161xf32>
    %c4_326 = arith.constant 4 : index
    %c0_327 = arith.constant 0 : index
    %c0_328 = arith.constant 0 : index
    %521 = vector.load %arg6[%c4_326, %c0_327, %c0_328] : memref<25x16x6xf32, #tpu.memory_space<vmem>>, vector<1x16x6xf32>
    %522 = vector.shape_cast %521 : vector<1x16x6xf32> to vector<16x6xf32>
    %523 = vector.extract_strided_slice %499 {offsets = [0, 4], sizes = [6, 161], strides = [1, 1]} : vector<6x225xf32> to vector<6x161xf32>
    %cst_329 = arith.constant dense<0.000000e+00> : vector<16x161xf32>
    %524 = tpu.matmul %522, %523, %cst_329 {dimension_numbers = #tpu.dot_dimension_numbers<[1], [0], [0], [1], [0, 0, 1, 1], [], []>} : vector<16x6xf32>, vector<6x161xf32>, vector<16x161xf32> -> vector<16x161xf32>
    %525 = arith.addf %520, %524 : vector<16x161xf32>
    %c5_330 = arith.constant 5 : index
    %c0_331 = arith.constant 0 : index
    %c0_332 = arith.constant 0 : index
    %526 = vector.load %arg6[%c5_330, %c0_331, %c0_332] : memref<25x16x6xf32, #tpu.memory_space<vmem>>, vector<1x16x6xf32>
    %527 = vector.shape_cast %526 : vector<1x16x6xf32> to vector<16x6xf32>
    %528 = vector.extract_strided_slice %499 {offsets = [0, 15], sizes = [6, 161], strides = [1, 1]} : vector<6x225xf32> to vector<6x161xf32>
    %cst_333 = arith.constant dense<0.000000e+00> : vector<16x161xf32>
    %529 = tpu.matmul %527, %528, %cst_333 {dimension_numbers = #tpu.dot_dimension_numbers<[1], [0], [0], [1], [0, 0, 1, 1], [], []>} : vector<16x6xf32>, vector<6x161xf32>, vector<16x161xf32> -> vector<16x161xf32>
    %530 = arith.addf %525, %529 : vector<16x161xf32>
    %c6_334 = arith.constant 6 : index
    %c0_335 = arith.constant 0 : index
    %c0_336 = arith.constant 0 : index
    %531 = vector.load %arg6[%c6_334, %c0_335, %c0_336] : memref<25x16x6xf32, #tpu.memory_space<vmem>>, vector<1x16x6xf32>
    %532 = vector.shape_cast %531 : vector<1x16x6xf32> to vector<16x6xf32>
    %533 = vector.extract_strided_slice %499 {offsets = [0, 16], sizes = [6, 161], strides = [1, 1]} : vector<6x225xf32> to vector<6x161xf32>
    %cst_337 = arith.constant dense<0.000000e+00> : vector<16x161xf32>
    %534 = tpu.matmul %532, %533, %cst_337 {dimension_numbers = #tpu.dot_dimension_numbers<[1], [0], [0], [1], [0, 0, 1, 1], [], []>} : vector<16x6xf32>, vector<6x161xf32>, vector<16x161xf32> -> vector<16x161xf32>
    %535 = arith.addf %530, %534 : vector<16x161xf32>
    %c7_338 = arith.constant 7 : index
    %c0_339 = arith.constant 0 : index
    %c0_340 = arith.constant 0 : index
    %536 = vector.load %arg6[%c7_338, %c0_339, %c0_340] : memref<25x16x6xf32, #tpu.memory_space<vmem>>, vector<1x16x6xf32>
    %537 = vector.shape_cast %536 : vector<1x16x6xf32> to vector<16x6xf32>
    %538 = vector.extract_strided_slice %499 {offsets = [0, 17], sizes = [6, 161], strides = [1, 1]} : vector<6x225xf32> to vector<6x161xf32>
    %cst_341 = arith.constant dense<0.000000e+00> : vector<16x161xf32>
    %539 = tpu.matmul %537, %538, %cst_341 {dimension_numbers = #tpu.dot_dimension_numbers<[1], [0], [0], [1], [0, 0, 1, 1], [], []>} : vector<16x6xf32>, vector<6x161xf32>, vector<16x161xf32> -> vector<16x161xf32>
    %540 = arith.addf %535, %539 : vector<16x161xf32>
    %c8_342 = arith.constant 8 : index
    %c0_343 = arith.constant 0 : index
    %c0_344 = arith.constant 0 : index
    %541 = vector.load %arg6[%c8_342, %c0_343, %c0_344] : memref<25x16x6xf32, #tpu.memory_space<vmem>>, vector<1x16x6xf32>
    %542 = vector.shape_cast %541 : vector<1x16x6xf32> to vector<16x6xf32>
    %543 = vector.extract_strided_slice %499 {offsets = [0, 18], sizes = [6, 161], strides = [1, 1]} : vector<6x225xf32> to vector<6x161xf32>
    %cst_345 = arith.constant dense<0.000000e+00> : vector<16x161xf32>
    %544 = tpu.matmul %542, %543, %cst_345 {dimension_numbers = #tpu.dot_dimension_numbers<[1], [0], [0], [1], [0, 0, 1, 1], [], []>} : vector<16x6xf32>, vector<6x161xf32>, vector<16x161xf32> -> vector<16x161xf32>
    %545 = arith.addf %540, %544 : vector<16x161xf32>
    %c9 = arith.constant 9 : index
    %c0_346 = arith.constant 0 : index
    %c0_347 = arith.constant 0 : index
    %546 = vector.load %arg6[%c9, %c0_346, %c0_347] : memref<25x16x6xf32, #tpu.memory_space<vmem>>, vector<1x16x6xf32>
    %547 = vector.shape_cast %546 : vector<1x16x6xf32> to vector<16x6xf32>
    %548 = vector.extract_strided_slice %499 {offsets = [0, 19], sizes = [6, 161], strides = [1, 1]} : vector<6x225xf32> to vector<6x161xf32>
    %cst_348 = arith.constant dense<0.000000e+00> : vector<16x161xf32>
    %549 = tpu.matmul %547, %548, %cst_348 {dimension_numbers = #tpu.dot_dimension_numbers<[1], [0], [0], [1], [0, 0, 1, 1], [], []>} : vector<16x6xf32>, vector<6x161xf32>, vector<16x161xf32> -> vector<16x161xf32>
    %550 = arith.addf %545, %549 : vector<16x161xf32>
    %c10 = arith.constant 10 : index
    %c0_349 = arith.constant 0 : index
    %c0_350 = arith.constant 0 : index
    %551 = vector.load %arg6[%c10, %c0_349, %c0_350] : memref<25x16x6xf32, #tpu.memory_space<vmem>>, vector<1x16x6xf32>
    %552 = vector.shape_cast %551 : vector<1x16x6xf32> to vector<16x6xf32>
    %553 = vector.extract_strided_slice %499 {offsets = [0, 30], sizes = [6, 161], strides = [1, 1]} : vector<6x225xf32> to vector<6x161xf32>
    %cst_351 = arith.constant dense<0.000000e+00> : vector<16x161xf32>
    %554 = tpu.matmul %552, %553, %cst_351 {dimension_numbers = #tpu.dot_dimension_numbers<[1], [0], [0], [1], [0, 0, 1, 1], [], []>} : vector<16x6xf32>, vector<6x161xf32>, vector<16x161xf32> -> vector<16x161xf32>
    %555 = arith.addf %550, %554 : vector<16x161xf32>
    %c11 = arith.constant 11 : index
    %c0_352 = arith.constant 0 : index
    %c0_353 = arith.constant 0 : index
    %556 = vector.load %arg6[%c11, %c0_352, %c0_353] : memref<25x16x6xf32, #tpu.memory_space<vmem>>, vector<1x16x6xf32>
    %557 = vector.shape_cast %556 : vector<1x16x6xf32> to vector<16x6xf32>
    %558 = vector.extract_strided_slice %499 {offsets = [0, 31], sizes = [6, 161], strides = [1, 1]} : vector<6x225xf32> to vector<6x161xf32>
    %cst_354 = arith.constant dense<0.000000e+00> : vector<16x161xf32>
    %559 = tpu.matmul %557, %558, %cst_354 {dimension_numbers = #tpu.dot_dimension_numbers<[1], [0], [0], [1], [0, 0, 1, 1], [], []>} : vector<16x6xf32>, vector<6x161xf32>, vector<16x161xf32> -> vector<16x161xf32>
    %560 = arith.addf %555, %559 : vector<16x161xf32>
    %c12 = arith.constant 12 : index
    %c0_355 = arith.constant 0 : index
    %c0_356 = arith.constant 0 : index
    %561 = vector.load %arg6[%c12, %c0_355, %c0_356] : memref<25x16x6xf32, #tpu.memory_space<vmem>>, vector<1x16x6xf32>
    %562 = vector.shape_cast %561 : vector<1x16x6xf32> to vector<16x6xf32>
    %563 = vector.extract_strided_slice %499 {offsets = [0, 32], sizes = [6, 161], strides = [1, 1]} : vector<6x225xf32> to vector<6x161xf32>
    %cst_357 = arith.constant dense<0.000000e+00> : vector<16x161xf32>
    %564 = tpu.matmul %562, %563, %cst_357 {dimension_numbers = #tpu.dot_dimension_numbers<[1], [0], [0], [1], [0, 0, 1, 1], [], []>} : vector<16x6xf32>, vector<6x161xf32>, vector<16x161xf32> -> vector<16x161xf32>
    %565 = arith.addf %560, %564 : vector<16x161xf32>
    %c13 = arith.constant 13 : index
    %c0_358 = arith.constant 0 : index
    %c0_359 = arith.constant 0 : index
    %566 = vector.load %arg6[%c13, %c0_358, %c0_359] : memref<25x16x6xf32, #tpu.memory_space<vmem>>, vector<1x16x6xf32>
    %567 = vector.shape_cast %566 : vector<1x16x6xf32> to vector<16x6xf32>
    %568 = vector.extract_strided_slice %499 {offsets = [0, 33], sizes = [6, 161], strides = [1, 1]} : vector<6x225xf32> to vector<6x161xf32>
    %cst_360 = arith.constant dense<0.000000e+00> : vector<16x161xf32>
    %569 = tpu.matmul %567, %568, %cst_360 {dimension_numbers = #tpu.dot_dimension_numbers<[1], [0], [0], [1], [0, 0, 1, 1], [], []>} : vector<16x6xf32>, vector<6x161xf32>, vector<16x161xf32> -> vector<16x161xf32>
    %570 = arith.addf %565, %569 : vector<16x161xf32>
    %c14 = arith.constant 14 : index
    %c0_361 = arith.constant 0 : index
    %c0_362 = arith.constant 0 : index
    %571 = vector.load %arg6[%c14, %c0_361, %c0_362] : memref<25x16x6xf32, #tpu.memory_space<vmem>>, vector<1x16x6xf32>
    %572 = vector.shape_cast %571 : vector<1x16x6xf32> to vector<16x6xf32>
    %573 = vector.extract_strided_slice %499 {offsets = [0, 34], sizes = [6, 161], strides = [1, 1]} : vector<6x225xf32> to vector<6x161xf32>
    %cst_363 = arith.constant dense<0.000000e+00> : vector<16x161xf32>
    %574 = tpu.matmul %572, %573, %cst_363 {dimension_numbers = #tpu.dot_dimension_numbers<[1], [0], [0], [1], [0, 0, 1, 1], [], []>} : vector<16x6xf32>, vector<6x161xf32>, vector<16x161xf32> -> vector<16x161xf32>
    %575 = arith.addf %570, %574 : vector<16x161xf32>
    %c15_364 = arith.constant 15 : index
    %c0_365 = arith.constant 0 : index
    %c0_366 = arith.constant 0 : index
    %576 = vector.load %arg6[%c15_364, %c0_365, %c0_366] : memref<25x16x6xf32, #tpu.memory_space<vmem>>, vector<1x16x6xf32>
    %577 = vector.shape_cast %576 : vector<1x16x6xf32> to vector<16x6xf32>
    %578 = vector.extract_strided_slice %499 {offsets = [0, 45], sizes = [6, 161], strides = [1, 1]} : vector<6x225xf32> to vector<6x161xf32>
    %cst_367 = arith.constant dense<0.000000e+00> : vector<16x161xf32>
    %579 = tpu.matmul %577, %578, %cst_367 {dimension_numbers = #tpu.dot_dimension_numbers<[1], [0], [0], [1], [0, 0, 1, 1], [], []>} : vector<16x6xf32>, vector<6x161xf32>, vector<16x161xf32> -> vector<16x161xf32>
    %580 = arith.addf %575, %579 : vector<16x161xf32>
    %c16 = arith.constant 16 : index
    %c0_368 = arith.constant 0 : index
    %c0_369 = arith.constant 0 : index
    %581 = vector.load %arg6[%c16, %c0_368, %c0_369] : memref<25x16x6xf32, #tpu.memory_space<vmem>>, vector<1x16x6xf32>
    %582 = vector.shape_cast %581 : vector<1x16x6xf32> to vector<16x6xf32>
    %583 = vector.extract_strided_slice %499 {offsets = [0, 46], sizes = [6, 161], strides = [1, 1]} : vector<6x225xf32> to vector<6x161xf32>
    %cst_370 = arith.constant dense<0.000000e+00> : vector<16x161xf32>
    %584 = tpu.matmul %582, %583, %cst_370 {dimension_numbers = #tpu.dot_dimension_numbers<[1], [0], [0], [1], [0, 0, 1, 1], [], []>} : vector<16x6xf32>, vector<6x161xf32>, vector<16x161xf32> -> vector<16x161xf32>
    %585 = arith.addf %580, %584 : vector<16x161xf32>
    %c17 = arith.constant 17 : index
    %c0_371 = arith.constant 0 : index
    %c0_372 = arith.constant 0 : index
    %586 = vector.load %arg6[%c17, %c0_371, %c0_372] : memref<25x16x6xf32, #tpu.memory_space<vmem>>, vector<1x16x6xf32>
    %587 = vector.shape_cast %586 : vector<1x16x6xf32> to vector<16x6xf32>
    %588 = vector.extract_strided_slice %499 {offsets = [0, 47], sizes = [6, 161], strides = [1, 1]} : vector<6x225xf32> to vector<6x161xf32>
    %cst_373 = arith.constant dense<0.000000e+00> : vector<16x161xf32>
    %589 = tpu.matmul %587, %588, %cst_373 {dimension_numbers = #tpu.dot_dimension_numbers<[1], [0], [0], [1], [0, 0, 1, 1], [], []>} : vector<16x6xf32>, vector<6x161xf32>, vector<16x161xf32> -> vector<16x161xf32>
    %590 = arith.addf %585, %589 : vector<16x161xf32>
    %c18 = arith.constant 18 : index
    %c0_374 = arith.constant 0 : index
    %c0_375 = arith.constant 0 : index
    %591 = vector.load %arg6[%c18, %c0_374, %c0_375] : memref<25x16x6xf32, #tpu.memory_space<vmem>>, vector<1x16x6xf32>
    %592 = vector.shape_cast %591 : vector<1x16x6xf32> to vector<16x6xf32>
    %593 = vector.extract_strided_slice %499 {offsets = [0, 48], sizes = [6, 161], strides = [1, 1]} : vector<6x225xf32> to vector<6x161xf32>
    %cst_376 = arith.constant dense<0.000000e+00> : vector<16x161xf32>
    %594 = tpu.matmul %592, %593, %cst_376 {dimension_numbers = #tpu.dot_dimension_numbers<[1], [0], [0], [1], [0, 0, 1, 1], [], []>} : vector<16x6xf32>, vector<6x161xf32>, vector<16x161xf32> -> vector<16x161xf32>
    %595 = arith.addf %590, %594 : vector<16x161xf32>
    %c19 = arith.constant 19 : index
    %c0_377 = arith.constant 0 : index
    %c0_378 = arith.constant 0 : index
    %596 = vector.load %arg6[%c19, %c0_377, %c0_378] : memref<25x16x6xf32, #tpu.memory_space<vmem>>, vector<1x16x6xf32>
    %597 = vector.shape_cast %596 : vector<1x16x6xf32> to vector<16x6xf32>
    %598 = vector.extract_strided_slice %499 {offsets = [0, 49], sizes = [6, 161], strides = [1, 1]} : vector<6x225xf32> to vector<6x161xf32>
    %cst_379 = arith.constant dense<0.000000e+00> : vector<16x161xf32>
    %599 = tpu.matmul %597, %598, %cst_379 {dimension_numbers = #tpu.dot_dimension_numbers<[1], [0], [0], [1], [0, 0, 1, 1], [], []>} : vector<16x6xf32>, vector<6x161xf32>, vector<16x161xf32> -> vector<16x161xf32>
    %600 = arith.addf %595, %599 : vector<16x161xf32>
    %c20 = arith.constant 20 : index
    %c0_380 = arith.constant 0 : index
    %c0_381 = arith.constant 0 : index
    %601 = vector.load %arg6[%c20, %c0_380, %c0_381] : memref<25x16x6xf32, #tpu.memory_space<vmem>>, vector<1x16x6xf32>
    %602 = vector.shape_cast %601 : vector<1x16x6xf32> to vector<16x6xf32>
    %603 = vector.extract_strided_slice %499 {offsets = [0, 60], sizes = [6, 161], strides = [1, 1]} : vector<6x225xf32> to vector<6x161xf32>
    %cst_382 = arith.constant dense<0.000000e+00> : vector<16x161xf32>
    %604 = tpu.matmul %602, %603, %cst_382 {dimension_numbers = #tpu.dot_dimension_numbers<[1], [0], [0], [1], [0, 0, 1, 1], [], []>} : vector<16x6xf32>, vector<6x161xf32>, vector<16x161xf32> -> vector<16x161xf32>
    %605 = arith.addf %600, %604 : vector<16x161xf32>
    %c21 = arith.constant 21 : index
    %c0_383 = arith.constant 0 : index
    %c0_384 = arith.constant 0 : index
    %606 = vector.load %arg6[%c21, %c0_383, %c0_384] : memref<25x16x6xf32, #tpu.memory_space<vmem>>, vector<1x16x6xf32>
    %607 = vector.shape_cast %606 : vector<1x16x6xf32> to vector<16x6xf32>
    %608 = vector.extract_strided_slice %499 {offsets = [0, 61], sizes = [6, 161], strides = [1, 1]} : vector<6x225xf32> to vector<6x161xf32>
    %cst_385 = arith.constant dense<0.000000e+00> : vector<16x161xf32>
    %609 = tpu.matmul %607, %608, %cst_385 {dimension_numbers = #tpu.dot_dimension_numbers<[1], [0], [0], [1], [0, 0, 1, 1], [], []>} : vector<16x6xf32>, vector<6x161xf32>, vector<16x161xf32> -> vector<16x161xf32>
    %610 = arith.addf %605, %609 : vector<16x161xf32>
    %c22 = arith.constant 22 : index
    %c0_386 = arith.constant 0 : index
    %c0_387 = arith.constant 0 : index
    %611 = vector.load %arg6[%c22, %c0_386, %c0_387] : memref<25x16x6xf32, #tpu.memory_space<vmem>>, vector<1x16x6xf32>
    %612 = vector.shape_cast %611 : vector<1x16x6xf32> to vector<16x6xf32>
    %613 = vector.extract_strided_slice %499 {offsets = [0, 62], sizes = [6, 161], strides = [1, 1]} : vector<6x225xf32> to vector<6x161xf32>
    %cst_388 = arith.constant dense<0.000000e+00> : vector<16x161xf32>
    %614 = tpu.matmul %612, %613, %cst_388 {dimension_numbers = #tpu.dot_dimension_numbers<[1], [0], [0], [1], [0, 0, 1, 1], [], []>} : vector<16x6xf32>, vector<6x161xf32>, vector<16x161xf32> -> vector<16x161xf32>
    %615 = arith.addf %610, %614 : vector<16x161xf32>
    %c23 = arith.constant 23 : index
    %c0_389 = arith.constant 0 : index
    %c0_390 = arith.constant 0 : index
    %616 = vector.load %arg6[%c23, %c0_389, %c0_390] : memref<25x16x6xf32, #tpu.memory_space<vmem>>, vector<1x16x6xf32>
    %617 = vector.shape_cast %616 : vector<1x16x6xf32> to vector<16x6xf32>
    %618 = vector.extract_strided_slice %499 {offsets = [0, 63], sizes = [6, 161], strides = [1, 1]} : vector<6x225xf32> to vector<6x161xf32>
    %cst_391 = arith.constant dense<0.000000e+00> : vector<16x161xf32>
    %619 = tpu.matmul %617, %618, %cst_391 {dimension_numbers = #tpu.dot_dimension_numbers<[1], [0], [0], [1], [0, 0, 1, 1], [], []>} : vector<16x6xf32>, vector<6x161xf32>, vector<16x161xf32> -> vector<16x161xf32>
    %620 = arith.addf %615, %619 : vector<16x161xf32>
    %c24 = arith.constant 24 : index
    %c0_392 = arith.constant 0 : index
    %c0_393 = arith.constant 0 : index
    %621 = vector.load %arg6[%c24, %c0_392, %c0_393] : memref<25x16x6xf32, #tpu.memory_space<vmem>>, vector<1x16x6xf32>
    %622 = vector.shape_cast %621 : vector<1x16x6xf32> to vector<16x6xf32>
    %623 = vector.extract_strided_slice %499 {offsets = [0, 64], sizes = [6, 161], strides = [1, 1]} : vector<6x225xf32> to vector<6x161xf32>
    %cst_394 = arith.constant dense<0.000000e+00> : vector<16x161xf32>
    %624 = tpu.matmul %622, %623, %cst_394 {dimension_numbers = #tpu.dot_dimension_numbers<[1], [0], [0], [1], [0, 0, 1, 1], [], []>} : vector<16x6xf32>, vector<6x161xf32>, vector<16x161xf32> -> vector<16x161xf32>
    %625 = arith.addf %620, %624 : vector<16x161xf32>
    %c0_395 = arith.constant 0 : index
    %c0_396 = arith.constant 0 : index
    %626 = vector.load %arg7[%c0_395, %c0_396] : memref<16x1xf32, #tpu.memory_space<vmem>>, vector<16x1xf32>
    %627 = vector.broadcast %626 : vector<16x1xf32> to vector<16x161xf32>
    %628 = arith.addf %625, %627 : vector<16x161xf32>
    %cst_397 = arith.constant 0.000000e+00 : f32
    %629 = vector.broadcast %cst_397 : f32 to vector<16x161xf32>
    %630 = arith.maximumf %628, %629 : vector<16x161xf32>
    %631 = vector.extract_strided_slice %630 {offsets = [0, 0], sizes = [16, 129], strides = [1, 1]} : vector<16x161xf32> to vector<16x129xf32>
    %632 = vector.extract_strided_slice %630 {offsets = [0, 1], sizes = [16, 129], strides = [1, 1]} : vector<16x161xf32> to vector<16x129xf32>
    %633 = arith.maximumf %631, %632 : vector<16x129xf32>
    %634 = vector.extract_strided_slice %630 {offsets = [0, 15], sizes = [16, 129], strides = [1, 1]} : vector<16x161xf32> to vector<16x129xf32>
    %635 = vector.extract_strided_slice %630 {offsets = [0, 16], sizes = [16, 129], strides = [1, 1]} : vector<16x161xf32> to vector<16x129xf32>
    %636 = arith.maximumf %634, %635 : vector<16x129xf32>
    %637 = arith.maximumf %633, %636 : vector<16x129xf32>
    %c0_398 = arith.constant 0 : index
    %c0_399 = arith.constant 0 : index
    %638 = vector.load %arg8[%c0_398, %c0_399] : memref<129x25xf32, #tpu.memory_space<vmem>>, vector<129x25xf32>
    %cst_400 = arith.constant dense<0.000000e+00> : vector<16x25xf32>
    %639 = tpu.matmul %637, %638, %cst_400 {dimension_numbers = #tpu.dot_dimension_numbers<[1], [0], [0], [1], [0, 0, 1, 1], [], []>} : vector<16x129xf32>, vector<129x25xf32>, vector<16x25xf32> -> vector<16x25xf32>
    %640 = vector.extract_strided_slice %639 {offsets = [0, 0], sizes = [1, 25], strides = [1, 1]} : vector<16x25xf32> to vector<1x25xf32>
    %c0_401 = arith.constant 0 : index
    %c0_402 = arith.constant 0 : index
    %641 = vector.load %arg17[%c0_401, %c0_402] : memref<1x400xf32, #tpu.memory_space<vmem>>, vector<1x25xf32>
    tpu.vector_store %arg17[%c0_401, %c0_402], %640 {strides = array<i32>} : memref<1x400xf32, #tpu.memory_space<vmem>>, vector<1x25xf32>,
    %642 = vector.extract_strided_slice %639 {offsets = [1, 0], sizes = [1, 25], strides = [1, 1]} : vector<16x25xf32> to vector<1x25xf32>
    %c0_403 = arith.constant 0 : index
    %c25 = arith.constant 25 : index
    %643 = vector.load %arg17[%c0_403, %c25] : memref<1x400xf32, #tpu.memory_space<vmem>>, vector<1x25xf32>
    tpu.vector_store %arg17[%c0_403, %c25], %642 {strides = array<i32>} : memref<1x400xf32, #tpu.memory_space<vmem>>, vector<1x25xf32>,
    %644 = vector.extract_strided_slice %639 {offsets = [2, 0], sizes = [1, 25], strides = [1, 1]} : vector<16x25xf32> to vector<1x25xf32>
    %c0_404 = arith.constant 0 : index
    %c50 = arith.constant 50 : index
    %645 = vector.load %arg17[%c0_404, %c50] : memref<1x400xf32, #tpu.memory_space<vmem>>, vector<1x25xf32>
    tpu.vector_store %arg17[%c0_404, %c50], %644 {strides = array<i32>} : memref<1x400xf32, #tpu.memory_space<vmem>>, vector<1x25xf32>,
    %646 = vector.extract_strided_slice %639 {offsets = [3, 0], sizes = [1, 25], strides = [1, 1]} : vector<16x25xf32> to vector<1x25xf32>
    %c0_405 = arith.constant 0 : index
    %c75_406 = arith.constant 75 : index
    %647 = vector.load %arg17[%c0_405, %c75_406] : memref<1x400xf32, #tpu.memory_space<vmem>>, vector<1x25xf32>
    tpu.vector_store %arg17[%c0_405, %c75_406], %646 {strides = array<i32>} : memref<1x400xf32, #tpu.memory_space<vmem>>, vector<1x25xf32>,
    %648 = vector.extract_strided_slice %639 {offsets = [4, 0], sizes = [1, 25], strides = [1, 1]} : vector<16x25xf32> to vector<1x25xf32>
    %c0_407 = arith.constant 0 : index
    %c100 = arith.constant 100 : index
    %649 = vector.load %arg17[%c0_407, %c100] : memref<1x400xf32, #tpu.memory_space<vmem>>, vector<1x25xf32>
    tpu.vector_store %arg17[%c0_407, %c100], %648 {strides = array<i32>} : memref<1x400xf32, #tpu.memory_space<vmem>>, vector<1x25xf32>,
    %650 = vector.extract_strided_slice %639 {offsets = [5, 0], sizes = [1, 25], strides = [1, 1]} : vector<16x25xf32> to vector<1x25xf32>
    %c0_408 = arith.constant 0 : index
    %c125 = arith.constant 125 : index
    %651 = vector.load %arg17[%c0_408, %c125] : memref<1x400xf32, #tpu.memory_space<vmem>>, vector<1x25xf32>
    tpu.vector_store %arg17[%c0_408, %c125], %650 {strides = array<i32>} : memref<1x400xf32, #tpu.memory_space<vmem>>, vector<1x25xf32>,
    %652 = vector.extract_strided_slice %639 {offsets = [6, 0], sizes = [1, 25], strides = [1, 1]} : vector<16x25xf32> to vector<1x25xf32>
    %c0_409 = arith.constant 0 : index
    %c150_410 = arith.constant 150 : index
    %653 = vector.load %arg17[%c0_409, %c150_410] : memref<1x400xf32, #tpu.memory_space<vmem>>, vector<1x25xf32>
    tpu.vector_store %arg17[%c0_409, %c150_410], %652 {strides = array<i32>} : memref<1x400xf32, #tpu.memory_space<vmem>>, vector<1x25xf32>,
    %654 = vector.extract_strided_slice %639 {offsets = [7, 0], sizes = [1, 25], strides = [1, 1]} : vector<16x25xf32> to vector<1x25xf32>
    %c0_411 = arith.constant 0 : index
    %c175 = arith.constant 175 : index
    %655 = vector.load %arg17[%c0_411, %c175] : memref<1x400xf32, #tpu.memory_space<vmem>>, vector<1x25xf32>
    tpu.vector_store %arg17[%c0_411, %c175], %654 {strides = array<i32>} : memref<1x400xf32, #tpu.memory_space<vmem>>, vector<1x25xf32>,
    %656 = vector.extract_strided_slice %639 {offsets = [8, 0], sizes = [1, 25], strides = [1, 1]} : vector<16x25xf32> to vector<1x25xf32>
    %c0_412 = arith.constant 0 : index
    %c200 = arith.constant 200 : index
    %657 = vector.load %arg17[%c0_412, %c200] : memref<1x400xf32, #tpu.memory_space<vmem>>, vector<1x25xf32>
    tpu.vector_store %arg17[%c0_412, %c200], %656 {strides = array<i32>} : memref<1x400xf32, #tpu.memory_space<vmem>>, vector<1x25xf32>,
    %658 = vector.extract_strided_slice %639 {offsets = [9, 0], sizes = [1, 25], strides = [1, 1]} : vector<16x25xf32> to vector<1x25xf32>
    %c0_413 = arith.constant 0 : index
    %c225 = arith.constant 225 : index
    %659 = vector.load %arg17[%c0_413, %c225] : memref<1x400xf32, #tpu.memory_space<vmem>>, vector<1x25xf32>
    tpu.vector_store %arg17[%c0_413, %c225], %658 {strides = array<i32>} : memref<1x400xf32, #tpu.memory_space<vmem>>, vector<1x25xf32>,
    %660 = vector.extract_strided_slice %639 {offsets = [10, 0], sizes = [1, 25], strides = [1, 1]} : vector<16x25xf32> to vector<1x25xf32>
    %c0_414 = arith.constant 0 : index
    %c250 = arith.constant 250 : index
    %661 = vector.load %arg17[%c0_414, %c250] : memref<1x400xf32, #tpu.memory_space<vmem>>, vector<1x25xf32>
    tpu.vector_store %arg17[%c0_414, %c250], %660 {strides = array<i32>} : memref<1x400xf32, #tpu.memory_space<vmem>>, vector<1x25xf32>,
    %662 = vector.extract_strided_slice %639 {offsets = [11, 0], sizes = [1, 25], strides = [1, 1]} : vector<16x25xf32> to vector<1x25xf32>
    %c0_415 = arith.constant 0 : index
    %c275 = arith.constant 275 : index
    %663 = vector.load %arg17[%c0_415, %c275] : memref<1x400xf32, #tpu.memory_space<vmem>>, vector<1x25xf32>
    tpu.vector_store %arg17[%c0_415, %c275], %662 {strides = array<i32>} : memref<1x400xf32, #tpu.memory_space<vmem>>, vector<1x25xf32>,
    %664 = vector.extract_strided_slice %639 {offsets = [12, 0], sizes = [1, 25], strides = [1, 1]} : vector<16x25xf32> to vector<1x25xf32>
    %c0_416 = arith.constant 0 : index
    %c300 = arith.constant 300 : index
    %665 = vector.load %arg17[%c0_416, %c300] : memref<1x400xf32, #tpu.memory_space<vmem>>, vector<1x25xf32>
    tpu.vector_store %arg17[%c0_416, %c300], %664 {strides = array<i32>} : memref<1x400xf32, #tpu.memory_space<vmem>>, vector<1x25xf32>,
    %666 = vector.extract_strided_slice %639 {offsets = [13, 0], sizes = [1, 25], strides = [1, 1]} : vector<16x25xf32> to vector<1x25xf32>
    %c0_417 = arith.constant 0 : index
    %c325 = arith.constant 325 : index
    %667 = vector.load %arg17[%c0_417, %c325] : memref<1x400xf32, #tpu.memory_space<vmem>>, vector<1x25xf32>
    tpu.vector_store %arg17[%c0_417, %c325], %666 {strides = array<i32>} : memref<1x400xf32, #tpu.memory_space<vmem>>, vector<1x25xf32>,
    %668 = vector.extract_strided_slice %639 {offsets = [14, 0], sizes = [1, 25], strides = [1, 1]} : vector<16x25xf32> to vector<1x25xf32>
    %c0_418 = arith.constant 0 : index
    %c350 = arith.constant 350 : index
    %669 = vector.load %arg17[%c0_418, %c350] : memref<1x400xf32, #tpu.memory_space<vmem>>, vector<1x25xf32>
    tpu.vector_store %arg17[%c0_418, %c350], %668 {strides = array<i32>} : memref<1x400xf32, #tpu.memory_space<vmem>>, vector<1x25xf32>,
    %670 = vector.extract_strided_slice %639 {offsets = [15, 0], sizes = [1, 25], strides = [1, 1]} : vector<16x25xf32> to vector<1x25xf32>
    %c0_419 = arith.constant 0 : index
    %c375 = arith.constant 375 : index
    %671 = vector.load %arg17[%c0_419, %c375] : memref<1x400xf32, #tpu.memory_space<vmem>>, vector<1x25xf32>
    tpu.vector_store %arg17[%c0_419, %c375], %670 {strides = array<i32>} : memref<1x400xf32, #tpu.memory_space<vmem>>, vector<1x25xf32>,
    %c0_420 = arith.constant 0 : index
    %c0_421 = arith.constant 0 : index
    %672 = vector.load %arg17[%c0_420, %c0_421] : memref<1x400xf32, #tpu.memory_space<vmem>>, vector<1x400xf32>
    %c0_422 = arith.constant 0 : index
    %c0_423 = arith.constant 0 : index
    %673 = vector.load %arg9[%c0_422, %c0_423] : memref<400x120xf32, #tpu.memory_space<vmem>>, vector<400x120xf32>
    %cst_424 = arith.constant dense<0.000000e+00> : vector<1x120xf32>
    %674 = tpu.matmul %672, %673, %cst_424 {dimension_numbers = #tpu.dot_dimension_numbers<[1], [0], [0], [1], [0, 0, 1, 1], [], []>} : vector<1x400xf32>, vector<400x120xf32>, vector<1x120xf32> -> vector<1x120xf32>
    %c0_425 = arith.constant 0 : index
    %c0_426 = arith.constant 0 : index
    %675 = vector.load %arg10[%c0_425, %c0_426] : memref<1x120xf32, #tpu.memory_space<vmem>>, vector<1x120xf32>
    %676 = arith.addf %674, %675 : vector<1x120xf32>
    %c0_427 = arith.constant 0 : index
    %c0_428 = arith.constant 0 : index
    %677 = vector.load %arg11[%c0_427, %c0_428] : memref<120x84xf32, #tpu.memory_space<vmem>>, vector<120x84xf32>
    %cst_429 = arith.constant dense<0.000000e+00> : vector<1x84xf32>
    %678 = tpu.matmul %676, %677, %cst_429 {dimension_numbers = #tpu.dot_dimension_numbers<[1], [0], [0], [1], [0, 0, 1, 1], [], []>} : vector<1x120xf32>, vector<120x84xf32>, vector<1x84xf32> -> vector<1x84xf32>
    %c0_430 = arith.constant 0 : index
    %c0_431 = arith.constant 0 : index
    %679 = vector.load %arg12[%c0_430, %c0_431] : memref<1x84xf32, #tpu.memory_space<vmem>>, vector<1x84xf32>
    %680 = arith.addf %678, %679 : vector<1x84xf32>
    %c0_432 = arith.constant 0 : index
    %c0_433 = arith.constant 0 : index
    %681 = vector.load %arg13[%c0_432, %c0_433] : memref<84x10xf32, #tpu.memory_space<vmem>>, vector<84x10xf32>
    %cst_434 = arith.constant dense<0.000000e+00> : vector<1x10xf32>
    %682 = tpu.matmul %680, %681, %cst_434 {dimension_numbers = #tpu.dot_dimension_numbers<[1], [0], [0], [1], [0, 0, 1, 1], [], []>} : vector<1x84xf32>, vector<84x10xf32>, vector<1x10xf32> -> vector<1x10xf32>
    %c0_435 = arith.constant 0 : index
    %c0_436 = arith.constant 0 : index
    %683 = vector.load %arg14[%c0_435, %c0_436] : memref<1x10xf32, #tpu.memory_space<vmem>>, vector<1x10xf32>
    %684 = arith.addf %682, %683 : vector<1x10xf32>
    %c0_437 = arith.constant 0 : index
    %c0_438 = arith.constant 0 : index
    %c0_439 = arith.constant 0 : index
    %685 = vector.load %arg15[%c0_437, %c0_438, %c0_439] : memref<1x1x10xf32, #tpu.memory_space<vmem>>, vector<1x1x10xf32>
    %686 = vector.shape_cast %685 : vector<1x1x10xf32> to vector<1x10xf32>
    %687 = vector.shape_cast %684 : vector<1x10xf32> to vector<1x1x10xf32>
    tpu.vector_store %arg15[%c0_437, %c0_438, %c0_439], %687 {strides = array<i32>} : memref<1x1x10xf32, #tpu.memory_space<vmem>>, vector<1x1x10xf32>,
    return
  }
  func.func @transform_0(%arg0: i32) -> (i32, i32, i32) {
    %c0_i32 = arith.constant 0 : i32
    %c0_i32_0 = arith.constant 0 : i32
    %c0_i32_1 = arith.constant 0 : i32
    return %arg0, %c0_i32, %c0_i32_0 : i32, i32, i32
  }
  func.func @transform_1(%arg0: i32) -> (i32, i32) {
    %c0_i32 = arith.constant 0 : i32
    %c0_i32_0 = arith.constant 0 : i32
    %c0_i32_1 = arith.constant 0 : i32
    return %c0_i32, %c0_i32_0 : i32, i32
  }
  func.func @transform_2(%arg0: i32) -> (i32, i32) {
    %c0_i32 = arith.constant 0 : i32
    %c0_i32_0 = arith.constant 0 : i32
    %c0_i32_1 = arith.constant 0 : i32
    return %c0_i32, %c0_i32_0 : i32, i32
  }
  func.func @transform_3(%arg0: i32) -> (i32, i32) {
    %c0_i32 = arith.constant 0 : i32
    %c0_i32_0 = arith.constant 0 : i32
    %c0_i32_1 = arith.constant 0 : i32
    return %c0_i32, %c0_i32_0 : i32, i32
  }
  func.func @transform_4(%arg0: i32) -> (i32, i32) {
    %c0_i32 = arith.constant 0 : i32
    %c0_i32_0 = arith.constant 0 : i32
    %c0_i32_1 = arith.constant 0 : i32
    return %c0_i32, %c0_i32_0 : i32, i32
  }
  func.func @transform_5(%arg0: i32) -> (i32, i32, i32) {
    %c0_i32 = arith.constant 0 : i32
    %c0_i32_0 = arith.constant 0 : i32
    %c0_i32_1 = arith.constant 0 : i32
    %c0_i32_2 = arith.constant 0 : i32
    return %c0_i32, %c0_i32_0, %c0_i32_1 : i32, i32, i32
  }
  func.func @transform_6(%arg0: i32) -> (i32, i32) {
    %c0_i32 = arith.constant 0 : i32
    %c0_i32_0 = arith.constant 0 : i32
    %c0_i32_1 = arith.constant 0 : i32
    return %c0_i32, %c0_i32_0 : i32, i32
  }
  func.func @transform_7(%arg0: i32) -> (i32, i32) {
    %c0_i32 = arith.constant 0 : i32
    %c0_i32_0 = arith.constant 0 : i32
    %c0_i32_1 = arith.constant 0 : i32
    return %c0_i32, %c0_i32_0 : i32, i32
  }
  func.func @transform_8(%arg0: i32) -> (i32, i32) {
    %c0_i32 = arith.constant 0 : i32
    %c0_i32_0 = arith.constant 0 : i32
    %c0_i32_1 = arith.constant 0 : i32
    return %c0_i32, %c0_i32_0 : i32, i32
  }
  func.func @transform_9(%arg0: i32) -> (i32, i32) {
    %c0_i32 = arith.constant 0 : i32
    %c0_i32_0 = arith.constant 0 : i32
    %c0_i32_1 = arith.constant 0 : i32
    return %c0_i32, %c0_i32_0 : i32, i32
  }
  func.func @transform_10(%arg0: i32) -> (i32, i32) {
    %c0_i32 = arith.constant 0 : i32
    %c0_i32_0 = arith.constant 0 : i32
    %c0_i32_1 = arith.constant 0 : i32
    return %c0_i32, %c0_i32_0 : i32, i32
  }
  func.func @transform_11(%arg0: i32) -> (i32, i32) {
    %c0_i32 = arith.constant 0 : i32
    %c0_i32_0 = arith.constant 0 : i32
    %c0_i32_1 = arith.constant 0 : i32
    return %c0_i32, %c0_i32_0 : i32, i32
  }
  func.func @transform_12(%arg0: i32) -> (i32, i32) {
    %c0_i32 = arith.constant 0 : i32
    %c0_i32_0 = arith.constant 0 : i32
    %c0_i32_1 = arith.constant 0 : i32
    return %c0_i32, %c0_i32_0 : i32, i32
  }
  func.func @transform_13(%arg0: i32) -> (i32, i32) {
    %c0_i32 = arith.constant 0 : i32
    %c0_i32_0 = arith.constant 0 : i32
    %c0_i32_1 = arith.constant 0 : i32
    return %c0_i32, %c0_i32_0 : i32, i32
  }
  func.func @transform_14(%arg0: i32) -> (i32, i32, i32) {
    %c0_i32 = arith.constant 0 : i32
    %c0_i32_0 = arith.constant 0 : i32
    %c0_i32_1 = arith.constant 0 : i32
    return %arg0, %c0_i32, %c0_i32_0 : i32, i32, i32
  }
}

</mosaic_0001>

<llo_original>
// kernel: lenet_forward.1
$region0: #{lenet_forward.1}
  #allocation0 [shape = 'u32[]', space=smem, size = 0x4, offset = 0x4, fixed_abs, tag = 'smem constant byte address 0x4 - core index']
  #allocation1 [shape = 'u32[144,128]{1,0:T(1,128)}', space=vmem, size = 0x12000, scoped, tag = 'internal scratch']
  #allocation2 [shape = 'f32[6,225]{1,0:T(8,128)}', space=vmem, size = 0x2000, scoped, tag = 'scratch operand']
  #allocation3 [shape = 'f32[1,400]{1,0:T(1,128)}', space=vmem, size = 0x800, scoped, tag = 'scratch operand']
  %s0 = inlined_call_operand.vmem [shape: f32[2,32,32], index: 0, kind: input, shape index: {}]
  %s1 = inlined_call_operand.vmem [shape: f32[6,9], index: 1, kind: input, shape index: {}]
  %s2 = inlined_call_operand.vmem [shape: f32[6,1], index: 2, kind: input, shape index: {}]
  %s3 = inlined_call_operand.vmem [shape: f32[15,29], index: 3, kind: input, shape index: {}]
  %s4 = inlined_call_operand.vmem [shape: f32[29,15], index: 4, kind: input, shape index: {}]
  %s5 = inlined_call_operand.vmem [shape: f32[25,16,6], index: 5, kind: input, shape index: {}]
  %s6 = inlined_call_operand.vmem [shape: f32[16,1], index: 6, kind: input, shape index: {}]
  %s7 = inlined_call_operand.vmem [shape: f32[129,25], index: 7, kind: input, shape index: {}]
  %s8 = inlined_call_operand.vmem [shape: f32[400,120], index: 8, kind: input, shape index: {}]
  %s9 = inlined_call_operand.vmem [shape: f32[1,120], index: 9, kind: input, shape index: {}]
  %s10 = inlined_call_operand.vmem [shape: f32[120,84], index: 10, kind: input, shape index: {}]
  %s11 = inlined_call_operand.vmem [shape: f32[1,84], index: 11, kind: input, shape index: {}]
  %s12 = inlined_call_operand.vmem [shape: f32[84,10], index: 12, kind: input, shape index: {}]
  %s13 = inlined_call_operand.vmem [shape: f32[1,10], index: 13, kind: input, shape index: {}]
  %s14 = inlined_call_operand.hbm [shape: f32[2,1,10], index: 14, kind: output, shape index: {}]
  %s15 = sld [smem:[#allocation0]]
  $region89: #{lenet_forward.1} parent=0
    _
  %s17 = ssub.s32 1, %s15
  %s18 = scalar_select 0, %s17, %s15
  $region1: #{lenet_forward.1} parent=0
    #allocation4 [shape = 'u8[1024]{0}', space=vmem, size = 0x400, scoped, tag = 'output window, operand 0']
    #allocation5 [shape = 's32[2]{0}', space=sflag, size = 0x8, scoped, tag = 'scoped memory for lenet_forward.1']
    %19 = vsyncpa [#allocation5], 0
    %s20 = scalar_lea.sflag [#allocation5], 1
    %21 = vsyncpa %s20, 0
    loop: start=0, step=1, limit=4
    $region2: #{lenet_forward.1} parent=1 // loop_pre_header
      _
    $region3: #{lenet_forward.1} parent=1 // loop_header
      %s23 = sphi 0, %s27
      %p24 = scmp.ge.s32.totalorder %s23, 4
      %s33 = sphi 0, %s35
      %s36 = sphi 0, %s33
      %s37 = sphi 0, %s36
      %s53 = sphi 0, %s37
      %s57 = sphi 0, %s57
      %s59 = sphi 0, %s57
      %s60 = sphi 0, %s59
      %s74 = sphi 0, %s60
      %s78 = sphi 0, %s78
      %s80 = sphi 0, %s78
      %s81 = sphi 0, %s80
      %s95 = sphi 0, %s81
      %s99 = sphi 0, %s99
      %s101 = sphi 0, %s99
      %s102 = sphi 0, %s101
      %s116 = sphi 0, %s102
      %s120 = sphi 0, %s120
      %s122 = sphi 0, %s120
      %s123 = sphi 0, %s122
      %s137 = sphi 0, %s123
      %s141 = sphi 0, %s141
      %s143 = sphi 0, %s141
      %s144 = sphi 0, %s143
      %s158 = sphi 0, %s144
      %s162 = sphi 0, %s162
      %s164 = sphi 0, %s162
      %s165 = sphi 0, %s164
      %s179 = sphi 0, %s165
      %s183 = sphi 0, %s183
      %s185 = sphi 0, %s183
      %s186 = sphi 0, %s185
      %s200 = sphi 0, %s186
      %s204 = sphi 0, %s204
      %s206 = sphi 0, %s204
      %s207 = sphi 0, %s206
      %s221 = sphi 0, %s207
      %s225 = sphi 0, %s225
      %s227 = sphi 0, %s225
      %s228 = sphi 0, %s227
      %s242 = sphi 0, %s228
      %s246 = sphi 0, %s246
      %s248 = sphi 0, %s246
      %s249 = sphi 0, %s248
      %s263 = sphi 0, %s249
      %s267 = sphi 0, %s267
      %s269 = sphi 0, %s267
      %s270 = sphi 0, %s269
      %s284 = sphi 0, %s270
      %s288 = sphi 0, %s288
      %s290 = sphi 0, %s288
      %s291 = sphi 0, %s290
      %s305 = sphi 0, %s291
      %s309 = sphi 0, %s309
      %s311 = sphi 0, %s309
      %s312 = sphi 0, %s311
      %s326 = sphi 0, %s312
      %s332 = sphi 0, %s334
      %s335 = sphi 0, %s332
      %s336 = sphi 0, %s335
      %s352 = sphi 0, %s336
    $region4: #{lenet_forward.1} parent=1 // loop_header_branch
      %26 = sbr.rel (%p24) target = $region8
    $region5: #{lenet_forward.1} parent=1 // loop_body
      %s28 = ssub.s32 %s23, 1
      %s29 = ssub.s32 %s23, 2
      %s30 = sadd.s32 %s23, 1
      %s31 = ssub.s32 %s23, %s30
      %p32 = scmp.eq.s32.totalorder %s31, 0
      %s34 = sadd.s32 %s33, 1
      %s35 = scalar_select %p32, %s33, %s34
      %p38 = pneg %p32
      %p39 = scmp.eq.s32.totalorder %s23, 1
      %p40 = por %p38, %p39
      %p41 = scmp.ne.s32.totalorder %s33, %s36
      %p42 = scmp.eq.s32.totalorder %s23, 0
      %p43 = por %p41, %p42
      %p44 = scmp.ne.s32.totalorder %s33, %s36
      %p45 = scmp.eq.s32.totalorder %s28, 1
      %p46 = por %p44, %p45
      %p47 = scmp.ne.s32.totalorder %s36, %s37
      %p48 = scmp.eq.s32.totalorder %s28, 0
      %p49 = por %p47, %p48
      %p50 = scmp.ne.s32.totalorder %s36, %s37
      %p51 = scmp.eq.s32.totalorder %s29, 1
      %p52 = por %p50, %p51
      %p54 = scmp.ne.s32.totalorder %s37, %s53
      %p55 = scmp.eq.s32.totalorder %s29, 0
      %p56 = por %p54, %p55
      %s58 = sadd.s32 %s57, 1
      %p61 = scmp.eq.s32.totalorder %s23, 1
      %p62 = scmp.ne.s32.totalorder %s57, %s59
      %p63 = scmp.eq.s32.totalorder %s23, 0
      %p64 = por %p62, %p63
      %p65 = scmp.ne.s32.totalorder %s57, %s59
      %p66 = scmp.eq.s32.totalorder %s28, 1
      %p67 = por %p65, %p66
      %p68 = scmp.ne.s32.totalorder %s59, %s60
      %p69 = scmp.eq.s32.totalorder %s28, 0
      %p70 = por %p68, %p69
      %p71 = scmp.ne.s32.totalorder %s59, %s60
      %p72 = scmp.eq.s32.totalorder %s29, 1
      %p73 = por %p71, %p72
      %p75 = scmp.ne.s32.totalorder %s60, %s74
      %p76 = scmp.eq.s32.totalorder %s29, 0
      %p77 = por %p75, %p76
      %s79 = sadd.s32 %s78, 1
      %p82 = scmp.eq.s32.totalorder %s23, 1
      %p83 = scmp.ne.s32.totalorder %s78, %s80
      %p84 = scmp.eq.s32.totalorder %s23, 0
      %p85 = por %p83, %p84
      %p86 = scmp.ne.s32.totalorder %s78, %s80
      %p87 = scmp.eq.s32.totalorder %s28, 1
      %p88 = por %p86, %p87
      %p89 = scmp.ne.s32.totalorder %s80, %s81
      %p90 = scmp.eq.s32.totalorder %s28, 0
      %p91 = por %p89, %p90
      %p92 = scmp.ne.s32.totalorder %s80, %s81
      %p93 = scmp.eq.s32.totalorder %s29, 1
      %p94 = por %p92, %p93
      %p96 = scmp.ne.s32.totalorder %s81, %s95
      %p97 = scmp.eq.s32.totalorder %s29, 0
      %p98 = por %p96, %p97
      %s100 = sadd.s32 %s99, 1
      %p103 = scmp.eq.s32.totalorder %s23, 1
      %p104 = scmp.ne.s32.totalorder %s99, %s101
      %p105 = scmp.eq.s32.totalorder %s23, 0
      %p106 = por %p104, %p105
      %p107 = scmp.ne.s32.totalorder %s99, %s101
      %p108 = scmp.eq.s32.totalorder %s28, 1
      %p109 = por %p107, %p108
      %p110 = scmp.ne.s32.totalorder %s101, %s102
      %p111 = scmp.eq.s32.totalorder %s28, 0
      %p112 = por %p110, %p111
      %p113 = scmp.ne.s32.totalorder %s101, %s102
      %p114 = scmp.eq.s32.totalorder %s29, 1
      %p115 = por %p113, %p114
      %p117 = scmp.ne.s32.totalorder %s102, %s116
      %p118 = scmp.eq.s32.totalorder %s29, 0
      %p119 = por %p117, %p118
      %s121 = sadd.s32 %s120, 1
      %p124 = scmp.eq.s32.totalorder %s23, 1
      %p125 = scmp.ne.s32.totalorder %s120, %s122
      %p126 = scmp.eq.s32.totalorder %s23, 0
      %p127 = por %p125, %p126
      %p128 = scmp.ne.s32.totalorder %s120, %s122
      %p129 = scmp.eq.s32.totalorder %s28, 1
      %p130 = por %p128, %p129
      %p131 = scmp.ne.s32.totalorder %s122, %s123
      %p132 = scmp.eq.s32.totalorder %s28, 0
      %p133 = por %p131, %p132
      %p134 = scmp.ne.s32.totalorder %s122, %s123
      %p135 = scmp.eq.s32.totalorder %s29, 1
      %p136 = por %p134, %p135
      %p138 = scmp.ne.s32.totalorder %s123, %s137
      %p139 = scmp.eq.s32.totalorder %s29, 0
      %p140 = por %p138, %p139
      %s142 = sadd.s32 %s141, 1
      %p145 = scmp.eq.s32.totalorder %s23, 1
      %p146 = scmp.ne.s32.totalorder %s141, %s143
      %p147 = scmp.eq.s32.totalorder %s23, 0
      %p148 = por %p146, %p147
      %p149 = scmp.ne.s32.totalorder %s141, %s143
      %p150 = scmp.eq.s32.totalorder %s28, 1
      %p151 = por %p149, %p150
      %p152 = scmp.ne.s32.totalorder %s143, %s144
      %p153 = scmp.eq.s32.totalorder %s28, 0
      %p154 = por %p152, %p153
      %p155 = scmp.ne.s32.totalorder %s143, %s144
      %p156 = scmp.eq.s32.totalorder %s29, 1
      %p157 = por %p155, %p156
      %p159 = scmp.ne.s32.totalorder %s144, %s158
      %p160 = scmp.eq.s32.totalorder %s29, 0
      %p161 = por %p159, %p160
      %s163 = sadd.s32 %s162, 1
      %p166 = scmp.eq.s32.totalorder %s23, 1
      %p167 = scmp.ne.s32.totalorder %s162, %s164
      %p168 = scmp.eq.s32.totalorder %s23, 0
      %p169 = por %p167, %p168
      %p170 = scmp.ne.s32.totalorder %s162, %s164
      %p171 = scmp.eq.s32.totalorder %s28, 1
      %p172 = por %p170, %p171
      %p173 = scmp.ne.s32.totalorder %s164, %s165
      %p174 = scmp.eq.s32.totalorder %s28, 0
      %p175 = por %p173, %p174
      %p176 = scmp.ne.s32.totalorder %s164, %s165
      %p177 = scmp.eq.s32.totalorder %s29, 1
      %p178 = por %p176, %p177
      %p180 = scmp.ne.s32.totalorder %s165, %s179
      %p181 = scmp.eq.s32.totalorder %s29, 0
      %p182 = por %p180, %p181
      %s184 = sadd.s32 %s183, 1
      %p187 = scmp.eq.s32.totalorder %s23, 1
      %p188 = scmp.ne.s32.totalorder %s183, %s185
      %p189 = scmp.eq.s32.totalorder %s23, 0
      %p190 = por %p188, %p189
      %p191 = scmp.ne.s32.totalorder %s183, %s185
      %p192 = scmp.eq.s32.totalorder %s28, 1
      %p193 = por %p191, %p192
      %p194 = scmp.ne.s32.totalorder %s185, %s186
      %p195 = scmp.eq.s32.totalorder %s28, 0
      %p196 = por %p194, %p195
      %p197 = scmp.ne.s32.totalorder %s185, %s186
      %p198 = scmp.eq.s32.totalorder %s29, 1
      %p199 = por %p197, %p198
      %p201 = scmp.ne.s32.totalorder %s186, %s200
      %p202 = scmp.eq.s32.totalorder %s29, 0
      %p203 = por %p201, %p202
      %s205 = sadd.s32 %s204, 1
      %p208 = scmp.eq.s32.totalorder %s23, 1
      %p209 = scmp.ne.s32.totalorder %s204, %s206
      %p210 = scmp.eq.s32.totalorder %s23, 0
      %p211 = por %p209, %p210
      %p212 = scmp.ne.s32.totalorder %s204, %s206
      %p213 = scmp.eq.s32.totalorder %s28, 1
      %p214 = por %p212, %p213
      %p215 = scmp.ne.s32.totalorder %s206, %s207
      %p216 = scmp.eq.s32.totalorder %s28, 0
      %p217 = por %p215, %p216
      %p218 = scmp.ne.s32.totalorder %s206, %s207
      %p219 = scmp.eq.s32.totalorder %s29, 1
      %p220 = por %p218, %p219
      %p222 = scmp.ne.s32.totalorder %s207, %s221
      %p223 = scmp.eq.s32.totalorder %s29, 0
      %p224 = por %p222, %p223
      %s226 = sadd.s32 %s225, 1
      %p229 = scmp.eq.s32.totalorder %s23, 1
      %p230 = scmp.ne.s32.totalorder %s225, %s227
      %p231 = scmp.eq.s32.totalorder %s23, 0
      %p232 = por %p230, %p231
      %p233 = scmp.ne.s32.totalorder %s225, %s227
      %p234 = scmp.eq.s32.totalorder %s28, 1
      %p235 = por %p233, %p234
      %p236 = scmp.ne.s32.totalorder %s227, %s228
      %p237 = scmp.eq.s32.totalorder %s28, 0
      %p238 = por %p236, %p237
      %p239 = scmp.ne.s32.totalorder %s227, %s228
      %p240 = scmp.eq.s32.totalorder %s29, 1
      %p241 = por %p239, %p240
      %p243 = scmp.ne.s32.totalorder %s228, %s242
      %p244 = scmp.eq.s32.totalorder %s29, 0
      %p245 = por %p243, %p244
      %s247 = sadd.s32 %s246, 1
      %p250 = scmp.eq.s32.totalorder %s23, 1
      %p251 = scmp.ne.s32.totalorder %s246, %s248
      %p252 = scmp.eq.s32.totalorder %s23, 0
      %p253 = por %p251, %p252
      %p254 = scmp.ne.s32.totalorder %s246, %s248
      %p255 = scmp.eq.s32.totalorder %s28, 1
      %p256 = por %p254, %p255
      %p257 = scmp.ne.s32.totalorder %s248, %s249
      %p258 = scmp.eq.s32.totalorder %s28, 0
      %p259 = por %p257, %p258
      %p260 = scmp.ne.s32.totalorder %s248, %s249
      %p261 = scmp.eq.s32.totalorder %s29, 1
      %p262 = por %p260, %p261
      %p264 = scmp.ne.s32.totalorder %s249, %s263
      %p265 = scmp.eq.s32.totalorder %s29, 0
      %p266 = por %p264, %p265
      %s268 = sadd.s32 %s267, 1
      %p271 = scmp.eq.s32.totalorder %s23, 1
      %p272 = scmp.ne.s32.totalorder %s267, %s269
      %p273 = scmp.eq.s32.totalorder %s23, 0
      %p274 = por %p272, %p273
      %p275 = scmp.ne.s32.totalorder %s267, %s269
      %p276 = scmp.eq.s32.totalorder %s28, 1
      %p277 = por %p275, %p276
      %p278 = scmp.ne.s32.totalorder %s269, %s270
      %p279 = scmp.eq.s32.totalorder %s28, 0
      %p280 = por %p278, %p279
      %p281 = scmp.ne.s32.totalorder %s269, %s270
      %p282 = scmp.eq.s32.totalorder %s29, 1
      %p283 = por %p281, %p282
      %p285 = scmp.ne.s32.totalorder %s270, %s284
      %p286 = scmp.eq.s32.totalorder %s29, 0
      %p287 = por %p285, %p286
      %s289 = sadd.s32 %s288, 1
      %p292 = scmp.eq.s32.totalorder %s23, 1
      %p293 = scmp.ne.s32.totalorder %s288, %s290
      %p294 = scmp.eq.s32.totalorder %s23, 0
      %p295 = por %p293, %p294
      %p296 = scmp.ne.s32.totalorder %s288, %s290
      %p297 = scmp.eq.s32.totalorder %s28, 1
      %p298 = por %p296, %p297
      %p299 = scmp.ne.s32.totalorder %s290, %s291
      %p300 = scmp.eq.s32.totalorder %s28, 0
      %p301 = por %p299, %p300
      %p302 = scmp.ne.s32.totalorder %s290, %s291
      %p303 = scmp.eq.s32.totalorder %s29, 1
      %p304 = por %p302, %p303
      %p306 = scmp.ne.s32.totalorder %s291, %s305
      %p307 = scmp.eq.s32.totalorder %s29, 0
      %p308 = por %p306, %p307
      %s310 = sadd.s32 %s309, 1
      %p313 = scmp.eq.s32.totalorder %s23, 1
      %p314 = scmp.ne.s32.totalorder %s309, %s311
      %p315 = scmp.eq.s32.totalorder %s23, 0
      %p316 = por %p314, %p315
      %p317 = scmp.ne.s32.totalorder %s309, %s311
      %p318 = scmp.eq.s32.totalorder %s28, 1
      %p319 = por %p317, %p318
      %p320 = scmp.ne.s32.totalorder %s311, %s312
      %p321 = scmp.eq.s32.totalorder %s28, 0
      %p322 = por %p320, %p321
      %p323 = scmp.ne.s32.totalorder %s311, %s312
      %p324 = scmp.eq.s32.totalorder %s29, 1
      %p325 = por %p323, %p324
      %p327 = scmp.ne.s32.totalorder %s312, %s326
      %p328 = scmp.eq.s32.totalorder %s29, 0
      %p329 = por %p327, %p328
      %s330 = ssub.s32 %s23, %s30
      %p331 = scmp.eq.s32.totalorder %s330, 0
      %s333 = sadd.s32 %s332, 1
      %s334 = scalar_select %p331, %s332, %s333
      %p337 = pneg %p331
      %p338 = scmp.eq.s32.totalorder %s23, 1
      %p339 = por %p337, %p338
      %p340 = scmp.ne.s32.totalorder %s332, %s335
      %p341 = scmp.eq.s32.totalorder %s23, 0
      %p342 = por %p340, %p341
      %p343 = scmp.ne.s32.totalorder %s332, %s335
      %p344 = scmp.eq.s32.totalorder %s28, 1
      %p345 = por %p343, %p344
      %p346 = scmp.ne.s32.totalorder %s335, %s336
      %p347 = scmp.eq.s32.totalorder %s28, 0
      %p348 = por %p346, %p347
      %p349 = scmp.ne.s32.totalorder %s335, %s336
      %p350 = scmp.eq.s32.totalorder %s29, 1
      %p351 = por %p349, %p350
      %p353 = scmp.ne.s32.totalorder %s336, %s352
      %p354 = scmp.eq.s32.totalorder %s29, 0
      %p355 = por %p353, %p354
      %p356 = scmp.le.s32.totalorder 1, %s23
      %p357 = scmp.lt.s32.totalorder %s23, 3
      %p358 = pnand %p356, %p357
      %p359 = pneg %p358
      // Predicated region
      $region9: #{lenet_forward.1} parent=5 // pred_check
        _
      $region10: #{lenet_forward.1} parent=5 // pred_check_branch
        %361 = sbr.rel (%p358) target = $region12
      $region11: #{lenet_forward.1} parent=5 // pred_region
        %s362 = ssub.s32 %s23, 1
        // Predicated region
        $region13: #{lenet_forward.1} parent=11 // pred_check
          %p363 = pneg %p70
        $region14: #{lenet_forward.1} parent=11 // pred_check_branch
          %365 = sbr.rel (%p363) target = $region16
        $region15: #{lenet_forward.1} parent=11 // pred_region
          _
        $region16: #{lenet_forward.1} parent=11 // pred_fallthru
          _
        // Predicated region
        $region17: #{lenet_forward.1} parent=11 // pred_check
          %p366 = pneg %p91
        $region18: #{lenet_forward.1} parent=11 // pred_check_branch
          %368 = sbr.rel (%p366) target = $region20
        $region19: #{lenet_forward.1} parent=11 // pred_region
          _
        $region20: #{lenet_forward.1} parent=11 // pred_fallthru
          _
        // Predicated region
        $region21: #{lenet_forward.1} parent=11 // pred_check
          %p369 = pneg %p112
        $region22: #{lenet_forward.1} parent=11 // pred_check_branch
          %371 = sbr.rel (%p369) target = $region24
        $region23: #{lenet_forward.1} parent=11 // pred_region
          _
        $region24: #{lenet_forward.1} parent=11 // pred_fallthru
          _
        // Predicated region
        $region25: #{lenet_forward.1} parent=11 // pred_check
          %p372 = pneg %p133
        $region26: #{lenet_forward.1} parent=11 // pred_check_branch
          %374 = sbr.rel (%p372) target = $region28
        $region27: #{lenet_forward.1} parent=11 // pred_region
          _
        $region28: #{lenet_forward.1} parent=11 // pred_fallthru
          _
        // Predicated region
        $region29: #{lenet_forward.1} parent=11 // pred_check
          %p375 = pneg %p154
        $region30: #{lenet_forward.1} parent=11 // pred_check_branch
          %377 = sbr.rel (%p375) target = $region32
        $region31: #{lenet_forward.1} parent=11 // pred_region
          _
        $region32: #{lenet_forward.1} parent=11 // pred_fallthru
          _
        // Predicated region
        $region33: #{lenet_forward.1} parent=11 // pred_check
          %p378 = pneg %p175
        $region34: #{lenet_forward.1} parent=11 // pred_check_branch
          %380 = sbr.rel (%p378) target = $region36
        $region35: #{lenet_forward.1} parent=11 // pred_region
          _
        $region36: #{lenet_forward.1} parent=11 // pred_fallthru
          _
        // Predicated region
        $region37: #{lenet_forward.1} parent=11 // pred_check
          %p381 = pneg %p196
        $region38: #{lenet_forward.1} parent=11 // pred_check_branch
          %383 = sbr.rel (%p381) target = $region40
        $region39: #{lenet_forward.1} parent=11 // pred_region
          _
        $region40: #{lenet_forward.1} parent=11 // pred_fallthru
          _
        // Predicated region
        $region41: #{lenet_forward.1} parent=11 // pred_check
          %p384 = pneg %p217
        $region42: #{lenet_forward.1} parent=11 // pred_check_branch
          %386 = sbr.rel (%p384) target = $region44
        $region43: #{lenet_forward.1} parent=11 // pred_region
          _
        $region44: #{lenet_forward.1} parent=11 // pred_fallthru
          _
        // Predicated region
        $region45: #{lenet_forward.1} parent=11 // pred_check
          %p387 = pneg %p238
        $region46: #{lenet_forward.1} parent=11 // pred_check_branch
          %389 = sbr.rel (%p387) target = $region48
        $region47: #{lenet_forward.1} parent=11 // pred_region
          _
        $region48: #{lenet_forward.1} parent=11 // pred_fallthru
          _
        // Predicated region
        $region49: #{lenet_forward.1} parent=11 // pred_check
          %p390 = pneg %p259
        $region50: #{lenet_forward.1} parent=11 // pred_check_branch
          %392 = sbr.rel (%p390) target = $region52
        $region51: #{lenet_forward.1} parent=11 // pred_region
          _
        $region52: #{lenet_forward.1} parent=11 // pred_fallthru
          _
        // Predicated region
        $region53: #{lenet_forward.1} parent=11 // pred_check
          %p393 = pneg %p280
        $region54: #{lenet_forward.1} parent=11 // pred_check_branch
          %395 = sbr.rel (%p393) target = $region56
        $region55: #{lenet_forward.1} parent=11 // pred_region
          _
        $region56: #{lenet_forward.1} parent=11 // pred_fallthru
          _
        // Predicated region
        $region57: #{lenet_forward.1} parent=11 // pred_check
          %p396 = pneg %p301
        $region58: #{lenet_forward.1} parent=11 // pred_check_branch
          %398 = sbr.rel (%p396) target = $region60
        $region59: #{lenet_forward.1} parent=11 // pred_region
          _
        $region60: #{lenet_forward.1} parent=11 // pred_fallthru
          _
        // Predicated region
        $region61: #{lenet_forward.1} parent=11 // pred_check
          %p399 = pneg %p322
        $region62: #{lenet_forward.1} parent=11 // pred_check_branch
          %401 = sbr.rel (%p399) target = $region64
        $region63: #{lenet_forward.1} parent=11 // pred_region
          _
        $region64: #{lenet_forward.1} parent=11 // pred_fallthru
          _
      $region12: #{lenet_forward.1} parent=5 // pred_fallthru
        _
      %p402 = scmp.lt.s32.totalorder %s23, 2
      // Predicated region
      $region65: #{lenet_forward.1} parent=5 // pred_check
        %p403 = pneg %p402
      $region66: #{lenet_forward.1} parent=5 // pred_check_branch
        %405 = sbr.rel (%p403) target = $region68
      $region67: #{lenet_forward.1} parent=5 // pred_region
        // Predicated region
        $region69: #{lenet_forward.1} parent=67 // pred_check
          %p406 = pneg %p43
        $region70: #{lenet_forward.1} parent=67 // pred_check_branch
          %408 = sbr.rel (%p406) target = $region72
        $region71: #{lenet_forward.1} parent=67 // pred_region
          %p409 = scmp.lt.s32.totalorder %s23, 1
          %s410 = scalar_select %p409, %s23, 1
          %s411 = smul.addr %s410, 4
          %s412 = smul.addr %s411, 8
          %s413 = scalar_lea.vmem %s0, %s412
        $region72: #{lenet_forward.1} parent=67 // pred_fallthru
          _
      $region68: #{lenet_forward.1} parent=5 // pred_fallthru
        _
      %p414 = scmp.le.s32.totalorder 1, %s23
      %p415 = scmp.lt.s32.totalorder %s23, 3
      %p416 = pnand %p414, %p415
      %p417 = pneg %p416
      // Predicated region
      $region73: #{lenet_forward.1} parent=5 // pred_check
        _
      $region74: #{lenet_forward.1} parent=5 // pred_check_branch
        %419 = sbr.rel (%p416) target = $region76
      $region75: #{lenet_forward.1} parent=5 // pred_region
        %s420 = ssub.s32 %s23, 1
        %p421 = scmp.lt.s32.totalorder %s28, 1
        %s422 = scalar_select %p421, %s28, 1
        %s423 = smul.addr %s422, 4
        %s424 = smul.addr %s423, 8
        %s425 = scalar_lea.vmem %s0, %s424
        %p426 = pneg %p49
        %p427 = pneg %p46
        %p428 = pneg %p70
        %p429 = pneg %p67
        %p430 = pneg %p91
        %p431 = pneg %p88
        %p432 = pneg %p112
        %p433 = pneg %p109
        %p434 = pneg %p133
        %p435 = pneg %p130
        %p436 = pneg %p154
        %p437 = pneg %p151
        %p438 = pneg %p175
        %p439 = pneg %p172
        %p440 = pneg %p196
        %p441 = pneg %p193
        %p442 = pneg %p217
        %p443 = pneg %p214
        %p444 = pneg %p238
        %p445 = pneg %p235
        %p446 = pneg %p259
        %p447 = pneg %p256
        %p448 = pneg %p280
        %p449 = pneg %p277
        %p450 = pneg %p301
        %p451 = pneg %p298
        %p452 = pneg %p322
        %p453 = pneg %p319
        %p454 = pneg %p348
        %p455 = pneg %p345
        %s456 = sand.u32 %s335, 1
        %s457 = scalar_lea.sflag [#allocation5], %s456
        %s458 = sand.u32 %s335, 1
        %s459 = scalar_lea.vmem [#allocation4], %s458
        %p460 = scmp.lt.s32.totalorder %s28, 1
        %s461 = scalar_select %p460, %s28, 1
        %s462 = smul.addr %s461, 4
        %s463 = smul.addr %s462, 8
        %s464 = scalar_lea.vmem %s0, %s463
        %v465 = vld [vmem:[%s464] sm:$0xff]
        %v466 = vld [vmem:[%s464 + $0x8] sm:$0xff]
        %v467 = vld [vmem:[%s464 + $0x10] sm:$0xff]
        %v468 = vld [vmem:[%s464 + $0x18] sm:$0xff]
        %v469 = vld [vmem:[%s3] sm:$0xff]
        %v470 = vld [vmem:[%s3 + $0x8] sm:$0x7f]
        %v471 = vld [vmem:[%s4] sm:$0xff]
        %v472 = vld [vmem:[%s4 + $0x8] sm:$0xff]
        %v473 = vld [vmem:[%s4 + $0x10] sm:$0xff]
        %v474 = vld [vmem:[%s4 + $0x18] sm:$0x1f]
        %v475 = vld [vmem:[%s1] sm:$0x1]
        %s477 = vtos %v475
        %v478 = vstv %s477
        %v480 = vmul.f32 %v478, %v465
        %v481 = vmul.f32 %v478, %v466
        %v482 = vmul.f32 %v478, %v467
        %v483 = vmul.f32 %v478, %v468
        %v484 = vadd.f32 %v480, 0.0
        %v485 = vadd.f32 %v481, 0.0
        %v486 = vadd.f32 %v482, 0.0
        %v487 = vadd.f32 %v483, 0.0
        %488 = vrot.lane.b32.xlu0 %v475, 127
        %v489 = vpop.permute.xlu0 %488
        %s490 = vtos %v489
        %v491 = vstv %s490
        %v493 = vmul.f32 %v491, %v465
        %v494 = vmul.f32 %v491, %v466
        %v495 = vmul.f32 %v491, %v467
        %v496 = vmul.f32 %v491, %v468
        %501 = vrot.lane.b32.xlu0 %v493, 127
        %v502 = vpop.permute.xlu0 %501
        %503 = vrot.lane.b32.xlu0 %v494, 127
        %v504 = vpop.permute.xlu0 %503
        %505 = vrot.lane.b32.xlu0 %v495, 127
        %v506 = vpop.permute.xlu0 %505
        %507 = vrot.lane.b32.xlu0 %v496, 127
        %v508 = vpop.permute.xlu0 %507
        %v513 = vadd.f32 %v484, %v502
        %v514 = vadd.f32 %v485, %v504
        %v515 = vadd.f32 %v486, %v506
        %v516 = vadd.f32 %v487, %v508
        %517 = vrot.lane.b32.xlu0 %v475, 126
        %v518 = vpop.permute.xlu0 %517
        %s519 = vtos %v518
        %v520 = vstv %s519
        %v522 = vmul.f32 %v520, %v465
        %v523 = vmul.f32 %v520, %v466
        %v524 = vmul.f32 %v520, %v467
        %v525 = vmul.f32 %v520, %v468
        %530 = vrot.lane.b32.xlu0 %v522, 126
        %v531 = vpop.permute.xlu0 %530
        %532 = vrot.lane.b32.xlu0 %v523, 126
        %v533 = vpop.permute.xlu0 %532
        %534 = vrot.lane.b32.xlu0 %v524, 126
        %v535 = vpop.permute.xlu0 %534
        %536 = vrot.lane.b32.xlu0 %v525, 126
        %v537 = vpop.permute.xlu0 %536
        %v542 = vadd.f32 %v513, %v531
        %v543 = vadd.f32 %v514, %v533
        %v544 = vadd.f32 %v515, %v535
        %v545 = vadd.f32 %v516, %v537
        %546 = vrot.lane.b32.xlu0 %v475, 125
        %v547 = vpop.permute.xlu0 %546
        %s548 = vtos %v547
        %v549 = vstv %s548
        %v551 = vmul.f32 %v549, %v465
        %v552 = vmul.f32 %v549, %v466
        %v553 = vmul.f32 %v549, %v467
        %v554 = vmul.f32 %v549, %v468
        %vm559 = vcmask 1046528
        %v560 = vrot.slane %v551, 1
        %v561 = vrot.slane %v552, 1
        %v562 = vsel %vm559, %v560, %v561
        %v563 = vrot.slane %v553, 1
        %v564 = vsel %vm559, %v561, %v563
        %v565 = vrot.slane %v554, 1
        %v566 = vsel %vm559, %v563, %v565
        %v571 = vadd.f32 %v542, %v562
        %v572 = vadd.f32 %v543, %v564
        %v573 = vadd.f32 %v544, %v566
        %v574 = vadd.f32 %v545, %v565
        %575 = vrot.lane.b32.xlu0 %v475, 124
        %v576 = vpop.permute.xlu0 %575
        %s577 = vtos %v576
        %v578 = vstv %s577
        %v580 = vmul.f32 %v578, %v465
        %v581 = vmul.f32 %v578, %v466
        %v582 = vmul.f32 %v578, %v467
        %v583 = vmul.f32 %v578, %v468
        %v588 = vrot.slane %v580, 1
        %v589 = vrot.slane %v581, 1
        %v590 = vsel %vm559, %v588, %v589
        %v591 = vrot.slane %v582, 1
        %v592 = vsel %vm559, %v589, %v591
        %v593 = vrot.slane %v583, 1
        %v594 = vsel %vm559, %v591, %v593
        %595 = vrot.lane.b32.xlu0 %v590, 127
        %v596 = vpop.permute.xlu0 %595
        %597 = vrot.lane.b32.xlu0 %v592, 127
        %v598 = vpop.permute.xlu0 %597
        %599 = vrot.lane.b32.xlu0 %v594, 127
        %v600 = vpop.permute.xlu0 %599
        %601 = vrot.lane.b32.xlu0 %v593, 127
        %v602 = vpop.permute.xlu0 %601
        %v607 = vadd.f32 %v571, %v596
        %v608 = vadd.f32 %v572, %v598
        %v609 = vadd.f32 %v573, %v600
        %v610 = vadd.f32 %v574, %v602
        %611 = vrot.lane.b32.xlu0 %v475, 123
        %v612 = vpop.permute.xlu0 %611
        %s613 = vtos %v612
        %v614 = vstv %s613
        %v616 = vmul.f32 %v614, %v465
        %v617 = vmul.f32 %v614, %v466
        %v618 = vmul.f32 %v614, %v467
        %v619 = vmul.f32 %v614, %v468
        %v624 = vrot.slane %v616, 1
        %v625 = vrot.slane %v617, 1
        %v626 = vsel %vm559, %v624, %v625
        %v627 = vrot.slane %v618, 1
        %v628 = vsel %vm559, %v625, %v627
        %v629 = vrot.slane %v619, 1
        %v630 = vsel %vm559, %v627, %v629
        %631 = vrot.lane.b32.xlu0 %v626, 126
        %v632 = vpop.permute.xlu0 %631
        %633 = vrot.lane.b32.xlu0 %v628, 126
        %v634 = vpop.permute.xlu0 %633
        %635 = vrot.lane.b32.xlu0 %v630, 126
        %v636 = vpop.permute.xlu0 %635
        %637 = vrot.lane.b32.xlu0 %v629, 126
        %v638 = vpop.permute.xlu0 %637
        %v643 = vadd.f32 %v607, %v632
        %v644 = vadd.f32 %v608, %v634
        %v645 = vadd.f32 %v609, %v636
        %v646 = vadd.f32 %v610, %v638
        %647 = vrot.lane.b32.xlu0 %v475, 122
        %v648 = vpop.permute.xlu0 %647
        %s649 = vtos %v648
        %v650 = vstv %s649
        %v652 = vmul.f32 %v650, %v465
        %v653 = vmul.f32 %v650, %v466
        %v654 = vmul.f32 %v650, %v467
        %v655 = vmul.f32 %v650, %v468
        %vm660 = vcmask 1045504
        %v661 = vrot.slane %v652, 2
        %v662 = vrot.slane %v653, 2
        %v663 = vsel %vm660, %v661, %v662
        %v664 = vrot.slane %v654, 2
        %v665 = vsel %vm660, %v662, %v664
        %v666 = vrot.slane %v655, 2
        %v667 = vsel %vm660, %v664, %v666
        %v672 = vadd.f32 %v643, %v663
        %v673 = vadd.f32 %v644, %v665
        %v674 = vadd.f32 %v645, %v667
        %v675 = vadd.f32 %v646, %v666
        %676 = vrot.lane.b32.xlu0 %v475, 121
        %v677 = vpop.permute.xlu0 %676
        %s678 = vtos %v677
        %v679 = vstv %s678
        %v681 = vmul.f32 %v679, %v465
        %v682 = vmul.f32 %v679, %v466
        %v683 = vmul.f32 %v679, %v467
        %v684 = vmul.f32 %v679, %v468
        %v689 = vrot.slane %v681, 2
        %v690 = vrot.slane %v682, 2
        %v691 = vsel %vm660, %v689, %v690
        %v692 = vrot.slane %v683, 2
        %v693 = vsel %vm660, %v690, %v692
        %v694 = vrot.slane %v684, 2
        %v695 = vsel %vm660, %v692, %v694
        %696 = vrot.lane.b32.xlu0 %v691, 127
        %v697 = vpop.permute.xlu0 %696
        %698 = vrot.lane.b32.xlu0 %v693, 127
        %v699 = vpop.permute.xlu0 %698
        %700 = vrot.lane.b32.xlu0 %v695, 127
        %v701 = vpop.permute.xlu0 %700
        %702 = vrot.lane.b32.xlu0 %v694, 127
        %v703 = vpop.permute.xlu0 %702
        %v708 = vadd.f32 %v672, %v697
        %v709 = vadd.f32 %v673, %v699
        %v710 = vadd.f32 %v674, %v701
        %v711 = vadd.f32 %v675, %v703
        %712 = vrot.lane.b32.xlu0 %v475, 120
        %v713 = vpop.permute.xlu0 %712
        %s714 = vtos %v713
        %v715 = vstv %s714
        %v717 = vmul.f32 %v715, %v465
        %v718 = vmul.f32 %v715, %v466
        %v719 = vmul.f32 %v715, %v467
        %v720 = vmul.f32 %v715, %v468
        %v725 = vrot.slane %v717, 2
        %v726 = vrot.slane %v718, 2
        %v727 = vsel %vm660, %v725, %v726
        %v728 = vrot.slane %v719, 2
        %v729 = vsel %vm660, %v726, %v728
        %v730 = vrot.slane %v720, 2
        %v731 = vsel %vm660, %v728, %v730
        %732 = vrot.lane.b32.xlu0 %v727, 126
        %v733 = vpop.permute.xlu0 %732
        %734 = vrot.lane.b32.xlu0 %v729, 126
        %v735 = vpop.permute.xlu0 %734
        %736 = vrot.lane.b32.xlu0 %v731, 126
        %v737 = vpop.permute.xlu0 %736
        %738 = vrot.lane.b32.xlu0 %v730, 126
        %v739 = vpop.permute.xlu0 %738
        %v744 = vadd.f32 %v708, %v733
        %v745 = vadd.f32 %v709, %v735
        %v746 = vadd.f32 %v710, %v737
        %v747 = vadd.f32 %v711, %v739
        %v748 = vld [vmem:[%s2] sm:$0x1]
        %s750 = vtos %v748
        %v751 = vstv %s750
        %v753 = vadd.f32 %v744, %v751
        %v754 = vadd.f32 %v745, %v751
        %v755 = vadd.f32 %v746, %v751
        %v756 = vadd.f32 %v747, %v751
        %v757 = vmax.f32 %v753, 0.0
        %v758 = vmax.f32 %v754, 0.0
        %v759 = vmax.f32 %v755, 0.0
        %v760 = vmax.f32 %v756, 0.0
        %765 = vrot.lane.b32.xlu0 %v757, 127
        %v766 = vpop.permute.xlu0 %765
        %767 = vrot.lane.b32.xlu0 %v758, 127
        %v768 = vpop.permute.xlu0 %767
        %769 = vrot.lane.b32.xlu0 %v759, 127
        %v770 = vpop.permute.xlu0 %769
        %771 = vrot.lane.b32.xlu0 %v760, 127
        %v772 = vpop.permute.xlu0 %771
        %v777 = vmax.f32 %v757, %v766
        %v778 = vmax.f32 %v758, %v768
        %v779 = vmax.f32 %v759, %v770
        %v780 = vmax.f32 %v760, %v772
        %v785 = vrot.slane %v777, 1
        %v786 = vrot.slane %v778, 1
        %v787 = vsel %vm559, %v785, %v786
        %v788 = vrot.slane %v779, 1
        %v789 = vsel %vm559, %v786, %v788
        %v790 = vrot.slane %v780, 1
        %v791 = vsel %vm559, %v788, %v790
        %v796 = vmax.f32 %v777, %v787
        %v797 = vmax.f32 %v778, %v789
        %v798 = vmax.f32 %v779, %v791
        %v799 = vmax.f32 %v780, %v790
        %vm800 = vcmask 236544
        %v802 = vsel %vm800, %v469, 0
        %v805 = vsel %vm800, %v470, 0
        %vm807 = vcmask 1044480
        %v809 = vsel %vm807, %v799, 0
        %811 = vmatprep.subr.mxu0 0.0
        %812 = vmatpush1.msra.mxu0 %v796
        %813 = vmatprep.subr.mxu0 0.0
        %814 = vmatpush1.msra.mxu0 %v797
        %815 = vmatprep.subr.mxu0 0.0
        %816 = vmatpush1.msra.mxu0 %v798
        %817 = vmatprep.subr.mxu0 0.0
        %818 = vmatpush1.msra.mxu0 %v809
        %819 = vmatprep.subr.mxu0 0.0
        %820 = vmatpush1.msra.mxu0 0.0
        %821 = vmatprep.subr.mxu0 0.0
        %822 = vmatpush1.msra.mxu0 0.0
        %823 = vmatprep.subr.mxu0 0.0
        %824 = vmatpush1.msra.mxu0 0.0
        %825 = vmatprep.subr.mxu0 0.0
        %826 = vmatpush1.msra.mxu0 0.0
        %827 = vmatprep.subr.mxu0 0.0
        %828 = vmatpush1.msra.mxu0 0.0
        %829 = vmatprep.subr.mxu0 0.0
        %830 = vmatpush1.msra.mxu0 0.0
        %831 = vmatprep.subr.mxu0 0.0
        %832 = vmatpush1.msra.mxu0 0.0
        %833 = vmatprep.subr.mxu0 0.0
        %834 = vmatpush1.msra.mxu0 0.0
        %835 = vmatprep.subr.mxu0 0.0
        %836 = vmatpush1.msra.mxu0 0.0
        %837 = vmatprep.subr.mxu0 0.0
        %838 = vmatpush1.msra.mxu0 0.0
        %839 = vmatprep.subr.mxu0 0.0
        %840 = vmatpush1.msra.mxu0 0.0
        %841 = vmatprep.subr.mxu0 0.0
        %842 = vmatpush1.msra.mxu0 0.0
        %843 = vmatprep.subr.mxu0 0.0
        %844 = vmatpush1.msra.mxu0 0.0
        %845 = vmatprep.subr.mxu0 0.0
        %846 = vmatpush1.msra.mxu0 0.0
        %847 = vmatprep.subr.mxu0 0.0
        %848 = vmatpush1.msra.mxu0 0.0
        %849 = vmatprep.subr.mxu0 0.0
        %850 = vmatpush1.msra.mxu0 0.0
        %851 = vmatprep.subr.mxu0 0.0
        %852 = vmatpush1.msra.mxu0 0.0
        %853 = vmatprep.subr.mxu0 0.0
        %854 = vmatpush1.msra.mxu0 0.0
        %855 = vmatprep.subr.mxu0 0.0
        %856 = vmatpush1.msra.mxu0 0.0
        %857 = vmatprep.subr.mxu0 0.0
        %858 = vmatpush1.msra.mxu0 0.0
        %859 = vmatprep.subr.mxu0 0.0
        %860 = vmatpush1.msra.mxu0 0.0
        %861 = vmatprep.subr.mxu0 0.0
        %862 = vmatpush1.msra.mxu0 0.0
        %863 = vmatprep.subr.mxu0 0.0
        %864 = vmatpush1.msra.mxu0 0.0
        %865 = vmatprep.subr.mxu0 0.0
        %866 = vmatpush1.msra.mxu0 0.0
        %867 = vmatprep.subr.mxu0 0.0
        %868 = vmatpush1.msra.mxu0 0.0
        %869 = vmatprep.subr.mxu0 0.0
        %870 = vmatpush1.msra.mxu0 0.0
        %871 = vmatprep.subr.mxu0 0.0
        %872 = vmatpush1.msra.mxu0 0.0
        %873 = vmatprep.subr.mxu0 0.0
        %874 = vmatpush1.msra.mxu0 0.0
        %875 = vmatprep.mubr.f32.mxu0 0.0
        %876 = vmatmul.mubr.f32.gmra.mrb[0].mxu0 %v802
        %v877 = vpop.f32.mrb[0].mxu0
        %v878 = vadd.f32 0.0, %v877
        %v879 = vpop.f32.mrb[0].mxu0
        %880 = vmatprep.mubr.f32.mxu0 0.0
        %881 = vmatmul.mubr.f32.gmra.mrb[0].mxu0 %v805
        %v882 = vpop.f32.mrb[0].mxu0
        %v883 = vadd.f32 0.0, %v882
        %v884 = vpop.f32.mrb[0].mxu0
        %885 = vdwg.mxu0
        %v887 = vsel %vm800, %v878, 0
        %v890 = vsel %vm800, %v883, 0
        %v893 = vsel %vm807, %v474, 0
        %895 = vmatprep.subr.mxu0 0.0
        %896 = vmatpush1.msra.mxu0 %v471
        %897 = vmatprep.subr.mxu0 0.0
        %898 = vmatpush1.msra.mxu0 %v472
        %899 = vmatprep.subr.mxu0 0.0
        %900 = vmatpush1.msra.mxu0 %v473
        %901 = vmatprep.subr.mxu0 0.0
        %902 = vmatpush1.msra.mxu0 %v893
        %903 = vmatprep.subr.mxu0 0.0
        %904 = vmatpush1.msra.mxu0 0.0
        %905 = vmatprep.subr.mxu0 0.0
        %906 = vmatpush1.msra.mxu0 0.0
        %907 = vmatprep.subr.mxu0 0.0
        %908 = vmatpush1.msra.mxu0 0.0
        %909 = vmatprep.subr.mxu0 0.0
        %910 = vmatpush1.msra.mxu0 0.0
        %911 = vmatprep.subr.mxu0 0.0
        %912 = vmatpush1.msra.mxu0 0.0
        %913 = vmatprep.subr.mxu0 0.0
        %914 = vmatpush1.msra.mxu0 0.0
        %915 = vmatprep.subr.mxu0 0.0
        %916 = vmatpush1.msra.mxu0 0.0
        %917 = vmatprep.subr.mxu0 0.0
        %918 = vmatpush1.msra.mxu0 0.0
        %919 = vmatprep.subr.mxu0 0.0
        %920 = vmatpush1.msra.mxu0 0.0
        %921 = vmatprep.subr.mxu0 0.0
        %922 = vmatpush1.msra.mxu0 0.0
        %923 = vmatprep.subr.mxu0 0.0
        %924 = vmatpush1.msra.mxu0 0.0
        %925 = vmatprep.subr.mxu0 0.0
        %926 = vmatpush1.msra.mxu0 0.0
        %927 = vmatprep.subr.mxu0 0.0
        %928 = vmatpush1.msra.mxu0 0.0
        %929 = vmatprep.subr.mxu0 0.0
        %930 = vmatpush1.msra.mxu0 0.0
        %931 = vmatprep.subr.mxu0 0.0
        %932 = vmatpush1.msra.mxu0 0.0
        %933 = vmatprep.subr.mxu0 0.0
        %934 = vmatpush1.msra.mxu0 0.0
        %935 = vmatprep.subr.mxu0 0.0
        %936 = vmatpush1.msra.mxu0 0.0
        %937 = vmatprep.subr.mxu0 0.0
        %938 = vmatpush1.msra.mxu0 0.0
        %939 = vmatprep.subr.mxu0 0.0
        %940 = vmatpush1.msra.mxu0 0.0
        %941 = vmatprep.subr.mxu0 0.0
        %942 = vmatpush1.msra.mxu0 0.0
        %943 = vmatprep.subr.mxu0 0.0
        %944 = vmatpush1.msra.mxu0 0.0
        %945 = vmatprep.subr.mxu0 0.0
        %946 = vmatpush1.msra.mxu0 0.0
        %947 = vmatprep.subr.mxu0 0.0
        %948 = vmatpush1.msra.mxu0 0.0
        %949 = vmatprep.subr.mxu0 0.0
        %950 = vmatpush1.msra.mxu0 0.0
        %951 = vmatprep.subr.mxu0 0.0
        %952 = vmatpush1.msra.mxu0 0.0
        %953 = vmatprep.subr.mxu0 0.0
        %954 = vmatpush1.msra.mxu0 0.0
        %955 = vmatprep.subr.mxu0 0.0
        %956 = vmatpush1.msra.mxu0 0.0
        %957 = vmatprep.subr.mxu0 0.0
        %958 = vmatpush1.msra.mxu0 0.0
        %959 = vmatprep.mubr.f32.mxu0 0.0
        %960 = vmatmul.mubr.f32.gmra.mrb[0].mxu0 %v887
        %v961 = vpop.f32.mrb[0].mxu0
        %v962 = vadd.f32 0.0, %v961
        %v963 = vpop.f32.mrb[0].mxu0
        %964 = vmatprep.mubr.f32.mxu0 0.0
        %965 = vmatmul.mubr.f32.gmra.mrb[0].mxu0 %v890
        %v966 = vpop.f32.mrb[0].mxu0
        %v967 = vadd.f32 0.0, %v966
        %v968 = vpop.f32.mrb[0].mxu0
        %969 = vdwg.mxu0
        %vm970 = vcmask 114688
        %971 = vst.msk [vmem:[#allocation2] sm:$0x1] %vm970, %v962
        %v973 = vrot.slane %v962, 1
        %974 = vrot.lane.b32.xlu0 %v973, 15
        %v975 = vpop.permute.xlu0 %974
        %vm977 = vcmask 237688
        %978 = vst.msk [vmem:[#allocation2] sm:$0x1] %vm977, %v975
        %v979 = vrot.slane %v962, 2
        %980 = vrot.lane.b32.xlu0 %v979, 30
        %v981 = vpop.permute.xlu0 %980
        %vm983 = vcmask 360688
        %984 = vst.msk [vmem:[#allocation2] sm:$0x1] %vm983, %v981
        %v985 = vrot.slane %v962, 3
        %986 = vrot.lane.b32.xlu0 %v985, 45
        %v987 = vpop.permute.xlu0 %986
        %vm989 = vcmask 483688
        %990 = vst.msk [vmem:[#allocation2] sm:$0x1] %vm989, %v987
        %v991 = vrot.slane %v962, 4
        %992 = vrot.lane.b32.xlu0 %v991, 60
        %v993 = vpop.permute.xlu0 %992
        %vm995 = vcmask 606688
        %996 = vst.msk [vmem:[#allocation2] sm:$0x1] %vm995, %v993
        %v997 = vrot.slane %v962, 5
        %998 = vrot.lane.b32.xlu0 %v997, 75
        %v999 = vpop.permute.xlu0 %998
        %vm1001 = vcmask 729688
        %1002 = vst.msk [vmem:[#allocation2] sm:$0x1] %vm1001, %v999
        %v1003 = vrot.slane %v962, 6
        %1004 = vrot.lane.b32.xlu0 %v1003, 90
        %v1005 = vpop.permute.xlu0 %1004
        %vm1007 = vcmask 852688
        %1008 = vst.msk [vmem:[#allocation2] sm:$0x1] %vm1007, %v1005
        %v1009 = vrot.slane %v962, 7
        %1010 = vrot.lane.b32.xlu0 %v1009, 105
        %v1011 = vpop.permute.xlu0 %1010
        %vm1013 = vcmask 975688
        %1014 = vst.msk [vmem:[#allocation2] sm:$0x1] %vm1013, %v1011
        %1016 = vrot.lane.b32.xlu0 %v967, 120
        %v1017 = vpop.permute.xlu0 %1016
        %vm1019 = vcmask 1041344
        %1020 = vst.msk [vmem:[#allocation2] sm:$0x1] %vm1019, %v1017
        %vm1021 = vcmask 49152
        %1022 = vst.msk [vmem:[#allocation2 + $0x8] sm:$0x1] %vm1021, %v1017
        %v1023 = vrot.slane %v967, 1
        %1024 = vrot.lane.b32.xlu0 %v1023, 7
        %v1025 = vpop.permute.xlu0 %1024
        %vm1027 = vcmask 172088
        %1028 = vst.msk [vmem:[#allocation2 + $0x8] sm:$0x1] %vm1027, %v1025
        %v1029 = vrot.slane %v967, 2
        %1030 = vrot.lane.b32.xlu0 %v1029, 22
        %v1031 = vpop.permute.xlu0 %1030
        %vm1033 = vcmask 295088
        %1034 = vst.msk [vmem:[#allocation2 + $0x8] sm:$0x1] %vm1033, %v1031
        %v1035 = vrot.slane %v967, 3
        %1036 = vrot.lane.b32.xlu0 %v1035, 37
        %v1037 = vpop.permute.xlu0 %1036
        %vm1039 = vcmask 418088
        %1040 = vst.msk [vmem:[#allocation2 + $0x8] sm:$0x1] %vm1039, %v1037
        %v1041 = vrot.slane %v967, 4
        %1042 = vrot.lane.b32.xlu0 %v1041, 52
        %v1043 = vpop.permute.xlu0 %1042
        %vm1045 = vcmask 541088
        %1046 = vst.msk [vmem:[#allocation2 + $0x8] sm:$0x1] %vm1045, %v1043
        %v1047 = vrot.slane %v967, 5
        %1048 = vrot.lane.b32.xlu0 %v1047, 67
        %v1049 = vpop.permute.xlu0 %1048
        %vm1051 = vcmask 664088
        %1052 = vst.msk [vmem:[#allocation2 + $0x8] sm:$0x1] %vm1051, %v1049
        %v1053 = vrot.slane %v967, 6
        %1054 = vrot.lane.b32.xlu0 %v1053, 82
        %v1055 = vpop.permute.xlu0 %1054
        %vm1057 = vcmask 787088
        %1058 = vst.msk [vmem:[#allocation2 + $0x8] sm:$0x1] %vm1057, %v1055
        %v1059 = vld [vmem:[%s1 + $0x1] sm:$0x1]
        %s1061 = vtos %v1059
        %v1062 = vstv %s1061
        %v1064 = vmul.f32 %v1062, %v465
        %v1065 = vmul.f32 %v1062, %v466
        %v1066 = vmul.f32 %v1062, %v467
        %v1067 = vmul.f32 %v1062, %v468
        %v1068 = vadd.f32 %v1064, 0.0
        %v1069 = vadd.f32 %v1065, 0.0
        %v1070 = vadd.f32 %v1066, 0.0
        %v1071 = vadd.f32 %v1067, 0.0
        %1072 = vrot.lane.b32.xlu0 %v1059, 127
        %v1073 = vpop.permute.xlu0 %1072
        %s1074 = vtos %v1073
        %v1075 = vstv %s1074
        %v1077 = vmul.f32 %v1075, %v465
        %v1078 = vmul.f32 %v1075, %v466
        %v1079 = vmul.f32 %v1075, %v467
        %v1080 = vmul.f32 %v1075, %v468
        %1085 = vrot.lane.b32.xlu0 %v1077, 127
        %v1086 = vpop.permute.xlu0 %1085
        %1087 = vrot.lane.b32.xlu0 %v1078, 127
        %v1088 = vpop.permute.xlu0 %1087
        %1089 = vrot.lane.b32.xlu0 %v1079, 127
        %v1090 = vpop.permute.xlu0 %1089
        %1091 = vrot.lane.b32.xlu0 %v1080, 127
        %v1092 = vpop.permute.xlu0 %1091
        %v1097 = vadd.f32 %v1068, %v1086
        %v1098 = vadd.f32 %v1069, %v1088
        %v1099 = vadd.f32 %v1070, %v1090
        %v1100 = vadd.f32 %v1071, %v1092
        %1101 = vrot.lane.b32.xlu0 %v1059, 126
        %v1102 = vpop.permute.xlu0 %1101
        %s1103 = vtos %v1102
        %v1104 = vstv %s1103
        %v1106 = vmul.f32 %v1104, %v465
        %v1107 = vmul.f32 %v1104, %v466
        %v1108 = vmul.f32 %v1104, %v467
        %v1109 = vmul.f32 %v1104, %v468
        %1114 = vrot.lane.b32.xlu0 %v1106, 126
        %v1115 = vpop.permute.xlu0 %1114
        %1116 = vrot.lane.b32.xlu0 %v1107, 126
        %v1117 = vpop.permute.xlu0 %1116
        %1118 = vrot.lane.b32.xlu0 %v1108, 126
        %v1119 = vpop.permute.xlu0 %1118
        %1120 = vrot.lane.b32.xlu0 %v1109, 126
        %v1121 = vpop.permute.xlu0 %1120
        %v1126 = vadd.f32 %v1097, %v1115
        %v1127 = vadd.f32 %v1098, %v1117
        %v1128 = vadd.f32 %v1099, %v1119
        %v1129 = vadd.f32 %v1100, %v1121
        %1130 = vrot.lane.b32.xlu0 %v1059, 125
        %v1131 = vpop.permute.xlu0 %1130
        %s1132 = vtos %v1131
        %v1133 = vstv %s1132
        %v1135 = vmul.f32 %v1133, %v465
        %v1136 = vmul.f32 %v1133, %v466
        %v1137 = vmul.f32 %v1133, %v467
        %v1138 = vmul.f32 %v1133, %v468
        %v1143 = vrot.slane %v1135, 1
        %v1144 = vrot.slane %v1136, 1
        %v1145 = vsel %vm559, %v1143, %v1144
        %v1146 = vrot.slane %v1137, 1
        %v1147 = vsel %vm559, %v1144, %v1146
        %v1148 = vrot.slane %v1138, 1
        %v1149 = vsel %vm559, %v1146, %v1148
        %v1154 = vadd.f32 %v1126, %v1145
        %v1155 = vadd.f32 %v1127, %v1147
        %v1156 = vadd.f32 %v1128, %v1149
        %v1157 = vadd.f32 %v1129, %v1148
        %1158 = vrot.lane.b32.xlu0 %v1059, 124
        %v1159 = vpop.permute.xlu0 %1158
        %s1160 = vtos %v1159
        %v1161 = vstv %s1160
        %v1163 = vmul.f32 %v1161, %v465
        %v1164 = vmul.f32 %v1161, %v466
        %v1165 = vmul.f32 %v1161, %v467
        %v1166 = vmul.f32 %v1161, %v468
        %v1171 = vrot.slane %v1163, 1
        %v1172 = vrot.slane %v1164, 1
        %v1173 = vsel %vm559, %v1171, %v1172
        %v1174 = vrot.slane %v1165, 1
        %v1175 = vsel %vm559, %v1172, %v1174
        %v1176 = vrot.slane %v1166, 1
        %v1177 = vsel %vm559, %v1174, %v1176
        %1178 = vrot.lane.b32.xlu0 %v1173, 127
        %v1179 = vpop.permute.xlu0 %1178
        %1180 = vrot.lane.b32.xlu0 %v1175, 127
        %v1181 = vpop.permute.xlu0 %1180
        %1182 = vrot.lane.b32.xlu0 %v1177, 127
        %v1183 = vpop.permute.xlu0 %1182
        %1184 = vrot.lane.b32.xlu0 %v1176, 127
        %v1185 = vpop.permute.xlu0 %1184
        %v1190 = vadd.f32 %v1154, %v1179
        %v1191 = vadd.f32 %v1155, %v1181
        %v1192 = vadd.f32 %v1156, %v1183
        %v1193 = vadd.f32 %v1157, %v1185
        %1194 = vrot.lane.b32.xlu0 %v1059, 123
        %v1195 = vpop.permute.xlu0 %1194
        %s1196 = vtos %v1195
        %v1197 = vstv %s1196
        %v1199 = vmul.f32 %v1197, %v465
        %v1200 = vmul.f32 %v1197, %v466
        %v1201 = vmul.f32 %v1197, %v467
        %v1202 = vmul.f32 %v1197, %v468
        %v1207 = vrot.slane %v1199, 1
        %v1208 = vrot.slane %v1200, 1
        %v1209 = vsel %vm559, %v1207, %v1208
        %v1210 = vrot.slane %v1201, 1
        %v1211 = vsel %vm559, %v1208, %v1210
        %v1212 = vrot.slane %v1202, 1
        %v1213 = vsel %vm559, %v1210, %v1212
        %1214 = vrot.lane.b32.xlu0 %v1209, 126
        %v1215 = vpop.permute.xlu0 %1214
        %1216 = vrot.lane.b32.xlu0 %v1211, 126
        %v1217 = vpop.permute.xlu0 %1216
        %1218 = vrot.lane.b32.xlu0 %v1213, 126
        %v1219 = vpop.permute.xlu0 %1218
        %1220 = vrot.lane.b32.xlu0 %v1212, 126
        %v1221 = vpop.permute.xlu0 %1220
        %v1226 = vadd.f32 %v1190, %v1215
        %v1227 = vadd.f32 %v1191, %v1217
        %v1228 = vadd.f32 %v1192, %v1219
        %v1229 = vadd.f32 %v1193, %v1221
        %1230 = vrot.lane.b32.xlu0 %v1059, 122
        %v1231 = vpop.permute.xlu0 %1230
        %s1232 = vtos %v1231
        %v1233 = vstv %s1232
        %v1235 = vmul.f32 %v1233, %v465
        %v1236 = vmul.f32 %v1233, %v466
        %v1237 = vmul.f32 %v1233, %v467
        %v1238 = vmul.f32 %v1233, %v468
        %v1243 = vrot.slane %v1235, 2
        %v1244 = vrot.slane %v1236, 2
        %v1245 = vsel %vm660, %v1243, %v1244
        %v1246 = vrot.slane %v1237, 2
        %v1247 = vsel %vm660, %v1244, %v1246
        %v1248 = vrot.slane %v1238, 2
        %v1249 = vsel %vm660, %v1246, %v1248
        %v1254 = vadd.f32 %v1226, %v1245
        %v1255 = vadd.f32 %v1227, %v1247
        %v1256 = vadd.f32 %v1228, %v1249
        %v1257 = vadd.f32 %v1229, %v1248
        %1258 = vrot.lane.b32.xlu0 %v1059, 121
        %v1259 = vpop.permute.xlu0 %1258
        %s1260 = vtos %v1259
        %v1261 = vstv %s1260
        %v1263 = vmul.f32 %v1261, %v465
        %v1264 = vmul.f32 %v1261, %v466
        %v1265 = vmul.f32 %v1261, %v467
        %v1266 = vmul.f32 %v1261, %v468
        %v1271 = vrot.slane %v1263, 2
        %v1272 = vrot.slane %v1264, 2
        %v1273 = vsel %vm660, %v1271, %v1272
        %v1274 = vrot.slane %v1265, 2
        %v1275 = vsel %vm660, %v1272, %v1274
        %v1276 = vrot.slane %v1266, 2
        %v1277 = vsel %vm660, %v1274, %v1276
        %1278 = vrot.lane.b32.xlu0 %v1273, 127
        %v1279 = vpop.permute.xlu0 %1278
        %1280 = vrot.lane.b32.xlu0 %v1275, 127
        %v1281 = vpop.permute.xlu0 %1280
        %1282 = vrot.lane.b32.xlu0 %v1277, 127
        %v1283 = vpop.permute.xlu0 %1282
        %1284 = vrot.lane.b32.xlu0 %v1276, 127
        %v1285 = vpop.permute.xlu0 %1284
        %v1290 = vadd.f32 %v1254, %v1279
        %v1291 = vadd.f32 %v1255, %v1281
        %v1292 = vadd.f32 %v1256, %v1283
        %v1293 = vadd.f32 %v1257, %v1285
        %1294 = vrot.lane.b32.xlu0 %v1059, 120
        %v1295 = vpop.permute.xlu0 %1294
        %s1296 = vtos %v1295
        %v1297 = vstv %s1296
        %v1299 = vmul.f32 %v1297, %v465
        %v1300 = vmul.f32 %v1297, %v466
        %v1301 = vmul.f32 %v1297, %v467
        %v1302 = vmul.f32 %v1297, %v468
        %v1307 = vrot.slane %v1299, 2
        %v1308 = vrot.slane %v1300, 2
        %v1309 = vsel %vm660, %v1307, %v1308
        %v1310 = vrot.slane %v1301, 2
        %v1311 = vsel %vm660, %v1308, %v1310
        %v1312 = vrot.slane %v1302, 2
        %v1313 = vsel %vm660, %v1310, %v1312
        %1314 = vrot.lane.b32.xlu0 %v1309, 126
        %v1315 = vpop.permute.xlu0 %1314
        %1316 = vrot.lane.b32.xlu0 %v1311, 126
        %v1317 = vpop.permute.xlu0 %1316
        %1318 = vrot.lane.b32.xlu0 %v1313, 126
        %v1319 = vpop.permute.xlu0 %1318
        %1320 = vrot.lane.b32.xlu0 %v1312, 126
        %v1321 = vpop.permute.xlu0 %1320
        %v1326 = vadd.f32 %v1290, %v1315
        %v1327 = vadd.f32 %v1291, %v1317
        %v1328 = vadd.f32 %v1292, %v1319
        %v1329 = vadd.f32 %v1293, %v1321
        %v1330 = vld [vmem:[%s2 + $0x1] sm:$0x1]
        %s1332 = vtos %v1330
        %v1333 = vstv %s1332
        %v1335 = vadd.f32 %v1326, %v1333
        %v1336 = vadd.f32 %v1327, %v1333
        %v1337 = vadd.f32 %v1328, %v1333
        %v1338 = vadd.f32 %v1329, %v1333
        %v1339 = vmax.f32 %v1335, 0.0
        %v1340 = vmax.f32 %v1336, 0.0
        %v1341 = vmax.f32 %v1337, 0.0
        %v1342 = vmax.f32 %v1338, 0.0
        %1347 = vrot.lane.b32.xlu0 %v1339, 127
        %v1348 = vpop.permute.xlu0 %1347
        %1349 = vrot.lane.b32.xlu0 %v1340, 127
        %v1350 = vpop.permute.xlu0 %1349
        %1351 = vrot.lane.b32.xlu0 %v1341, 127
        %v1352 = vpop.permute.xlu0 %1351
        %1353 = vrot.lane.b32.xlu0 %v1342, 127
        %v1354 = vpop.permute.xlu0 %1353
        %v1359 = vmax.f32 %v1339, %v1348
        %v1360 = vmax.f32 %v1340, %v1350
        %v1361 = vmax.f32 %v1341, %v1352
        %v1362 = vmax.f32 %v1342, %v1354
        %v1367 = vrot.slane %v1359, 1
        %v1368 = vrot.slane %v1360, 1
        %v1369 = vsel %vm559, %v1367, %v1368
        %v1370 = vrot.slane %v1361, 1
        %v1371 = vsel %vm559, %v1368, %v1370
        %v1372 = vrot.slane %v1362, 1
        %v1373 = vsel %vm559, %v1370, %v1372
        %v1378 = vmax.f32 %v1359, %v1369
        %v1379 = vmax.f32 %v1360, %v1371
        %v1380 = vmax.f32 %v1361, %v1373
        %v1381 = vmax.f32 %v1362, %v1372
        %v1383 = vsel %vm807, %v1381, 0
        %1385 = vmatprep.subr.mxu0 0.0
        %1386 = vmatpush1.msra.mxu0 %v1378
        %1387 = vmatprep.subr.mxu0 0.0
        %1388 = vmatpush1.msra.mxu0 %v1379
        %1389 = vmatprep.subr.mxu0 0.0
        %1390 = vmatpush1.msra.mxu0 %v1380
        %1391 = vmatprep.subr.mxu0 0.0
        %1392 = vmatpush1.msra.mxu0 %v1383
        %1393 = vmatprep.subr.mxu0 0.0
        %1394 = vmatpush1.msra.mxu0 0.0
        %1395 = vmatprep.subr.mxu0 0.0
        %1396 = vmatpush1.msra.mxu0 0.0
        %1397 = vmatprep.subr.mxu0 0.0
        %1398 = vmatpush1.msra.mxu0 0.0
        %1399 = vmatprep.subr.mxu0 0.0
        %1400 = vmatpush1.msra.mxu0 0.0
        %1401 = vmatprep.subr.mxu0 0.0
        %1402 = vmatpush1.msra.mxu0 0.0
        %1403 = vmatprep.subr.mxu0 0.0
        %1404 = vmatpush1.msra.mxu0 0.0
        %1405 = vmatprep.subr.mxu0 0.0
        %1406 = vmatpush1.msra.mxu0 0.0
        %1407 = vmatprep.subr.mxu0 0.0
        %1408 = vmatpush1.msra.mxu0 0.0
        %1409 = vmatprep.subr.mxu0 0.0
        %1410 = vmatpush1.msra.mxu0 0.0
        %1411 = vmatprep.subr.mxu0 0.0
        %1412 = vmatpush1.msra.mxu0 0.0
        %1413 = vmatprep.subr.mxu0 0.0
        %1414 = vmatpush1.msra.mxu0 0.0
        %1415 = vmatprep.subr.mxu0 0.0
        %1416 = vmatpush1.msra.mxu0 0.0
        %1417 = vmatprep.subr.mxu0 0.0
        %1418 = vmatpush1.msra.mxu0 0.0
        %1419 = vmatprep.subr.mxu0 0.0
        %1420 = vmatpush1.msra.mxu0 0.0
        %1421 = vmatprep.subr.mxu0 0.0
        %1422 = vmatpush1.msra.mxu0 0.0
        %1423 = vmatprep.subr.mxu0 0.0
        %1424 = vmatpush1.msra.mxu0 0.0
        %1425 = vmatprep.subr.mxu0 0.0
        %1426 = vmatpush1.msra.mxu0 0.0
        %1427 = vmatprep.subr.mxu0 0.0
        %1428 = vmatpush1.msra.mxu0 0.0
        %1429 = vmatprep.subr.mxu0 0.0
        %1430 = vmatpush1.msra.mxu0 0.0
        %1431 = vmatprep.subr.mxu0 0.0
        %1432 = vmatpush1.msra.mxu0 0.0
        %1433 = vmatprep.subr.mxu0 0.0
        %1434 = vmatpush1.msra.mxu0 0.0
        %1435 = vmatprep.subr.mxu0 0.0
        %1436 = vmatpush1.msra.mxu0 0.0
        %1437 = vmatprep.subr.mxu0 0.0
        %1438 = vmatpush1.msra.mxu0 0.0
        %1439 = vmatprep.subr.mxu0 0.0
        %1440 = vmatpush1.msra.mxu0 0.0
        %1441 = vmatprep.subr.mxu0 0.0
        %1442 = vmatpush1.msra.mxu0 0.0
        %1443 = vmatprep.subr.mxu0 0.0
        %1444 = vmatpush1.msra.mxu0 0.0
        %1445 = vmatprep.subr.mxu0 0.0
        %1446 = vmatpush1.msra.mxu0 0.0
        %1447 = vmatprep.subr.mxu0 0.0
        %1448 = vmatpush1.msra.mxu0 0.0
        %1449 = vmatprep.mubr.f32.mxu0 0.0
        %1450 = vmatmul.mubr.f32.gmra.mrb[0].mxu0 %v802
        %v1451 = vpop.f32.mrb[0].mxu0
        %v1452 = vadd.f32 0.0, %v1451
        %v1453 = vpop.f32.mrb[0].mxu0
        %1454 = vmatprep.mubr.f32.mxu0 0.0
        %1455 = vmatmul.mubr.f32.gmra.mrb[0].mxu0 %v805
        %v1456 = vpop.f32.mrb[0].mxu0
        %v1457 = vadd.f32 0.0, %v1456
        %v1458 = vpop.f32.mrb[0].mxu0
        %1459 = vdwg.mxu0
        %v1461 = vsel %vm800, %v1452, 0
        %v1464 = vsel %vm800, %v1457, 0
        %1466 = vmatprep.subr.mxu0 0.0
        %1467 = vmatpush1.msra.mxu0 %v471
        %1468 = vmatprep.subr.mxu0 0.0
        %1469 = vmatpush1.msra.mxu0 %v472
        %1470 = vmatprep.subr.mxu0 0.0
        %1471 = vmatpush1.msra.mxu0 %v473
        %1472 = vmatprep.subr.mxu0 0.0
        %1473 = vmatpush1.msra.mxu0 %v893
        %1474 = vmatprep.subr.mxu0 0.0
        %1475 = vmatpush1.msra.mxu0 0.0
        %1476 = vmatprep.subr.mxu0 0.0
        %1477 = vmatpush1.msra.mxu0 0.0
        %1478 = vmatprep.subr.mxu0 0.0
        %1479 = vmatpush1.msra.mxu0 0.0
        %1480 = vmatprep.subr.mxu0 0.0
        %1481 = vmatpush1.msra.mxu0 0.0
        %1482 = vmatprep.subr.mxu0 0.0
        %1483 = vmatpush1.msra.mxu0 0.0
        %1484 = vmatprep.subr.mxu0 0.0
        %1485 = vmatpush1.msra.mxu0 0.0
        %1486 = vmatprep.subr.mxu0 0.0
        %1487 = vmatpush1.msra.mxu0 0.0
        %1488 = vmatprep.subr.mxu0 0.0
        %1489 = vmatpush1.msra.mxu0 0.0
        %1490 = vmatprep.subr.mxu0 0.0
        %1491 = vmatpush1.msra.mxu0 0.0
        %1492 = vmatprep.subr.mxu0 0.0
        %1493 = vmatpush1.msra.mxu0 0.0
        %1494 = vmatprep.subr.mxu0 0.0
        %1495 = vmatpush1.msra.mxu0 0.0
        %1496 = vmatprep.subr.mxu0 0.0
        %1497 = vmatpush1.msra.mxu0 0.0
        %1498 = vmatprep.subr.mxu0 0.0
        %1499 = vmatpush1.msra.mxu0 0.0
        %1500 = vmatprep.subr.mxu0 0.0
        %1501 = vmatpush1.msra.mxu0 0.0
        %1502 = vmatprep.subr.mxu0 0.0
        %1503 = vmatpush1.msra.mxu0 0.0
        %1504 = vmatprep.subr.mxu0 0.0
        %1505 = vmatpush1.msra.mxu0 0.0
        %1506 = vmatprep.subr.mxu0 0.0
        %1507 = vmatpush1.msra.mxu0 0.0
        %1508 = vmatprep.subr.mxu0 0.0
        %1509 = vmatpush1.msra.mxu0 0.0
        %1510 = vmatprep.subr.mxu0 0.0
        %1511 = vmatpush1.msra.mxu0 0.0
        %1512 = vmatprep.subr.mxu0 0.0
        %1513 = vmatpush1.msra.mxu0 0.0
        %1514 = vmatprep.subr.mxu0 0.0
        %1515 = vmatpush1.msra.mxu0 0.0
        %1516 = vmatprep.subr.mxu0 0.0
        %1517 = vmatpush1.msra.mxu0 0.0
        %1518 = vmatprep.subr.mxu0 0.0
        %1519 = vmatpush1.msra.mxu0 0.0
        %1520 = vmatprep.subr.mxu0 0.0
        %1521 = vmatpush1.msra.mxu0 0.0
        %1522 = vmatprep.subr.mxu0 0.0
        %1523 = vmatpush1.msra.mxu0 0.0
        %1524 = vmatprep.subr.mxu0 0.0
        %1525 = vmatpush1.msra.mxu0 0.0
        %1526 = vmatprep.subr.mxu0 0.0
        %1527 = vmatpush1.msra.mxu0 0.0
        %1528 = vmatprep.subr.mxu0 0.0
        %1529 = vmatpush1.msra.mxu0 0.0
        %1530 = vmatprep.mubr.f32.mxu0 0.0
        %1531 = vmatmul.mubr.f32.gmra.mrb[0].mxu0 %v1461
        %v1532 = vpop.f32.mrb[0].mxu0
        %v1533 = vadd.f32 0.0, %v1532
        %v1534 = vpop.f32.mrb[0].mxu0
        %1535 = vmatprep.mubr.f32.mxu0 0.0
        %1536 = vmatmul.mubr.f32.gmra.mrb[0].mxu0 %v1464
        %v1537 = vpop.f32.mrb[0].mxu0
        %v1538 = vadd.f32 0.0, %v1537
        %v1539 = vpop.f32.mrb[0].mxu0
        %1540 = vdwg.mxu0
        %1541 = vst.msk [vmem:[#allocation2 + $0x1] sm:$0x1] %vm970, %v1533
        %v1543 = vrot.slane %v1533, 1
        %1544 = vrot.lane.b32.xlu0 %v1543, 15
        %v1545 = vpop.permute.xlu0 %1544
        %1547 = vst.msk [vmem:[#allocation2 + $0x1] sm:$0x1] %vm977, %v1545
        %v1548 = vrot.slane %v1533, 2
        %1549 = vrot.lane.b32.xlu0 %v1548, 30
        %v1550 = vpop.permute.xlu0 %1549
        %1552 = vst.msk [vmem:[#allocation2 + $0x1] sm:$0x1] %vm983, %v1550
        %v1553 = vrot.slane %v1533, 3
        %1554 = vrot.lane.b32.xlu0 %v1553, 45
        %v1555 = vpop.permute.xlu0 %1554
        %1557 = vst.msk [vmem:[#allocation2 + $0x1] sm:$0x1] %vm989, %v1555
        %v1558 = vrot.slane %v1533, 4
        %1559 = vrot.lane.b32.xlu0 %v1558, 60
        %v1560 = vpop.permute.xlu0 %1559
        %1562 = vst.msk [vmem:[#allocation2 + $0x1] sm:$0x1] %vm995, %v1560
        %v1563 = vrot.slane %v1533, 5
        %1564 = vrot.lane.b32.xlu0 %v1563, 75
        %v1565 = vpop.permute.xlu0 %1564
        %1567 = vst.msk [vmem:[#allocation2 + $0x1] sm:$0x1] %vm1001, %v1565
        %v1568 = vrot.slane %v1533, 6
        %1569 = vrot.lane.b32.xlu0 %v1568, 90
        %v1570 = vpop.permute.xlu0 %1569
        %1572 = vst.msk [vmem:[#allocation2 + $0x1] sm:$0x1] %vm1007, %v1570
        %v1573 = vrot.slane %v1533, 7
        %1574 = vrot.lane.b32.xlu0 %v1573, 105
        %v1575 = vpop.permute.xlu0 %1574
        %1577 = vst.msk [vmem:[#allocation2 + $0x1] sm:$0x1] %vm1013, %v1575
        %1579 = vrot.lane.b32.xlu0 %v1538, 120
        %v1580 = vpop.permute.xlu0 %1579
        %1582 = vst.msk [vmem:[#allocation2 + $0x1] sm:$0x1] %vm1019, %v1580
        %1583 = vst.msk [vmem:[#allocation2 + $0x9] sm:$0x1] %vm1021, %v1580
        %v1584 = vrot.slane %v1538, 1
        %1585 = vrot.lane.b32.xlu0 %v1584, 7
        %v1586 = vpop.permute.xlu0 %1585
        %1588 = vst.msk [vmem:[#allocation2 + $0x9] sm:$0x1] %vm1027, %v1586
        %v1589 = vrot.slane %v1538, 2
        %1590 = vrot.lane.b32.xlu0 %v1589, 22
        %v1591 = vpop.permute.xlu0 %1590
        %1593 = vst.msk [vmem:[#allocation2 + $0x9] sm:$0x1] %vm1033, %v1591
        %v1594 = vrot.slane %v1538, 3
        %1595 = vrot.lane.b32.xlu0 %v1594, 37
        %v1596 = vpop.permute.xlu0 %1595
        %1598 = vst.msk [vmem:[#allocation2 + $0x9] sm:$0x1] %vm1039, %v1596
        %v1599 = vrot.slane %v1538, 4
        %1600 = vrot.lane.b32.xlu0 %v1599, 52
        %v1601 = vpop.permute.xlu0 %1600
        %1603 = vst.msk [vmem:[#allocation2 + $0x9] sm:$0x1] %vm1045, %v1601
        %v1604 = vrot.slane %v1538, 5
        %1605 = vrot.lane.b32.xlu0 %v1604, 67
        %v1606 = vpop.permute.xlu0 %1605
        %1608 = vst.msk [vmem:[#allocation2 + $0x9] sm:$0x1] %vm1051, %v1606
        %v1609 = vrot.slane %v1538, 6
        %1610 = vrot.lane.b32.xlu0 %v1609, 82
        %v1611 = vpop.permute.xlu0 %1610
        %1613 = vst.msk [vmem:[#allocation2 + $0x9] sm:$0x1] %vm1057, %v1611
        %v1614 = vld [vmem:[%s1 + $0x2] sm:$0x1]
        %s1616 = vtos %v1614
        %v1617 = vstv %s1616
        %v1619 = vmul.f32 %v1617, %v465
        %v1620 = vmul.f32 %v1617, %v466
        %v1621 = vmul.f32 %v1617, %v467
        %v1622 = vmul.f32 %v1617, %v468
        %v1623 = vadd.f32 %v1619, 0.0
        %v1624 = vadd.f32 %v1620, 0.0
        %v1625 = vadd.f32 %v1621, 0.0
        %v1626 = vadd.f32 %v1622, 0.0
        %1627 = vrot.lane.b32.xlu0 %v1614, 127
        %v1628 = vpop.permute.xlu0 %1627
        %s1629 = vtos %v1628
        %v1630 = vstv %s1629
        %v1632 = vmul.f32 %v1630, %v465
        %v1633 = vmul.f32 %v1630, %v466
        %v1634 = vmul.f32 %v1630, %v467
        %v1635 = vmul.f32 %v1630, %v468
        %1640 = vrot.lane.b32.xlu0 %v1632, 127
        %v1641 = vpop.permute.xlu0 %1640
        %1642 = vrot.lane.b32.xlu0 %v1633, 127
        %v1643 = vpop.permute.xlu0 %1642
        %1644 = vrot.lane.b32.xlu0 %v1634, 127
        %v1645 = vpop.permute.xlu0 %1644
        %1646 = vrot.lane.b32.xlu0 %v1635, 127
        %v1647 = vpop.permute.xlu0 %1646
        %v1652 = vadd.f32 %v1623, %v1641
        %v1653 = vadd.f32 %v1624, %v1643
        %v1654 = vadd.f32 %v1625, %v1645
        %v1655 = vadd.f32 %v1626, %v1647
        %1656 = vrot.lane.b32.xlu0 %v1614, 126
        %v1657 = vpop.permute.xlu0 %1656
        %s1658 = vtos %v1657
        %v1659 = vstv %s1658
        %v1661 = vmul.f32 %v1659, %v465
        %v1662 = vmul.f32 %v1659, %v466
        %v1663 = vmul.f32 %v1659, %v467
        %v1664 = vmul.f32 %v1659, %v468
        %1669 = vrot.lane.b32.xlu0 %v1661, 126
        %v1670 = vpop.permute.xlu0 %1669
        %1671 = vrot.lane.b32.xlu0 %v1662, 126
        %v1672 = vpop.permute.xlu0 %1671
        %1673 = vrot.lane.b32.xlu0 %v1663, 126
        %v1674 = vpop.permute.xlu0 %1673
        %1675 = vrot.lane.b32.xlu0 %v1664, 126
        %v1676 = vpop.permute.xlu0 %1675
        %v1681 = vadd.f32 %v1652, %v1670
        %v1682 = vadd.f32 %v1653, %v1672
        %v1683 = vadd.f32 %v1654, %v1674
        %v1684 = vadd.f32 %v1655, %v1676
        %1685 = vrot.lane.b32.xlu0 %v1614, 125
        %v1686 = vpop.permute.xlu0 %1685
        %s1687 = vtos %v1686
        %v1688 = vstv %s1687
        %v1690 = vmul.f32 %v1688, %v465
        %v1691 = vmul.f32 %v1688, %v466
        %v1692 = vmul.f32 %v1688, %v467
        %v1693 = vmul.f32 %v1688, %v468
        %v1698 = vrot.slane %v1690, 1
        %v1699 = vrot.slane %v1691, 1
        %v1700 = vsel %vm559, %v1698, %v1699
        %v1701 = vrot.slane %v1692, 1
        %v1702 = vsel %vm559, %v1699, %v1701
        %v1703 = vrot.slane %v1693, 1
        %v1704 = vsel %vm559, %v1701, %v1703
        %v1709 = vadd.f32 %v1681, %v1700
        %v1710 = vadd.f32 %v1682, %v1702
        %v1711 = vadd.f32 %v1683, %v1704
        %v1712 = vadd.f32 %v1684, %v1703
        %1713 = vrot.lane.b32.xlu0 %v1614, 124
        %v1714 = vpop.permute.xlu0 %1713
        %s1715 = vtos %v1714
        %v1716 = vstv %s1715
        %v1718 = vmul.f32 %v1716, %v465
        %v1719 = vmul.f32 %v1716, %v466
        %v1720 = vmul.f32 %v1716, %v467
        %v1721 = vmul.f32 %v1716, %v468
        %v1726 = vrot.slane %v1718, 1
        %v1727 = vrot.slane %v1719, 1
        %v1728 = vsel %vm559, %v1726, %v1727
        %v1729 = vrot.slane %v1720, 1
        %v1730 = vsel %vm559, %v1727, %v1729
        %v1731 = vrot.slane %v1721, 1
        %v1732 = vsel %vm559, %v1729, %v1731
        %1733 = vrot.lane.b32.xlu0 %v1728, 127
        %v1734 = vpop.permute.xlu0 %1733
        %1735 = vrot.lane.b32.xlu0 %v1730, 127
        %v1736 = vpop.permute.xlu0 %1735
        %1737 = vrot.lane.b32.xlu0 %v1732, 127
        %v1738 = vpop.permute.xlu0 %1737
        %1739 = vrot.lane.b32.xlu0 %v1731, 127
        %v1740 = vpop.permute.xlu0 %1739
        %v1745 = vadd.f32 %v1709, %v1734
        %v1746 = vadd.f32 %v1710, %v1736
        %v1747 = vadd.f32 %v1711, %v1738
        %v1748 = vadd.f32 %v1712, %v1740
        %1749 = vrot.lane.b32.xlu0 %v1614, 123
        %v1750 = vpop.permute.xlu0 %1749
        %s1751 = vtos %v1750
        %v1752 = vstv %s1751
        %v1754 = vmul.f32 %v1752, %v465
        %v1755 = vmul.f32 %v1752, %v466
        %v1756 = vmul.f32 %v1752, %v467
        %v1757 = vmul.f32 %v1752, %v468
        %v1762 = vrot.slane %v1754, 1
        %v1763 = vrot.slane %v1755, 1
        %v1764 = vsel %vm559, %v1762, %v1763
        %v1765 = vrot.slane %v1756, 1
        %v1766 = vsel %vm559, %v1763, %v1765
        %v1767 = vrot.slane %v1757, 1
        %v1768 = vsel %vm559, %v1765, %v1767
        %1769 = vrot.lane.b32.xlu0 %v1764, 126
        %v1770 = vpop.permute.xlu0 %1769
        %1771 = vrot.lane.b32.xlu0 %v1766, 126
        %v1772 = vpop.permute.xlu0 %1771
        %1773 = vrot.lane.b32.xlu0 %v1768, 126
        %v1774 = vpop.permute.xlu0 %1773
        %1775 = vrot.lane.b32.xlu0 %v1767, 126
        %v1776 = vpop.permute.xlu0 %1775
        %v1781 = vadd.f32 %v1745, %v1770
        %v1782 = vadd.f32 %v1746, %v1772
        %v1783 = vadd.f32 %v1747, %v1774
        %v1784 = vadd.f32 %v1748, %v1776
        %1785 = vrot.lane.b32.xlu0 %v1614, 122
        %v1786 = vpop.permute.xlu0 %1785
        %s1787 = vtos %v1786
        %v1788 = vstv %s1787
        %v1790 = vmul.f32 %v1788, %v465
        %v1791 = vmul.f32 %v1788, %v466
        %v1792 = vmul.f32 %v1788, %v467
        %v1793 = vmul.f32 %v1788, %v468
        %v1798 = vrot.slane %v1790, 2
        %v1799 = vrot.slane %v1791, 2
        %v1800 = vsel %vm660, %v1798, %v1799
        %v1801 = vrot.slane %v1792, 2
        %v1802 = vsel %vm660, %v1799, %v1801
        %v1803 = vrot.slane %v1793, 2
        %v1804 = vsel %vm660, %v1801, %v1803
        %v1809 = vadd.f32 %v1781, %v1800
        %v1810 = vadd.f32 %v1782, %v1802
        %v1811 = vadd.f32 %v1783, %v1804
        %v1812 = vadd.f32 %v1784, %v1803
        %1813 = vrot.lane.b32.xlu0 %v1614, 121
        %v1814 = vpop.permute.xlu0 %1813
        %s1815 = vtos %v1814
        %v1816 = vstv %s1815
        %v1818 = vmul.f32 %v1816, %v465
        %v1819 = vmul.f32 %v1816, %v466
        %v1820 = vmul.f32 %v1816, %v467
        %v1821 = vmul.f32 %v1816, %v468
        %v1826 = vrot.slane %v1818, 2
        %v1827 = vrot.slane %v1819, 2
        %v1828 = vsel %vm660, %v1826, %v1827
        %v1829 = vrot.slane %v1820, 2
        %v1830 = vsel %vm660, %v1827, %v1829
        %v1831 = vrot.slane %v1821, 2
        %v1832 = vsel %vm660, %v1829, %v1831
        %1833 = vrot.lane.b32.xlu0 %v1828, 127
        %v1834 = vpop.permute.xlu0 %1833
        %1835 = vrot.lane.b32.xlu0 %v1830, 127
        %v1836 = vpop.permute.xlu0 %1835
        %1837 = vrot.lane.b32.xlu0 %v1832, 127
        %v1838 = vpop.permute.xlu0 %1837
        %1839 = vrot.lane.b32.xlu0 %v1831, 127
        %v1840 = vpop.permute.xlu0 %1839
        %v1845 = vadd.f32 %v1809, %v1834
        %v1846 = vadd.f32 %v1810, %v1836
        %v1847 = vadd.f32 %v1811, %v1838
        %v1848 = vadd.f32 %v1812, %v1840
        %1849 = vrot.lane.b32.xlu0 %v1614, 120
        %v1850 = vpop.permute.xlu0 %1849
        %s1851 = vtos %v1850
        %v1852 = vstv %s1851
        %v1854 = vmul.f32 %v1852, %v465
        %v1855 = vmul.f32 %v1852, %v466
        %v1856 = vmul.f32 %v1852, %v467
        %v1857 = vmul.f32 %v1852, %v468
        %v1862 = vrot.slane %v1854, 2
        %v1863 = vrot.slane %v1855, 2
        %v1864 = vsel %vm660, %v1862, %v1863
        %v1865 = vrot.slane %v1856, 2
        %v1866 = vsel %vm660, %v1863, %v1865
        %v1867 = vrot.slane %v1857, 2
        %v1868 = vsel %vm660, %v1865, %v1867
        %1869 = vrot.lane.b32.xlu0 %v1864, 126
        %v1870 = vpop.permute.xlu0 %1869
        %1871 = vrot.lane.b32.xlu0 %v1866, 126
        %v1872 = vpop.permute.xlu0 %1871
        %1873 = vrot.lane.b32.xlu0 %v1868, 126
        %v1874 = vpop.permute.xlu0 %1873
        %1875 = vrot.lane.b32.xlu0 %v1867, 126
        %v1876 = vpop.permute.xlu0 %1875
        %v1881 = vadd.f32 %v1845, %v1870
        %v1882 = vadd.f32 %v1846, %v1872
        %v1883 = vadd.f32 %v1847, %v1874
        %v1884 = vadd.f32 %v1848, %v1876
        %v1885 = vld [vmem:[%s2 + $0x2] sm:$0x1]
        %s1887 = vtos %v1885
        %v1888 = vstv %s1887
        %v1890 = vadd.f32 %v1881, %v1888
        %v1891 = vadd.f32 %v1882, %v1888
        %v1892 = vadd.f32 %v1883, %v1888
        %v1893 = vadd.f32 %v1884, %v1888
        %v1894 = vmax.f32 %v1890, 0.0
        %v1895 = vmax.f32 %v1891, 0.0
        %v1896 = vmax.f32 %v1892, 0.0
        %v1897 = vmax.f32 %v1893, 0.0
        %1902 = vrot.lane.b32.xlu0 %v1894, 127
        %v1903 = vpop.permute.xlu0 %1902
        %1904 = vrot.lane.b32.xlu0 %v1895, 127
        %v1905 = vpop.permute.xlu0 %1904
        %1906 = vrot.lane.b32.xlu0 %v1896, 127
        %v1907 = vpop.permute.xlu0 %1906
        %1908 = vrot.lane.b32.xlu0 %v1897, 127
        %v1909 = vpop.permute.xlu0 %1908
        %v1914 = vmax.f32 %v1894, %v1903
        %v1915 = vmax.f32 %v1895, %v1905
        %v1916 = vmax.f32 %v1896, %v1907
        %v1917 = vmax.f32 %v1897, %v1909
        %v1922 = vrot.slane %v1914, 1
        %v1923 = vrot.slane %v1915, 1
        %v1924 = vsel %vm559, %v1922, %v1923
        %v1925 = vrot.slane %v1916, 1
        %v1926 = vsel %vm559, %v1923, %v1925
        %v1927 = vrot.slane %v1917, 1
        %v1928 = vsel %vm559, %v1925, %v1927
        %v1933 = vmax.f32 %v1914, %v1924
        %v1934 = vmax.f32 %v1915, %v1926
        %v1935 = vmax.f32 %v1916, %v1928
        %v1936 = vmax.f32 %v1917, %v1927
        %v1938 = vsel %vm807, %v1936, 0
        %1940 = vmatprep.subr.mxu0 0.0
        %1941 = vmatpush1.msra.mxu0 %v1933
        %1942 = vmatprep.subr.mxu0 0.0
        %1943 = vmatpush1.msra.mxu0 %v1934
        %1944 = vmatprep.subr.mxu0 0.0
        %1945 = vmatpush1.msra.mxu0 %v1935
        %1946 = vmatprep.subr.mxu0 0.0
        %1947 = vmatpush1.msra.mxu0 %v1938
        %1948 = vmatprep.subr.mxu0 0.0
        %1949 = vmatpush1.msra.mxu0 0.0
        %1950 = vmatprep.subr.mxu0 0.0
        %1951 = vmatpush1.msra.mxu0 0.0
        %1952 = vmatprep.subr.mxu0 0.0
        %1953 = vmatpush1.msra.mxu0 0.0
        %1954 = vmatprep.subr.mxu0 0.0
        %1955 = vmatpush1.msra.mxu0 0.0
        %1956 = vmatprep.subr.mxu0 0.0
        %1957 = vmatpush1.msra.mxu0 0.0
        %1958 = vmatprep.subr.mxu0 0.0
        %1959 = vmatpush1.msra.mxu0 0.0
        %1960 = vmatprep.subr.mxu0 0.0
        %1961 = vmatpush1.msra.mxu0 0.0
        %1962 = vmatprep.subr.mxu0 0.0
        %1963 = vmatpush1.msra.mxu0 0.0
        %1964 = vmatprep.subr.mxu0 0.0
        %1965 = vmatpush1.msra.mxu0 0.0
        %1966 = vmatprep.subr.mxu0 0.0
        %1967 = vmatpush1.msra.mxu0 0.0
        %1968 = vmatprep.subr.mxu0 0.0
        %1969 = vmatpush1.msra.mxu0 0.0
        %1970 = vmatprep.subr.mxu0 0.0
        %1971 = vmatpush1.msra.mxu0 0.0
        %1972 = vmatprep.subr.mxu0 0.0
        %1973 = vmatpush1.msra.mxu0 0.0
        %1974 = vmatprep.subr.mxu0 0.0
        %1975 = vmatpush1.msra.mxu0 0.0
        %1976 = vmatprep.subr.mxu0 0.0
        %1977 = vmatpush1.msra.mxu0 0.0
        %1978 = vmatprep.subr.mxu0 0.0
        %1979 = vmatpush1.msra.mxu0 0.0
        %1980 = vmatprep.subr.mxu0 0.0
        %1981 = vmatpush1.msra.mxu0 0.0
        %1982 = vmatprep.subr.mxu0 0.0
        %1983 = vmatpush1.msra.mxu0 0.0
        %1984 = vmatprep.subr.mxu0 0.0
        %1985 = vmatpush1.msra.mxu0 0.0
        %1986 = vmatprep.subr.mxu0 0.0
        %1987 = vmatpush1.msra.mxu0 0.0
        %1988 = vmatprep.subr.mxu0 0.0
        %1989 = vmatpush1.msra.mxu0 0.0
        %1990 = vmatprep.subr.mxu0 0.0
        %1991 = vmatpush1.msra.mxu0 0.0
        %1992 = vmatprep.subr.mxu0 0.0
        %1993 = vmatpush1.msra.mxu0 0.0
        %1994 = vmatprep.subr.mxu0 0.0
        %1995 = vmatpush1.msra.mxu0 0.0
        %1996 = vmatprep.subr.mxu0 0.0
        %1997 = vmatpush1.msra.mxu0 0.0
        %1998 = vmatprep.subr.mxu0 0.0
        %1999 = vmatpush1.msra.mxu0 0.0
        %2000 = vmatprep.subr.mxu0 0.0
        %2001 = vmatpush1.msra.mxu0 0.0
        %2002 = vmatprep.subr.mxu0 0.0
        %2003 = vmatpush1.msra.mxu0 0.0
        %2004 = vmatprep.mubr.f32.mxu0 0.0
        %2005 = vmatmul.mubr.f32.gmra.mrb[0].mxu0 %v802
        %v2006 = vpop.f32.mrb[0].mxu0
        %v2007 = vadd.f32 0.0, %v2006
        %v2008 = vpop.f32.mrb[0].mxu0
        %2009 = vmatprep.mubr.f32.mxu0 0.0
        %2010 = vmatmul.mubr.f32.gmra.mrb[0].mxu0 %v805
        %v2011 = vpop.f32.mrb[0].mxu0
        %v2012 = vadd.f32 0.0, %v2011
        %v2013 = vpop.f32.mrb[0].mxu0
        %2014 = vdwg.mxu0
        %v2016 = vsel %vm800, %v2007, 0
        %v2019 = vsel %vm800, %v2012, 0
        %2021 = vmatprep.subr.mxu0 0.0
        %2022 = vmatpush1.msra.mxu0 %v471
        %2023 = vmatprep.subr.mxu0 0.0
        %2024 = vmatpush1.msra.mxu0 %v472
        %2025 = vmatprep.subr.mxu0 0.0
        %2026 = vmatpush1.msra.mxu0 %v473
        %2027 = vmatprep.subr.mxu0 0.0
        %2028 = vmatpush1.msra.mxu0 %v893
        %2029 = vmatprep.subr.mxu0 0.0
        %2030 = vmatpush1.msra.mxu0 0.0
        %2031 = vmatprep.subr.mxu0 0.0
        %2032 = vmatpush1.msra.mxu0 0.0
        %2033 = vmatprep.subr.mxu0 0.0
        %2034 = vmatpush1.msra.mxu0 0.0
        %2035 = vmatprep.subr.mxu0 0.0
        %2036 = vmatpush1.msra.mxu0 0.0
        %2037 = vmatprep.subr.mxu0 0.0
        %2038 = vmatpush1.msra.mxu0 0.0
        %2039 = vmatprep.subr.mxu0 0.0
        %2040 = vmatpush1.msra.mxu0 0.0
        %2041 = vmatprep.subr.mxu0 0.0
        %2042 = vmatpush1.msra.mxu0 0.0
        %2043 = vmatprep.subr.mxu0 0.0
        %2044 = vmatpush1.msra.mxu0 0.0
        %2045 = vmatprep.subr.mxu0 0.0
        %2046 = vmatpush1.msra.mxu0 0.0
        %2047 = vmatprep.subr.mxu0 0.0
        %2048 = vmatpush1.msra.mxu0 0.0
        %2049 = vmatprep.subr.mxu0 0.0
        %2050 = vmatpush1.msra.mxu0 0.0
        %2051 = vmatprep.subr.mxu0 0.0
        %2052 = vmatpush1.msra.mxu0 0.0
        %2053 = vmatprep.subr.mxu0 0.0
        %2054 = vmatpush1.msra.mxu0 0.0
        %2055 = vmatprep.subr.mxu0 0.0
        %2056 = vmatpush1.msra.mxu0 0.0
        %2057 = vmatprep.subr.mxu0 0.0
        %2058 = vmatpush1.msra.mxu0 0.0
        %2059 = vmatprep.subr.mxu0 0.0
        %2060 = vmatpush1.msra.mxu0 0.0
        %2061 = vmatprep.subr.mxu0 0.0
        %2062 = vmatpush1.msra.mxu0 0.0
        %2063 = vmatprep.subr.mxu0 0.0
        %2064 = vmatpush1.msra.mxu0 0.0
        %2065 = vmatprep.subr.mxu0 0.0
        %2066 = vmatpush1.msra.mxu0 0.0
        %2067 = vmatprep.subr.mxu0 0.0
        %2068 = vmatpush1.msra.mxu0 0.0
        %2069 = vmatprep.subr.mxu0 0.0
        %2070 = vmatpush1.msra.mxu0 0.0
        %2071 = vmatprep.subr.mxu0 0.0
        %2072 = vmatpush1.msra.mxu0 0.0
        %2073 = vmatprep.subr.mxu0 0.0
        %2074 = vmatpush1.msra.mxu0 0.0
        %2075 = vmatprep.subr.mxu0 0.0
        %2076 = vmatpush1.msra.mxu0 0.0
        %2077 = vmatprep.subr.mxu0 0.0
        %2078 = vmatpush1.msra.mxu0 0.0
        %2079 = vmatprep.subr.mxu0 0.0
        %2080 = vmatpush1.msra.mxu0 0.0
        %2081 = vmatprep.subr.mxu0 0.0
        %2082 = vmatpush1.msra.mxu0 0.0
        %2083 = vmatprep.subr.mxu0 0.0
        %2084 = vmatpush1.msra.mxu0 0.0
        %2085 = vmatprep.mubr.f32.mxu0 0.0
        %2086 = vmatmul.mubr.f32.gmra.mrb[0].mxu0 %v2016
        %v2087 = vpop.f32.mrb[0].mxu0
        %v2088 = vadd.f32 0.0, %v2087
        %v2089 = vpop.f32.mrb[0].mxu0
        %2090 = vmatprep.mubr.f32.mxu0 0.0
        %2091 = vmatmul.mubr.f32.gmra.mrb[0].mxu0 %v2019
        %v2092 = vpop.f32.mrb[0].mxu0
        %v2093 = vadd.f32 0.0, %v2092
        %v2094 = vpop.f32.mrb[0].mxu0
        %2095 = vdwg.mxu0
        %2096 = vst.msk [vmem:[#allocation2 + $0x2] sm:$0x1] %vm970, %v2088
        %v2098 = vrot.slane %v2088, 1
        %2099 = vrot.lane.b32.xlu0 %v2098, 15
        %v2100 = vpop.permute.xlu0 %2099
        %2102 = vst.msk [vmem:[#allocation2 + $0x2] sm:$0x1] %vm977, %v2100
        %v2103 = vrot.slane %v2088, 2
        %2104 = vrot.lane.b32.xlu0 %v2103, 30
        %v2105 = vpop.permute.xlu0 %2104
        %2107 = vst.msk [vmem:[#allocation2 + $0x2] sm:$0x1] %vm983, %v2105
        %v2108 = vrot.slane %v2088, 3
        %2109 = vrot.lane.b32.xlu0 %v2108, 45
        %v2110 = vpop.permute.xlu0 %2109
        %2112 = vst.msk [vmem:[#allocation2 + $0x2] sm:$0x1] %vm989, %v2110
        %v2113 = vrot.slane %v2088, 4
        %2114 = vrot.lane.b32.xlu0 %v2113, 60
        %v2115 = vpop.permute.xlu0 %2114
        %2117 = vst.msk [vmem:[#allocation2 + $0x2] sm:$0x1] %vm995, %v2115
        %v2118 = vrot.slane %v2088, 5
        %2119 = vrot.lane.b32.xlu0 %v2118, 75
        %v2120 = vpop.permute.xlu0 %2119
        %2122 = vst.msk [vmem:[#allocation2 + $0x2] sm:$0x1] %vm1001, %v2120
        %v2123 = vrot.slane %v2088, 6
        %2124 = vrot.lane.b32.xlu0 %v2123, 90
        %v2125 = vpop.permute.xlu0 %2124
        %2127 = vst.msk [vmem:[#allocation2 + $0x2] sm:$0x1] %vm1007, %v2125
        %v2128 = vrot.slane %v2088, 7
        %2129 = vrot.lane.b32.xlu0 %v2128, 105
        %v2130 = vpop.permute.xlu0 %2129
        %2132 = vst.msk [vmem:[#allocation2 + $0x2] sm:$0x1] %vm1013, %v2130
        %2134 = vrot.lane.b32.xlu0 %v2093, 120
        %v2135 = vpop.permute.xlu0 %2134
        %2137 = vst.msk [vmem:[#allocation2 + $0x2] sm:$0x1] %vm1019, %v2135
        %2138 = vst.msk [vmem:[#allocation2 + $0xa] sm:$0x1] %vm1021, %v2135
        %v2139 = vrot.slane %v2093, 1
        %2140 = vrot.lane.b32.xlu0 %v2139, 7
        %v2141 = vpop.permute.xlu0 %2140
        %2143 = vst.msk [vmem:[#allocation2 + $0xa] sm:$0x1] %vm1027, %v2141
        %v2144 = vrot.slane %v2093, 2
        %2145 = vrot.lane.b32.xlu0 %v2144, 22
        %v2146 = vpop.permute.xlu0 %2145
        %2148 = vst.msk [vmem:[#allocation2 + $0xa] sm:$0x1] %vm1033, %v2146
        %v2149 = vrot.slane %v2093, 3
        %2150 = vrot.lane.b32.xlu0 %v2149, 37
        %v2151 = vpop.permute.xlu0 %2150
        %2153 = vst.msk [vmem:[#allocation2 + $0xa] sm:$0x1] %vm1039, %v2151
        %v2154 = vrot.slane %v2093, 4
        %2155 = vrot.lane.b32.xlu0 %v2154, 52
        %v2156 = vpop.permute.xlu0 %2155
        %2158 = vst.msk [vmem:[#allocation2 + $0xa] sm:$0x1] %vm1045, %v2156
        %v2159 = vrot.slane %v2093, 5
        %2160 = vrot.lane.b32.xlu0 %v2159, 67
        %v2161 = vpop.permute.xlu0 %2160
        %2163 = vst.msk [vmem:[#allocation2 + $0xa] sm:$0x1] %vm1051, %v2161
        %v2164 = vrot.slane %v2093, 6
        %2165 = vrot.lane.b32.xlu0 %v2164, 82
        %v2166 = vpop.permute.xlu0 %2165
        %2168 = vst.msk [vmem:[#allocation2 + $0xa] sm:$0x1] %vm1057, %v2166
        %v2169 = vld [vmem:[%s1 + $0x3] sm:$0x1]
        %s2171 = vtos %v2169
        %v2172 = vstv %s2171
        %v2174 = vmul.f32 %v2172, %v465
        %v2175 = vmul.f32 %v2172, %v466
        %v2176 = vmul.f32 %v2172, %v467
        %v2177 = vmul.f32 %v2172, %v468
        %v2178 = vadd.f32 %v2174, 0.0
        %v2179 = vadd.f32 %v2175, 0.0
        %v2180 = vadd.f32 %v2176, 0.0
        %v2181 = vadd.f32 %v2177, 0.0
        %2182 = vrot.lane.b32.xlu0 %v2169, 127
        %v2183 = vpop.permute.xlu0 %2182
        %s2184 = vtos %v2183
        %v2185 = vstv %s2184
        %v2187 = vmul.f32 %v2185, %v465
        %v2188 = vmul.f32 %v2185, %v466
        %v2189 = vmul.f32 %v2185, %v467
        %v2190 = vmul.f32 %v2185, %v468
        %2195 = vrot.lane.b32.xlu0 %v2187, 127
        %v2196 = vpop.permute.xlu0 %2195
        %2197 = vrot.lane.b32.xlu0 %v2188, 127
        %v2198 = vpop.permute.xlu0 %2197
        %2199 = vrot.lane.b32.xlu0 %v2189, 127
        %v2200 = vpop.permute.xlu0 %2199
        %2201 = vrot.lane.b32.xlu0 %v2190, 127
        %v2202 = vpop.permute.xlu0 %2201
        %v2207 = vadd.f32 %v2178, %v2196
        %v2208 = vadd.f32 %v2179, %v2198
        %v2209 = vadd.f32 %v2180, %v2200
        %v2210 = vadd.f32 %v2181, %v2202
        %2211 = vrot.lane.b32.xlu0 %v2169, 126
        %v2212 = vpop.permute.xlu0 %2211
        %s2213 = vtos %v2212
        %v2214 = vstv %s2213
        %v2216 = vmul.f32 %v2214, %v465
        %v2217 = vmul.f32 %v2214, %v466
        %v2218 = vmul.f32 %v2214, %v467
        %v2219 = vmul.f32 %v2214, %v468
        %2224 = vrot.lane.b32.xlu0 %v2216, 126
        %v2225 = vpop.permute.xlu0 %2224
        %2226 = vrot.lane.b32.xlu0 %v2217, 126
        %v2227 = vpop.permute.xlu0 %2226
        %2228 = vrot.lane.b32.xlu0 %v2218, 126
        %v2229 = vpop.permute.xlu0 %2228
        %2230 = vrot.lane.b32.xlu0 %v2219, 126
        %v2231 = vpop.permute.xlu0 %2230
        %v2236 = vadd.f32 %v2207, %v2225
        %v2237 = vadd.f32 %v2208, %v2227
        %v2238 = vadd.f32 %v2209, %v2229
        %v2239 = vadd.f32 %v2210, %v2231
        %2240 = vrot.lane.b32.xlu0 %v2169, 125
        %v2241 = vpop.permute.xlu0 %2240
        %s2242 = vtos %v2241
        %v2243 = vstv %s2242
        %v2245 = vmul.f32 %v2243, %v465
        %v2246 = vmul.f32 %v2243, %v466
        %v2247 = vmul.f32 %v2243, %v467
        %v2248 = vmul.f32 %v2243, %v468
        %v2253 = vrot.slane %v2245, 1
        %v2254 = vrot.slane %v2246, 1
        %v2255 = vsel %vm559, %v2253, %v2254
        %v2256 = vrot.slane %v2247, 1
        %v2257 = vsel %vm559, %v2254, %v2256
        %v2258 = vrot.slane %v2248, 1
        %v2259 = vsel %vm559, %v2256, %v2258
        %v2264 = vadd.f32 %v2236, %v2255
        %v2265 = vadd.f32 %v2237, %v2257
        %v2266 = vadd.f32 %v2238, %v2259
        %v2267 = vadd.f32 %v2239, %v2258
        %2268 = vrot.lane.b32.xlu0 %v2169, 124
        %v2269 = vpop.permute.xlu0 %2268
        %s2270 = vtos %v2269
        %v2271 = vstv %s2270
        %v2273 = vmul.f32 %v2271, %v465
        %v2274 = vmul.f32 %v2271, %v466
        %v2275 = vmul.f32 %v2271, %v467
        %v2276 = vmul.f32 %v2271, %v468
        %v2281 = vrot.slane %v2273, 1
        %v2282 = vrot.slane %v2274, 1
        %v2283 = vsel %vm559, %v2281, %v2282
        %v2284 = vrot.slane %v2275, 1
        %v2285 = vsel %vm559, %v2282, %v2284
        %v2286 = vrot.slane %v2276, 1
        %v2287 = vsel %vm559, %v2284, %v2286
        %2288 = vrot.lane.b32.xlu0 %v2283, 127
        %v2289 = vpop.permute.xlu0 %2288
        %2290 = vrot.lane.b32.xlu0 %v2285, 127
        %v2291 = vpop.permute.xlu0 %2290
        %2292 = vrot.lane.b32.xlu0 %v2287, 127
        %v2293 = vpop.permute.xlu0 %2292
        %2294 = vrot.lane.b32.xlu0 %v2286, 127
        %v2295 = vpop.permute.xlu0 %2294
        %v2300 = vadd.f32 %v2264, %v2289
        %v2301 = vadd.f32 %v2265, %v2291
        %v2302 = vadd.f32 %v2266, %v2293
        %v2303 = vadd.f32 %v2267, %v2295
        %2304 = vrot.lane.b32.xlu0 %v2169, 123
        %v2305 = vpop.permute.xlu0 %2304
        %s2306 = vtos %v2305
        %v2307 = vstv %s2306
        %v2309 = vmul.f32 %v2307, %v465
        %v2310 = vmul.f32 %v2307, %v466
        %v2311 = vmul.f32 %v2307, %v467
        %v2312 = vmul.f32 %v2307, %v468
        %v2317 = vrot.slane %v2309, 1
        %v2318 = vrot.slane %v2310, 1
        %v2319 = vsel %vm559, %v2317, %v2318
        %v2320 = vrot.slane %v2311, 1
        %v2321 = vsel %vm559, %v2318, %v2320
        %v2322 = vrot.slane %v2312, 1
        %v2323 = vsel %vm559, %v2320, %v2322
        %2324 = vrot.lane.b32.xlu0 %v2319, 126
        %v2325 = vpop.permute.xlu0 %2324
        %2326 = vrot.lane.b32.xlu0 %v2321, 126
        %v2327 = vpop.permute.xlu0 %2326
        %2328 = vrot.lane.b32.xlu0 %v2323, 126
        %v2329 = vpop.permute.xlu0 %2328
        %2330 = vrot.lane.b32.xlu0 %v2322, 126
        %v2331 = vpop.permute.xlu0 %2330
        %v2336 = vadd.f32 %v2300, %v2325
        %v2337 = vadd.f32 %v2301, %v2327
        %v2338 = vadd.f32 %v2302, %v2329
        %v2339 = vadd.f32 %v2303, %v2331
        %2340 = vrot.lane.b32.xlu0 %v2169, 122
        %v2341 = vpop.permute.xlu0 %2340
        %s2342 = vtos %v2341
        %v2343 = vstv %s2342
        %v2345 = vmul.f32 %v2343, %v465
        %v2346 = vmul.f32 %v2343, %v466
        %v2347 = vmul.f32 %v2343, %v467
        %v2348 = vmul.f32 %v2343, %v468
        %v2353 = vrot.slane %v2345, 2
        %v2354 = vrot.slane %v2346, 2
        %v2355 = vsel %vm660, %v2353, %v2354
        %v2356 = vrot.slane %v2347, 2
        %v2357 = vsel %vm660, %v2354, %v2356
        %v2358 = vrot.slane %v2348, 2
        %v2359 = vsel %vm660, %v2356, %v2358
        %v2364 = vadd.f32 %v2336, %v2355
        %v2365 = vadd.f32 %v2337, %v2357
        %v2366 = vadd.f32 %v2338, %v2359
        %v2367 = vadd.f32 %v2339, %v2358
        %2368 = vrot.lane.b32.xlu0 %v2169, 121
        %v2369 = vpop.permute.xlu0 %2368
        %s2370 = vtos %v2369
        %v2371 = vstv %s2370
        %v2373 = vmul.f32 %v2371, %v465
        %v2374 = vmul.f32 %v2371, %v466
        %v2375 = vmul.f32 %v2371, %v467
        %v2376 = vmul.f32 %v2371, %v468
        %v2381 = vrot.slane %v2373, 2
        %v2382 = vrot.slane %v2374, 2
        %v2383 = vsel %vm660, %v2381, %v2382
        %v2384 = vrot.slane %v2375, 2
        %v2385 = vsel %vm660, %v2382, %v2384
        %v2386 = vrot.slane %v2376, 2
        %v2387 = vsel %vm660, %v2384, %v2386
        %2388 = vrot.lane.b32.xlu0 %v2383, 127
        %v2389 = vpop.permute.xlu0 %2388
        %2390 = vrot.lane.b32.xlu0 %v2385, 127
        %v2391 = vpop.permute.xlu0 %2390
        %2392 = vrot.lane.b32.xlu0 %v2387, 127
        %v2393 = vpop.permute.xlu0 %2392
        %2394 = vrot.lane.b32.xlu0 %v2386, 127
        %v2395 = vpop.permute.xlu0 %2394
        %v2400 = vadd.f32 %v2364, %v2389
        %v2401 = vadd.f32 %v2365, %v2391
        %v2402 = vadd.f32 %v2366, %v2393
        %v2403 = vadd.f32 %v2367, %v2395
        %2404 = vrot.lane.b32.xlu0 %v2169, 120
        %v2405 = vpop.permute.xlu0 %2404
        %s2406 = vtos %v2405
        %v2407 = vstv %s2406
        %v2409 = vmul.f32 %v2407, %v465
        %v2410 = vmul.f32 %v2407, %v466
        %v2411 = vmul.f32 %v2407, %v467
        %v2412 = vmul.f32 %v2407, %v468
        %v2417 = vrot.slane %v2409, 2
        %v2418 = vrot.slane %v2410, 2
        %v2419 = vsel %vm660, %v2417, %v2418
        %v2420 = vrot.slane %v2411, 2
        %v2421 = vsel %vm660, %v2418, %v2420
        %v2422 = vrot.slane %v2412, 2
        %v2423 = vsel %vm660, %v2420, %v2422
        %2424 = vrot.lane.b32.xlu0 %v2419, 126
        %v2425 = vpop.permute.xlu0 %2424
        %2426 = vrot.lane.b32.xlu0 %v2421, 126
        %v2427 = vpop.permute.xlu0 %2426
        %2428 = vrot.lane.b32.xlu0 %v2423, 126
        %v2429 = vpop.permute.xlu0 %2428
        %2430 = vrot.lane.b32.xlu0 %v2422, 126
        %v2431 = vpop.permute.xlu0 %2430
        %v2436 = vadd.f32 %v2400, %v2425
        %v2437 = vadd.f32 %v2401, %v2427
        %v2438 = vadd.f32 %v2402, %v2429
        %v2439 = vadd.f32 %v2403, %v2431
        %v2440 = vld [vmem:[%s2 + $0x3] sm:$0x1]
        %s2442 = vtos %v2440
        %v2443 = vstv %s2442
        %v2445 = vadd.f32 %v2436, %v2443
        %v2446 = vadd.f32 %v2437, %v2443
        %v2447 = vadd.f32 %v2438, %v2443
        %v2448 = vadd.f32 %v2439, %v2443
        %v2449 = vmax.f32 %v2445, 0.0
        %v2450 = vmax.f32 %v2446, 0.0
        %v2451 = vmax.f32 %v2447, 0.0
        %v2452 = vmax.f32 %v2448, 0.0
        %2457 = vrot.lane.b32.xlu0 %v2449, 127
        %v2458 = vpop.permute.xlu0 %2457
        %2459 = vrot.lane.b32.xlu0 %v2450, 127
        %v2460 = vpop.permute.xlu0 %2459
        %2461 = vrot.lane.b32.xlu0 %v2451, 127
        %v2462 = vpop.permute.xlu0 %2461
        %2463 = vrot.lane.b32.xlu0 %v2452, 127
        %v2464 = vpop.permute.xlu0 %2463
        %v2469 = vmax.f32 %v2449, %v2458
        %v2470 = vmax.f32 %v2450, %v2460
        %v2471 = vmax.f32 %v2451, %v2462
        %v2472 = vmax.f32 %v2452, %v2464
        %v2477 = vrot.slane %v2469, 1
        %v2478 = vrot.slane %v2470, 1
        %v2479 = vsel %vm559, %v2477, %v2478
        %v2480 = vrot.slane %v2471, 1
        %v2481 = vsel %vm559, %v2478, %v2480
        %v2482 = vrot.slane %v2472, 1
        %v2483 = vsel %vm559, %v2480, %v2482
        %v2488 = vmax.f32 %v2469, %v2479
        %v2489 = vmax.f32 %v2470, %v2481
        %v2490 = vmax.f32 %v2471, %v2483
        %v2491 = vmax.f32 %v2472, %v2482
        %v2493 = vsel %vm807, %v2491, 0
        %2495 = vmatprep.subr.mxu0 0.0
        %2496 = vmatpush1.msra.mxu0 %v2488
        %2497 = vmatprep.subr.mxu0 0.0
        %2498 = vmatpush1.msra.mxu0 %v2489
        %2499 = vmatprep.subr.mxu0 0.0
        %2500 = vmatpush1.msra.mxu0 %v2490
        %2501 = vmatprep.subr.mxu0 0.0
        %2502 = vmatpush1.msra.mxu0 %v2493
        %2503 = vmatprep.subr.mxu0 0.0
        %2504 = vmatpush1.msra.mxu0 0.0
        %2505 = vmatprep.subr.mxu0 0.0
        %2506 = vmatpush1.msra.mxu0 0.0
        %2507 = vmatprep.subr.mxu0 0.0
        %2508 = vmatpush1.msra.mxu0 0.0
        %2509 = vmatprep.subr.mxu0 0.0
        %2510 = vmatpush1.msra.mxu0 0.0
        %2511 = vmatprep.subr.mxu0 0.0
        %2512 = vmatpush1.msra.mxu0 0.0
        %2513 = vmatprep.subr.mxu0 0.0
        %2514 = vmatpush1.msra.mxu0 0.0
        %2515 = vmatprep.subr.mxu0 0.0
        %2516 = vmatpush1.msra.mxu0 0.0
        %2517 = vmatprep.subr.mxu0 0.0
        %2518 = vmatpush1.msra.mxu0 0.0
        %2519 = vmatprep.subr.mxu0 0.0
        %2520 = vmatpush1.msra.mxu0 0.0
        %2521 = vmatprep.subr.mxu0 0.0
        %2522 = vmatpush1.msra.mxu0 0.0
        %2523 = vmatprep.subr.mxu0 0.0
        %2524 = vmatpush1.msra.mxu0 0.0
        %2525 = vmatprep.subr.mxu0 0.0
        %2526 = vmatpush1.msra.mxu0 0.0
        %2527 = vmatprep.subr.mxu0 0.0
        %2528 = vmatpush1.msra.mxu0 0.0
        %2529 = vmatprep.subr.mxu0 0.0
        %2530 = vmatpush1.msra.mxu0 0.0
        %2531 = vmatprep.subr.mxu0 0.0
        %2532 = vmatpush1.msra.mxu0 0.0
        %2533 = vmatprep.subr.mxu0 0.0
        %2534 = vmatpush1.msra.mxu0 0.0
        %2535 = vmatprep.subr.mxu0 0.0
        %2536 = vmatpush1.msra.mxu0 0.0
        %2537 = vmatprep.subr.mxu0 0.0
        %2538 = vmatpush1.msra.mxu0 0.0
        %2539 = vmatprep.subr.mxu0 0.0
        %2540 = vmatpush1.msra.mxu0 0.0
        %2541 = vmatprep.subr.mxu0 0.0
        %2542 = vmatpush1.msra.mxu0 0.0
        %2543 = vmatprep.subr.mxu0 0.0
        %2544 = vmatpush1.msra.mxu0 0.0
        %2545 = vmatprep.subr.mxu0 0.0
        %2546 = vmatpush1.msra.mxu0 0.0
        %2547 = vmatprep.subr.mxu0 0.0
        %2548 = vmatpush1.msra.mxu0 0.0
        %2549 = vmatprep.subr.mxu0 0.0
        %2550 = vmatpush1.msra.mxu0 0.0
        %2551 = vmatprep.subr.mxu0 0.0
        %2552 = vmatpush1.msra.mxu0 0.0
        %2553 = vmatprep.subr.mxu0 0.0
        %2554 = vmatpush1.msra.mxu0 0.0
        %2555 = vmatprep.subr.mxu0 0.0
        %2556 = vmatpush1.msra.mxu0 0.0
        %2557 = vmatprep.subr.mxu0 0.0
        %2558 = vmatpush1.msra.mxu0 0.0
        %2559 = vmatprep.mubr.f32.mxu0 0.0
        %2560 = vmatmul.mubr.f32.gmra.mrb[0].mxu0 %v802
        %v2561 = vpop.f32.mrb[0].mxu0
        %v2562 = vadd.f32 0.0, %v2561
        %v2563 = vpop.f32.mrb[0].mxu0
        %2564 = vmatprep.mubr.f32.mxu0 0.0
        %2565 = vmatmul.mubr.f32.gmra.mrb[0].mxu0 %v805
        %v2566 = vpop.f32.mrb[0].mxu0
        %v2567 = vadd.f32 0.0, %v2566
        %v2568 = vpop.f32.mrb[0].mxu0
        %2569 = vdwg.mxu0
        %v2571 = vsel %vm800, %v2562, 0
        %v2574 = vsel %vm800, %v2567, 0
        %2576 = vmatprep.subr.mxu0 0.0
        %2577 = vmatpush1.msra.mxu0 %v471
        %2578 = vmatprep.subr.mxu0 0.0
        %2579 = vmatpush1.msra.mxu0 %v472
        %2580 = vmatprep.subr.mxu0 0.0
        %2581 = vmatpush1.msra.mxu0 %v473
        %2582 = vmatprep.subr.mxu0 0.0
        %2583 = vmatpush1.msra.mxu0 %v893
        %2584 = vmatprep.subr.mxu0 0.0
        %2585 = vmatpush1.msra.mxu0 0.0
        %2586 = vmatprep.subr.mxu0 0.0
        %2587 = vmatpush1.msra.mxu0 0.0
        %2588 = vmatprep.subr.mxu0 0.0
        %2589 = vmatpush1.msra.mxu0 0.0
        %2590 = vmatprep.subr.mxu0 0.0
        %2591 = vmatpush1.msra.mxu0 0.0
        %2592 = vmatprep.subr.mxu0 0.0
        %2593 = vmatpush1.msra.mxu0 0.0
        %2594 = vmatprep.subr.mxu0 0.0
        %2595 = vmatpush1.msra.mxu0 0.0
        %2596 = vmatprep.subr.mxu0 0.0
        %2597 = vmatpush1.msra.mxu0 0.0
        %2598 = vmatprep.subr.mxu0 0.0
        %2599 = vmatpush1.msra.mxu0 0.0
        %2600 = vmatprep.subr.mxu0 0.0
        %2601 = vmatpush1.msra.mxu0 0.0
        %2602 = vmatprep.subr.mxu0 0.0
        %2603 = vmatpush1.msra.mxu0 0.0
        %2604 = vmatprep.subr.mxu0 0.0
        %2605 = vmatpush1.msra.mxu0 0.0
        %2606 = vmatprep.subr.mxu0 0.0
        %2607 = vmatpush1.msra.mxu0 0.0
        %2608 = vmatprep.subr.mxu0 0.0
        %2609 = vmatpush1.msra.mxu0 0.0
        %2610 = vmatprep.subr.mxu0 0.0
        %2611 = vmatpush1.msra.mxu0 0.0
        %2612 = vmatprep.subr.mxu0 0.0
        %2613 = vmatpush1.msra.mxu0 0.0
        %2614 = vmatprep.subr.mxu0 0.0
        %2615 = vmatpush1.msra.mxu0 0.0
        %2616 = vmatprep.subr.mxu0 0.0
        %2617 = vmatpush1.msra.mxu0 0.0
        %2618 = vmatprep.subr.mxu0 0.0
        %2619 = vmatpush1.msra.mxu0 0.0
        %2620 = vmatprep.subr.mxu0 0.0
        %2621 = vmatpush1.msra.mxu0 0.0
        %2622 = vmatprep.subr.mxu0 0.0
        %2623 = vmatpush1.msra.mxu0 0.0
        %2624 = vmatprep.subr.mxu0 0.0
        %2625 = vmatpush1.msra.mxu0 0.0
        %2626 = vmatprep.subr.mxu0 0.0
        %2627 = vmatpush1.msra.mxu0 0.0
        %2628 = vmatprep.subr.mxu0 0.0
        %2629 = vmatpush1.msra.mxu0 0.0
        %2630 = vmatprep.subr.mxu0 0.0
        %2631 = vmatpush1.msra.mxu0 0.0
        %2632 = vmatprep.subr.mxu0 0.0
        %2633 = vmatpush1.msra.mxu0 0.0
        %2634 = vmatprep.subr.mxu0 0.0
        %2635 = vmatpush1.msra.mxu0 0.0
        %2636 = vmatprep.subr.mxu0 0.0
        %2637 = vmatpush1.msra.mxu0 0.0
        %2638 = vmatprep.subr.mxu0 0.0
        %2639 = vmatpush1.msra.mxu0 0.0
        %2640 = vmatprep.mubr.f32.mxu0 0.0
        %2641 = vmatmul.mubr.f32.gmra.mrb[0].mxu0 %v2571
        %v2642 = vpop.f32.mrb[0].mxu0
        %v2643 = vadd.f32 0.0, %v2642
        %v2644 = vpop.f32.mrb[0].mxu0
        %2645 = vmatprep.mubr.f32.mxu0 0.0
        %2646 = vmatmul.mubr.f32.gmra.mrb[0].mxu0 %v2574
        %v2647 = vpop.f32.mrb[0].mxu0
        %v2648 = vadd.f32 0.0, %v2647
        %v2649 = vpop.f32.mrb[0].mxu0
        %2650 = vdwg.mxu0
        %2651 = vst.msk [vmem:[#allocation2 + $0x3] sm:$0x1] %vm970, %v2643
        %v2653 = vrot.slane %v2643, 1
        %2654 = vrot.lane.b32.xlu0 %v2653, 15
        %v2655 = vpop.permute.xlu0 %2654
        %2657 = vst.msk [vmem:[#allocation2 + $0x3] sm:$0x1] %vm977, %v2655
        %v2658 = vrot.slane %v2643, 2
        %2659 = vrot.lane.b32.xlu0 %v2658, 30
        %v2660 = vpop.permute.xlu0 %2659
        %2662 = vst.msk [vmem:[#allocation2 + $0x3] sm:$0x1] %vm983, %v2660
        %v2663 = vrot.slane %v2643, 3
        %2664 = vrot.lane.b32.xlu0 %v2663, 45
        %v2665 = vpop.permute.xlu0 %2664
        %2667 = vst.msk [vmem:[#allocation2 + $0x3] sm:$0x1] %vm989, %v2665
        %v2668 = vrot.slane %v2643, 4
        %2669 = vrot.lane.b32.xlu0 %v2668, 60
        %v2670 = vpop.permute.xlu0 %2669
        %2672 = vst.msk [vmem:[#allocation2 + $0x3] sm:$0x1] %vm995, %v2670
        %v2673 = vrot.slane %v2643, 5
        %2674 = vrot.lane.b32.xlu0 %v2673, 75
        %v2675 = vpop.permute.xlu0 %2674
        %2677 = vst.msk [vmem:[#allocation2 + $0x3] sm:$0x1] %vm1001, %v2675
        %v2678 = vrot.slane %v2643, 6
        %2679 = vrot.lane.b32.xlu0 %v2678, 90
        %v2680 = vpop.permute.xlu0 %2679
        %2682 = vst.msk [vmem:[#allocation2 + $0x3] sm:$0x1] %vm1007, %v2680
        %v2683 = vrot.slane %v2643, 7
        %2684 = vrot.lane.b32.xlu0 %v2683, 105
        %v2685 = vpop.permute.xlu0 %2684
        %2687 = vst.msk [vmem:[#allocation2 + $0x3] sm:$0x1] %vm1013, %v2685
        %2689 = vrot.lane.b32.xlu0 %v2648, 120
        %v2690 = vpop.permute.xlu0 %2689
        %2692 = vst.msk [vmem:[#allocation2 + $0x3] sm:$0x1] %vm1019, %v2690
        %2693 = vst.msk [vmem:[#allocation2 + $0xb] sm:$0x1] %vm1021, %v2690
        %v2694 = vrot.slane %v2648, 1
        %2695 = vrot.lane.b32.xlu0 %v2694, 7
        %v2696 = vpop.permute.xlu0 %2695
        %2698 = vst.msk [vmem:[#allocation2 + $0xb] sm:$0x1] %vm1027, %v2696
        %v2699 = vrot.slane %v2648, 2
        %2700 = vrot.lane.b32.xlu0 %v2699, 22
        %v2701 = vpop.permute.xlu0 %2700
        %2703 = vst.msk [vmem:[#allocation2 + $0xb] sm:$0x1] %vm1033, %v2701
        %v2704 = vrot.slane %v2648, 3
        %2705 = vrot.lane.b32.xlu0 %v2704, 37
        %v2706 = vpop.permute.xlu0 %2705
        %2708 = vst.msk [vmem:[#allocation2 + $0xb] sm:$0x1] %vm1039, %v2706
        %v2709 = vrot.slane %v2648, 4
        %2710 = vrot.lane.b32.xlu0 %v2709, 52
        %v2711 = vpop.permute.xlu0 %2710
        %2713 = vst.msk [vmem:[#allocation2 + $0xb] sm:$0x1] %vm1045, %v2711
        %v2714 = vrot.slane %v2648, 5
        %2715 = vrot.lane.b32.xlu0 %v2714, 67
        %v2716 = vpop.permute.xlu0 %2715
        %2718 = vst.msk [vmem:[#allocation2 + $0xb] sm:$0x1] %vm1051, %v2716
        %v2719 = vrot.slane %v2648, 6
        %2720 = vrot.lane.b32.xlu0 %v2719, 82
        %v2721 = vpop.permute.xlu0 %2720
        %2723 = vst.msk [vmem:[#allocation2 + $0xb] sm:$0x1] %vm1057, %v2721
        %v2724 = vld [vmem:[%s1 + $0x4] sm:$0x1]
        %s2726 = vtos %v2724
        %v2727 = vstv %s2726
        %v2729 = vmul.f32 %v2727, %v465
        %v2730 = vmul.f32 %v2727, %v466
        %v2731 = vmul.f32 %v2727, %v467
        %v2732 = vmul.f32 %v2727, %v468
        %v2733 = vadd.f32 %v2729, 0.0
        %v2734 = vadd.f32 %v2730, 0.0
        %v2735 = vadd.f32 %v2731, 0.0
        %v2736 = vadd.f32 %v2732, 0.0
        %2737 = vrot.lane.b32.xlu0 %v2724, 127
        %v2738 = vpop.permute.xlu0 %2737
        %s2739 = vtos %v2738
        %v2740 = vstv %s2739
        %v2742 = vmul.f32 %v2740, %v465
        %v2743 = vmul.f32 %v2740, %v466
        %v2744 = vmul.f32 %v2740, %v467
        %v2745 = vmul.f32 %v2740, %v468
        %2750 = vrot.lane.b32.xlu0 %v2742, 127
        %v2751 = vpop.permute.xlu0 %2750
        %2752 = vrot.lane.b32.xlu0 %v2743, 127
        %v2753 = vpop.permute.xlu0 %2752
        %2754 = vrot.lane.b32.xlu0 %v2744, 127
        %v2755 = vpop.permute.xlu0 %2754
        %2756 = vrot.lane.b32.xlu0 %v2745, 127
        %v2757 = vpop.permute.xlu0 %2756
        %v2762 = vadd.f32 %v2733, %v2751
        %v2763 = vadd.f32 %v2734, %v2753
        %v2764 = vadd.f32 %v2735, %v2755
        %v2765 = vadd.f32 %v2736, %v2757
        %2766 = vrot.lane.b32.xlu0 %v2724, 126
        %v2767 = vpop.permute.xlu0 %2766
        %s2768 = vtos %v2767
        %v2769 = vstv %s2768
        %v2771 = vmul.f32 %v2769, %v465
        %v2772 = vmul.f32 %v2769, %v466
        %v2773 = vmul.f32 %v2769, %v467
        %v2774 = vmul.f32 %v2769, %v468
        %2779 = vrot.lane.b32.xlu0 %v2771, 126
        %v2780 = vpop.permute.xlu0 %2779
        %2781 = vrot.lane.b32.xlu0 %v2772, 126
        %v2782 = vpop.permute.xlu0 %2781
        %2783 = vrot.lane.b32.xlu0 %v2773, 126
        %v2784 = vpop.permute.xlu0 %2783
        %2785 = vrot.lane.b32.xlu0 %v2774, 126
        %v2786 = vpop.permute.xlu0 %2785
        %v2791 = vadd.f32 %v2762, %v2780
        %v2792 = vadd.f32 %v2763, %v2782
        %v2793 = vadd.f32 %v2764, %v2784
        %v2794 = vadd.f32 %v2765, %v2786
        %2795 = vrot.lane.b32.xlu0 %v2724, 125
        %v2796 = vpop.permute.xlu0 %2795
        %s2797 = vtos %v2796
        %v2798 = vstv %s2797
        %v2800 = vmul.f32 %v2798, %v465
        %v2801 = vmul.f32 %v2798, %v466
        %v2802 = vmul.f32 %v2798, %v467
        %v2803 = vmul.f32 %v2798, %v468
        %v2808 = vrot.slane %v2800, 1
        %v2809 = vrot.slane %v2801, 1
        %v2810 = vsel %vm559, %v2808, %v2809
        %v2811 = vrot.slane %v2802, 1
        %v2812 = vsel %vm559, %v2809, %v2811
        %v2813 = vrot.slane %v2803, 1
        %v2814 = vsel %vm559, %v2811, %v2813
        %v2819 = vadd.f32 %v2791, %v2810
        %v2820 = vadd.f32 %v2792, %v2812
        %v2821 = vadd.f32 %v2793, %v2814
        %v2822 = vadd.f32 %v2794, %v2813
        %2823 = vrot.lane.b32.xlu0 %v2724, 124
        %v2824 = vpop.permute.xlu0 %2823
        %s2825 = vtos %v2824
        %v2826 = vstv %s2825
        %v2828 = vmul.f32 %v2826, %v465
        %v2829 = vmul.f32 %v2826, %v466
        %v2830 = vmul.f32 %v2826, %v467
        %v2831 = vmul.f32 %v2826, %v468
        %v2836 = vrot.slane %v2828, 1
        %v2837 = vrot.slane %v2829, 1
        %v2838 = vsel %vm559, %v2836, %v2837
        %v2839 = vrot.slane %v2830, 1
        %v2840 = vsel %vm559, %v2837, %v2839
        %v2841 = vrot.slane %v2831, 1
        %v2842 = vsel %vm559, %v2839, %v2841
        %2843 = vrot.lane.b32.xlu0 %v2838, 127
        %v2844 = vpop.permute.xlu0 %2843
        %2845 = vrot.lane.b32.xlu0 %v2840, 127
        %v2846 = vpop.permute.xlu0 %2845
        %2847 = vrot.lane.b32.xlu0 %v2842, 127
        %v2848 = vpop.permute.xlu0 %2847
        %2849 = vrot.lane.b32.xlu0 %v2841, 127
        %v2850 = vpop.permute.xlu0 %2849
        %v2855 = vadd.f32 %v2819, %v2844
        %v2856 = vadd.f32 %v2820, %v2846
        %v2857 = vadd.f32 %v2821, %v2848
        %v2858 = vadd.f32 %v2822, %v2850
        %2859 = vrot.lane.b32.xlu0 %v2724, 123
        %v2860 = vpop.permute.xlu0 %2859
        %s2861 = vtos %v2860
        %v2862 = vstv %s2861
        %v2864 = vmul.f32 %v2862, %v465
        %v2865 = vmul.f32 %v2862, %v466
        %v2866 = vmul.f32 %v2862, %v467
        %v2867 = vmul.f32 %v2862, %v468
        %v2872 = vrot.slane %v2864, 1
        %v2873 = vrot.slane %v2865, 1
        %v2874 = vsel %vm559, %v2872, %v2873
        %v2875 = vrot.slane %v2866, 1
        %v2876 = vsel %vm559, %v2873, %v2875
        %v2877 = vrot.slane %v2867, 1
        %v2878 = vsel %vm559, %v2875, %v2877
        %2879 = vrot.lane.b32.xlu0 %v2874, 126
        %v2880 = vpop.permute.xlu0 %2879
        %2881 = vrot.lane.b32.xlu0 %v2876, 126
        %v2882 = vpop.permute.xlu0 %2881
        %2883 = vrot.lane.b32.xlu0 %v2878, 126
        %v2884 = vpop.permute.xlu0 %2883
        %2885 = vrot.lane.b32.xlu0 %v2877, 126
        %v2886 = vpop.permute.xlu0 %2885
        %v2891 = vadd.f32 %v2855, %v2880
        %v2892 = vadd.f32 %v2856, %v2882
        %v2893 = vadd.f32 %v2857, %v2884
        %v2894 = vadd.f32 %v2858, %v2886
        %2895 = vrot.lane.b32.xlu0 %v2724, 122
        %v2896 = vpop.permute.xlu0 %2895
        %s2897 = vtos %v2896
        %v2898 = vstv %s2897
        %v2900 = vmul.f32 %v2898, %v465
        %v2901 = vmul.f32 %v2898, %v466
        %v2902 = vmul.f32 %v2898, %v467
        %v2903 = vmul.f32 %v2898, %v468
        %v2908 = vrot.slane %v2900, 2
        %v2909 = vrot.slane %v2901, 2
        %v2910 = vsel %vm660, %v2908, %v2909
        %v2911 = vrot.slane %v2902, 2
        %v2912 = vsel %vm660, %v2909, %v2911
        %v2913 = vrot.slane %v2903, 2
        %v2914 = vsel %vm660, %v2911, %v2913
        %v2919 = vadd.f32 %v2891, %v2910
        %v2920 = vadd.f32 %v2892, %v2912
        %v2921 = vadd.f32 %v2893, %v2914
        %v2922 = vadd.f32 %v2894, %v2913
        %2923 = vrot.lane.b32.xlu0 %v2724, 121
        %v2924 = vpop.permute.xlu0 %2923
        %s2925 = vtos %v2924
        %v2926 = vstv %s2925
        %v2928 = vmul.f32 %v2926, %v465
        %v2929 = vmul.f32 %v2926, %v466
        %v2930 = vmul.f32 %v2926, %v467
        %v2931 = vmul.f32 %v2926, %v468
        %v2936 = vrot.slane %v2928, 2
        %v2937 = vrot.slane %v2929, 2
        %v2938 = vsel %vm660, %v2936, %v2937
        %v2939 = vrot.slane %v2930, 2
        %v2940 = vsel %vm660, %v2937, %v2939
        %v2941 = vrot.slane %v2931, 2
        %v2942 = vsel %vm660, %v2939, %v2941
        %2943 = vrot.lane.b32.xlu0 %v2938, 127
        %v2944 = vpop.permute.xlu0 %2943
        %2945 = vrot.lane.b32.xlu0 %v2940, 127
        %v2946 = vpop.permute.xlu0 %2945
        %2947 = vrot.lane.b32.xlu0 %v2942, 127
        %v2948 = vpop.permute.xlu0 %2947
        %2949 = vrot.lane.b32.xlu0 %v2941, 127
        %v2950 = vpop.permute.xlu0 %2949
        %v2955 = vadd.f32 %v2919, %v2944
        %v2956 = vadd.f32 %v2920, %v2946
        %v2957 = vadd.f32 %v2921, %v2948
        %v2958 = vadd.f32 %v2922, %v2950
        %2959 = vrot.lane.b32.xlu0 %v2724, 120
        %v2960 = vpop.permute.xlu0 %2959
        %s2961 = vtos %v2960
        %v2962 = vstv %s2961
        %v2964 = vmul.f32 %v2962, %v465
        %v2965 = vmul.f32 %v2962, %v466
        %v2966 = vmul.f32 %v2962, %v467
        %v2967 = vmul.f32 %v2962, %v468
        %v2972 = vrot.slane %v2964, 2
        %v2973 = vrot.slane %v2965, 2
        %v2974 = vsel %vm660, %v2972, %v2973
        %v2975 = vrot.slane %v2966, 2
        %v2976 = vsel %vm660, %v2973, %v2975
        %v2977 = vrot.slane %v2967, 2
        %v2978 = vsel %vm660, %v2975, %v2977
        %2979 = vrot.lane.b32.xlu0 %v2974, 126
        %v2980 = vpop.permute.xlu0 %2979
        %2981 = vrot.lane.b32.xlu0 %v2976, 126
        %v2982 = vpop.permute.xlu0 %2981
        %2983 = vrot.lane.b32.xlu0 %v2978, 126
        %v2984 = vpop.permute.xlu0 %2983
        %2985 = vrot.lane.b32.xlu0 %v2977, 126
        %v2986 = vpop.permute.xlu0 %2985
        %v2991 = vadd.f32 %v2955, %v2980
        %v2992 = vadd.f32 %v2956, %v2982
        %v2993 = vadd.f32 %v2957, %v2984
        %v2994 = vadd.f32 %v2958, %v2986
        %v2995 = vld [vmem:[%s2 + $0x4] sm:$0x1]
        %s2997 = vtos %v2995
        %v2998 = vstv %s2997
        %v3000 = vadd.f32 %v2991, %v2998
        %v3001 = vadd.f32 %v2992, %v2998
        %v3002 = vadd.f32 %v2993, %v2998
        %v3003 = vadd.f32 %v2994, %v2998
        %v3004 = vmax.f32 %v3000, 0.0
        %v3005 = vmax.f32 %v3001, 0.0
        %v3006 = vmax.f32 %v3002, 0.0
        %v3007 = vmax.f32 %v3003, 0.0
        %3012 = vrot.lane.b32.xlu0 %v3004, 127
        %v3013 = vpop.permute.xlu0 %3012
        %3014 = vrot.lane.b32.xlu0 %v3005, 127
        %v3015 = vpop.permute.xlu0 %3014
        %3016 = vrot.lane.b32.xlu0 %v3006, 127
        %v3017 = vpop.permute.xlu0 %3016
        %3018 = vrot.lane.b32.xlu0 %v3007, 127
        %v3019 = vpop.permute.xlu0 %3018
        %v3024 = vmax.f32 %v3004, %v3013
        %v3025 = vmax.f32 %v3005, %v3015
        %v3026 = vmax.f32 %v3006, %v3017
        %v3027 = vmax.f32 %v3007, %v3019
        %v3032 = vrot.slane %v3024, 1
        %v3033 = vrot.slane %v3025, 1
        %v3034 = vsel %vm559, %v3032, %v3033
        %v3035 = vrot.slane %v3026, 1
        %v3036 = vsel %vm559, %v3033, %v3035
        %v3037 = vrot.slane %v3027, 1
        %v3038 = vsel %vm559, %v3035, %v3037
        %v3043 = vmax.f32 %v3024, %v3034
        %v3044 = vmax.f32 %v3025, %v3036
        %v3045 = vmax.f32 %v3026, %v3038
        %v3046 = vmax.f32 %v3027, %v3037
        %v3048 = vsel %vm807, %v3046, 0
        %3050 = vmatprep.subr.mxu0 0.0
        %3051 = vmatpush1.msra.mxu0 %v3043
        %3052 = vmatprep.subr.mxu0 0.0
        %3053 = vmatpush1.msra.mxu0 %v3044
        %3054 = vmatprep.subr.mxu0 0.0
        %3055 = vmatpush1.msra.mxu0 %v3045
        %3056 = vmatprep.subr.mxu0 0.0
        %3057 = vmatpush1.msra.mxu0 %v3048
        %3058 = vmatprep.subr.mxu0 0.0
        %3059 = vmatpush1.msra.mxu0 0.0
        %3060 = vmatprep.subr.mxu0 0.0
        %3061 = vmatpush1.msra.mxu0 0.0
        %3062 = vmatprep.subr.mxu0 0.0
        %3063 = vmatpush1.msra.mxu0 0.0
        %3064 = vmatprep.subr.mxu0 0.0
        %3065 = vmatpush1.msra.mxu0 0.0
        %3066 = vmatprep.subr.mxu0 0.0
        %3067 = vmatpush1.msra.mxu0 0.0
        %3068 = vmatprep.subr.mxu0 0.0
        %3069 = vmatpush1.msra.mxu0 0.0
        %3070 = vmatprep.subr.mxu0 0.0
        %3071 = vmatpush1.msra.mxu0 0.0
        %3072 = vmatprep.subr.mxu0 0.0
        %3073 = vmatpush1.msra.mxu0 0.0
        %3074 = vmatprep.subr.mxu0 0.0
        %3075 = vmatpush1.msra.mxu0 0.0
        %3076 = vmatprep.subr.mxu0 0.0
        %3077 = vmatpush1.msra.mxu0 0.0
        %3078 = vmatprep.subr.mxu0 0.0
        %3079 = vmatpush1.msra.mxu0 0.0
        %3080 = vmatprep.subr.mxu0 0.0
        %3081 = vmatpush1.msra.mxu0 0.0
        %3082 = vmatprep.subr.mxu0 0.0
        %3083 = vmatpush1.msra.mxu0 0.0
        %3084 = vmatprep.subr.mxu0 0.0
        %3085 = vmatpush1.msra.mxu0 0.0
        %3086 = vmatprep.subr.mxu0 0.0
        %3087 = vmatpush1.msra.mxu0 0.0
        %3088 = vmatprep.subr.mxu0 0.0
        %3089 = vmatpush1.msra.mxu0 0.0
        %3090 = vmatprep.subr.mxu0 0.0
        %3091 = vmatpush1.msra.mxu0 0.0
        %3092 = vmatprep.subr.mxu0 0.0
        %3093 = vmatpush1.msra.mxu0 0.0
        %3094 = vmatprep.subr.mxu0 0.0
        %3095 = vmatpush1.msra.mxu0 0.0
        %3096 = vmatprep.subr.mxu0 0.0
        %3097 = vmatpush1.msra.mxu0 0.0
        %3098 = vmatprep.subr.mxu0 0.0
        %3099 = vmatpush1.msra.mxu0 0.0
        %3100 = vmatprep.subr.mxu0 0.0
        %3101 = vmatpush1.msra.mxu0 0.0
        %3102 = vmatprep.subr.mxu0 0.0
        %3103 = vmatpush1.msra.mxu0 0.0
        %3104 = vmatprep.subr.mxu0 0.0
        %3105 = vmatpush1.msra.mxu0 0.0
        %3106 = vmatprep.subr.mxu0 0.0
        %3107 = vmatpush1.msra.mxu0 0.0
        %3108 = vmatprep.subr.mxu0 0.0
        %3109 = vmatpush1.msra.mxu0 0.0
        %3110 = vmatprep.subr.mxu0 0.0
        %3111 = vmatpush1.msra.mxu0 0.0
        %3112 = vmatprep.subr.mxu0 0.0
        %3113 = vmatpush1.msra.mxu0 0.0
        %3114 = vmatprep.mubr.f32.mxu0 0.0
        %3115 = vmatmul.mubr.f32.gmra.mrb[0].mxu0 %v802
        %v3116 = vpop.f32.mrb[0].mxu0
        %v3117 = vadd.f32 0.0, %v3116
        %v3118 = vpop.f32.mrb[0].mxu0
        %3119 = vmatprep.mubr.f32.mxu0 0.0
        %3120 = vmatmul.mubr.f32.gmra.mrb[0].mxu0 %v805
        %v3121 = vpop.f32.mrb[0].mxu0
        %v3122 = vadd.f32 0.0, %v3121
        %v3123 = vpop.f32.mrb[0].mxu0
        %3124 = vdwg.mxu0
        %v3126 = vsel %vm800, %v3117, 0
        %v3129 = vsel %vm800, %v3122, 0
        %3131 = vmatprep.subr.mxu0 0.0
        %3132 = vmatpush1.msra.mxu0 %v471
        %3133 = vmatprep.subr.mxu0 0.0
        %3134 = vmatpush1.msra.mxu0 %v472
        %3135 = vmatprep.subr.mxu0 0.0
        %3136 = vmatpush1.msra.mxu0 %v473
        %3137 = vmatprep.subr.mxu0 0.0
        %3138 = vmatpush1.msra.mxu0 %v893
        %3139 = vmatprep.subr.mxu0 0.0
        %3140 = vmatpush1.msra.mxu0 0.0
        %3141 = vmatprep.subr.mxu0 0.0
        %3142 = vmatpush1.msra.mxu0 0.0
        %3143 = vmatprep.subr.mxu0 0.0
        %3144 = vmatpush1.msra.mxu0 0.0
        %3145 = vmatprep.subr.mxu0 0.0
        %3146 = vmatpush1.msra.mxu0 0.0
        %3147 = vmatprep.subr.mxu0 0.0
        %3148 = vmatpush1.msra.mxu0 0.0
        %3149 = vmatprep.subr.mxu0 0.0
        %3150 = vmatpush1.msra.mxu0 0.0
        %3151 = vmatprep.subr.mxu0 0.0
        %3152 = vmatpush1.msra.mxu0 0.0
        %3153 = vmatprep.subr.mxu0 0.0
        %3154 = vmatpush1.msra.mxu0 0.0
        %3155 = vmatprep.subr.mxu0 0.0
        %3156 = vmatpush1.msra.mxu0 0.0
        %3157 = vmatprep.subr.mxu0 0.0
        %3158 = vmatpush1.msra.mxu0 0.0
        %3159 = vmatprep.subr.mxu0 0.0
        %3160 = vmatpush1.msra.mxu0 0.0
        %3161 = vmatprep.subr.mxu0 0.0
        %3162 = vmatpush1.msra.mxu0 0.0
        %3163 = vmatprep.subr.mxu0 0.0
        %3164 = vmatpush1.msra.mxu0 0.0
        %3165 = vmatprep.subr.mxu0 0.0
        %3166 = vmatpush1.msra.mxu0 0.0
        %3167 = vmatprep.subr.mxu0 0.0
        %3168 = vmatpush1.msra.mxu0 0.0
        %3169 = vmatprep.subr.mxu0 0.0
        %3170 = vmatpush1.msra.mxu0 0.0
        %3171 = vmatprep.subr.mxu0 0.0
        %3172 = vmatpush1.msra.mxu0 0.0
        %3173 = vmatprep.subr.mxu0 0.0
        %3174 = vmatpush1.msra.mxu0 0.0
        %3175 = vmatprep.subr.mxu0 0.0
        %3176 = vmatpush1.msra.mxu0 0.0
        %3177 = vmatprep.subr.mxu0 0.0
        %3178 = vmatpush1.msra.mxu0 0.0
        %3179 = vmatprep.subr.mxu0 0.0
        %3180 = vmatpush1.msra.mxu0 0.0
        %3181 = vmatprep.subr.mxu0 0.0
        %3182 = vmatpush1.msra.mxu0 0.0
        %3183 = vmatprep.subr.mxu0 0.0
        %3184 = vmatpush1.msra.mxu0 0.0
        %3185 = vmatprep.subr.mxu0 0.0
        %3186 = vmatpush1.msra.mxu0 0.0
        %3187 = vmatprep.subr.mxu0 0.0
        %3188 = vmatpush1.msra.mxu0 0.0
        %3189 = vmatprep.subr.mxu0 0.0
        %3190 = vmatpush1.msra.mxu0 0.0
        %3191 = vmatprep.subr.mxu0 0.0
        %3192 = vmatpush1.msra.mxu0 0.0
        %3193 = vmatprep.subr.mxu0 0.0
        %3194 = vmatpush1.msra.mxu0 0.0
        %3195 = vmatprep.mubr.f32.mxu0 0.0
        %3196 = vmatmul.mubr.f32.gmra.mrb[0].mxu0 %v3126
        %v3197 = vpop.f32.mrb[0].mxu0
        %v3198 = vadd.f32 0.0, %v3197
        %v3199 = vpop.f32.mrb[0].mxu0
        %3200 = vmatprep.mubr.f32.mxu0 0.0
        %3201 = vmatmul.mubr.f32.gmra.mrb[0].mxu0 %v3129
        %v3202 = vpop.f32.mrb[0].mxu0
        %v3203 = vadd.f32 0.0, %v3202
        %v3204 = vpop.f32.mrb[0].mxu0
        %3205 = vdwg.mxu0
        %3206 = vst.msk [vmem:[#allocation2 + $0x4] sm:$0x1] %vm970, %v3198
        %v3208 = vrot.slane %v3198, 1
        %3209 = vrot.lane.b32.xlu0 %v3208, 15
        %v3210 = vpop.permute.xlu0 %3209
        %3212 = vst.msk [vmem:[#allocation2 + $0x4] sm:$0x1] %vm977, %v3210
        %v3213 = vrot.slane %v3198, 2
        %3214 = vrot.lane.b32.xlu0 %v3213, 30
        %v3215 = vpop.permute.xlu0 %3214
        %3217 = vst.msk [vmem:[#allocation2 + $0x4] sm:$0x1] %vm983, %v3215
        %v3218 = vrot.slane %v3198, 3
        %3219 = vrot.lane.b32.xlu0 %v3218, 45
        %v3220 = vpop.permute.xlu0 %3219
        %3222 = vst.msk [vmem:[#allocation2 + $0x4] sm:$0x1] %vm989, %v3220
        %v3223 = vrot.slane %v3198, 4
        %3224 = vrot.lane.b32.xlu0 %v3223, 60
        %v3225 = vpop.permute.xlu0 %3224
        %3227 = vst.msk [vmem:[#allocation2 + $0x4] sm:$0x1] %vm995, %v3225
        %v3228 = vrot.slane %v3198, 5
        %3229 = vrot.lane.b32.xlu0 %v3228, 75
        %v3230 = vpop.permute.xlu0 %3229
        %3232 = vst.msk [vmem:[#allocation2 + $0x4] sm:$0x1] %vm1001, %v3230
        %v3233 = vrot.slane %v3198, 6
        %3234 = vrot.lane.b32.xlu0 %v3233, 90
        %v3235 = vpop.permute.xlu0 %3234
        %3237 = vst.msk [vmem:[#allocation2 + $0x4] sm:$0x1] %vm1007, %v3235
        %v3238 = vrot.slane %v3198, 7
        %3239 = vrot.lane.b32.xlu0 %v3238, 105
        %v3240 = vpop.permute.xlu0 %3239
        %3242 = vst.msk [vmem:[#allocation2 + $0x4] sm:$0x1] %vm1013, %v3240
        %3244 = vrot.lane.b32.xlu0 %v3203, 120
        %v3245 = vpop.permute.xlu0 %3244
        %3247 = vst.msk [vmem:[#allocation2 + $0x4] sm:$0x1] %vm1019, %v3245
        %3248 = vst.msk [vmem:[#allocation2 + $0xc] sm:$0x1] %vm1021, %v3245
        %v3249 = vrot.slane %v3203, 1
        %3250 = vrot.lane.b32.xlu0 %v3249, 7
        %v3251 = vpop.permute.xlu0 %3250
        %3253 = vst.msk [vmem:[#allocation2 + $0xc] sm:$0x1] %vm1027, %v3251
        %v3254 = vrot.slane %v3203, 2
        %3255 = vrot.lane.b32.xlu0 %v3254, 22
        %v3256 = vpop.permute.xlu0 %3255
        %3258 = vst.msk [vmem:[#allocation2 + $0xc] sm:$0x1] %vm1033, %v3256
        %v3259 = vrot.slane %v3203, 3
        %3260 = vrot.lane.b32.xlu0 %v3259, 37
        %v3261 = vpop.permute.xlu0 %3260
        %3263 = vst.msk [vmem:[#allocation2 + $0xc] sm:$0x1] %vm1039, %v3261
        %v3264 = vrot.slane %v3203, 4
        %3265 = vrot.lane.b32.xlu0 %v3264, 52
        %v3266 = vpop.permute.xlu0 %3265
        %3268 = vst.msk [vmem:[#allocation2 + $0xc] sm:$0x1] %vm1045, %v3266
        %v3269 = vrot.slane %v3203, 5
        %3270 = vrot.lane.b32.xlu0 %v3269, 67
        %v3271 = vpop.permute.xlu0 %3270
        %3273 = vst.msk [vmem:[#allocation2 + $0xc] sm:$0x1] %vm1051, %v3271
        %v3274 = vrot.slane %v3203, 6
        %3275 = vrot.lane.b32.xlu0 %v3274, 82
        %v3276 = vpop.permute.xlu0 %3275
        %3278 = vst.msk [vmem:[#allocation2 + $0xc] sm:$0x1] %vm1057, %v3276
        %v3279 = vld [vmem:[%s1 + $0x5] sm:$0x1]
        %s3281 = vtos %v3279
        %v3282 = vstv %s3281
        %v3284 = vmul.f32 %v3282, %v465
        %v3285 = vmul.f32 %v3282, %v466
        %v3286 = vmul.f32 %v3282, %v467
        %v3287 = vmul.f32 %v3282, %v468
        %v3288 = vadd.f32 %v3284, 0.0
        %v3289 = vadd.f32 %v3285, 0.0
        %v3290 = vadd.f32 %v3286, 0.0
        %v3291 = vadd.f32 %v3287, 0.0
        %3292 = vrot.lane.b32.xlu0 %v3279, 127
        %v3293 = vpop.permute.xlu0 %3292
        %s3294 = vtos %v3293
        %v3295 = vstv %s3294
        %v3297 = vmul.f32 %v3295, %v465
        %v3298 = vmul.f32 %v3295, %v466
        %v3299 = vmul.f32 %v3295, %v467
        %v3300 = vmul.f32 %v3295, %v468
        %3305 = vrot.lane.b32.xlu0 %v3297, 127
        %v3306 = vpop.permute.xlu0 %3305
        %3307 = vrot.lane.b32.xlu0 %v3298, 127
        %v3308 = vpop.permute.xlu0 %3307
        %3309 = vrot.lane.b32.xlu0 %v3299, 127
        %v3310 = vpop.permute.xlu0 %3309
        %3311 = vrot.lane.b32.xlu0 %v3300, 127
        %v3312 = vpop.permute.xlu0 %3311
        %v3317 = vadd.f32 %v3288, %v3306
        %v3318 = vadd.f32 %v3289, %v3308
        %v3319 = vadd.f32 %v3290, %v3310
        %v3320 = vadd.f32 %v3291, %v3312
        %3321 = vrot.lane.b32.xlu0 %v3279, 126
        %v3322 = vpop.permute.xlu0 %3321
        %s3323 = vtos %v3322
        %v3324 = vstv %s3323
        %v3326 = vmul.f32 %v3324, %v465
        %v3327 = vmul.f32 %v3324, %v466
        %v3328 = vmul.f32 %v3324, %v467
        %v3329 = vmul.f32 %v3324, %v468
        %3334 = vrot.lane.b32.xlu0 %v3326, 126
        %v3335 = vpop.permute.xlu0 %3334
        %3336 = vrot.lane.b32.xlu0 %v3327, 126
        %v3337 = vpop.permute.xlu0 %3336
        %3338 = vrot.lane.b32.xlu0 %v3328, 126
        %v3339 = vpop.permute.xlu0 %3338
        %3340 = vrot.lane.b32.xlu0 %v3329, 126
        %v3341 = vpop.permute.xlu0 %3340
        %v3346 = vadd.f32 %v3317, %v3335
        %v3347 = vadd.f32 %v3318, %v3337
        %v3348 = vadd.f32 %v3319, %v3339
        %v3349 = vadd.f32 %v3320, %v3341
        %3350 = vrot.lane.b32.xlu0 %v3279, 125
        %v3351 = vpop.permute.xlu0 %3350
        %s3352 = vtos %v3351
        %v3353 = vstv %s3352
        %v3355 = vmul.f32 %v3353, %v465
        %v3356 = vmul.f32 %v3353, %v466
        %v3357 = vmul.f32 %v3353, %v467
        %v3358 = vmul.f32 %v3353, %v468
        %v3363 = vrot.slane %v3355, 1
        %v3364 = vrot.slane %v3356, 1
        %v3365 = vsel %vm559, %v3363, %v3364
        %v3366 = vrot.slane %v3357, 1
        %v3367 = vsel %vm559, %v3364, %v3366
        %v3368 = vrot.slane %v3358, 1
        %v3369 = vsel %vm559, %v3366, %v3368
        %v3374 = vadd.f32 %v3346, %v3365
        %v3375 = vadd.f32 %v3347, %v3367
        %v3376 = vadd.f32 %v3348, %v3369
        %v3377 = vadd.f32 %v3349, %v3368
        %3378 = vrot.lane.b32.xlu0 %v3279, 124
        %v3379 = vpop.permute.xlu0 %3378
        %s3380 = vtos %v3379
        %v3381 = vstv %s3380
        %v3383 = vmul.f32 %v3381, %v465
        %v3384 = vmul.f32 %v3381, %v466
        %v3385 = vmul.f32 %v3381, %v467
        %v3386 = vmul.f32 %v3381, %v468
        %v3391 = vrot.slane %v3383, 1
        %v3392 = vrot.slane %v3384, 1
        %v3393 = vsel %vm559, %v3391, %v3392
        %v3394 = vrot.slane %v3385, 1
        %v3395 = vsel %vm559, %v3392, %v3394
        %v3396 = vrot.slane %v3386, 1
        %v3397 = vsel %vm559, %v3394, %v3396
        %3398 = vrot.lane.b32.xlu0 %v3393, 127
        %v3399 = vpop.permute.xlu0 %3398
        %3400 = vrot.lane.b32.xlu0 %v3395, 127
        %v3401 = vpop.permute.xlu0 %3400
        %3402 = vrot.lane.b32.xlu0 %v3397, 127
        %v3403 = vpop.permute.xlu0 %3402
        %3404 = vrot.lane.b32.xlu0 %v3396, 127
        %v3405 = vpop.permute.xlu0 %3404
        %v3410 = vadd.f32 %v3374, %v3399
        %v3411 = vadd.f32 %v3375, %v3401
        %v3412 = vadd.f32 %v3376, %v3403
        %v3413 = vadd.f32 %v3377, %v3405
        %3414 = vrot.lane.b32.xlu0 %v3279, 123
        %v3415 = vpop.permute.xlu0 %3414
        %s3416 = vtos %v3415
        %v3417 = vstv %s3416
        %v3419 = vmul.f32 %v3417, %v465
        %v3420 = vmul.f32 %v3417, %v466
        %v3421 = vmul.f32 %v3417, %v467
        %v3422 = vmul.f32 %v3417, %v468
        %v3427 = vrot.slane %v3419, 1
        %v3428 = vrot.slane %v3420, 1
        %v3429 = vsel %vm559, %v3427, %v3428
        %v3430 = vrot.slane %v3421, 1
        %v3431 = vsel %vm559, %v3428, %v3430
        %v3432 = vrot.slane %v3422, 1
        %v3433 = vsel %vm559, %v3430, %v3432
        %3434 = vrot.lane.b32.xlu0 %v3429, 126
        %v3435 = vpop.permute.xlu0 %3434
        %3436 = vrot.lane.b32.xlu0 %v3431, 126
        %v3437 = vpop.permute.xlu0 %3436
        %3438 = vrot.lane.b32.xlu0 %v3433, 126
        %v3439 = vpop.permute.xlu0 %3438
        %3440 = vrot.lane.b32.xlu0 %v3432, 126
        %v3441 = vpop.permute.xlu0 %3440
        %v3446 = vadd.f32 %v3410, %v3435
        %v3447 = vadd.f32 %v3411, %v3437
        %v3448 = vadd.f32 %v3412, %v3439
        %v3449 = vadd.f32 %v3413, %v3441
        %3450 = vrot.lane.b32.xlu0 %v3279, 122
        %v3451 = vpop.permute.xlu0 %3450
        %s3452 = vtos %v3451
        %v3453 = vstv %s3452
        %v3455 = vmul.f32 %v3453, %v465
        %v3456 = vmul.f32 %v3453, %v466
        %v3457 = vmul.f32 %v3453, %v467
        %v3458 = vmul.f32 %v3453, %v468
        %v3463 = vrot.slane %v3455, 2
        %v3464 = vrot.slane %v3456, 2
        %v3465 = vsel %vm660, %v3463, %v3464
        %v3466 = vrot.slane %v3457, 2
        %v3467 = vsel %vm660, %v3464, %v3466
        %v3468 = vrot.slane %v3458, 2
        %v3469 = vsel %vm660, %v3466, %v3468
        %v3474 = vadd.f32 %v3446, %v3465
        %v3475 = vadd.f32 %v3447, %v3467
        %v3476 = vadd.f32 %v3448, %v3469
        %v3477 = vadd.f32 %v3449, %v3468
        %3478 = vrot.lane.b32.xlu0 %v3279, 121
        %v3479 = vpop.permute.xlu0 %3478
        %s3480 = vtos %v3479
        %v3481 = vstv %s3480
        %v3483 = vmul.f32 %v3481, %v465
        %v3484 = vmul.f32 %v3481, %v466
        %v3485 = vmul.f32 %v3481, %v467
        %v3486 = vmul.f32 %v3481, %v468
        %v3491 = vrot.slane %v3483, 2
        %v3492 = vrot.slane %v3484, 2
        %v3493 = vsel %vm660, %v3491, %v3492
        %v3494 = vrot.slane %v3485, 2
        %v3495 = vsel %vm660, %v3492, %v3494
        %v3496 = vrot.slane %v3486, 2
        %v3497 = vsel %vm660, %v3494, %v3496
        %3498 = vrot.lane.b32.xlu0 %v3493, 127
        %v3499 = vpop.permute.xlu0 %3498
        %3500 = vrot.lane.b32.xlu0 %v3495, 127
        %v3501 = vpop.permute.xlu0 %3500
        %3502 = vrot.lane.b32.xlu0 %v3497, 127
        %v3503 = vpop.permute.xlu0 %3502
        %3504 = vrot.lane.b32.xlu0 %v3496, 127
        %v3505 = vpop.permute.xlu0 %3504
        %v3510 = vadd.f32 %v3474, %v3499
        %v3511 = vadd.f32 %v3475, %v3501
        %v3512 = vadd.f32 %v3476, %v3503
        %v3513 = vadd.f32 %v3477, %v3505
        %3514 = vrot.lane.b32.xlu0 %v3279, 120
        %v3515 = vpop.permute.xlu0 %3514
        %s3516 = vtos %v3515
        %v3517 = vstv %s3516
        %v3519 = vmul.f32 %v3517, %v465
        %v3520 = vmul.f32 %v3517, %v466
        %v3521 = vmul.f32 %v3517, %v467
        %v3522 = vmul.f32 %v3517, %v468
        %v3527 = vrot.slane %v3519, 2
        %v3528 = vrot.slane %v3520, 2
        %v3529 = vsel %vm660, %v3527, %v3528
        %v3530 = vrot.slane %v3521, 2
        %v3531 = vsel %vm660, %v3528, %v3530
        %v3532 = vrot.slane %v3522, 2
        %v3533 = vsel %vm660, %v3530, %v3532
        %3534 = vrot.lane.b32.xlu0 %v3529, 126
        %v3535 = vpop.permute.xlu0 %3534
        %3536 = vrot.lane.b32.xlu0 %v3531, 126
        %v3537 = vpop.permute.xlu0 %3536
        %3538 = vrot.lane.b32.xlu0 %v3533, 126
        %v3539 = vpop.permute.xlu0 %3538
        %3540 = vrot.lane.b32.xlu0 %v3532, 126
        %v3541 = vpop.permute.xlu0 %3540
        %v3546 = vadd.f32 %v3510, %v3535
        %v3547 = vadd.f32 %v3511, %v3537
        %v3548 = vadd.f32 %v3512, %v3539
        %v3549 = vadd.f32 %v3513, %v3541
        %v3550 = vld [vmem:[%s2 + $0x5] sm:$0x1]
        %s3552 = vtos %v3550
        %v3553 = vstv %s3552
        %v3555 = vadd.f32 %v3546, %v3553
        %v3556 = vadd.f32 %v3547, %v3553
        %v3557 = vadd.f32 %v3548, %v3553
        %v3558 = vadd.f32 %v3549, %v3553
        %v3559 = vmax.f32 %v3555, 0.0
        %v3560 = vmax.f32 %v3556, 0.0
        %v3561 = vmax.f32 %v3557, 0.0
        %v3562 = vmax.f32 %v3558, 0.0
        %3567 = vrot.lane.b32.xlu0 %v3559, 127
        %v3568 = vpop.permute.xlu0 %3567
        %3569 = vrot.lane.b32.xlu0 %v3560, 127
        %v3570 = vpop.permute.xlu0 %3569
        %3571 = vrot.lane.b32.xlu0 %v3561, 127
        %v3572 = vpop.permute.xlu0 %3571
        %3573 = vrot.lane.b32.xlu0 %v3562, 127
        %v3574 = vpop.permute.xlu0 %3573
        %v3579 = vmax.f32 %v3559, %v3568
        %v3580 = vmax.f32 %v3560, %v3570
        %v3581 = vmax.f32 %v3561, %v3572
        %v3582 = vmax.f32 %v3562, %v3574
        %v3587 = vrot.slane %v3579, 1
        %v3588 = vrot.slane %v3580, 1
        %v3589 = vsel %vm559, %v3587, %v3588
        %v3590 = vrot.slane %v3581, 1
        %v3591 = vsel %vm559, %v3588, %v3590
        %v3592 = vrot.slane %v3582, 1
        %v3593 = vsel %vm559, %v3590, %v3592
        %v3598 = vmax.f32 %v3579, %v3589
        %v3599 = vmax.f32 %v3580, %v3591
        %v3600 = vmax.f32 %v3581, %v3593
        %v3601 = vmax.f32 %v3582, %v3592
        %v3603 = vsel %vm807, %v3601, 0
        %3605 = vmatprep.subr.mxu0 0.0
        %3606 = vmatpush1.msra.mxu0 %v3598
        %3607 = vmatprep.subr.mxu0 0.0
        %3608 = vmatpush1.msra.mxu0 %v3599
        %3609 = vmatprep.subr.mxu0 0.0
        %3610 = vmatpush1.msra.mxu0 %v3600
        %3611 = vmatprep.subr.mxu0 0.0
        %3612 = vmatpush1.msra.mxu0 %v3603
        %3613 = vmatprep.subr.mxu0 0.0
        %3614 = vmatpush1.msra.mxu0 0.0
        %3615 = vmatprep.subr.mxu0 0.0
        %3616 = vmatpush1.msra.mxu0 0.0
        %3617 = vmatprep.subr.mxu0 0.0
        %3618 = vmatpush1.msra.mxu0 0.0
        %3619 = vmatprep.subr.mxu0 0.0
        %3620 = vmatpush1.msra.mxu0 0.0
        %3621 = vmatprep.subr.mxu0 0.0
        %3622 = vmatpush1.msra.mxu0 0.0
        %3623 = vmatprep.subr.mxu0 0.0
        %3624 = vmatpush1.msra.mxu0 0.0
        %3625 = vmatprep.subr.mxu0 0.0
        %3626 = vmatpush1.msra.mxu0 0.0
        %3627 = vmatprep.subr.mxu0 0.0
        %3628 = vmatpush1.msra.mxu0 0.0
        %3629 = vmatprep.subr.mxu0 0.0
        %3630 = vmatpush1.msra.mxu0 0.0
        %3631 = vmatprep.subr.mxu0 0.0
        %3632 = vmatpush1.msra.mxu0 0.0
        %3633 = vmatprep.subr.mxu0 0.0
        %3634 = vmatpush1.msra.mxu0 0.0
        %3635 = vmatprep.subr.mxu0 0.0
        %3636 = vmatpush1.msra.mxu0 0.0
        %3637 = vmatprep.subr.mxu0 0.0
        %3638 = vmatpush1.msra.mxu0 0.0
        %3639 = vmatprep.subr.mxu0 0.0
        %3640 = vmatpush1.msra.mxu0 0.0
        %3641 = vmatprep.subr.mxu0 0.0
        %3642 = vmatpush1.msra.mxu0 0.0
        %3643 = vmatprep.subr.mxu0 0.0
        %3644 = vmatpush1.msra.mxu0 0.0
        %3645 = vmatprep.subr.mxu0 0.0
        %3646 = vmatpush1.msra.mxu0 0.0
        %3647 = vmatprep.subr.mxu0 0.0
        %3648 = vmatpush1.msra.mxu0 0.0
        %3649 = vmatprep.subr.mxu0 0.0
        %3650 = vmatpush1.msra.mxu0 0.0
        %3651 = vmatprep.subr.mxu0 0.0
        %3652 = vmatpush1.msra.mxu0 0.0
        %3653 = vmatprep.subr.mxu0 0.0
        %3654 = vmatpush1.msra.mxu0 0.0
        %3655 = vmatprep.subr.mxu0 0.0
        %3656 = vmatpush1.msra.mxu0 0.0
        %3657 = vmatprep.subr.mxu0 0.0
        %3658 = vmatpush1.msra.mxu0 0.0
        %3659 = vmatprep.subr.mxu0 0.0
        %3660 = vmatpush1.msra.mxu0 0.0
        %3661 = vmatprep.subr.mxu0 0.0
        %3662 = vmatpush1.msra.mxu0 0.0
        %3663 = vmatprep.subr.mxu0 0.0
        %3664 = vmatpush1.msra.mxu0 0.0
        %3665 = vmatprep.subr.mxu0 0.0
        %3666 = vmatpush1.msra.mxu0 0.0
        %3667 = vmatprep.subr.mxu0 0.0
        %3668 = vmatpush1.msra.mxu0 0.0
        %3669 = vmatprep.mubr.f32.mxu0 0.0
        %3670 = vmatmul.mubr.f32.gmra.mrb[0].mxu0 %v802
        %v3671 = vpop.f32.mrb[0].mxu0
        %v3672 = vadd.f32 0.0, %v3671
        %v3673 = vpop.f32.mrb[0].mxu0
        %3674 = vmatprep.mubr.f32.mxu0 0.0
        %3675 = vmatmul.mubr.f32.gmra.mrb[0].mxu0 %v805
        %v3676 = vpop.f32.mrb[0].mxu0
        %v3677 = vadd.f32 0.0, %v3676
        %v3678 = vpop.f32.mrb[0].mxu0
        %3679 = vdwg.mxu0
        %v3681 = vsel %vm800, %v3672, 0
        %v3684 = vsel %vm800, %v3677, 0
        %3686 = vmatprep.subr.mxu0 0.0
        %3687 = vmatpush1.msra.mxu0 %v471
        %3688 = vmatprep.subr.mxu0 0.0
        %3689 = vmatpush1.msra.mxu0 %v472
        %3690 = vmatprep.subr.mxu0 0.0
        %3691 = vmatpush1.msra.mxu0 %v473
        %3692 = vmatprep.subr.mxu0 0.0
        %3693 = vmatpush1.msra.mxu0 %v893
        %3694 = vmatprep.subr.mxu0 0.0
        %3695 = vmatpush1.msra.mxu0 0.0
        %3696 = vmatprep.subr.mxu0 0.0
        %3697 = vmatpush1.msra.mxu0 0.0
        %3698 = vmatprep.subr.mxu0 0.0
        %3699 = vmatpush1.msra.mxu0 0.0
        %3700 = vmatprep.subr.mxu0 0.0
        %3701 = vmatpush1.msra.mxu0 0.0
        %3702 = vmatprep.subr.mxu0 0.0
        %3703 = vmatpush1.msra.mxu0 0.0
        %3704 = vmatprep.subr.mxu0 0.0
        %3705 = vmatpush1.msra.mxu0 0.0
        %3706 = vmatprep.subr.mxu0 0.0
        %3707 = vmatpush1.msra.mxu0 0.0
        %3708 = vmatprep.subr.mxu0 0.0
        %3709 = vmatpush1.msra.mxu0 0.0
        %3710 = vmatprep.subr.mxu0 0.0
        %3711 = vmatpush1.msra.mxu0 0.0
        %3712 = vmatprep.subr.mxu0 0.0
        %3713 = vmatpush1.msra.mxu0 0.0
        %3714 = vmatprep.subr.mxu0 0.0
        %3715 = vmatpush1.msra.mxu0 0.0
        %3716 = vmatprep.subr.mxu0 0.0
        %3717 = vmatpush1.msra.mxu0 0.0
        %3718 = vmatprep.subr.mxu0 0.0
        %3719 = vmatpush1.msra.mxu0 0.0
        %3720 = vmatprep.subr.mxu0 0.0
        %3721 = vmatpush1.msra.mxu0 0.0
        %3722 = vmatprep.subr.mxu0 0.0
        %3723 = vmatpush1.msra.mxu0 0.0
        %3724 = vmatprep.subr.mxu0 0.0
        %3725 = vmatpush1.msra.mxu0 0.0
        %3726 = vmatprep.subr.mxu0 0.0
        %3727 = vmatpush1.msra.mxu0 0.0
        %3728 = vmatprep.subr.mxu0 0.0
        %3729 = vmatpush1.msra.mxu0 0.0
        %3730 = vmatprep.subr.mxu0 0.0
        %3731 = vmatpush1.msra.mxu0 0.0
        %3732 = vmatprep.subr.mxu0 0.0
        %3733 = vmatpush1.msra.mxu0 0.0
        %3734 = vmatprep.subr.mxu0 0.0
        %3735 = vmatpush1.msra.mxu0 0.0
        %3736 = vmatprep.subr.mxu0 0.0
        %3737 = vmatpush1.msra.mxu0 0.0
        %3738 = vmatprep.subr.mxu0 0.0
        %3739 = vmatpush1.msra.mxu0 0.0
        %3740 = vmatprep.subr.mxu0 0.0
        %3741 = vmatpush1.msra.mxu0 0.0
        %3742 = vmatprep.subr.mxu0 0.0
        %3743 = vmatpush1.msra.mxu0 0.0
        %3744 = vmatprep.subr.mxu0 0.0
        %3745 = vmatpush1.msra.mxu0 0.0
        %3746 = vmatprep.subr.mxu0 0.0
        %3747 = vmatpush1.msra.mxu0 0.0
        %3748 = vmatprep.subr.mxu0 0.0
        %3749 = vmatpush1.msra.mxu0 0.0
        %3750 = vmatprep.mubr.f32.mxu0 0.0
        %3751 = vmatmul.mubr.f32.gmra.mrb[0].mxu0 %v3681
        %v3752 = vpop.f32.mrb[0].mxu0
        %v3753 = vadd.f32 0.0, %v3752
        %v3754 = vpop.f32.mrb[0].mxu0
        %3755 = vmatprep.mubr.f32.mxu0 0.0
        %3756 = vmatmul.mubr.f32.gmra.mrb[0].mxu0 %v3684
        %v3757 = vpop.f32.mrb[0].mxu0
        %v3758 = vadd.f32 0.0, %v3757
        %v3759 = vpop.f32.mrb[0].mxu0
        %3760 = vdwg.mxu0
        %3761 = vst.msk [vmem:[#allocation2 + $0x5] sm:$0x1] %vm970, %v3753
        %v3763 = vrot.slane %v3753, 1
        %3764 = vrot.lane.b32.xlu0 %v3763, 15
        %v3765 = vpop.permute.xlu0 %3764
        %3767 = vst.msk [vmem:[#allocation2 + $0x5] sm:$0x1] %vm977, %v3765
        %v3768 = vrot.slane %v3753, 2
        %3769 = vrot.lane.b32.xlu0 %v3768, 30
        %v3770 = vpop.permute.xlu0 %3769
        %3772 = vst.msk [vmem:[#allocation2 + $0x5] sm:$0x1] %vm983, %v3770
        %v3773 = vrot.slane %v3753, 3
        %3774 = vrot.lane.b32.xlu0 %v3773, 45
        %v3775 = vpop.permute.xlu0 %3774
        %3777 = vst.msk [vmem:[#allocation2 + $0x5] sm:$0x1] %vm989, %v3775
        %v3778 = vrot.slane %v3753, 4
        %3779 = vrot.lane.b32.xlu0 %v3778, 60
        %v3780 = vpop.permute.xlu0 %3779
        %3782 = vst.msk [vmem:[#allocation2 + $0x5] sm:$0x1] %vm995, %v3780
        %v3783 = vrot.slane %v3753, 5
        %3784 = vrot.lane.b32.xlu0 %v3783, 75
        %v3785 = vpop.permute.xlu0 %3784
        %3787 = vst.msk [vmem:[#allocation2 + $0x5] sm:$0x1] %vm1001, %v3785
        %v3788 = vrot.slane %v3753, 6
        %3789 = vrot.lane.b32.xlu0 %v3788, 90
        %v3790 = vpop.permute.xlu0 %3789
        %3792 = vst.msk [vmem:[#allocation2 + $0x5] sm:$0x1] %vm1007, %v3790
        %v3793 = vrot.slane %v3753, 7
        %3794 = vrot.lane.b32.xlu0 %v3793, 105
        %v3795 = vpop.permute.xlu0 %3794
        %3797 = vst.msk [vmem:[#allocation2 + $0x5] sm:$0x1] %vm1013, %v3795
        %3799 = vrot.lane.b32.xlu0 %v3758, 120
        %v3800 = vpop.permute.xlu0 %3799
        %3802 = vst.msk [vmem:[#allocation2 + $0x5] sm:$0x1] %vm1019, %v3800
        %3803 = vst.msk [vmem:[#allocation2 + $0xd] sm:$0x1] %vm1021, %v3800
        %v3804 = vrot.slane %v3758, 1
        %3805 = vrot.lane.b32.xlu0 %v3804, 7
        %v3806 = vpop.permute.xlu0 %3805
        %3808 = vst.msk [vmem:[#allocation2 + $0xd] sm:$0x1] %vm1027, %v3806
        %v3809 = vrot.slane %v3758, 2
        %3810 = vrot.lane.b32.xlu0 %v3809, 22
        %v3811 = vpop.permute.xlu0 %3810
        %3813 = vst.msk [vmem:[#allocation2 + $0xd] sm:$0x1] %vm1033, %v3811
        %v3814 = vrot.slane %v3758, 3
        %3815 = vrot.lane.b32.xlu0 %v3814, 37
        %v3816 = vpop.permute.xlu0 %3815
        %3818 = vst.msk [vmem:[#allocation2 + $0xd] sm:$0x1] %vm1039, %v3816
        %v3819 = vrot.slane %v3758, 4
        %3820 = vrot.lane.b32.xlu0 %v3819, 52
        %v3821 = vpop.permute.xlu0 %3820
        %3823 = vst.msk [vmem:[#allocation2 + $0xd] sm:$0x1] %vm1045, %v3821
        %v3824 = vrot.slane %v3758, 5
        %3825 = vrot.lane.b32.xlu0 %v3824, 67
        %v3826 = vpop.permute.xlu0 %3825
        %3828 = vst.msk [vmem:[#allocation2 + $0xd] sm:$0x1] %vm1051, %v3826
        %v3829 = vrot.slane %v3758, 6
        %3830 = vrot.lane.b32.xlu0 %v3829, 82
        %v3831 = vpop.permute.xlu0 %3830
        %3833 = vst.msk [vmem:[#allocation2 + $0xd] sm:$0x1] %vm1057, %v3831
        %v3834 = vld [vmem:[#allocation2] sm:$0x3f]
        %v3835 = vld [vmem:[#allocation2 + $0x8] sm:$0x3f]
        %v3836 = vld [vmem:[%s5] sm:$0xff]
        %v3837 = vld [vmem:[%s5 + $0x8] sm:$0xff]
        %s3838 = scalar_lea.vmem %s5, 16
        %v3839 = vld [vmem:[%s3838] sm:$0xff]
        %v3840 = vld [vmem:[%s3838 + $0x8] sm:$0xff]
        %3843 = vrot.lane.b32.xlu0 %v3834, 127
        %v3844 = vpop.permute.xlu0 %3843
        %3845 = vrot.lane.b32.xlu0 %v3835, 127
        %v3846 = vpop.permute.xlu0 %3845
        %vm3847 = vcmask 1039360
        %v3848 = vsel %vm3847, %v3844, %v3846
        %vm3849 = vcmask 48128
        %v3851 = vsel %vm3849, %v3839, 0
        %v3854 = vsel %vm3849, %v3840, 0
        %v3856 = vsel %vm660, %v3848, 0
        %v3858 = vsel %vm660, %v3846, 0
        %3860 = vmatprep.subr.mxu0 %v3858
        %3861 = vmatpush1.msra.mxu0 %v3856
        %3862 = vmatprep.subr.mxu0 0.0
        %3863 = vmatpush1.msra.mxu0 0.0
        %3864 = vmatprep.subr.mxu0 0.0
        %3865 = vmatpush1.msra.mxu0 0.0
        %3866 = vmatprep.subr.mxu0 0.0
        %3867 = vmatpush1.msra.mxu0 0.0
        %3868 = vmatprep.subr.mxu0 0.0
        %3869 = vmatpush1.msra.mxu0 0.0
        %3870 = vmatprep.subr.mxu0 0.0
        %3871 = vmatpush1.msra.mxu0 0.0
        %3872 = vmatprep.subr.mxu0 0.0
        %3873 = vmatpush1.msra.mxu0 0.0
        %3874 = vmatprep.subr.mxu0 0.0
        %3875 = vmatpush1.msra.mxu0 0.0
        %3876 = vmatprep.subr.mxu0 0.0
        %3877 = vmatpush1.msra.mxu0 0.0
        %3878 = vmatprep.subr.mxu0 0.0
        %3879 = vmatpush1.msra.mxu0 0.0
        %3880 = vmatprep.subr.mxu0 0.0
        %3881 = vmatpush1.msra.mxu0 0.0
        %3882 = vmatprep.subr.mxu0 0.0
        %3883 = vmatpush1.msra.mxu0 0.0
        %3884 = vmatprep.subr.mxu0 0.0
        %3885 = vmatpush1.msra.mxu0 0.0
        %3886 = vmatprep.subr.mxu0 0.0
        %3887 = vmatpush1.msra.mxu0 0.0
        %3888 = vmatprep.subr.mxu0 0.0
        %3889 = vmatpush1.msra.mxu0 0.0
        %3890 = vmatprep.subr.mxu0 0.0
        %3891 = vmatpush1.msra.mxu0 0.0
        %3892 = vmatprep.subr.mxu0 0.0
        %3893 = vmatpush1.msra.mxu0 0.0
        %3894 = vmatprep.subr.mxu0 0.0
        %3895 = vmatpush1.msra.mxu0 0.0
        %3896 = vmatprep.subr.mxu0 0.0
        %3897 = vmatpush1.msra.mxu0 0.0
        %3898 = vmatprep.subr.mxu0 0.0
        %3899 = vmatpush1.msra.mxu0 0.0
        %3900 = vmatprep.subr.mxu0 0.0
        %3901 = vmatpush1.msra.mxu0 0.0
        %3902 = vmatprep.subr.mxu0 0.0
        %3903 = vmatpush1.msra.mxu0 0.0
        %3904 = vmatprep.subr.mxu0 0.0
        %3905 = vmatpush1.msra.mxu0 0.0
        %3906 = vmatprep.subr.mxu0 0.0
        %3907 = vmatpush1.msra.mxu0 0.0
        %3908 = vmatprep.subr.mxu0 0.0
        %3909 = vmatpush1.msra.mxu0 0.0
        %3910 = vmatprep.subr.mxu0 0.0
        %3911 = vmatpush1.msra.mxu0 0.0
        %3912 = vmatprep.subr.mxu0 0.0
        %3913 = vmatpush1.msra.mxu0 0.0
        %3914 = vmatprep.subr.mxu0 0.0
        %3915 = vmatpush1.msra.mxu0 0.0
        %3916 = vmatprep.subr.mxu0 0.0
        %3917 = vmatpush1.msra.mxu0 0.0
        %3918 = vmatprep.subr.mxu0 0.0
        %3919 = vmatpush1.msra.mxu0 0.0
        %3920 = vmatprep.subr.mxu0 0.0
        %3921 = vmatpush1.msra.mxu0 0.0
        %3922 = vmatprep.subr.mxu0 0.0
        %3923 = vmatpush1.msra.mxu0 0.0
        %3924 = vmatprep.mubr.f32.mxu0 0.0
        %3925 = vmatmul.mubr.f32.gmra.mrb[0].mxu0 %v3851
        %v3926 = vpop.f32.mrb[0].mxu0
        %v3927 = vadd.f32 0.0, %v3926
        %v3928 = vpop.f32.mrb[0].mxu0
        %v3929 = vadd.f32 0.0, %v3928
        %3930 = vmatprep.mubr.f32.mxu0 0.0
        %3931 = vmatmul.mubr.f32.gmra.mrb[0].mxu0 %v3854
        %v3932 = vpop.f32.mrb[0].mxu0
        %v3933 = vadd.f32 0.0, %v3932
        %v3934 = vpop.f32.mrb[0].mxu0
        %v3935 = vadd.f32 0.0, %v3934
        %3936 = vdwg.mxu0
        %v3938 = vsel %vm3849, %v3836, 0
        %v3941 = vsel %vm3849, %v3837, 0
        %v3943 = vsel %vm660, %v3834, 0
        %v3945 = vsel %vm660, %v3835, 0
        %3947 = vmatprep.subr.mxu0 %v3945
        %3948 = vmatpush1.msra.mxu0 %v3943
        %3949 = vmatprep.subr.mxu0 0.0
        %3950 = vmatpush1.msra.mxu0 0.0
        %3951 = vmatprep.subr.mxu0 0.0
        %3952 = vmatpush1.msra.mxu0 0.0
        %3953 = vmatprep.subr.mxu0 0.0
        %3954 = vmatpush1.msra.mxu0 0.0
        %3955 = vmatprep.subr.mxu0 0.0
        %3956 = vmatpush1.msra.mxu0 0.0
        %3957 = vmatprep.subr.mxu0 0.0
        %3958 = vmatpush1.msra.mxu0 0.0
        %3959 = vmatprep.subr.mxu0 0.0
        %3960 = vmatpush1.msra.mxu0 0.0
        %3961 = vmatprep.subr.mxu0 0.0
        %3962 = vmatpush1.msra.mxu0 0.0
        %3963 = vmatprep.subr.mxu0 0.0
        %3964 = vmatpush1.msra.mxu0 0.0
        %3965 = vmatprep.subr.mxu0 0.0
        %3966 = vmatpush1.msra.mxu0 0.0
        %3967 = vmatprep.subr.mxu0 0.0
        %3968 = vmatpush1.msra.mxu0 0.0
        %3969 = vmatprep.subr.mxu0 0.0
        %3970 = vmatpush1.msra.mxu0 0.0
        %3971 = vmatprep.subr.mxu0 0.0
        %3972 = vmatpush1.msra.mxu0 0.0
        %3973 = vmatprep.subr.mxu0 0.0
        %3974 = vmatpush1.msra.mxu0 0.0
        %3975 = vmatprep.subr.mxu0 0.0
        %3976 = vmatpush1.msra.mxu0 0.0
        %3977 = vmatprep.subr.mxu0 0.0
        %3978 = vmatpush1.msra.mxu0 0.0
        %3979 = vmatprep.subr.mxu0 0.0
        %3980 = vmatpush1.msra.mxu0 0.0
        %3981 = vmatprep.subr.mxu0 0.0
        %3982 = vmatpush1.msra.mxu0 0.0
        %3983 = vmatprep.subr.mxu0 0.0
        %3984 = vmatpush1.msra.mxu0 0.0
        %3985 = vmatprep.subr.mxu0 0.0
        %3986 = vmatpush1.msra.mxu0 0.0
        %3987 = vmatprep.subr.mxu0 0.0
        %3988 = vmatpush1.msra.mxu0 0.0
        %3989 = vmatprep.subr.mxu0 0.0
        %3990 = vmatpush1.msra.mxu0 0.0
        %3991 = vmatprep.subr.mxu0 0.0
        %3992 = vmatpush1.msra.mxu0 0.0
        %3993 = vmatprep.subr.mxu0 0.0
        %3994 = vmatpush1.msra.mxu0 0.0
        %3995 = vmatprep.subr.mxu0 0.0
        %3996 = vmatpush1.msra.mxu0 0.0
        %3997 = vmatprep.subr.mxu0 0.0
        %3998 = vmatpush1.msra.mxu0 0.0
        %3999 = vmatprep.subr.mxu0 0.0
        %4000 = vmatpush1.msra.mxu0 0.0
        %4001 = vmatprep.subr.mxu0 0.0
        %4002 = vmatpush1.msra.mxu0 0.0
        %4003 = vmatprep.subr.mxu0 0.0
        %4004 = vmatpush1.msra.mxu0 0.0
        %4005 = vmatprep.subr.mxu0 0.0
        %4006 = vmatpush1.msra.mxu0 0.0
        %4007 = vmatprep.subr.mxu0 0.0
        %4008 = vmatpush1.msra.mxu0 0.0
        %4009 = vmatprep.subr.mxu0 0.0
        %4010 = vmatpush1.msra.mxu0 0.0
        %4011 = vmatprep.mubr.f32.mxu0 0.0
        %4012 = vmatmul.mubr.f32.gmra.mrb[0].mxu0 %v3938
        %v4013 = vpop.f32.mrb[0].mxu0
        %v4014 = vadd.f32 %v3927, %v4013
        %v4015 = vpop.f32.mrb[0].mxu0
        %v4016 = vadd.f32 %v3929, %v4015
        %4017 = vmatprep.mubr.f32.mxu0 0.0
        %4018 = vmatmul.mubr.f32.gmra.mrb[0].mxu0 %v3941
        %v4019 = vpop.f32.mrb[0].mxu0
        %v4020 = vadd.f32 %v3933, %v4019
        %v4021 = vpop.f32.mrb[0].mxu0
        %v4022 = vadd.f32 %v3935, %v4021
        %4023 = vdwg.mxu0
        %s4024 = scalar_lea.vmem %s5, 32
        %v4025 = vld [vmem:[%s4024] sm:$0xff]
        %v4026 = vld [vmem:[%s4024 + $0x8] sm:$0xff]
        %4027 = vrot.lane.b32.xlu0 %v3834, 126
        %v4028 = vpop.permute.xlu0 %4027
        %4029 = vrot.lane.b32.xlu0 %v3835, 126
        %v4030 = vpop.permute.xlu0 %4029
        %vm4031 = vcmask 1031168
        %v4032 = vsel %vm4031, %v4028, %v4030
        %v4034 = vsel %vm3849, %v4025, 0
        %v4037 = vsel %vm3849, %v4026, 0
        %v4039 = vsel %vm660, %v4032, 0
        %v4041 = vsel %vm660, %v4030, 0
        %4043 = vmatprep.subr.mxu0 %v4041
        %4044 = vmatpush1.msra.mxu0 %v4039
        %4045 = vmatprep.subr.mxu0 0.0
        %4046 = vmatpush1.msra.mxu0 0.0
        %4047 = vmatprep.subr.mxu0 0.0
        %4048 = vmatpush1.msra.mxu0 0.0
        %4049 = vmatprep.subr.mxu0 0.0
        %4050 = vmatpush1.msra.mxu0 0.0
        %4051 = vmatprep.subr.mxu0 0.0
        %4052 = vmatpush1.msra.mxu0 0.0
        %4053 = vmatprep.subr.mxu0 0.0
        %4054 = vmatpush1.msra.mxu0 0.0
        %4055 = vmatprep.subr.mxu0 0.0
        %4056 = vmatpush1.msra.mxu0 0.0
        %4057 = vmatprep.subr.mxu0 0.0
        %4058 = vmatpush1.msra.mxu0 0.0
        %4059 = vmatprep.subr.mxu0 0.0
        %4060 = vmatpush1.msra.mxu0 0.0
        %4061 = vmatprep.subr.mxu0 0.0
        %4062 = vmatpush1.msra.mxu0 0.0
        %4063 = vmatprep.subr.mxu0 0.0
        %4064 = vmatpush1.msra.mxu0 0.0
        %4065 = vmatprep.subr.mxu0 0.0
        %4066 = vmatpush1.msra.mxu0 0.0
        %4067 = vmatprep.subr.mxu0 0.0
        %4068 = vmatpush1.msra.mxu0 0.0
        %4069 = vmatprep.subr.mxu0 0.0
        %4070 = vmatpush1.msra.mxu0 0.0
        %4071 = vmatprep.subr.mxu0 0.0
        %4072 = vmatpush1.msra.mxu0 0.0
        %4073 = vmatprep.subr.mxu0 0.0
        %4074 = vmatpush1.msra.mxu0 0.0
        %4075 = vmatprep.subr.mxu0 0.0
        %4076 = vmatpush1.msra.mxu0 0.0
        %4077 = vmatprep.subr.mxu0 0.0
        %4078 = vmatpush1.msra.mxu0 0.0
        %4079 = vmatprep.subr.mxu0 0.0
        %4080 = vmatpush1.msra.mxu0 0.0
        %4081 = vmatprep.subr.mxu0 0.0
        %4082 = vmatpush1.msra.mxu0 0.0
        %4083 = vmatprep.subr.mxu0 0.0
        %4084 = vmatpush1.msra.mxu0 0.0
        %4085 = vmatprep.subr.mxu0 0.0
        %4086 = vmatpush1.msra.mxu0 0.0
        %4087 = vmatprep.subr.mxu0 0.0
        %4088 = vmatpush1.msra.mxu0 0.0
        %4089 = vmatprep.subr.mxu0 0.0
        %4090 = vmatpush1.msra.mxu0 0.0
        %4091 = vmatprep.subr.mxu0 0.0
        %4092 = vmatpush1.msra.mxu0 0.0
        %4093 = vmatprep.subr.mxu0 0.0
        %4094 = vmatpush1.msra.mxu0 0.0
        %4095 = vmatprep.subr.mxu0 0.0
        %4096 = vmatpush1.msra.mxu0 0.0
        %4097 = vmatprep.subr.mxu0 0.0
        %4098 = vmatpush1.msra.mxu0 0.0
        %4099 = vmatprep.subr.mxu0 0.0
        %4100 = vmatpush1.msra.mxu0 0.0
        %4101 = vmatprep.subr.mxu0 0.0
        %4102 = vmatpush1.msra.mxu0 0.0
        %4103 = vmatprep.subr.mxu0 0.0
        %4104 = vmatpush1.msra.mxu0 0.0
        %4105 = vmatprep.subr.mxu0 0.0
        %4106 = vmatpush1.msra.mxu0 0.0
        %4107 = vmatprep.mubr.f32.mxu0 0.0
        %4108 = vmatmul.mubr.f32.gmra.mrb[0].mxu0 %v4034
        %v4109 = vpop.f32.mrb[0].mxu0
        %v4110 = vadd.f32 0.0, %v4109
        %v4111 = vpop.f32.mrb[0].mxu0
        %v4112 = vadd.f32 0.0, %v4111
        %4113 = vmatprep.mubr.f32.mxu0 0.0
        %4114 = vmatmul.mubr.f32.gmra.mrb[0].mxu0 %v4037
        %v4115 = vpop.f32.mrb[0].mxu0
        %v4116 = vadd.f32 0.0, %v4115
        %v4117 = vpop.f32.mrb[0].mxu0
        %v4118 = vadd.f32 0.0, %v4117
        %4119 = vdwg.mxu0
        %v4120 = vadd.f32 %v4014, %v4110
        %v4121 = vadd.f32 %v4016, %v4112
        %v4122 = vadd.f32 %v4020, %v4116
        %v4123 = vadd.f32 %v4022, %v4118
        %s4124 = scalar_lea.vmem %s5, 48
        %v4125 = vld [vmem:[%s4124] sm:$0xff]
        %v4126 = vld [vmem:[%s4124 + $0x8] sm:$0xff]
        %4127 = vrot.lane.b32.xlu0 %v3834, 125
        %v4128 = vpop.permute.xlu0 %4127
        %4129 = vrot.lane.b32.xlu0 %v3835, 125
        %v4130 = vpop.permute.xlu0 %4129
        %vm4131 = vcmask 1022976
        %v4132 = vsel %vm4131, %v4128, %v4130
        %v4134 = vsel %vm3849, %v4125, 0
        %v4137 = vsel %vm3849, %v4126, 0
        %v4139 = vsel %vm660, %v4132, 0
        %v4141 = vsel %vm660, %v4130, 0
        %4143 = vmatprep.subr.mxu0 %v4141
        %4144 = vmatpush1.msra.mxu0 %v4139
        %4145 = vmatprep.subr.mxu0 0.0
        %4146 = vmatpush1.msra.mxu0 0.0
        %4147 = vmatprep.subr.mxu0 0.0
        %4148 = vmatpush1.msra.mxu0 0.0
        %4149 = vmatprep.subr.mxu0 0.0
        %4150 = vmatpush1.msra.mxu0 0.0
        %4151 = vmatprep.subr.mxu0 0.0
        %4152 = vmatpush1.msra.mxu0 0.0
        %4153 = vmatprep.subr.mxu0 0.0
        %4154 = vmatpush1.msra.mxu0 0.0
        %4155 = vmatprep.subr.mxu0 0.0
        %4156 = vmatpush1.msra.mxu0 0.0
        %4157 = vmatprep.subr.mxu0 0.0
        %4158 = vmatpush1.msra.mxu0 0.0
        %4159 = vmatprep.subr.mxu0 0.0
        %4160 = vmatpush1.msra.mxu0 0.0
        %4161 = vmatprep.subr.mxu0 0.0
        %4162 = vmatpush1.msra.mxu0 0.0
        %4163 = vmatprep.subr.mxu0 0.0
        %4164 = vmatpush1.msra.mxu0 0.0
        %4165 = vmatprep.subr.mxu0 0.0
        %4166 = vmatpush1.msra.mxu0 0.0
        %4167 = vmatprep.subr.mxu0 0.0
        %4168 = vmatpush1.msra.mxu0 0.0
        %4169 = vmatprep.subr.mxu0 0.0
        %4170 = vmatpush1.msra.mxu0 0.0
        %4171 = vmatprep.subr.mxu0 0.0
        %4172 = vmatpush1.msra.mxu0 0.0
        %4173 = vmatprep.subr.mxu0 0.0
        %4174 = vmatpush1.msra.mxu0 0.0
        %4175 = vmatprep.subr.mxu0 0.0
        %4176 = vmatpush1.msra.mxu0 0.0
        %4177 = vmatprep.subr.mxu0 0.0
        %4178 = vmatpush1.msra.mxu0 0.0
        %4179 = vmatprep.subr.mxu0 0.0
        %4180 = vmatpush1.msra.mxu0 0.0
        %4181 = vmatprep.subr.mxu0 0.0
        %4182 = vmatpush1.msra.mxu0 0.0
        %4183 = vmatprep.subr.mxu0 0.0
        %4184 = vmatpush1.msra.mxu0 0.0
        %4185 = vmatprep.subr.mxu0 0.0
        %4186 = vmatpush1.msra.mxu0 0.0
        %4187 = vmatprep.subr.mxu0 0.0
        %4188 = vmatpush1.msra.mxu0 0.0
        %4189 = vmatprep.subr.mxu0 0.0
        %4190 = vmatpush1.msra.mxu0 0.0
        %4191 = vmatprep.subr.mxu0 0.0
        %4192 = vmatpush1.msra.mxu0 0.0
        %4193 = vmatprep.subr.mxu0 0.0
        %4194 = vmatpush1.msra.mxu0 0.0
        %4195 = vmatprep.subr.mxu0 0.0
        %4196 = vmatpush1.msra.mxu0 0.0
        %4197 = vmatprep.subr.mxu0 0.0
        %4198 = vmatpush1.msra.mxu0 0.0
        %4199 = vmatprep.subr.mxu0 0.0
        %4200 = vmatpush1.msra.mxu0 0.0
        %4201 = vmatprep.subr.mxu0 0.0
        %4202 = vmatpush1.msra.mxu0 0.0
        %4203 = vmatprep.subr.mxu0 0.0
        %4204 = vmatpush1.msra.mxu0 0.0
        %4205 = vmatprep.subr.mxu0 0.0
        %4206 = vmatpush1.msra.mxu0 0.0
        %4207 = vmatprep.mubr.f32.mxu0 0.0
        %4208 = vmatmul.mubr.f32.gmra.mrb[0].mxu0 %v4134
        %v4209 = vpop.f32.mrb[0].mxu0
        %v4210 = vadd.f32 0.0, %v4209
        %v4211 = vpop.f32.mrb[0].mxu0
        %v4212 = vadd.f32 0.0, %v4211
        %4213 = vmatprep.mubr.f32.mxu0 0.0
        %4214 = vmatmul.mubr.f32.gmra.mrb[0].mxu0 %v4137
        %v4215 = vpop.f32.mrb[0].mxu0
        %v4216 = vadd.f32 0.0, %v4215
        %v4217 = vpop.f32.mrb[0].mxu0
        %v4218 = vadd.f32 0.0, %v4217
        %4219 = vdwg.mxu0
        %v4220 = vadd.f32 %v4120, %v4210
        %v4221 = vadd.f32 %v4121, %v4212
        %v4222 = vadd.f32 %v4122, %v4216
        %v4223 = vadd.f32 %v4123, %v4218
        %s4224 = scalar_lea.vmem %s5, 64
        %v4225 = vld [vmem:[%s4224] sm:$0xff]
        %v4226 = vld [vmem:[%s4224 + $0x8] sm:$0xff]
        %4227 = vrot.lane.b32.xlu0 %v3834, 124
        %v4228 = vpop.permute.xlu0 %4227
        %4229 = vrot.lane.b32.xlu0 %v3835, 124
        %v4230 = vpop.permute.xlu0 %4229
        %vm4231 = vcmask 1014784
        %v4232 = vsel %vm4231, %v4228, %v4230
        %v4234 = vsel %vm3849, %v4225, 0
        %v4237 = vsel %vm3849, %v4226, 0
        %v4239 = vsel %vm660, %v4232, 0
        %v4241 = vsel %vm660, %v4230, 0
        %4243 = vmatprep.subr.mxu0 %v4241
        %4244 = vmatpush1.msra.mxu0 %v4239
        %4245 = vmatprep.subr.mxu0 0.0
        %4246 = vmatpush1.msra.mxu0 0.0
        %4247 = vmatprep.subr.mxu0 0.0
        %4248 = vmatpush1.msra.mxu0 0.0
        %4249 = vmatprep.subr.mxu0 0.0
        %4250 = vmatpush1.msra.mxu0 0.0
        %4251 = vmatprep.subr.mxu0 0.0
        %4252 = vmatpush1.msra.mxu0 0.0
        %4253 = vmatprep.subr.mxu0 0.0
        %4254 = vmatpush1.msra.mxu0 0.0
        %4255 = vmatprep.subr.mxu0 0.0
        %4256 = vmatpush1.msra.mxu0 0.0
        %4257 = vmatprep.subr.mxu0 0.0
        %4258 = vmatpush1.msra.mxu0 0.0
        %4259 = vmatprep.subr.mxu0 0.0
        %4260 = vmatpush1.msra.mxu0 0.0
        %4261 = vmatprep.subr.mxu0 0.0
        %4262 = vmatpush1.msra.mxu0 0.0
        %4263 = vmatprep.subr.mxu0 0.0
        %4264 = vmatpush1.msra.mxu0 0.0
        %4265 = vmatprep.subr.mxu0 0.0
        %4266 = vmatpush1.msra.mxu0 0.0
        %4267 = vmatprep.subr.mxu0 0.0
        %4268 = vmatpush1.msra.mxu0 0.0
        %4269 = vmatprep.subr.mxu0 0.0
        %4270 = vmatpush1.msra.mxu0 0.0
        %4271 = vmatprep.subr.mxu0 0.0
        %4272 = vmatpush1.msra.mxu0 0.0
        %4273 = vmatprep.subr.mxu0 0.0
        %4274 = vmatpush1.msra.mxu0 0.0
        %4275 = vmatprep.subr.mxu0 0.0
        %4276 = vmatpush1.msra.mxu0 0.0
        %4277 = vmatprep.subr.mxu0 0.0
        %4278 = vmatpush1.msra.mxu0 0.0
        %4279 = vmatprep.subr.mxu0 0.0
        %4280 = vmatpush1.msra.mxu0 0.0
        %4281 = vmatprep.subr.mxu0 0.0
        %4282 = vmatpush1.msra.mxu0 0.0
        %4283 = vmatprep.subr.mxu0 0.0
        %4284 = vmatpush1.msra.mxu0 0.0
        %4285 = vmatprep.subr.mxu0 0.0
        %4286 = vmatpush1.msra.mxu0 0.0
        %4287 = vmatprep.subr.mxu0 0.0
        %4288 = vmatpush1.msra.mxu0 0.0
        %4289 = vmatprep.subr.mxu0 0.0
        %4290 = vmatpush1.msra.mxu0 0.0
        %4291 = vmatprep.subr.mxu0 0.0
        %4292 = vmatpush1.msra.mxu0 0.0
        %4293 = vmatprep.subr.mxu0 0.0
        %4294 = vmatpush1.msra.mxu0 0.0
        %4295 = vmatprep.subr.mxu0 0.0
        %4296 = vmatpush1.msra.mxu0 0.0
        %4297 = vmatprep.subr.mxu0 0.0
        %4298 = vmatpush1.msra.mxu0 0.0
        %4299 = vmatprep.subr.mxu0 0.0
        %4300 = vmatpush1.msra.mxu0 0.0
        %4301 = vmatprep.subr.mxu0 0.0
        %4302 = vmatpush1.msra.mxu0 0.0
        %4303 = vmatprep.subr.mxu0 0.0
        %4304 = vmatpush1.msra.mxu0 0.0
        %4305 = vmatprep.subr.mxu0 0.0
        %4306 = vmatpush1.msra.mxu0 0.0
        %4307 = vmatprep.mubr.f32.mxu0 0.0
        %4308 = vmatmul.mubr.f32.gmra.mrb[0].mxu0 %v4234
        %v4309 = vpop.f32.mrb[0].mxu0
        %v4310 = vadd.f32 0.0, %v4309
        %v4311 = vpop.f32.mrb[0].mxu0
        %v4312 = vadd.f32 0.0, %v4311
        %4313 = vmatprep.mubr.f32.mxu0 0.0
        %4314 = vmatmul.mubr.f32.gmra.mrb[0].mxu0 %v4237
        %v4315 = vpop.f32.mrb[0].mxu0
        %v4316 = vadd.f32 0.0, %v4315
        %v4317 = vpop.f32.mrb[0].mxu0
        %v4318 = vadd.f32 0.0, %v4317
        %4319 = vdwg.mxu0
        %v4320 = vadd.f32 %v4220, %v4310
        %v4321 = vadd.f32 %v4221, %v4312
        %v4322 = vadd.f32 %v4222, %v4316
        %v4323 = vadd.f32 %v4223, %v4318
        %s4324 = scalar_lea.vmem %s5, 80
        %v4325 = vld [vmem:[%s4324] sm:$0xff]
        %v4326 = vld [vmem:[%s4324 + $0x8] sm:$0xff]
        %4327 = vrot.lane.b32.xlu0 %v3834, 113
        %v4328 = vpop.permute.xlu0 %4327
        %4329 = vrot.lane.b32.xlu0 %v3835, 113
        %v4330 = vpop.permute.xlu0 %4329
        %vm4331 = vcmask 924672
        %v4332 = vsel %vm4331, %v4328, %v4330
        %v4334 = vsel %vm3849, %v4325, 0
        %v4337 = vsel %vm3849, %v4326, 0
        %v4339 = vsel %vm660, %v4332, 0
        %v4341 = vsel %vm660, %v4330, 0
        %4343 = vmatprep.subr.mxu0 %v4341
        %4344 = vmatpush1.msra.mxu0 %v4339
        %4345 = vmatprep.subr.mxu0 0.0
        %4346 = vmatpush1.msra.mxu0 0.0
        %4347 = vmatprep.subr.mxu0 0.0
        %4348 = vmatpush1.msra.mxu0 0.0
        %4349 = vmatprep.subr.mxu0 0.0
        %4350 = vmatpush1.msra.mxu0 0.0
        %4351 = vmatprep.subr.mxu0 0.0
        %4352 = vmatpush1.msra.mxu0 0.0
        %4353 = vmatprep.subr.mxu0 0.0
        %4354 = vmatpush1.msra.mxu0 0.0
        %4355 = vmatprep.subr.mxu0 0.0
        %4356 = vmatpush1.msra.mxu0 0.0
        %4357 = vmatprep.subr.mxu0 0.0
        %4358 = vmatpush1.msra.mxu0 0.0
        %4359 = vmatprep.subr.mxu0 0.0
        %4360 = vmatpush1.msra.mxu0 0.0
        %4361 = vmatprep.subr.mxu0 0.0
        %4362 = vmatpush1.msra.mxu0 0.0
        %4363 = vmatprep.subr.mxu0 0.0
        %4364 = vmatpush1.msra.mxu0 0.0
        %4365 = vmatprep.subr.mxu0 0.0
        %4366 = vmatpush1.msra.mxu0 0.0
        %4367 = vmatprep.subr.mxu0 0.0
        %4368 = vmatpush1.msra.mxu0 0.0
        %4369 = vmatprep.subr.mxu0 0.0
        %4370 = vmatpush1.msra.mxu0 0.0
        %4371 = vmatprep.subr.mxu0 0.0
        %4372 = vmatpush1.msra.mxu0 0.0
        %4373 = vmatprep.subr.mxu0 0.0
        %4374 = vmatpush1.msra.mxu0 0.0
        %4375 = vmatprep.subr.mxu0 0.0
        %4376 = vmatpush1.msra.mxu0 0.0
        %4377 = vmatprep.subr.mxu0 0.0
        %4378 = vmatpush1.msra.mxu0 0.0
        %4379 = vmatprep.subr.mxu0 0.0
        %4380 = vmatpush1.msra.mxu0 0.0
        %4381 = vmatprep.subr.mxu0 0.0
        %4382 = vmatpush1.msra.mxu0 0.0
        %4383 = vmatprep.subr.mxu0 0.0
        %4384 = vmatpush1.msra.mxu0 0.0
        %4385 = vmatprep.subr.mxu0 0.0
        %4386 = vmatpush1.msra.mxu0 0.0
        %4387 = vmatprep.subr.mxu0 0.0
        %4388 = vmatpush1.msra.mxu0 0.0
        %4389 = vmatprep.subr.mxu0 0.0
        %4390 = vmatpush1.msra.mxu0 0.0
        %4391 = vmatprep.subr.mxu0 0.0
        %4392 = vmatpush1.msra.mxu0 0.0
        %4393 = vmatprep.subr.mxu0 0.0
        %4394 = vmatpush1.msra.mxu0 0.0
        %4395 = vmatprep.subr.mxu0 0.0
        %4396 = vmatpush1.msra.mxu0 0.0
        %4397 = vmatprep.subr.mxu0 0.0
        %4398 = vmatpush1.msra.mxu0 0.0
        %4399 = vmatprep.subr.mxu0 0.0
        %4400 = vmatpush1.msra.mxu0 0.0
        %4401 = vmatprep.subr.mxu0 0.0
        %4402 = vmatpush1.msra.mxu0 0.0
        %4403 = vmatprep.subr.mxu0 0.0
        %4404 = vmatpush1.msra.mxu0 0.0
        %4405 = vmatprep.subr.mxu0 0.0
        %4406 = vmatpush1.msra.mxu0 0.0
        %4407 = vmatprep.mubr.f32.mxu0 0.0
        %4408 = vmatmul.mubr.f32.gmra.mrb[0].mxu0 %v4334
        %v4409 = vpop.f32.mrb[0].mxu0
        %v4410 = vadd.f32 0.0, %v4409
        %v4411 = vpop.f32.mrb[0].mxu0
        %v4412 = vadd.f32 0.0, %v4411
        %4413 = vmatprep.mubr.f32.mxu0 0.0
        %4414 = vmatmul.mubr.f32.gmra.mrb[0].mxu0 %v4337
        %v4415 = vpop.f32.mrb[0].mxu0
        %v4416 = vadd.f32 0.0, %v4415
        %v4417 = vpop.f32.mrb[0].mxu0
        %v4418 = vadd.f32 0.0, %v4417
        %4419 = vdwg.mxu0
        %v4420 = vadd.f32 %v4320, %v4410
        %v4421 = vadd.f32 %v4321, %v4412
        %v4422 = vadd.f32 %v4322, %v4416
        %v4423 = vadd.f32 %v4323, %v4418
        %s4424 = scalar_lea.vmem %s5, 96
        %v4425 = vld [vmem:[%s4424] sm:$0xff]
        %v4426 = vld [vmem:[%s4424 + $0x8] sm:$0xff]
        %4427 = vrot.lane.b32.xlu0 %v3834, 112
        %v4428 = vpop.permute.xlu0 %4427
        %4429 = vrot.lane.b32.xlu0 %v3835, 112
        %v4430 = vpop.permute.xlu0 %4429
        %vm4431 = vcmask 916480
        %v4432 = vsel %vm4431, %v4428, %v4430
        %v4434 = vsel %vm3849, %v4425, 0
        %v4437 = vsel %vm3849, %v4426, 0
        %v4439 = vsel %vm660, %v4432, 0
        %v4441 = vsel %vm660, %v4430, 0
        %4443 = vmatprep.subr.mxu0 %v4441
        %4444 = vmatpush1.msra.mxu0 %v4439
        %4445 = vmatprep.subr.mxu0 0.0
        %4446 = vmatpush1.msra.mxu0 0.0
        %4447 = vmatprep.subr.mxu0 0.0
        %4448 = vmatpush1.msra.mxu0 0.0
        %4449 = vmatprep.subr.mxu0 0.0
        %4450 = vmatpush1.msra.mxu0 0.0
        %4451 = vmatprep.subr.mxu0 0.0
        %4452 = vmatpush1.msra.mxu0 0.0
        %4453 = vmatprep.subr.mxu0 0.0
        %4454 = vmatpush1.msra.mxu0 0.0
        %4455 = vmatprep.subr.mxu0 0.0
        %4456 = vmatpush1.msra.mxu0 0.0
        %4457 = vmatprep.subr.mxu0 0.0
        %4458 = vmatpush1.msra.mxu0 0.0
        %4459 = vmatprep.subr.mxu0 0.0
        %4460 = vmatpush1.msra.mxu0 0.0
        %4461 = vmatprep.subr.mxu0 0.0
        %4462 = vmatpush1.msra.mxu0 0.0
        %4463 = vmatprep.subr.mxu0 0.0
        %4464 = vmatpush1.msra.mxu0 0.0
        %4465 = vmatprep.subr.mxu0 0.0
        %4466 = vmatpush1.msra.mxu0 0.0
        %4467 = vmatprep.subr.mxu0 0.0
        %4468 = vmatpush1.msra.mxu0 0.0
        %4469 = vmatprep.subr.mxu0 0.0
        %4470 = vmatpush1.msra.mxu0 0.0
        %4471 = vmatprep.subr.mxu0 0.0
        %4472 = vmatpush1.msra.mxu0 0.0
        %4473 = vmatprep.subr.mxu0 0.0
        %4474 = vmatpush1.msra.mxu0 0.0
        %4475 = vmatprep.subr.mxu0 0.0
        %4476 = vmatpush1.msra.mxu0 0.0
        %4477 = vmatprep.subr.mxu0 0.0
        %4478 = vmatpush1.msra.mxu0 0.0
        %4479 = vmatprep.subr.mxu0 0.0
        %4480 = vmatpush1.msra.mxu0 0.0
        %4481 = vmatprep.subr.mxu0 0.0
        %4482 = vmatpush1.msra.mxu0 0.0
        %4483 = vmatprep.subr.mxu0 0.0
        %4484 = vmatpush1.msra.mxu0 0.0
        %4485 = vmatprep.subr.mxu0 0.0
        %4486 = vmatpush1.msra.mxu0 0.0
        %4487 = vmatprep.subr.mxu0 0.0
        %4488 = vmatpush1.msra.mxu0 0.0
        %4489 = vmatprep.subr.mxu0 0.0
        %4490 = vmatpush1.msra.mxu0 0.0
        %4491 = vmatprep.subr.mxu0 0.0
        %4492 = vmatpush1.msra.mxu0 0.0
        %4493 = vmatprep.subr.mxu0 0.0
        %4494 = vmatpush1.msra.mxu0 0.0
        %4495 = vmatprep.subr.mxu0 0.0
        %4496 = vmatpush1.msra.mxu0 0.0
        %4497 = vmatprep.subr.mxu0 0.0
        %4498 = vmatpush1.msra.mxu0 0.0
        %4499 = vmatprep.subr.mxu0 0.0
        %4500 = vmatpush1.msra.mxu0 0.0
        %4501 = vmatprep.subr.mxu0 0.0
        %4502 = vmatpush1.msra.mxu0 0.0
        %4503 = vmatprep.subr.mxu0 0.0
        %4504 = vmatpush1.msra.mxu0 0.0
        %4505 = vmatprep.subr.mxu0 0.0
        %4506 = vmatpush1.msra.mxu0 0.0
        %4507 = vmatprep.mubr.f32.mxu0 0.0
        %4508 = vmatmul.mubr.f32.gmra.mrb[0].mxu0 %v4434
        %v4509 = vpop.f32.mrb[0].mxu0
        %v4510 = vadd.f32 0.0, %v4509
        %v4511 = vpop.f32.mrb[0].mxu0
        %v4512 = vadd.f32 0.0, %v4511
        %4513 = vmatprep.mubr.f32.mxu0 0.0
        %4514 = vmatmul.mubr.f32.gmra.mrb[0].mxu0 %v4437
        %v4515 = vpop.f32.mrb[0].mxu0
        %v4516 = vadd.f32 0.0, %v4515
        %v4517 = vpop.f32.mrb[0].mxu0
        %v4518 = vadd.f32 0.0, %v4517
        %4519 = vdwg.mxu0
        %v4520 = vadd.f32 %v4420, %v4510
        %v4521 = vadd.f32 %v4421, %v4512
        %v4522 = vadd.f32 %v4422, %v4516
        %v4523 = vadd.f32 %v4423, %v4518
        %s4524 = scalar_lea.vmem %s5, 112
        %v4525 = vld [vmem:[%s4524] sm:$0xff]
        %v4526 = vld [vmem:[%s4524 + $0x8] sm:$0xff]
        %4527 = vrot.lane.b32.xlu0 %v3834, 111
        %v4528 = vpop.permute.xlu0 %4527
        %4529 = vrot.lane.b32.xlu0 %v3835, 111
        %v4530 = vpop.permute.xlu0 %4529
        %vm4531 = vcmask 908288
        %v4532 = vsel %vm4531, %v4528, %v4530
        %v4534 = vsel %vm3849, %v4525, 0
        %v4537 = vsel %vm3849, %v4526, 0
        %v4539 = vsel %vm660, %v4532, 0
        %v4541 = vsel %vm660, %v4530, 0
        %4543 = vmatprep.subr.mxu0 %v4541
        %4544 = vmatpush1.msra.mxu0 %v4539
        %4545 = vmatprep.subr.mxu0 0.0
        %4546 = vmatpush1.msra.mxu0 0.0
        %4547 = vmatprep.subr.mxu0 0.0
        %4548 = vmatpush1.msra.mxu0 0.0
        %4549 = vmatprep.subr.mxu0 0.0
        %4550 = vmatpush1.msra.mxu0 0.0
        %4551 = vmatprep.subr.mxu0 0.0
        %4552 = vmatpush1.msra.mxu0 0.0
        %4553 = vmatprep.subr.mxu0 0.0
        %4554 = vmatpush1.msra.mxu0 0.0
        %4555 = vmatprep.subr.mxu0 0.0
        %4556 = vmatpush1.msra.mxu0 0.0
        %4557 = vmatprep.subr.mxu0 0.0
        %4558 = vmatpush1.msra.mxu0 0.0
        %4559 = vmatprep.subr.mxu0 0.0
        %4560 = vmatpush1.msra.mxu0 0.0
        %4561 = vmatprep.subr.mxu0 0.0
        %4562 = vmatpush1.msra.mxu0 0.0
        %4563 = vmatprep.subr.mxu0 0.0
        %4564 = vmatpush1.msra.mxu0 0.0
        %4565 = vmatprep.subr.mxu0 0.0
        %4566 = vmatpush1.msra.mxu0 0.0
        %4567 = vmatprep.subr.mxu0 0.0
        %4568 = vmatpush1.msra.mxu0 0.0
        %4569 = vmatprep.subr.mxu0 0.0
        %4570 = vmatpush1.msra.mxu0 0.0
        %4571 = vmatprep.subr.mxu0 0.0
        %4572 = vmatpush1.msra.mxu0 0.0
        %4573 = vmatprep.subr.mxu0 0.0
        %4574 = vmatpush1.msra.mxu0 0.0
        %4575 = vmatprep.subr.mxu0 0.0
        %4576 = vmatpush1.msra.mxu0 0.0
        %4577 = vmatprep.subr.mxu0 0.0
        %4578 = vmatpush1.msra.mxu0 0.0
        %4579 = vmatprep.subr.mxu0 0.0
        %4580 = vmatpush1.msra.mxu0 0.0
        %4581 = vmatprep.subr.mxu0 0.0
        %4582 = vmatpush1.msra.mxu0 0.0
        %4583 = vmatprep.subr.mxu0 0.0
        %4584 = vmatpush1.msra.mxu0 0.0
        %4585 = vmatprep.subr.mxu0 0.0
        %4586 = vmatpush1.msra.mxu0 0.0
        %4587 = vmatprep.subr.mxu0 0.0
        %4588 = vmatpush1.msra.mxu0 0.0
        %4589 = vmatprep.subr.mxu0 0.0
        %4590 = vmatpush1.msra.mxu0 0.0
        %4591 = vmatprep.subr.mxu0 0.0
        %4592 = vmatpush1.msra.mxu0 0.0
        %4593 = vmatprep.subr.mxu0 0.0
        %4594 = vmatpush1.msra.mxu0 0.0
        %4595 = vmatprep.subr.mxu0 0.0
        %4596 = vmatpush1.msra.mxu0 0.0
        %4597 = vmatprep.subr.mxu0 0.0
        %4598 = vmatpush1.msra.mxu0 0.0
        %4599 = vmatprep.subr.mxu0 0.0
        %4600 = vmatpush1.msra.mxu0 0.0
        %4601 = vmatprep.subr.mxu0 0.0
        %4602 = vmatpush1.msra.mxu0 0.0
        %4603 = vmatprep.subr.mxu0 0.0
        %4604 = vmatpush1.msra.mxu0 0.0
        %4605 = vmatprep.subr.mxu0 0.0
        %4606 = vmatpush1.msra.mxu0 0.0
        %4607 = vmatprep.mubr.f32.mxu0 0.0
        %4608 = vmatmul.mubr.f32.gmra.mrb[0].mxu0 %v4534
        %v4609 = vpop.f32.mrb[0].mxu0
        %v4610 = vadd.f32 0.0, %v4609
        %v4611 = vpop.f32.mrb[0].mxu0
        %v4612 = vadd.f32 0.0, %v4611
        %4613 = vmatprep.mubr.f32.mxu0 0.0
        %4614 = vmatmul.mubr.f32.gmra.mrb[0].mxu0 %v4537
        %v4615 = vpop.f32.mrb[0].mxu0
        %v4616 = vadd.f32 0.0, %v4615
        %v4617 = vpop.f32.mrb[0].mxu0
        %v4618 = vadd.f32 0.0, %v4617
        %4619 = vdwg.mxu0
        %v4620 = vadd.f32 %v4520, %v4610
        %v4621 = vadd.f32 %v4521, %v4612
        %v4622 = vadd.f32 %v4522, %v4616
        %v4623 = vadd.f32 %v4523, %v4618
        %s4624 = scalar_lea.vmem %s5, 128
        %v4625 = vld [vmem:[%s4624] sm:$0xff]
        %v4626 = vld [vmem:[%s4624 + $0x8] sm:$0xff]
        %4627 = vrot.lane.b32.xlu0 %v3834, 110
        %v4628 = vpop.permute.xlu0 %4627
        %4629 = vrot.lane.b32.xlu0 %v3835, 110
        %v4630 = vpop.permute.xlu0 %4629
        %vm4631 = vcmask 900096
        %v4632 = vsel %vm4631, %v4628, %v4630
        %v4634 = vsel %vm3849, %v4625, 0
        %v4637 = vsel %vm3849, %v4626, 0
        %v4639 = vsel %vm660, %v4632, 0
        %v4641 = vsel %vm660, %v4630, 0
        %4643 = vmatprep.subr.mxu0 %v4641
        %4644 = vmatpush1.msra.mxu0 %v4639
        %4645 = vmatprep.subr.mxu0 0.0
        %4646 = vmatpush1.msra.mxu0 0.0
        %4647 = vmatprep.subr.mxu0 0.0
        %4648 = vmatpush1.msra.mxu0 0.0
        %4649 = vmatprep.subr.mxu0 0.0
        %4650 = vmatpush1.msra.mxu0 0.0
        %4651 = vmatprep.subr.mxu0 0.0
        %4652 = vmatpush1.msra.mxu0 0.0
        %4653 = vmatprep.subr.mxu0 0.0
        %4654 = vmatpush1.msra.mxu0 0.0
        %4655 = vmatprep.subr.mxu0 0.0
        %4656 = vmatpush1.msra.mxu0 0.0
        %4657 = vmatprep.subr.mxu0 0.0
        %4658 = vmatpush1.msra.mxu0 0.0
        %4659 = vmatprep.subr.mxu0 0.0
        %4660 = vmatpush1.msra.mxu0 0.0
        %4661 = vmatprep.subr.mxu0 0.0
        %4662 = vmatpush1.msra.mxu0 0.0
        %4663 = vmatprep.subr.mxu0 0.0
        %4664 = vmatpush1.msra.mxu0 0.0
        %4665 = vmatprep.subr.mxu0 0.0
        %4666 = vmatpush1.msra.mxu0 0.0
        %4667 = vmatprep.subr.mxu0 0.0
        %4668 = vmatpush1.msra.mxu0 0.0
        %4669 = vmatprep.subr.mxu0 0.0
        %4670 = vmatpush1.msra.mxu0 0.0
        %4671 = vmatprep.subr.mxu0 0.0
        %4672 = vmatpush1.msra.mxu0 0.0
        %4673 = vmatprep.subr.mxu0 0.0
        %4674 = vmatpush1.msra.mxu0 0.0
        %4675 = vmatprep.subr.mxu0 0.0
        %4676 = vmatpush1.msra.mxu0 0.0
        %4677 = vmatprep.subr.mxu0 0.0
        %4678 = vmatpush1.msra.mxu0 0.0
        %4679 = vmatprep.subr.mxu0 0.0
        %4680 = vmatpush1.msra.mxu0 0.0
        %4681 = vmatprep.subr.mxu0 0.0
        %4682 = vmatpush1.msra.mxu0 0.0
        %4683 = vmatprep.subr.mxu0 0.0
        %4684 = vmatpush1.msra.mxu0 0.0
        %4685 = vmatprep.subr.mxu0 0.0
        %4686 = vmatpush1.msra.mxu0 0.0
        %4687 = vmatprep.subr.mxu0 0.0
        %4688 = vmatpush1.msra.mxu0 0.0
        %4689 = vmatprep.subr.mxu0 0.0
        %4690 = vmatpush1.msra.mxu0 0.0
        %4691 = vmatprep.subr.mxu0 0.0
        %4692 = vmatpush1.msra.mxu0 0.0
        %4693 = vmatprep.subr.mxu0 0.0
        %4694 = vmatpush1.msra.mxu0 0.0
        %4695 = vmatprep.subr.mxu0 0.0
        %4696 = vmatpush1.msra.mxu0 0.0
        %4697 = vmatprep.subr.mxu0 0.0
        %4698 = vmatpush1.msra.mxu0 0.0
        %4699 = vmatprep.subr.mxu0 0.0
        %4700 = vmatpush1.msra.mxu0 0.0
        %4701 = vmatprep.subr.mxu0 0.0
        %4702 = vmatpush1.msra.mxu0 0.0
        %4703 = vmatprep.subr.mxu0 0.0
        %4704 = vmatpush1.msra.mxu0 0.0
        %4705 = vmatprep.subr.mxu0 0.0
        %4706 = vmatpush1.msra.mxu0 0.0
        %4707 = vmatprep.mubr.f32.mxu0 0.0
        %4708 = vmatmul.mubr.f32.gmra.mrb[0].mxu0 %v4634
        %v4709 = vpop.f32.mrb[0].mxu0
        %v4710 = vadd.f32 0.0, %v4709
        %v4711 = vpop.f32.mrb[0].mxu0
        %v4712 = vadd.f32 0.0, %v4711
        %4713 = vmatprep.mubr.f32.mxu0 0.0
        %4714 = vmatmul.mubr.f32.gmra.mrb[0].mxu0 %v4637
        %v4715 = vpop.f32.mrb[0].mxu0
        %v4716 = vadd.f32 0.0, %v4715
        %v4717 = vpop.f32.mrb[0].mxu0
        %v4718 = vadd.f32 0.0, %v4717
        %4719 = vdwg.mxu0
        %v4720 = vadd.f32 %v4620, %v4710
        %v4721 = vadd.f32 %v4621, %v4712
        %v4722 = vadd.f32 %v4622, %v4716
        %v4723 = vadd.f32 %v4623, %v4718
        %s4724 = scalar_lea.vmem %s5, 144
        %v4725 = vld [vmem:[%s4724] sm:$0xff]
        %v4726 = vld [vmem:[%s4724 + $0x8] sm:$0xff]
        %4727 = vrot.lane.b32.xlu0 %v3834, 109
        %v4728 = vpop.permute.xlu0 %4727
        %4729 = vrot.lane.b32.xlu0 %v3835, 109
        %v4730 = vpop.permute.xlu0 %4729
        %vm4731 = vcmask 891904
        %v4732 = vsel %vm4731, %v4728, %v4730
        %v4734 = vsel %vm3849, %v4725, 0
        %v4737 = vsel %vm3849, %v4726, 0
        %v4739 = vsel %vm660, %v4732, 0
        %v4741 = vsel %vm660, %v4730, 0
        %4743 = vmatprep.subr.mxu0 %v4741
        %4744 = vmatpush1.msra.mxu0 %v4739
        %4745 = vmatprep.subr.mxu0 0.0
        %4746 = vmatpush1.msra.mxu0 0.0
        %4747 = vmatprep.subr.mxu0 0.0
        %4748 = vmatpush1.msra.mxu0 0.0
        %4749 = vmatprep.subr.mxu0 0.0
        %4750 = vmatpush1.msra.mxu0 0.0
        %4751 = vmatprep.subr.mxu0 0.0
        %4752 = vmatpush1.msra.mxu0 0.0
        %4753 = vmatprep.subr.mxu0 0.0
        %4754 = vmatpush1.msra.mxu0 0.0
        %4755 = vmatprep.subr.mxu0 0.0
        %4756 = vmatpush1.msra.mxu0 0.0
        %4757 = vmatprep.subr.mxu0 0.0
        %4758 = vmatpush1.msra.mxu0 0.0
        %4759 = vmatprep.subr.mxu0 0.0
        %4760 = vmatpush1.msra.mxu0 0.0
        %4761 = vmatprep.subr.mxu0 0.0
        %4762 = vmatpush1.msra.mxu0 0.0
        %4763 = vmatprep.subr.mxu0 0.0
        %4764 = vmatpush1.msra.mxu0 0.0
        %4765 = vmatprep.subr.mxu0 0.0
        %4766 = vmatpush1.msra.mxu0 0.0
        %4767 = vmatprep.subr.mxu0 0.0
        %4768 = vmatpush1.msra.mxu0 0.0
        %4769 = vmatprep.subr.mxu0 0.0
        %4770 = vmatpush1.msra.mxu0 0.0
        %4771 = vmatprep.subr.mxu0 0.0
        %4772 = vmatpush1.msra.mxu0 0.0
        %4773 = vmatprep.subr.mxu0 0.0
        %4774 = vmatpush1.msra.mxu0 0.0
        %4775 = vmatprep.subr.mxu0 0.0
        %4776 = vmatpush1.msra.mxu0 0.0
        %4777 = vmatprep.subr.mxu0 0.0
        %4778 = vmatpush1.msra.mxu0 0.0
        %4779 = vmatprep.subr.mxu0 0.0
        %4780 = vmatpush1.msra.mxu0 0.0
        %4781 = vmatprep.subr.mxu0 0.0
        %4782 = vmatpush1.msra.mxu0 0.0
        %4783 = vmatprep.subr.mxu0 0.0
        %4784 = vmatpush1.msra.mxu0 0.0
        %4785 = vmatprep.subr.mxu0 0.0
        %4786 = vmatpush1.msra.mxu0 0.0
        %4787 = vmatprep.subr.mxu0 0.0
        %4788 = vmatpush1.msra.mxu0 0.0
        %4789 = vmatprep.subr.mxu0 0.0
        %4790 = vmatpush1.msra.mxu0 0.0
        %4791 = vmatprep.subr.mxu0 0.0
        %4792 = vmatpush1.msra.mxu0 0.0
        %4793 = vmatprep.subr.mxu0 0.0
        %4794 = vmatpush1.msra.mxu0 0.0
        %4795 = vmatprep.subr.mxu0 0.0
        %4796 = vmatpush1.msra.mxu0 0.0
        %4797 = vmatprep.subr.mxu0 0.0
        %4798 = vmatpush1.msra.mxu0 0.0
        %4799 = vmatprep.subr.mxu0 0.0
        %4800 = vmatpush1.msra.mxu0 0.0
        %4801 = vmatprep.subr.mxu0 0.0
        %4802 = vmatpush1.msra.mxu0 0.0
        %4803 = vmatprep.subr.mxu0 0.0
        %4804 = vmatpush1.msra.mxu0 0.0
        %4805 = vmatprep.subr.mxu0 0.0
        %4806 = vmatpush1.msra.mxu0 0.0
        %4807 = vmatprep.mubr.f32.mxu0 0.0
        %4808 = vmatmul.mubr.f32.gmra.mrb[0].mxu0 %v4734
        %v4809 = vpop.f32.mrb[0].mxu0
        %v4810 = vadd.f32 0.0, %v4809
        %v4811 = vpop.f32.mrb[0].mxu0
        %v4812 = vadd.f32 0.0, %v4811
        %4813 = vmatprep.mubr.f32.mxu0 0.0
        %4814 = vmatmul.mubr.f32.gmra.mrb[0].mxu0 %v4737
        %v4815 = vpop.f32.mrb[0].mxu0
        %v4816 = vadd.f32 0.0, %v4815
        %v4817 = vpop.f32.mrb[0].mxu0
        %v4818 = vadd.f32 0.0, %v4817
        %4819 = vdwg.mxu0
        %v4820 = vadd.f32 %v4720, %v4810
        %v4821 = vadd.f32 %v4721, %v4812
        %v4822 = vadd.f32 %v4722, %v4816
        %v4823 = vadd.f32 %v4723, %v4818
        %s4824 = scalar_lea.vmem %s5, 160
        %v4825 = vld [vmem:[%s4824] sm:$0xff]
        %v4826 = vld [vmem:[%s4824 + $0x8] sm:$0xff]
        %4827 = vrot.lane.b32.xlu0 %v3834, 98
        %v4828 = vpop.permute.xlu0 %4827
        %4829 = vrot.lane.b32.xlu0 %v3835, 98
        %v4830 = vpop.permute.xlu0 %4829
        %vm4831 = vcmask 801792
        %v4832 = vsel %vm4831, %v4828, %v4830
        %v4834 = vsel %vm3849, %v4825, 0
        %v4837 = vsel %vm3849, %v4826, 0
        %v4839 = vsel %vm660, %v4832, 0
        %v4841 = vsel %vm660, %v4830, 0
        %4843 = vmatprep.subr.mxu0 %v4841
        %4844 = vmatpush1.msra.mxu0 %v4839
        %4845 = vmatprep.subr.mxu0 0.0
        %4846 = vmatpush1.msra.mxu0 0.0
        %4847 = vmatprep.subr.mxu0 0.0
        %4848 = vmatpush1.msra.mxu0 0.0
        %4849 = vmatprep.subr.mxu0 0.0
        %4850 = vmatpush1.msra.mxu0 0.0
        %4851 = vmatprep.subr.mxu0 0.0
        %4852 = vmatpush1.msra.mxu0 0.0
        %4853 = vmatprep.subr.mxu0 0.0
        %4854 = vmatpush1.msra.mxu0 0.0
        %4855 = vmatprep.subr.mxu0 0.0
        %4856 = vmatpush1.msra.mxu0 0.0
        %4857 = vmatprep.subr.mxu0 0.0
        %4858 = vmatpush1.msra.mxu0 0.0
        %4859 = vmatprep.subr.mxu0 0.0
        %4860 = vmatpush1.msra.mxu0 0.0
        %4861 = vmatprep.subr.mxu0 0.0
        %4862 = vmatpush1.msra.mxu0 0.0
        %4863 = vmatprep.subr.mxu0 0.0
        %4864 = vmatpush1.msra.mxu0 0.0
        %4865 = vmatprep.subr.mxu0 0.0
        %4866 = vmatpush1.msra.mxu0 0.0
        %4867 = vmatprep.subr.mxu0 0.0
        %4868 = vmatpush1.msra.mxu0 0.0
        %4869 = vmatprep.subr.mxu0 0.0
        %4870 = vmatpush1.msra.mxu0 0.0
        %4871 = vmatprep.subr.mxu0 0.0
        %4872 = vmatpush1.msra.mxu0 0.0
        %4873 = vmatprep.subr.mxu0 0.0
        %4874 = vmatpush1.msra.mxu0 0.0
        %4875 = vmatprep.subr.mxu0 0.0
        %4876 = vmatpush1.msra.mxu0 0.0
        %4877 = vmatprep.subr.mxu0 0.0
        %4878 = vmatpush1.msra.mxu0 0.0
        %4879 = vmatprep.subr.mxu0 0.0
        %4880 = vmatpush1.msra.mxu0 0.0
        %4881 = vmatprep.subr.mxu0 0.0
        %4882 = vmatpush1.msra.mxu0 0.0
        %4883 = vmatprep.subr.mxu0 0.0
        %4884 = vmatpush1.msra.mxu0 0.0
        %4885 = vmatprep.subr.mxu0 0.0
        %4886 = vmatpush1.msra.mxu0 0.0
        %4887 = vmatprep.subr.mxu0 0.0
        %4888 = vmatpush1.msra.mxu0 0.0
        %4889 = vmatprep.subr.mxu0 0.0
        %4890 = vmatpush1.msra.mxu0 0.0
        %4891 = vmatprep.subr.mxu0 0.0
        %4892 = vmatpush1.msra.mxu0 0.0
        %4893 = vmatprep.subr.mxu0 0.0
        %4894 = vmatpush1.msra.mxu0 0.0
        %4895 = vmatprep.subr.mxu0 0.0
        %4896 = vmatpush1.msra.mxu0 0.0
        %4897 = vmatprep.subr.mxu0 0.0
        %4898 = vmatpush1.msra.mxu0 0.0
        %4899 = vmatprep.subr.mxu0 0.0
        %4900 = vmatpush1.msra.mxu0 0.0
        %4901 = vmatprep.subr.mxu0 0.0
        %4902 = vmatpush1.msra.mxu0 0.0
        %4903 = vmatprep.subr.mxu0 0.0
        %4904 = vmatpush1.msra.mxu0 0.0
        %4905 = vmatprep.subr.mxu0 0.0
        %4906 = vmatpush1.msra.mxu0 0.0
        %4907 = vmatprep.mubr.f32.mxu0 0.0
        %4908 = vmatmul.mubr.f32.gmra.mrb[0].mxu0 %v4834
        %v4909 = vpop.f32.mrb[0].mxu0
        %v4910 = vadd.f32 0.0, %v4909
        %v4911 = vpop.f32.mrb[0].mxu0
        %v4912 = vadd.f32 0.0, %v4911
        %4913 = vmatprep.mubr.f32.mxu0 0.0
        %4914 = vmatmul.mubr.f32.gmra.mrb[0].mxu0 %v4837
        %v4915 = vpop.f32.mrb[0].mxu0
        %v4916 = vadd.f32 0.0, %v4915
        %v4917 = vpop.f32.mrb[0].mxu0
        %v4918 = vadd.f32 0.0, %v4917
        %4919 = vdwg.mxu0
        %v4920 = vadd.f32 %v4820, %v4910
        %v4921 = vadd.f32 %v4821, %v4912
        %v4922 = vadd.f32 %v4822, %v4916
        %v4923 = vadd.f32 %v4823, %v4918
        %s4924 = scalar_lea.vmem %s5, 176
        %v4925 = vld [vmem:[%s4924] sm:$0xff]
        %v4926 = vld [vmem:[%s4924 + $0x8] sm:$0xff]
        %4927 = vrot.lane.b32.xlu0 %v3834, 97
        %v4928 = vpop.permute.xlu0 %4927
        %4929 = vrot.lane.b32.xlu0 %v3835, 97
        %v4930 = vpop.permute.xlu0 %4929
        %vm4931 = vcmask 793600
        %v4932 = vsel %vm4931, %v4928, %v4930
        %v4934 = vsel %vm3849, %v4925, 0
        %v4937 = vsel %vm3849, %v4926, 0
        %v4939 = vsel %vm660, %v4932, 0
        %v4941 = vsel %vm660, %v4930, 0
        %4943 = vmatprep.subr.mxu0 %v4941
        %4944 = vmatpush1.msra.mxu0 %v4939
        %4945 = vmatprep.subr.mxu0 0.0
        %4946 = vmatpush1.msra.mxu0 0.0
        %4947 = vmatprep.subr.mxu0 0.0
        %4948 = vmatpush1.msra.mxu0 0.0
        %4949 = vmatprep.subr.mxu0 0.0
        %4950 = vmatpush1.msra.mxu0 0.0
        %4951 = vmatprep.subr.mxu0 0.0
        %4952 = vmatpush1.msra.mxu0 0.0
        %4953 = vmatprep.subr.mxu0 0.0
        %4954 = vmatpush1.msra.mxu0 0.0
        %4955 = vmatprep.subr.mxu0 0.0
        %4956 = vmatpush1.msra.mxu0 0.0
        %4957 = vmatprep.subr.mxu0 0.0
        %4958 = vmatpush1.msra.mxu0 0.0
        %4959 = vmatprep.subr.mxu0 0.0
        %4960 = vmatpush1.msra.mxu0 0.0
        %4961 = vmatprep.subr.mxu0 0.0
        %4962 = vmatpush1.msra.mxu0 0.0
        %4963 = vmatprep.subr.mxu0 0.0
        %4964 = vmatpush1.msra.mxu0 0.0
        %4965 = vmatprep.subr.mxu0 0.0
        %4966 = vmatpush1.msra.mxu0 0.0
        %4967 = vmatprep.subr.mxu0 0.0
        %4968 = vmatpush1.msra.mxu0 0.0
        %4969 = vmatprep.subr.mxu0 0.0
        %4970 = vmatpush1.msra.mxu0 0.0
        %4971 = vmatprep.subr.mxu0 0.0
        %4972 = vmatpush1.msra.mxu0 0.0
        %4973 = vmatprep.subr.mxu0 0.0
        %4974 = vmatpush1.msra.mxu0 0.0
        %4975 = vmatprep.subr.mxu0 0.0
        %4976 = vmatpush1.msra.mxu0 0.0
        %4977 = vmatprep.subr.mxu0 0.0
        %4978 = vmatpush1.msra.mxu0 0.0
        %4979 = vmatprep.subr.mxu0 0.0
        %4980 = vmatpush1.msra.mxu0 0.0
        %4981 = vmatprep.subr.mxu0 0.0
        %4982 = vmatpush1.msra.mxu0 0.0
        %4983 = vmatprep.subr.mxu0 0.0
        %4984 = vmatpush1.msra.mxu0 0.0
        %4985 = vmatprep.subr.mxu0 0.0
        %4986 = vmatpush1.msra.mxu0 0.0
        %4987 = vmatprep.subr.mxu0 0.0
        %4988 = vmatpush1.msra.mxu0 0.0
        %4989 = vmatprep.subr.mxu0 0.0
        %4990 = vmatpush1.msra.mxu0 0.0
        %4991 = vmatprep.subr.mxu0 0.0
        %4992 = vmatpush1.msra.mxu0 0.0
        %4993 = vmatprep.subr.mxu0 0.0
        %4994 = vmatpush1.msra.mxu0 0.0
        %4995 = vmatprep.subr.mxu0 0.0
        %4996 = vmatpush1.msra.mxu0 0.0
        %4997 = vmatprep.subr.mxu0 0.0
        %4998 = vmatpush1.msra.mxu0 0.0
        %4999 = vmatprep.subr.mxu0 0.0
        %5000 = vmatpush1.msra.mxu0 0.0
        %5001 = vmatprep.subr.mxu0 0.0
        %5002 = vmatpush1.msra.mxu0 0.0
        %5003 = vmatprep.subr.mxu0 0.0
        %5004 = vmatpush1.msra.mxu0 0.0
        %5005 = vmatprep.subr.mxu0 0.0
        %5006 = vmatpush1.msra.mxu0 0.0
        %5007 = vmatprep.mubr.f32.mxu0 0.0
        %5008 = vmatmul.mubr.f32.gmra.mrb[0].mxu0 %v4934
        %v5009 = vpop.f32.mrb[0].mxu0
        %v5010 = vadd.f32 0.0, %v5009
        %v5011 = vpop.f32.mrb[0].mxu0
        %v5012 = vadd.f32 0.0, %v5011
        %5013 = vmatprep.mubr.f32.mxu0 0.0
        %5014 = vmatmul.mubr.f32.gmra.mrb[0].mxu0 %v4937
        %v5015 = vpop.f32.mrb[0].mxu0
        %v5016 = vadd.f32 0.0, %v5015
        %v5017 = vpop.f32.mrb[0].mxu0
        %v5018 = vadd.f32 0.0, %v5017
        %5019 = vdwg.mxu0
        %v5020 = vadd.f32 %v4920, %v5010
        %v5021 = vadd.f32 %v4921, %v5012
        %v5022 = vadd.f32 %v4922, %v5016
        %v5023 = vadd.f32 %v4923, %v5018
        %s5024 = scalar_lea.vmem %s5, 192
        %v5025 = vld [vmem:[%s5024] sm:$0xff]
        %v5026 = vld [vmem:[%s5024 + $0x8] sm:$0xff]
        %5027 = vrot.lane.b32.xlu0 %v3834, 96
        %v5028 = vpop.permute.xlu0 %5027
        %5029 = vrot.lane.b32.xlu0 %v3835, 96
        %v5030 = vpop.permute.xlu0 %5029
        %vm5031 = vcmask 785408
        %v5032 = vsel %vm5031, %v5028, %v5030
        %v5034 = vsel %vm3849, %v5025, 0
        %v5037 = vsel %vm3849, %v5026, 0
        %v5039 = vsel %vm660, %v5032, 0
        %v5041 = vsel %vm660, %v5030, 0
        %5043 = vmatprep.subr.mxu0 %v5041
        %5044 = vmatpush1.msra.mxu0 %v5039
        %5045 = vmatprep.subr.mxu0 0.0
        %5046 = vmatpush1.msra.mxu0 0.0
        %5047 = vmatprep.subr.mxu0 0.0
        %5048 = vmatpush1.msra.mxu0 0.0
        %5049 = vmatprep.subr.mxu0 0.0
        %5050 = vmatpush1.msra.mxu0 0.0
        %5051 = vmatprep.subr.mxu0 0.0
        %5052 = vmatpush1.msra.mxu0 0.0
        %5053 = vmatprep.subr.mxu0 0.0
        %5054 = vmatpush1.msra.mxu0 0.0
        %5055 = vmatprep.subr.mxu0 0.0
        %5056 = vmatpush1.msra.mxu0 0.0
        %5057 = vmatprep.subr.mxu0 0.0
        %5058 = vmatpush1.msra.mxu0 0.0
        %5059 = vmatprep.subr.mxu0 0.0
        %5060 = vmatpush1.msra.mxu0 0.0
        %5061 = vmatprep.subr.mxu0 0.0
        %5062 = vmatpush1.msra.mxu0 0.0
        %5063 = vmatprep.subr.mxu0 0.0
        %5064 = vmatpush1.msra.mxu0 0.0
        %5065 = vmatprep.subr.mxu0 0.0
        %5066 = vmatpush1.msra.mxu0 0.0
        %5067 = vmatprep.subr.mxu0 0.0
        %5068 = vmatpush1.msra.mxu0 0.0
        %5069 = vmatprep.subr.mxu0 0.0
        %5070 = vmatpush1.msra.mxu0 0.0
        %5071 = vmatprep.subr.mxu0 0.0
        %5072 = vmatpush1.msra.mxu0 0.0
        %5073 = vmatprep.subr.mxu0 0.0
        %5074 = vmatpush1.msra.mxu0 0.0
        %5075 = vmatprep.subr.mxu0 0.0
        %5076 = vmatpush1.msra.mxu0 0.0
        %5077 = vmatprep.subr.mxu0 0.0
        %5078 = vmatpush1.msra.mxu0 0.0
        %5079 = vmatprep.subr.mxu0 0.0
        %5080 = vmatpush1.msra.mxu0 0.0
        %5081 = vmatprep.subr.mxu0 0.0
        %5082 = vmatpush1.msra.mxu0 0.0
        %5083 = vmatprep.subr.mxu0 0.0
        %5084 = vmatpush1.msra.mxu0 0.0
        %5085 = vmatprep.subr.mxu0 0.0
        %5086 = vmatpush1.msra.mxu0 0.0
        %5087 = vmatprep.subr.mxu0 0.0
        %5088 = vmatpush1.msra.mxu0 0.0
        %5089 = vmatprep.subr.mxu0 0.0
        %5090 = vmatpush1.msra.mxu0 0.0
        %5091 = vmatprep.subr.mxu0 0.0
        %5092 = vmatpush1.msra.mxu0 0.0
        %5093 = vmatprep.subr.mxu0 0.0
        %5094 = vmatpush1.msra.mxu0 0.0
        %5095 = vmatprep.subr.mxu0 0.0
        %5096 = vmatpush1.msra.mxu0 0.0
        %5097 = vmatprep.subr.mxu0 0.0
        %5098 = vmatpush1.msra.mxu0 0.0
        %5099 = vmatprep.subr.mxu0 0.0
        %5100 = vmatpush1.msra.mxu0 0.0
        %5101 = vmatprep.subr.mxu0 0.0
        %5102 = vmatpush1.msra.mxu0 0.0
        %5103 = vmatprep.subr.mxu0 0.0
        %5104 = vmatpush1.msra.mxu0 0.0
        %5105 = vmatprep.subr.mxu0 0.0
        %5106 = vmatpush1.msra.mxu0 0.0
        %5107 = vmatprep.mubr.f32.mxu0 0.0
        %5108 = vmatmul.mubr.f32.gmra.mrb[0].mxu0 %v5034
        %v5109 = vpop.f32.mrb[0].mxu0
        %v5110 = vadd.f32 0.0, %v5109
        %v5111 = vpop.f32.mrb[0].mxu0
        %v5112 = vadd.f32 0.0, %v5111
        %5113 = vmatprep.mubr.f32.mxu0 0.0
        %5114 = vmatmul.mubr.f32.gmra.mrb[0].mxu0 %v5037
        %v5115 = vpop.f32.mrb[0].mxu0
        %v5116 = vadd.f32 0.0, %v5115
        %v5117 = vpop.f32.mrb[0].mxu0
        %v5118 = vadd.f32 0.0, %v5117
        %5119 = vdwg.mxu0
        %v5120 = vadd.f32 %v5020, %v5110
        %v5121 = vadd.f32 %v5021, %v5112
        %v5122 = vadd.f32 %v5022, %v5116
        %v5123 = vadd.f32 %v5023, %v5118
        %s5124 = scalar_lea.vmem %s5, 208
        %v5125 = vld [vmem:[%s5124] sm:$0xff]
        %v5126 = vld [vmem:[%s5124 + $0x8] sm:$0xff]
        %5127 = vrot.lane.b32.xlu0 %v3834, 95
        %v5128 = vpop.permute.xlu0 %5127
        %5129 = vrot.lane.b32.xlu0 %v3835, 95
        %v5130 = vpop.permute.xlu0 %5129
        %vm5131 = vcmask 777216
        %v5132 = vsel %vm5131, %v5128, %v5130
        %v5134 = vsel %vm3849, %v5125, 0
        %v5137 = vsel %vm3849, %v5126, 0
        %v5139 = vsel %vm660, %v5132, 0
        %v5141 = vsel %vm660, %v5130, 0
        %5143 = vmatprep.subr.mxu0 %v5141
        %5144 = vmatpush1.msra.mxu0 %v5139
        %5145 = vmatprep.subr.mxu0 0.0
        %5146 = vmatpush1.msra.mxu0 0.0
        %5147 = vmatprep.subr.mxu0 0.0
        %5148 = vmatpush1.msra.mxu0 0.0
        %5149 = vmatprep.subr.mxu0 0.0
        %5150 = vmatpush1.msra.mxu0 0.0
        %5151 = vmatprep.subr.mxu0 0.0
        %5152 = vmatpush1.msra.mxu0 0.0
        %5153 = vmatprep.subr.mxu0 0.0
        %5154 = vmatpush1.msra.mxu0 0.0
        %5155 = vmatprep.subr.mxu0 0.0
        %5156 = vmatpush1.msra.mxu0 0.0
        %5157 = vmatprep.subr.mxu0 0.0
        %5158 = vmatpush1.msra.mxu0 0.0
        %5159 = vmatprep.subr.mxu0 0.0
        %5160 = vmatpush1.msra.mxu0 0.0
        %5161 = vmatprep.subr.mxu0 0.0
        %5162 = vmatpush1.msra.mxu0 0.0
        %5163 = vmatprep.subr.mxu0 0.0
        %5164 = vmatpush1.msra.mxu0 0.0
        %5165 = vmatprep.subr.mxu0 0.0
        %5166 = vmatpush1.msra.mxu0 0.0
        %5167 = vmatprep.subr.mxu0 0.0
        %5168 = vmatpush1.msra.mxu0 0.0
        %5169 = vmatprep.subr.mxu0 0.0
        %5170 = vmatpush1.msra.mxu0 0.0
        %5171 = vmatprep.subr.mxu0 0.0
        %5172 = vmatpush1.msra.mxu0 0.0
        %5173 = vmatprep.subr.mxu0 0.0
        %5174 = vmatpush1.msra.mxu0 0.0
        %5175 = vmatprep.subr.mxu0 0.0
        %5176 = vmatpush1.msra.mxu0 0.0
        %5177 = vmatprep.subr.mxu0 0.0
        %5178 = vmatpush1.msra.mxu0 0.0
        %5179 = vmatprep.subr.mxu0 0.0
        %5180 = vmatpush1.msra.mxu0 0.0
        %5181 = vmatprep.subr.mxu0 0.0
        %5182 = vmatpush1.msra.mxu0 0.0
        %5183 = vmatprep.subr.mxu0 0.0
        %5184 = vmatpush1.msra.mxu0 0.0
        %5185 = vmatprep.subr.mxu0 0.0
        %5186 = vmatpush1.msra.mxu0 0.0
        %5187 = vmatprep.subr.mxu0 0.0
        %5188 = vmatpush1.msra.mxu0 0.0
        %5189 = vmatprep.subr.mxu0 0.0
        %5190 = vmatpush1.msra.mxu0 0.0
        %5191 = vmatprep.subr.mxu0 0.0
        %5192 = vmatpush1.msra.mxu0 0.0
        %5193 = vmatprep.subr.mxu0 0.0
        %5194 = vmatpush1.msra.mxu0 0.0
        %5195 = vmatprep.subr.mxu0 0.0
        %5196 = vmatpush1.msra.mxu0 0.0
        %5197 = vmatprep.subr.mxu0 0.0
        %5198 = vmatpush1.msra.mxu0 0.0
        %5199 = vmatprep.subr.mxu0 0.0
        %5200 = vmatpush1.msra.mxu0 0.0
        %5201 = vmatprep.subr.mxu0 0.0
        %5202 = vmatpush1.msra.mxu0 0.0
        %5203 = vmatprep.subr.mxu0 0.0
        %5204 = vmatpush1.msra.mxu0 0.0
        %5205 = vmatprep.subr.mxu0 0.0
        %5206 = vmatpush1.msra.mxu0 0.0
        %5207 = vmatprep.mubr.f32.mxu0 0.0
        %5208 = vmatmul.mubr.f32.gmra.mrb[0].mxu0 %v5134
        %v5209 = vpop.f32.mrb[0].mxu0
        %v5210 = vadd.f32 0.0, %v5209
        %v5211 = vpop.f32.mrb[0].mxu0
        %v5212 = vadd.f32 0.0, %v5211
        %5213 = vmatprep.mubr.f32.mxu0 0.0
        %5214 = vmatmul.mubr.f32.gmra.mrb[0].mxu0 %v5137
        %v5215 = vpop.f32.mrb[0].mxu0
        %v5216 = vadd.f32 0.0, %v5215
        %v5217 = vpop.f32.mrb[0].mxu0
        %v5218 = vadd.f32 0.0, %v5217
        %5219 = vdwg.mxu0
        %v5220 = vadd.f32 %v5120, %v5210
        %v5221 = vadd.f32 %v5121, %v5212
        %v5222 = vadd.f32 %v5122, %v5216
        %v5223 = vadd.f32 %v5123, %v5218
        %s5224 = scalar_lea.vmem %s5, 224
        %v5225 = vld [vmem:[%s5224] sm:$0xff]
        %v5226 = vld [vmem:[%s5224 + $0x8] sm:$0xff]
        %5227 = vrot.lane.b32.xlu0 %v3834, 94
        %v5228 = vpop.permute.xlu0 %5227
        %5229 = vrot.lane.b32.xlu0 %v3835, 94
        %v5230 = vpop.permute.xlu0 %5229
        %vm5231 = vcmask 769024
        %v5232 = vsel %vm5231, %v5228, %v5230
        %v5234 = vsel %vm3849, %v5225, 0
        %v5237 = vsel %vm3849, %v5226, 0
        %v5239 = vsel %vm660, %v5232, 0
        %v5241 = vsel %vm660, %v5230, 0
        %5243 = vmatprep.subr.mxu0 %v5241
        %5244 = vmatpush1.msra.mxu0 %v5239
        %5245 = vmatprep.subr.mxu0 0.0
        %5246 = vmatpush1.msra.mxu0 0.0
        %5247 = vmatprep.subr.mxu0 0.0
        %5248 = vmatpush1.msra.mxu0 0.0
        %5249 = vmatprep.subr.mxu0 0.0
        %5250 = vmatpush1.msra.mxu0 0.0
        %5251 = vmatprep.subr.mxu0 0.0
        %5252 = vmatpush1.msra.mxu0 0.0
        %5253 = vmatprep.subr.mxu0 0.0
        %5254 = vmatpush1.msra.mxu0 0.0
        %5255 = vmatprep.subr.mxu0 0.0
        %5256 = vmatpush1.msra.mxu0 0.0
        %5257 = vmatprep.subr.mxu0 0.0
        %5258 = vmatpush1.msra.mxu0 0.0
        %5259 = vmatprep.subr.mxu0 0.0
        %5260 = vmatpush1.msra.mxu0 0.0
        %5261 = vmatprep.subr.mxu0 0.0
        %5262 = vmatpush1.msra.mxu0 0.0
        %5263 = vmatprep.subr.mxu0 0.0
        %5264 = vmatpush1.msra.mxu0 0.0
        %5265 = vmatprep.subr.mxu0 0.0
        %5266 = vmatpush1.msra.mxu0 0.0
        %5267 = vmatprep.subr.mxu0 0.0
        %5268 = vmatpush1.msra.mxu0 0.0
        %5269 = vmatprep.subr.mxu0 0.0
        %5270 = vmatpush1.msra.mxu0 0.0
        %5271 = vmatprep.subr.mxu0 0.0
        %5272 = vmatpush1.msra.mxu0 0.0
        %5273 = vmatprep.subr.mxu0 0.0
        %5274 = vmatpush1.msra.mxu0 0.0
        %5275 = vmatprep.subr.mxu0 0.0
        %5276 = vmatpush1.msra.mxu0 0.0
        %5277 = vmatprep.subr.mxu0 0.0
        %5278 = vmatpush1.msra.mxu0 0.0
        %5279 = vmatprep.subr.mxu0 0.0
        %5280 = vmatpush1.msra.mxu0 0.0
        %5281 = vmatprep.subr.mxu0 0.0
        %5282 = vmatpush1.msra.mxu0 0.0
        %5283 = vmatprep.subr.mxu0 0.0
        %5284 = vmatpush1.msra.mxu0 0.0
        %5285 = vmatprep.subr.mxu0 0.0
        %5286 = vmatpush1.msra.mxu0 0.0
        %5287 = vmatprep.subr.mxu0 0.0
        %5288 = vmatpush1.msra.mxu0 0.0
        %5289 = vmatprep.subr.mxu0 0.0
        %5290 = vmatpush1.msra.mxu0 0.0
        %5291 = vmatprep.subr.mxu0 0.0
        %5292 = vmatpush1.msra.mxu0 0.0
        %5293 = vmatprep.subr.mxu0 0.0
        %5294 = vmatpush1.msra.mxu0 0.0
        %5295 = vmatprep.subr.mxu0 0.0
        %5296 = vmatpush1.msra.mxu0 0.0
        %5297 = vmatprep.subr.mxu0 0.0
        %5298 = vmatpush1.msra.mxu0 0.0
        %5299 = vmatprep.subr.mxu0 0.0
        %5300 = vmatpush1.msra.mxu0 0.0
        %5301 = vmatprep.subr.mxu0 0.0
        %5302 = vmatpush1.msra.mxu0 0.0
        %5303 = vmatprep.subr.mxu0 0.0
        %5304 = vmatpush1.msra.mxu0 0.0
        %5305 = vmatprep.subr.mxu0 0.0
        %5306 = vmatpush1.msra.mxu0 0.0
        %5307 = vmatprep.mubr.f32.mxu0 0.0
        %5308 = vmatmul.mubr.f32.gmra.mrb[0].mxu0 %v5234
        %v5309 = vpop.f32.mrb[0].mxu0
        %v5310 = vadd.f32 0.0, %v5309
        %v5311 = vpop.f32.mrb[0].mxu0
        %v5312 = vadd.f32 0.0, %v5311
        %5313 = vmatprep.mubr.f32.mxu0 0.0
        %5314 = vmatmul.mubr.f32.gmra.mrb[0].mxu0 %v5237
        %v5315 = vpop.f32.mrb[0].mxu0
        %v5316 = vadd.f32 0.0, %v5315
        %v5317 = vpop.f32.mrb[0].mxu0
        %v5318 = vadd.f32 0.0, %v5317
        %5319 = vdwg.mxu0
        %v5320 = vadd.f32 %v5220, %v5310
        %v5321 = vadd.f32 %v5221, %v5312
        %v5322 = vadd.f32 %v5222, %v5316
        %v5323 = vadd.f32 %v5223, %v5318
        %s5324 = scalar_lea.vmem %s5, 240
        %v5325 = vld [vmem:[%s5324] sm:$0xff]
        %v5326 = vld [vmem:[%s5324 + $0x8] sm:$0xff]
        %5327 = vrot.lane.b32.xlu0 %v3834, 83
        %v5328 = vpop.permute.xlu0 %5327
        %5329 = vrot.lane.b32.xlu0 %v3835, 83
        %v5330 = vpop.permute.xlu0 %5329
        %vm5331 = vcmask 678912
        %v5332 = vsel %vm5331, %v5328, %v5330
        %v5334 = vsel %vm3849, %v5325, 0
        %v5337 = vsel %vm3849, %v5326, 0
        %v5339 = vsel %vm660, %v5332, 0
        %v5341 = vsel %vm660, %v5330, 0
        %5343 = vmatprep.subr.mxu0 %v5341
        %5344 = vmatpush1.msra.mxu0 %v5339
        %5345 = vmatprep.subr.mxu0 0.0
        %5346 = vmatpush1.msra.mxu0 0.0
        %5347 = vmatprep.subr.mxu0 0.0
        %5348 = vmatpush1.msra.mxu0 0.0
        %5349 = vmatprep.subr.mxu0 0.0
        %5350 = vmatpush1.msra.mxu0 0.0
        %5351 = vmatprep.subr.mxu0 0.0
        %5352 = vmatpush1.msra.mxu0 0.0
        %5353 = vmatprep.subr.mxu0 0.0
        %5354 = vmatpush1.msra.mxu0 0.0
        %5355 = vmatprep.subr.mxu0 0.0
        %5356 = vmatpush1.msra.mxu0 0.0
        %5357 = vmatprep.subr.mxu0 0.0
        %5358 = vmatpush1.msra.mxu0 0.0
        %5359 = vmatprep.subr.mxu0 0.0
        %5360 = vmatpush1.msra.mxu0 0.0
        %5361 = vmatprep.subr.mxu0 0.0
        %5362 = vmatpush1.msra.mxu0 0.0
        %5363 = vmatprep.subr.mxu0 0.0
        %5364 = vmatpush1.msra.mxu0 0.0
        %5365 = vmatprep.subr.mxu0 0.0
        %5366 = vmatpush1.msra.mxu0 0.0
        %5367 = vmatprep.subr.mxu0 0.0
        %5368 = vmatpush1.msra.mxu0 0.0
        %5369 = vmatprep.subr.mxu0 0.0
        %5370 = vmatpush1.msra.mxu0 0.0
        %5371 = vmatprep.subr.mxu0 0.0
        %5372 = vmatpush1.msra.mxu0 0.0
        %5373 = vmatprep.subr.mxu0 0.0
        %5374 = vmatpush1.msra.mxu0 0.0
        %5375 = vmatprep.subr.mxu0 0.0
        %5376 = vmatpush1.msra.mxu0 0.0
        %5377 = vmatprep.subr.mxu0 0.0
        %5378 = vmatpush1.msra.mxu0 0.0
        %5379 = vmatprep.subr.mxu0 0.0
        %5380 = vmatpush1.msra.mxu0 0.0
        %5381 = vmatprep.subr.mxu0 0.0
        %5382 = vmatpush1.msra.mxu0 0.0
        %5383 = vmatprep.subr.mxu0 0.0
        %5384 = vmatpush1.msra.mxu0 0.0
        %5385 = vmatprep.subr.mxu0 0.0
        %5386 = vmatpush1.msra.mxu0 0.0
        %5387 = vmatprep.subr.mxu0 0.0
        %5388 = vmatpush1.msra.mxu0 0.0
        %5389 = vmatprep.subr.mxu0 0.0
        %5390 = vmatpush1.msra.mxu0 0.0
        %5391 = vmatprep.subr.mxu0 0.0
        %5392 = vmatpush1.msra.mxu0 0.0
        %5393 = vmatprep.subr.mxu0 0.0
        %5394 = vmatpush1.msra.mxu0 0.0
        %5395 = vmatprep.subr.mxu0 0.0
        %5396 = vmatpush1.msra.mxu0 0.0
        %5397 = vmatprep.subr.mxu0 0.0
        %5398 = vmatpush1.msra.mxu0 0.0
        %5399 = vmatprep.subr.mxu0 0.0
        %5400 = vmatpush1.msra.mxu0 0.0
        %5401 = vmatprep.subr.mxu0 0.0
        %5402 = vmatpush1.msra.mxu0 0.0
        %5403 = vmatprep.subr.mxu0 0.0
        %5404 = vmatpush1.msra.mxu0 0.0
        %5405 = vmatprep.subr.mxu0 0.0
        %5406 = vmatpush1.msra.mxu0 0.0
        %5407 = vmatprep.mubr.f32.mxu0 0.0
        %5408 = vmatmul.mubr.f32.gmra.mrb[0].mxu0 %v5334
        %v5409 = vpop.f32.mrb[0].mxu0
        %v5410 = vadd.f32 0.0, %v5409
        %v5411 = vpop.f32.mrb[0].mxu0
        %v5412 = vadd.f32 0.0, %v5411
        %5413 = vmatprep.mubr.f32.mxu0 0.0
        %5414 = vmatmul.mubr.f32.gmra.mrb[0].mxu0 %v5337
        %v5415 = vpop.f32.mrb[0].mxu0
        %v5416 = vadd.f32 0.0, %v5415
        %v5417 = vpop.f32.mrb[0].mxu0
        %v5418 = vadd.f32 0.0, %v5417
        %5419 = vdwg.mxu0
        %v5420 = vadd.f32 %v5320, %v5410
        %v5421 = vadd.f32 %v5321, %v5412
        %v5422 = vadd.f32 %v5322, %v5416
        %v5423 = vadd.f32 %v5323, %v5418
        %s5424 = scalar_lea.vmem %s5, 256
        %v5425 = vld [vmem:[%s5424] sm:$0xff]
        %v5426 = vld [vmem:[%s5424 + $0x8] sm:$0xff]
        %5427 = vrot.lane.b32.xlu0 %v3834, 82
        %v5428 = vpop.permute.xlu0 %5427
        %5429 = vrot.lane.b32.xlu0 %v3835, 82
        %v5430 = vpop.permute.xlu0 %5429
        %vm5431 = vcmask 670720
        %v5432 = vsel %vm5431, %v5428, %v5430
        %v5434 = vsel %vm3849, %v5425, 0
        %v5437 = vsel %vm3849, %v5426, 0
        %v5439 = vsel %vm660, %v5432, 0
        %v5441 = vsel %vm660, %v5430, 0
        %5443 = vmatprep.subr.mxu0 %v5441
        %5444 = vmatpush1.msra.mxu0 %v5439
        %5445 = vmatprep.subr.mxu0 0.0
        %5446 = vmatpush1.msra.mxu0 0.0
        %5447 = vmatprep.subr.mxu0 0.0
        %5448 = vmatpush1.msra.mxu0 0.0
        %5449 = vmatprep.subr.mxu0 0.0
        %5450 = vmatpush1.msra.mxu0 0.0
        %5451 = vmatprep.subr.mxu0 0.0
        %5452 = vmatpush1.msra.mxu0 0.0
        %5453 = vmatprep.subr.mxu0 0.0
        %5454 = vmatpush1.msra.mxu0 0.0
        %5455 = vmatprep.subr.mxu0 0.0
        %5456 = vmatpush1.msra.mxu0 0.0
        %5457 = vmatprep.subr.mxu0 0.0
        %5458 = vmatpush1.msra.mxu0 0.0
        %5459 = vmatprep.subr.mxu0 0.0
        %5460 = vmatpush1.msra.mxu0 0.0
        %5461 = vmatprep.subr.mxu0 0.0
        %5462 = vmatpush1.msra.mxu0 0.0
        %5463 = vmatprep.subr.mxu0 0.0
        %5464 = vmatpush1.msra.mxu0 0.0
        %5465 = vmatprep.subr.mxu0 0.0
        %5466 = vmatpush1.msra.mxu0 0.0
        %5467 = vmatprep.subr.mxu0 0.0
        %5468 = vmatpush1.msra.mxu0 0.0
        %5469 = vmatprep.subr.mxu0 0.0
        %5470 = vmatpush1.msra.mxu0 0.0
        %5471 = vmatprep.subr.mxu0 0.0
        %5472 = vmatpush1.msra.mxu0 0.0
        %5473 = vmatprep.subr.mxu0 0.0
        %5474 = vmatpush1.msra.mxu0 0.0
        %5475 = vmatprep.subr.mxu0 0.0
        %5476 = vmatpush1.msra.mxu0 0.0
        %5477 = vmatprep.subr.mxu0 0.0
        %5478 = vmatpush1.msra.mxu0 0.0
        %5479 = vmatprep.subr.mxu0 0.0
        %5480 = vmatpush1.msra.mxu0 0.0
        %5481 = vmatprep.subr.mxu0 0.0
        %5482 = vmatpush1.msra.mxu0 0.0
        %5483 = vmatprep.subr.mxu0 0.0
        %5484 = vmatpush1.msra.mxu0 0.0
        %5485 = vmatprep.subr.mxu0 0.0
        %5486 = vmatpush1.msra.mxu0 0.0
        %5487 = vmatprep.subr.mxu0 0.0
        %5488 = vmatpush1.msra.mxu0 0.0
        %5489 = vmatprep.subr.mxu0 0.0
        %5490 = vmatpush1.msra.mxu0 0.0
        %5491 = vmatprep.subr.mxu0 0.0
        %5492 = vmatpush1.msra.mxu0 0.0
        %5493 = vmatprep.subr.mxu0 0.0
        %5494 = vmatpush1.msra.mxu0 0.0
        %5495 = vmatprep.subr.mxu0 0.0
        %5496 = vmatpush1.msra.mxu0 0.0
        %5497 = vmatprep.subr.mxu0 0.0
        %5498 = vmatpush1.msra.mxu0 0.0
        %5499 = vmatprep.subr.mxu0 0.0
        %5500 = vmatpush1.msra.mxu0 0.0
        %5501 = vmatprep.subr.mxu0 0.0
        %5502 = vmatpush1.msra.mxu0 0.0
        %5503 = vmatprep.subr.mxu0 0.0
        %5504 = vmatpush1.msra.mxu0 0.0
        %5505 = vmatprep.subr.mxu0 0.0
        %5506 = vmatpush1.msra.mxu0 0.0
        %5507 = vmatprep.mubr.f32.mxu0 0.0
        %5508 = vmatmul.mubr.f32.gmra.mrb[0].mxu0 %v5434
        %v5509 = vpop.f32.mrb[0].mxu0
        %v5510 = vadd.f32 0.0, %v5509
        %v5511 = vpop.f32.mrb[0].mxu0
        %v5512 = vadd.f32 0.0, %v5511
        %5513 = vmatprep.mubr.f32.mxu0 0.0
        %5514 = vmatmul.mubr.f32.gmra.mrb[0].mxu0 %v5437
        %v5515 = vpop.f32.mrb[0].mxu0
        %v5516 = vadd.f32 0.0, %v5515
        %v5517 = vpop.f32.mrb[0].mxu0
        %v5518 = vadd.f32 0.0, %v5517
        %5519 = vdwg.mxu0
        %v5520 = vadd.f32 %v5420, %v5510
        %v5521 = vadd.f32 %v5421, %v5512
        %v5522 = vadd.f32 %v5422, %v5516
        %v5523 = vadd.f32 %v5423, %v5518
        %s5524 = scalar_lea.vmem %s5, 272
        %v5525 = vld [vmem:[%s5524] sm:$0xff]
        %v5526 = vld [vmem:[%s5524 + $0x8] sm:$0xff]
        %5527 = vrot.lane.b32.xlu0 %v3834, 81
        %v5528 = vpop.permute.xlu0 %5527
        %5529 = vrot.lane.b32.xlu0 %v3835, 81
        %v5530 = vpop.permute.xlu0 %5529
        %vm5531 = vcmask 662528
        %v5532 = vsel %vm5531, %v5528, %v5530
        %v5534 = vsel %vm3849, %v5525, 0
        %v5537 = vsel %vm3849, %v5526, 0
        %v5539 = vsel %vm660, %v5532, 0
        %v5541 = vsel %vm660, %v5530, 0
        %5543 = vmatprep.subr.mxu0 %v5541
        %5544 = vmatpush1.msra.mxu0 %v5539
        %5545 = vmatprep.subr.mxu0 0.0
        %5546 = vmatpush1.msra.mxu0 0.0
        %5547 = vmatprep.subr.mxu0 0.0
        %5548 = vmatpush1.msra.mxu0 0.0
        %5549 = vmatprep.subr.mxu0 0.0
        %5550 = vmatpush1.msra.mxu0 0.0
        %5551 = vmatprep.subr.mxu0 0.0
        %5552 = vmatpush1.msra.mxu0 0.0
        %5553 = vmatprep.subr.mxu0 0.0
        %5554 = vmatpush1.msra.mxu0 0.0
        %5555 = vmatprep.subr.mxu0 0.0
        %5556 = vmatpush1.msra.mxu0 0.0
        %5557 = vmatprep.subr.mxu0 0.0
        %5558 = vmatpush1.msra.mxu0 0.0
        %5559 = vmatprep.subr.mxu0 0.0
        %5560 = vmatpush1.msra.mxu0 0.0
        %5561 = vmatprep.subr.mxu0 0.0
        %5562 = vmatpush1.msra.mxu0 0.0
        %5563 = vmatprep.subr.mxu0 0.0
        %5564 = vmatpush1.msra.mxu0 0.0
        %5565 = vmatprep.subr.mxu0 0.0
        %5566 = vmatpush1.msra.mxu0 0.0
        %5567 = vmatprep.subr.mxu0 0.0
        %5568 = vmatpush1.msra.mxu0 0.0
        %5569 = vmatprep.subr.mxu0 0.0
        %5570 = vmatpush1.msra.mxu0 0.0
        %5571 = vmatprep.subr.mxu0 0.0
        %5572 = vmatpush1.msra.mxu0 0.0
        %5573 = vmatprep.subr.mxu0 0.0
        %5574 = vmatpush1.msra.mxu0 0.0
        %5575 = vmatprep.subr.mxu0 0.0
        %5576 = vmatpush1.msra.mxu0 0.0
        %5577 = vmatprep.subr.mxu0 0.0
        %5578 = vmatpush1.msra.mxu0 0.0
        %5579 = vmatprep.subr.mxu0 0.0
        %5580 = vmatpush1.msra.mxu0 0.0
        %5581 = vmatprep.subr.mxu0 0.0
        %5582 = vmatpush1.msra.mxu0 0.0
        %5583 = vmatprep.subr.mxu0 0.0
        %5584 = vmatpush1.msra.mxu0 0.0
        %5585 = vmatprep.subr.mxu0 0.0
        %5586 = vmatpush1.msra.mxu0 0.0
        %5587 = vmatprep.subr.mxu0 0.0
        %5588 = vmatpush1.msra.mxu0 0.0
        %5589 = vmatprep.subr.mxu0 0.0
        %5590 = vmatpush1.msra.mxu0 0.0
        %5591 = vmatprep.subr.mxu0 0.0
        %5592 = vmatpush1.msra.mxu0 0.0
        %5593 = vmatprep.subr.mxu0 0.0
        %5594 = vmatpush1.msra.mxu0 0.0
        %5595 = vmatprep.subr.mxu0 0.0
        %5596 = vmatpush1.msra.mxu0 0.0
        %5597 = vmatprep.subr.mxu0 0.0
        %5598 = vmatpush1.msra.mxu0 0.0
        %5599 = vmatprep.subr.mxu0 0.0
        %5600 = vmatpush1.msra.mxu0 0.0
        %5601 = vmatprep.subr.mxu0 0.0
        %5602 = vmatpush1.msra.mxu0 0.0
        %5603 = vmatprep.subr.mxu0 0.0
        %5604 = vmatpush1.msra.mxu0 0.0
        %5605 = vmatprep.subr.mxu0 0.0
        %5606 = vmatpush1.msra.mxu0 0.0
        %5607 = vmatprep.mubr.f32.mxu0 0.0
        %5608 = vmatmul.mubr.f32.gmra.mrb[0].mxu0 %v5534
        %v5609 = vpop.f32.mrb[0].mxu0
        %v5610 = vadd.f32 0.0, %v5609
        %v5611 = vpop.f32.mrb[0].mxu0
        %v5612 = vadd.f32 0.0, %v5611
        %5613 = vmatprep.mubr.f32.mxu0 0.0
        %5614 = vmatmul.mubr.f32.gmra.mrb[0].mxu0 %v5537
        %v5615 = vpop.f32.mrb[0].mxu0
        %v5616 = vadd.f32 0.0, %v5615
        %v5617 = vpop.f32.mrb[0].mxu0
        %v5618 = vadd.f32 0.0, %v5617
        %5619 = vdwg.mxu0
        %v5620 = vadd.f32 %v5520, %v5610
        %v5621 = vadd.f32 %v5521, %v5612
        %v5622 = vadd.f32 %v5522, %v5616
        %v5623 = vadd.f32 %v5523, %v5618
        %s5624 = scalar_lea.vmem %s5, 288
        %v5625 = vld [vmem:[%s5624] sm:$0xff]
        %v5626 = vld [vmem:[%s5624 + $0x8] sm:$0xff]
        %5627 = vrot.lane.b32.xlu0 %v3834, 80
        %v5628 = vpop.permute.xlu0 %5627
        %5629 = vrot.lane.b32.xlu0 %v3835, 80
        %v5630 = vpop.permute.xlu0 %5629
        %vm5631 = vcmask 654336
        %v5632 = vsel %vm5631, %v5628, %v5630
        %v5634 = vsel %vm3849, %v5625, 0
        %v5637 = vsel %vm3849, %v5626, 0
        %v5639 = vsel %vm660, %v5632, 0
        %v5641 = vsel %vm660, %v5630, 0
        %5643 = vmatprep.subr.mxu0 %v5641
        %5644 = vmatpush1.msra.mxu0 %v5639
        %5645 = vmatprep.subr.mxu0 0.0
        %5646 = vmatpush1.msra.mxu0 0.0
        %5647 = vmatprep.subr.mxu0 0.0
        %5648 = vmatpush1.msra.mxu0 0.0
        %5649 = vmatprep.subr.mxu0 0.0
        %5650 = vmatpush1.msra.mxu0 0.0
        %5651 = vmatprep.subr.mxu0 0.0
        %5652 = vmatpush1.msra.mxu0 0.0
        %5653 = vmatprep.subr.mxu0 0.0
        %5654 = vmatpush1.msra.mxu0 0.0
        %5655 = vmatprep.subr.mxu0 0.0
        %5656 = vmatpush1.msra.mxu0 0.0
        %5657 = vmatprep.subr.mxu0 0.0
        %5658 = vmatpush1.msra.mxu0 0.0
        %5659 = vmatprep.subr.mxu0 0.0
        %5660 = vmatpush1.msra.mxu0 0.0
        %5661 = vmatprep.subr.mxu0 0.0
        %5662 = vmatpush1.msra.mxu0 0.0
        %5663 = vmatprep.subr.mxu0 0.0
        %5664 = vmatpush1.msra.mxu0 0.0
        %5665 = vmatprep.subr.mxu0 0.0
        %5666 = vmatpush1.msra.mxu0 0.0
        %5667 = vmatprep.subr.mxu0 0.0
        %5668 = vmatpush1.msra.mxu0 0.0
        %5669 = vmatprep.subr.mxu0 0.0
        %5670 = vmatpush1.msra.mxu0 0.0
        %5671 = vmatprep.subr.mxu0 0.0
        %5672 = vmatpush1.msra.mxu0 0.0
        %5673 = vmatprep.subr.mxu0 0.0
        %5674 = vmatpush1.msra.mxu0 0.0
        %5675 = vmatprep.subr.mxu0 0.0
        %5676 = vmatpush1.msra.mxu0 0.0
        %5677 = vmatprep.subr.mxu0 0.0
        %5678 = vmatpush1.msra.mxu0 0.0
        %5679 = vmatprep.subr.mxu0 0.0
        %5680 = vmatpush1.msra.mxu0 0.0
        %5681 = vmatprep.subr.mxu0 0.0
        %5682 = vmatpush1.msra.mxu0 0.0
        %5683 = vmatprep.subr.mxu0 0.0
        %5684 = vmatpush1.msra.mxu0 0.0
        %5685 = vmatprep.subr.mxu0 0.0
        %5686 = vmatpush1.msra.mxu0 0.0
        %5687 = vmatprep.subr.mxu0 0.0
        %5688 = vmatpush1.msra.mxu0 0.0
        %5689 = vmatprep.subr.mxu0 0.0
        %5690 = vmatpush1.msra.mxu0 0.0
        %5691 = vmatprep.subr.mxu0 0.0
        %5692 = vmatpush1.msra.mxu0 0.0
        %5693 = vmatprep.subr.mxu0 0.0
        %5694 = vmatpush1.msra.mxu0 0.0
        %5695 = vmatprep.subr.mxu0 0.0
        %5696 = vmatpush1.msra.mxu0 0.0
        %5697 = vmatprep.subr.mxu0 0.0
        %5698 = vmatpush1.msra.mxu0 0.0
        %5699 = vmatprep.subr.mxu0 0.0
        %5700 = vmatpush1.msra.mxu0 0.0
        %5701 = vmatprep.subr.mxu0 0.0
        %5702 = vmatpush1.msra.mxu0 0.0
        %5703 = vmatprep.subr.mxu0 0.0
        %5704 = vmatpush1.msra.mxu0 0.0
        %5705 = vmatprep.subr.mxu0 0.0
        %5706 = vmatpush1.msra.mxu0 0.0
        %5707 = vmatprep.mubr.f32.mxu0 0.0
        %5708 = vmatmul.mubr.f32.gmra.mrb[0].mxu0 %v5634
        %v5709 = vpop.f32.mrb[0].mxu0
        %v5710 = vadd.f32 0.0, %v5709
        %v5711 = vpop.f32.mrb[0].mxu0
        %v5712 = vadd.f32 0.0, %v5711
        %5713 = vmatprep.mubr.f32.mxu0 0.0
        %5714 = vmatmul.mubr.f32.gmra.mrb[0].mxu0 %v5637
        %v5715 = vpop.f32.mrb[0].mxu0
        %v5716 = vadd.f32 0.0, %v5715
        %v5717 = vpop.f32.mrb[0].mxu0
        %v5718 = vadd.f32 0.0, %v5717
        %5719 = vdwg.mxu0
        %v5720 = vadd.f32 %v5620, %v5710
        %v5721 = vadd.f32 %v5621, %v5712
        %v5722 = vadd.f32 %v5622, %v5716
        %v5723 = vadd.f32 %v5623, %v5718
        %s5724 = scalar_lea.vmem %s5, 304
        %v5725 = vld [vmem:[%s5724] sm:$0xff]
        %v5726 = vld [vmem:[%s5724 + $0x8] sm:$0xff]
        %5727 = vrot.lane.b32.xlu0 %v3834, 79
        %v5728 = vpop.permute.xlu0 %5727
        %5729 = vrot.lane.b32.xlu0 %v3835, 79
        %v5730 = vpop.permute.xlu0 %5729
        %vm5731 = vcmask 646144
        %v5732 = vsel %vm5731, %v5728, %v5730
        %v5734 = vsel %vm3849, %v5725, 0
        %v5737 = vsel %vm3849, %v5726, 0
        %v5739 = vsel %vm660, %v5732, 0
        %v5741 = vsel %vm660, %v5730, 0
        %5743 = vmatprep.subr.mxu0 %v5741
        %5744 = vmatpush1.msra.mxu0 %v5739
        %5745 = vmatprep.subr.mxu0 0.0
        %5746 = vmatpush1.msra.mxu0 0.0
        %5747 = vmatprep.subr.mxu0 0.0
        %5748 = vmatpush1.msra.mxu0 0.0
        %5749 = vmatprep.subr.mxu0 0.0
        %5750 = vmatpush1.msra.mxu0 0.0
        %5751 = vmatprep.subr.mxu0 0.0
        %5752 = vmatpush1.msra.mxu0 0.0
        %5753 = vmatprep.subr.mxu0 0.0
        %5754 = vmatpush1.msra.mxu0 0.0
        %5755 = vmatprep.subr.mxu0 0.0
        %5756 = vmatpush1.msra.mxu0 0.0
        %5757 = vmatprep.subr.mxu0 0.0
        %5758 = vmatpush1.msra.mxu0 0.0
        %5759 = vmatprep.subr.mxu0 0.0
        %5760 = vmatpush1.msra.mxu0 0.0
        %5761 = vmatprep.subr.mxu0 0.0
        %5762 = vmatpush1.msra.mxu0 0.0
        %5763 = vmatprep.subr.mxu0 0.0
        %5764 = vmatpush1.msra.mxu0 0.0
        %5765 = vmatprep.subr.mxu0 0.0
        %5766 = vmatpush1.msra.mxu0 0.0
        %5767 = vmatprep.subr.mxu0 0.0
        %5768 = vmatpush1.msra.mxu0 0.0
        %5769 = vmatprep.subr.mxu0 0.0
        %5770 = vmatpush1.msra.mxu0 0.0
        %5771 = vmatprep.subr.mxu0 0.0
        %5772 = vmatpush1.msra.mxu0 0.0
        %5773 = vmatprep.subr.mxu0 0.0
        %5774 = vmatpush1.msra.mxu0 0.0
        %5775 = vmatprep.subr.mxu0 0.0
        %5776 = vmatpush1.msra.mxu0 0.0
        %5777 = vmatprep.subr.mxu0 0.0
        %5778 = vmatpush1.msra.mxu0 0.0
        %5779 = vmatprep.subr.mxu0 0.0
        %5780 = vmatpush1.msra.mxu0 0.0
        %5781 = vmatprep.subr.mxu0 0.0
        %5782 = vmatpush1.msra.mxu0 0.0
        %5783 = vmatprep.subr.mxu0 0.0
        %5784 = vmatpush1.msra.mxu0 0.0
        %5785 = vmatprep.subr.mxu0 0.0
        %5786 = vmatpush1.msra.mxu0 0.0
        %5787 = vmatprep.subr.mxu0 0.0
        %5788 = vmatpush1.msra.mxu0 0.0
        %5789 = vmatprep.subr.mxu0 0.0
        %5790 = vmatpush1.msra.mxu0 0.0
        %5791 = vmatprep.subr.mxu0 0.0
        %5792 = vmatpush1.msra.mxu0 0.0
        %5793 = vmatprep.subr.mxu0 0.0
        %5794 = vmatpush1.msra.mxu0 0.0
        %5795 = vmatprep.subr.mxu0 0.0
        %5796 = vmatpush1.msra.mxu0 0.0
        %5797 = vmatprep.subr.mxu0 0.0
        %5798 = vmatpush1.msra.mxu0 0.0
        %5799 = vmatprep.subr.mxu0 0.0
        %5800 = vmatpush1.msra.mxu0 0.0
        %5801 = vmatprep.subr.mxu0 0.0
        %5802 = vmatpush1.msra.mxu0 0.0
        %5803 = vmatprep.subr.mxu0 0.0
        %5804 = vmatpush1.msra.mxu0 0.0
        %5805 = vmatprep.subr.mxu0 0.0
        %5806 = vmatpush1.msra.mxu0 0.0
        %5807 = vmatprep.mubr.f32.mxu0 0.0
        %5808 = vmatmul.mubr.f32.gmra.mrb[0].mxu0 %v5734
        %v5809 = vpop.f32.mrb[0].mxu0
        %v5810 = vadd.f32 0.0, %v5809
        %v5811 = vpop.f32.mrb[0].mxu0
        %v5812 = vadd.f32 0.0, %v5811
        %5813 = vmatprep.mubr.f32.mxu0 0.0
        %5814 = vmatmul.mubr.f32.gmra.mrb[0].mxu0 %v5737
        %v5815 = vpop.f32.mrb[0].mxu0
        %v5816 = vadd.f32 0.0, %v5815
        %v5817 = vpop.f32.mrb[0].mxu0
        %v5818 = vadd.f32 0.0, %v5817
        %5819 = vdwg.mxu0
        %v5820 = vadd.f32 %v5720, %v5810
        %v5821 = vadd.f32 %v5721, %v5812
        %v5822 = vadd.f32 %v5722, %v5816
        %v5823 = vadd.f32 %v5723, %v5818
        %s5824 = scalar_lea.vmem %s5, 320
        %v5825 = vld [vmem:[%s5824] sm:$0xff]
        %v5826 = vld [vmem:[%s5824 + $0x8] sm:$0xff]
        %5827 = vrot.lane.b32.xlu0 %v3834, 68
        %v5828 = vpop.permute.xlu0 %5827
        %5829 = vrot.lane.b32.xlu0 %v3835, 68
        %v5830 = vpop.permute.xlu0 %5829
        %vm5831 = vcmask 556032
        %v5832 = vsel %vm5831, %v5828, %v5830
        %v5834 = vsel %vm3849, %v5825, 0
        %v5837 = vsel %vm3849, %v5826, 0
        %v5839 = vsel %vm660, %v5832, 0
        %v5841 = vsel %vm660, %v5830, 0
        %5843 = vmatprep.subr.mxu0 %v5841
        %5844 = vmatpush1.msra.mxu0 %v5839
        %5845 = vmatprep.subr.mxu0 0.0
        %5846 = vmatpush1.msra.mxu0 0.0
        %5847 = vmatprep.subr.mxu0 0.0
        %5848 = vmatpush1.msra.mxu0 0.0
        %5849 = vmatprep.subr.mxu0 0.0
        %5850 = vmatpush1.msra.mxu0 0.0
        %5851 = vmatprep.subr.mxu0 0.0
        %5852 = vmatpush1.msra.mxu0 0.0
        %5853 = vmatprep.subr.mxu0 0.0
        %5854 = vmatpush1.msra.mxu0 0.0
        %5855 = vmatprep.subr.mxu0 0.0
        %5856 = vmatpush1.msra.mxu0 0.0
        %5857 = vmatprep.subr.mxu0 0.0
        %5858 = vmatpush1.msra.mxu0 0.0
        %5859 = vmatprep.subr.mxu0 0.0
        %5860 = vmatpush1.msra.mxu0 0.0
        %5861 = vmatprep.subr.mxu0 0.0
        %5862 = vmatpush1.msra.mxu0 0.0
        %5863 = vmatprep.subr.mxu0 0.0
        %5864 = vmatpush1.msra.mxu0 0.0
        %5865 = vmatprep.subr.mxu0 0.0
        %5866 = vmatpush1.msra.mxu0 0.0
        %5867 = vmatprep.subr.mxu0 0.0
        %5868 = vmatpush1.msra.mxu0 0.0
        %5869 = vmatprep.subr.mxu0 0.0
        %5870 = vmatpush1.msra.mxu0 0.0
        %5871 = vmatprep.subr.mxu0 0.0
        %5872 = vmatpush1.msra.mxu0 0.0
        %5873 = vmatprep.subr.mxu0 0.0
        %5874 = vmatpush1.msra.mxu0 0.0
        %5875 = vmatprep.subr.mxu0 0.0
        %5876 = vmatpush1.msra.mxu0 0.0
        %5877 = vmatprep.subr.mxu0 0.0
        %5878 = vmatpush1.msra.mxu0 0.0
        %5879 = vmatprep.subr.mxu0 0.0
        %5880 = vmatpush1.msra.mxu0 0.0
        %5881 = vmatprep.subr.mxu0 0.0
        %5882 = vmatpush1.msra.mxu0 0.0
        %5883 = vmatprep.subr.mxu0 0.0
        %5884 = vmatpush1.msra.mxu0 0.0
        %5885 = vmatprep.subr.mxu0 0.0
        %5886 = vmatpush1.msra.mxu0 0.0
        %5887 = vmatprep.subr.mxu0 0.0
        %5888 = vmatpush1.msra.mxu0 0.0
        %5889 = vmatprep.subr.mxu0 0.0
        %5890 = vmatpush1.msra.mxu0 0.0
        %5891 = vmatprep.subr.mxu0 0.0
        %5892 = vmatpush1.msra.mxu0 0.0
        %5893 = vmatprep.subr.mxu0 0.0
        %5894 = vmatpush1.msra.mxu0 0.0
        %5895 = vmatprep.subr.mxu0 0.0
        %5896 = vmatpush1.msra.mxu0 0.0
        %5897 = vmatprep.subr.mxu0 0.0
        %5898 = vmatpush1.msra.mxu0 0.0
        %5899 = vmatprep.subr.mxu0 0.0
        %5900 = vmatpush1.msra.mxu0 0.0
        %5901 = vmatprep.subr.mxu0 0.0
        %5902 = vmatpush1.msra.mxu0 0.0
        %5903 = vmatprep.subr.mxu0 0.0
        %5904 = vmatpush1.msra.mxu0 0.0
        %5905 = vmatprep.subr.mxu0 0.0
        %5906 = vmatpush1.msra.mxu0 0.0
        %5907 = vmatprep.mubr.f32.mxu0 0.0
        %5908 = vmatmul.mubr.f32.gmra.mrb[0].mxu0 %v5834
        %v5909 = vpop.f32.mrb[0].mxu0
        %v5910 = vadd.f32 0.0, %v5909
        %v5911 = vpop.f32.mrb[0].mxu0
        %v5912 = vadd.f32 0.0, %v5911
        %5913 = vmatprep.mubr.f32.mxu0 0.0
        %5914 = vmatmul.mubr.f32.gmra.mrb[0].mxu0 %v5837
        %v5915 = vpop.f32.mrb[0].mxu0
        %v5916 = vadd.f32 0.0, %v5915
        %v5917 = vpop.f32.mrb[0].mxu0
        %v5918 = vadd.f32 0.0, %v5917
        %5919 = vdwg.mxu0
        %v5920 = vadd.f32 %v5820, %v5910
        %v5921 = vadd.f32 %v5821, %v5912
        %v5922 = vadd.f32 %v5822, %v5916
        %v5923 = vadd.f32 %v5823, %v5918
        %s5924 = scalar_lea.vmem %s5, 336
        %v5925 = vld [vmem:[%s5924] sm:$0xff]
        %v5926 = vld [vmem:[%s5924 + $0x8] sm:$0xff]
        %5927 = vrot.lane.b32.xlu0 %v3834, 67
        %v5928 = vpop.permute.xlu0 %5927
        %5929 = vrot.lane.b32.xlu0 %v3835, 67
        %v5930 = vpop.permute.xlu0 %5929
        %vm5931 = vcmask 547840
        %v5932 = vsel %vm5931, %v5928, %v5930
        %v5934 = vsel %vm3849, %v5925, 0
        %v5937 = vsel %vm3849, %v5926, 0
        %v5939 = vsel %vm660, %v5932, 0
        %v5941 = vsel %vm660, %v5930, 0
        %5943 = vmatprep.subr.mxu0 %v5941
        %5944 = vmatpush1.msra.mxu0 %v5939
        %5945 = vmatprep.subr.mxu0 0.0
        %5946 = vmatpush1.msra.mxu0 0.0
        %5947 = vmatprep.subr.mxu0 0.0
        %5948 = vmatpush1.msra.mxu0 0.0
        %5949 = vmatprep.subr.mxu0 0.0
        %5950 = vmatpush1.msra.mxu0 0.0
        %5951 = vmatprep.subr.mxu0 0.0
        %5952 = vmatpush1.msra.mxu0 0.0
        %5953 = vmatprep.subr.mxu0 0.0
        %5954 = vmatpush1.msra.mxu0 0.0
        %5955 = vmatprep.subr.mxu0 0.0
        %5956 = vmatpush1.msra.mxu0 0.0
        %5957 = vmatprep.subr.mxu0 0.0
        %5958 = vmatpush1.msra.mxu0 0.0
        %5959 = vmatprep.subr.mxu0 0.0
        %5960 = vmatpush1.msra.mxu0 0.0
        %5961 = vmatprep.subr.mxu0 0.0
        %5962 = vmatpush1.msra.mxu0 0.0
        %5963 = vmatprep.subr.mxu0 0.0
        %5964 = vmatpush1.msra.mxu0 0.0
        %5965 = vmatprep.subr.mxu0 0.0
        %5966 = vmatpush1.msra.mxu0 0.0
        %5967 = vmatprep.subr.mxu0 0.0
        %5968 = vmatpush1.msra.mxu0 0.0
        %5969 = vmatprep.subr.mxu0 0.0
        %5970 = vmatpush1.msra.mxu0 0.0
        %5971 = vmatprep.subr.mxu0 0.0
        %5972 = vmatpush1.msra.mxu0 0.0
        %5973 = vmatprep.subr.mxu0 0.0
        %5974 = vmatpush1.msra.mxu0 0.0
        %5975 = vmatprep.subr.mxu0 0.0
        %5976 = vmatpush1.msra.mxu0 0.0
        %5977 = vmatprep.subr.mxu0 0.0
        %5978 = vmatpush1.msra.mxu0 0.0
        %5979 = vmatprep.subr.mxu0 0.0
        %5980 = vmatpush1.msra.mxu0 0.0
        %5981 = vmatprep.subr.mxu0 0.0
        %5982 = vmatpush1.msra.mxu0 0.0
        %5983 = vmatprep.subr.mxu0 0.0
        %5984 = vmatpush1.msra.mxu0 0.0
        %5985 = vmatprep.subr.mxu0 0.0
        %5986 = vmatpush1.msra.mxu0 0.0
        %5987 = vmatprep.subr.mxu0 0.0
        %5988 = vmatpush1.msra.mxu0 0.0
        %5989 = vmatprep.subr.mxu0 0.0
        %5990 = vmatpush1.msra.mxu0 0.0
        %5991 = vmatprep.subr.mxu0 0.0
        %5992 = vmatpush1.msra.mxu0 0.0
        %5993 = vmatprep.subr.mxu0 0.0
        %5994 = vmatpush1.msra.mxu0 0.0
        %5995 = vmatprep.subr.mxu0 0.0
        %5996 = vmatpush1.msra.mxu0 0.0
        %5997 = vmatprep.subr.mxu0 0.0
        %5998 = vmatpush1.msra.mxu0 0.0
        %5999 = vmatprep.subr.mxu0 0.0
        %6000 = vmatpush1.msra.mxu0 0.0
        %6001 = vmatprep.subr.mxu0 0.0
        %6002 = vmatpush1.msra.mxu0 0.0
        %6003 = vmatprep.subr.mxu0 0.0
        %6004 = vmatpush1.msra.mxu0 0.0
        %6005 = vmatprep.subr.mxu0 0.0
        %6006 = vmatpush1.msra.mxu0 0.0
        %6007 = vmatprep.mubr.f32.mxu0 0.0
        %6008 = vmatmul.mubr.f32.gmra.mrb[0].mxu0 %v5934
        %v6009 = vpop.f32.mrb[0].mxu0
        %v6010 = vadd.f32 0.0, %v6009
        %v6011 = vpop.f32.mrb[0].mxu0
        %v6012 = vadd.f32 0.0, %v6011
        %6013 = vmatprep.mubr.f32.mxu0 0.0
        %6014 = vmatmul.mubr.f32.gmra.mrb[0].mxu0 %v5937
        %v6015 = vpop.f32.mrb[0].mxu0
        %v6016 = vadd.f32 0.0, %v6015
        %v6017 = vpop.f32.mrb[0].mxu0
        %v6018 = vadd.f32 0.0, %v6017
        %6019 = vdwg.mxu0
        %v6020 = vadd.f32 %v5920, %v6010
        %v6021 = vadd.f32 %v5921, %v6012
        %v6022 = vadd.f32 %v5922, %v6016
        %v6023 = vadd.f32 %v5923, %v6018
        %s6024 = scalar_lea.vmem %s5, 352
        %v6025 = vld [vmem:[%s6024] sm:$0xff]
        %v6026 = vld [vmem:[%s6024 + $0x8] sm:$0xff]
        %6027 = vrot.lane.b32.xlu0 %v3834, 66
        %v6028 = vpop.permute.xlu0 %6027
        %6029 = vrot.lane.b32.xlu0 %v3835, 66
        %v6030 = vpop.permute.xlu0 %6029
        %vm6031 = vcmask 539648
        %v6032 = vsel %vm6031, %v6028, %v6030
        %v6034 = vsel %vm3849, %v6025, 0
        %v6037 = vsel %vm3849, %v6026, 0
        %v6039 = vsel %vm660, %v6032, 0
        %v6041 = vsel %vm660, %v6030, 0
        %6043 = vmatprep.subr.mxu0 %v6041
        %6044 = vmatpush1.msra.mxu0 %v6039
        %6045 = vmatprep.subr.mxu0 0.0
        %6046 = vmatpush1.msra.mxu0 0.0
        %6047 = vmatprep.subr.mxu0 0.0
        %6048 = vmatpush1.msra.mxu0 0.0
        %6049 = vmatprep.subr.mxu0 0.0
        %6050 = vmatpush1.msra.mxu0 0.0
        %6051 = vmatprep.subr.mxu0 0.0
        %6052 = vmatpush1.msra.mxu0 0.0
        %6053 = vmatprep.subr.mxu0 0.0
        %6054 = vmatpush1.msra.mxu0 0.0
        %6055 = vmatprep.subr.mxu0 0.0
        %6056 = vmatpush1.msra.mxu0 0.0
        %6057 = vmatprep.subr.mxu0 0.0
        %6058 = vmatpush1.msra.mxu0 0.0
        %6059 = vmatprep.subr.mxu0 0.0
        %6060 = vmatpush1.msra.mxu0 0.0
        %6061 = vmatprep.subr.mxu0 0.0
        %6062 = vmatpush1.msra.mxu0 0.0
        %6063 = vmatprep.subr.mxu0 0.0
        %6064 = vmatpush1.msra.mxu0 0.0
        %6065 = vmatprep.subr.mxu0 0.0
        %6066 = vmatpush1.msra.mxu0 0.0
        %6067 = vmatprep.subr.mxu0 0.0
        %6068 = vmatpush1.msra.mxu0 0.0
        %6069 = vmatprep.subr.mxu0 0.0
        %6070 = vmatpush1.msra.mxu0 0.0
        %6071 = vmatprep.subr.mxu0 0.0
        %6072 = vmatpush1.msra.mxu0 0.0
        %6073 = vmatprep.subr.mxu0 0.0
        %6074 = vmatpush1.msra.mxu0 0.0
        %6075 = vmatprep.subr.mxu0 0.0
        %6076 = vmatpush1.msra.mxu0 0.0
        %6077 = vmatprep.subr.mxu0 0.0
        %6078 = vmatpush1.msra.mxu0 0.0
        %6079 = vmatprep.subr.mxu0 0.0
        %6080 = vmatpush1.msra.mxu0 0.0
        %6081 = vmatprep.subr.mxu0 0.0
        %6082 = vmatpush1.msra.mxu0 0.0
        %6083 = vmatprep.subr.mxu0 0.0
        %6084 = vmatpush1.msra.mxu0 0.0
        %6085 = vmatprep.subr.mxu0 0.0
        %6086 = vmatpush1.msra.mxu0 0.0
        %6087 = vmatprep.subr.mxu0 0.0
        %6088 = vmatpush1.msra.mxu0 0.0
        %6089 = vmatprep.subr.mxu0 0.0
        %6090 = vmatpush1.msra.mxu0 0.0
        %6091 = vmatprep.subr.mxu0 0.0
        %6092 = vmatpush1.msra.mxu0 0.0
        %6093 = vmatprep.subr.mxu0 0.0
        %6094 = vmatpush1.msra.mxu0 0.0
        %6095 = vmatprep.subr.mxu0 0.0
        %6096 = vmatpush1.msra.mxu0 0.0
        %6097 = vmatprep.subr.mxu0 0.0
        %6098 = vmatpush1.msra.mxu0 0.0
        %6099 = vmatprep.subr.mxu0 0.0
        %6100 = vmatpush1.msra.mxu0 0.0
        %6101 = vmatprep.subr.mxu0 0.0
        %6102 = vmatpush1.msra.mxu0 0.0
        %6103 = vmatprep.subr.mxu0 0.0
        %6104 = vmatpush1.msra.mxu0 0.0
        %6105 = vmatprep.subr.mxu0 0.0
        %6106 = vmatpush1.msra.mxu0 0.0
        %6107 = vmatprep.mubr.f32.mxu0 0.0
        %6108 = vmatmul.mubr.f32.gmra.mrb[0].mxu0 %v6034
        %v6109 = vpop.f32.mrb[0].mxu0
        %v6110 = vadd.f32 0.0, %v6109
        %v6111 = vpop.f32.mrb[0].mxu0
        %v6112 = vadd.f32 0.0, %v6111
        %6113 = vmatprep.mubr.f32.mxu0 0.0
        %6114 = vmatmul.mubr.f32.gmra.mrb[0].mxu0 %v6037
        %v6115 = vpop.f32.mrb[0].mxu0
        %v6116 = vadd.f32 0.0, %v6115
        %v6117 = vpop.f32.mrb[0].mxu0
        %v6118 = vadd.f32 0.0, %v6117
        %6119 = vdwg.mxu0
        %v6120 = vadd.f32 %v6020, %v6110
        %v6121 = vadd.f32 %v6021, %v6112
        %v6122 = vadd.f32 %v6022, %v6116
        %v6123 = vadd.f32 %v6023, %v6118
        %s6124 = scalar_lea.vmem %s5, 368
        %v6125 = vld [vmem:[%s6124] sm:$0xff]
        %v6126 = vld [vmem:[%s6124 + $0x8] sm:$0xff]
        %6127 = vrot.lane.b32.xlu0 %v3834, 65
        %v6128 = vpop.permute.xlu0 %6127
        %6129 = vrot.lane.b32.xlu0 %v3835, 65
        %v6130 = vpop.permute.xlu0 %6129
        %vm6131 = vcmask 531456
        %v6132 = vsel %vm6131, %v6128, %v6130
        %v6134 = vsel %vm3849, %v6125, 0
        %v6137 = vsel %vm3849, %v6126, 0
        %v6139 = vsel %vm660, %v6132, 0
        %v6141 = vsel %vm660, %v6130, 0
        %6143 = vmatprep.subr.mxu0 %v6141
        %6144 = vmatpush1.msra.mxu0 %v6139
        %6145 = vmatprep.subr.mxu0 0.0
        %6146 = vmatpush1.msra.mxu0 0.0
        %6147 = vmatprep.subr.mxu0 0.0
        %6148 = vmatpush1.msra.mxu0 0.0
        %6149 = vmatprep.subr.mxu0 0.0
        %6150 = vmatpush1.msra.mxu0 0.0
        %6151 = vmatprep.subr.mxu0 0.0
        %6152 = vmatpush1.msra.mxu0 0.0
        %6153 = vmatprep.subr.mxu0 0.0
        %6154 = vmatpush1.msra.mxu0 0.0
        %6155 = vmatprep.subr.mxu0 0.0
        %6156 = vmatpush1.msra.mxu0 0.0
        %6157 = vmatprep.subr.mxu0 0.0
        %6158 = vmatpush1.msra.mxu0 0.0
        %6159 = vmatprep.subr.mxu0 0.0
        %6160 = vmatpush1.msra.mxu0 0.0
        %6161 = vmatprep.subr.mxu0 0.0
        %6162 = vmatpush1.msra.mxu0 0.0
        %6163 = vmatprep.subr.mxu0 0.0
        %6164 = vmatpush1.msra.mxu0 0.0
        %6165 = vmatprep.subr.mxu0 0.0
        %6166 = vmatpush1.msra.mxu0 0.0
        %6167 = vmatprep.subr.mxu0 0.0
        %6168 = vmatpush1.msra.mxu0 0.0
        %6169 = vmatprep.subr.mxu0 0.0
        %6170 = vmatpush1.msra.mxu0 0.0
        %6171 = vmatprep.subr.mxu0 0.0
        %6172 = vmatpush1.msra.mxu0 0.0
        %6173 = vmatprep.subr.mxu0 0.0
        %6174 = vmatpush1.msra.mxu0 0.0
        %6175 = vmatprep.subr.mxu0 0.0
        %6176 = vmatpush1.msra.mxu0 0.0
        %6177 = vmatprep.subr.mxu0 0.0
        %6178 = vmatpush1.msra.mxu0 0.0
        %6179 = vmatprep.subr.mxu0 0.0
        %6180 = vmatpush1.msra.mxu0 0.0
        %6181 = vmatprep.subr.mxu0 0.0
        %6182 = vmatpush1.msra.mxu0 0.0
        %6183 = vmatprep.subr.mxu0 0.0
        %6184 = vmatpush1.msra.mxu0 0.0
        %6185 = vmatprep.subr.mxu0 0.0
        %6186 = vmatpush1.msra.mxu0 0.0
        %6187 = vmatprep.subr.mxu0 0.0
        %6188 = vmatpush1.msra.mxu0 0.0
        %6189 = vmatprep.subr.mxu0 0.0
        %6190 = vmatpush1.msra.mxu0 0.0
        %6191 = vmatprep.subr.mxu0 0.0
        %6192 = vmatpush1.msra.mxu0 0.0
        %6193 = vmatprep.subr.mxu0 0.0
        %6194 = vmatpush1.msra.mxu0 0.0
        %6195 = vmatprep.subr.mxu0 0.0
        %6196 = vmatpush1.msra.mxu0 0.0
        %6197 = vmatprep.subr.mxu0 0.0
        %6198 = vmatpush1.msra.mxu0 0.0
        %6199 = vmatprep.subr.mxu0 0.0
        %6200 = vmatpush1.msra.mxu0 0.0
        %6201 = vmatprep.subr.mxu0 0.0
        %6202 = vmatpush1.msra.mxu0 0.0
        %6203 = vmatprep.subr.mxu0 0.0
        %6204 = vmatpush1.msra.mxu0 0.0
        %6205 = vmatprep.subr.mxu0 0.0
        %6206 = vmatpush1.msra.mxu0 0.0
        %6207 = vmatprep.mubr.f32.mxu0 0.0
        %6208 = vmatmul.mubr.f32.gmra.mrb[0].mxu0 %v6134
        %v6209 = vpop.f32.mrb[0].mxu0
        %v6210 = vadd.f32 0.0, %v6209
        %v6211 = vpop.f32.mrb[0].mxu0
        %v6212 = vadd.f32 0.0, %v6211
        %6213 = vmatprep.mubr.f32.mxu0 0.0
        %6214 = vmatmul.mubr.f32.gmra.mrb[0].mxu0 %v6137
        %v6215 = vpop.f32.mrb[0].mxu0
        %v6216 = vadd.f32 0.0, %v6215
        %v6217 = vpop.f32.mrb[0].mxu0
        %v6218 = vadd.f32 0.0, %v6217
        %6219 = vdwg.mxu0
        %v6220 = vadd.f32 %v6120, %v6210
        %v6221 = vadd.f32 %v6121, %v6212
        %v6222 = vadd.f32 %v6122, %v6216
        %v6223 = vadd.f32 %v6123, %v6218
        %s6224 = scalar_lea.vmem %s5, 384
        %v6225 = vld [vmem:[%s6224] sm:$0xff]
        %v6226 = vld [vmem:[%s6224 + $0x8] sm:$0xff]
        %6227 = vrot.lane.b32.xlu0 %v3834, 64
        %v6228 = vpop.permute.xlu0 %6227
        %6229 = vrot.lane.b32.xlu0 %v3835, 64
        %v6230 = vpop.permute.xlu0 %6229
        %vm6231 = vcmask 523264
        %v6232 = vsel %vm6231, %v6228, %v6230
        %v6234 = vsel %vm3849, %v6225, 0
        %v6237 = vsel %vm3849, %v6226, 0
        %v6239 = vsel %vm660, %v6232, 0
        %v6241 = vsel %vm660, %v6230, 0
        %6243 = vmatprep.subr.mxu0 %v6241
        %6244 = vmatpush1.msra.mxu0 %v6239
        %6245 = vmatprep.subr.mxu0 0.0
        %6246 = vmatpush1.msra.mxu0 0.0
        %6247 = vmatprep.subr.mxu0 0.0
        %6248 = vmatpush1.msra.mxu0 0.0
        %6249 = vmatprep.subr.mxu0 0.0
        %6250 = vmatpush1.msra.mxu0 0.0
        %6251 = vmatprep.subr.mxu0 0.0
        %6252 = vmatpush1.msra.mxu0 0.0
        %6253 = vmatprep.subr.mxu0 0.0
        %6254 = vmatpush1.msra.mxu0 0.0
        %6255 = vmatprep.subr.mxu0 0.0
        %6256 = vmatpush1.msra.mxu0 0.0
        %6257 = vmatprep.subr.mxu0 0.0
        %6258 = vmatpush1.msra.mxu0 0.0
        %6259 = vmatprep.subr.mxu0 0.0
        %6260 = vmatpush1.msra.mxu0 0.0
        %6261 = vmatprep.subr.mxu0 0.0
        %6262 = vmatpush1.msra.mxu0 0.0
        %6263 = vmatprep.subr.mxu0 0.0
        %6264 = vmatpush1.msra.mxu0 0.0
        %6265 = vmatprep.subr.mxu0 0.0
        %6266 = vmatpush1.msra.mxu0 0.0
        %6267 = vmatprep.subr.mxu0 0.0
        %6268 = vmatpush1.msra.mxu0 0.0
        %6269 = vmatprep.subr.mxu0 0.0
        %6270 = vmatpush1.msra.mxu0 0.0
        %6271 = vmatprep.subr.mxu0 0.0
        %6272 = vmatpush1.msra.mxu0 0.0
        %6273 = vmatprep.subr.mxu0 0.0
        %6274 = vmatpush1.msra.mxu0 0.0
        %6275 = vmatprep.subr.mxu0 0.0
        %6276 = vmatpush1.msra.mxu0 0.0
        %6277 = vmatprep.subr.mxu0 0.0
        %6278 = vmatpush1.msra.mxu0 0.0
        %6279 = vmatprep.subr.mxu0 0.0
        %6280 = vmatpush1.msra.mxu0 0.0
        %6281 = vmatprep.subr.mxu0 0.0
        %6282 = vmatpush1.msra.mxu0 0.0
        %6283 = vmatprep.subr.mxu0 0.0
        %6284 = vmatpush1.msra.mxu0 0.0
        %6285 = vmatprep.subr.mxu0 0.0
        %6286 = vmatpush1.msra.mxu0 0.0
        %6287 = vmatprep.subr.mxu0 0.0
        %6288 = vmatpush1.msra.mxu0 0.0
        %6289 = vmatprep.subr.mxu0 0.0
        %6290 = vmatpush1.msra.mxu0 0.0
        %6291 = vmatprep.subr.mxu0 0.0
        %6292 = vmatpush1.msra.mxu0 0.0
        %6293 = vmatprep.subr.mxu0 0.0
        %6294 = vmatpush1.msra.mxu0 0.0
        %6295 = vmatprep.subr.mxu0 0.0
        %6296 = vmatpush1.msra.mxu0 0.0
        %6297 = vmatprep.subr.mxu0 0.0
        %6298 = vmatpush1.msra.mxu0 0.0
        %6299 = vmatprep.subr.mxu0 0.0
        %6300 = vmatpush1.msra.mxu0 0.0
        %6301 = vmatprep.subr.mxu0 0.0
        %6302 = vmatpush1.msra.mxu0 0.0
        %6303 = vmatprep.subr.mxu0 0.0
        %6304 = vmatpush1.msra.mxu0 0.0
        %6305 = vmatprep.subr.mxu0 0.0
        %6306 = vmatpush1.msra.mxu0 0.0
        %6307 = vmatprep.mubr.f32.mxu0 0.0
        %6308 = vmatmul.mubr.f32.gmra.mrb[0].mxu0 %v6234
        %v6309 = vpop.f32.mrb[0].mxu0
        %v6310 = vadd.f32 0.0, %v6309
        %v6311 = vpop.f32.mrb[0].mxu0
        %v6312 = vadd.f32 0.0, %v6311
        %6313 = vmatprep.mubr.f32.mxu0 0.0
        %6314 = vmatmul.mubr.f32.gmra.mrb[0].mxu0 %v6237
        %v6315 = vpop.f32.mrb[0].mxu0
        %v6316 = vadd.f32 0.0, %v6315
        %v6317 = vpop.f32.mrb[0].mxu0
        %v6318 = vadd.f32 0.0, %v6317
        %6319 = vdwg.mxu0
        %v6320 = vadd.f32 %v6220, %v6310
        %v6321 = vadd.f32 %v6221, %v6312
        %v6322 = vadd.f32 %v6222, %v6316
        %v6323 = vadd.f32 %v6223, %v6318
        %v6324 = vld [vmem:[%s6] sm:$0xff]
        %v6325 = vld [vmem:[%s6 + $0x8] sm:$0xff]
        %6327 = vset.pattern.permute.xlu0 0
        %6328 = vperm.xlu0 %6327, %v6324
        %v6329 = vpop.permute.xlu0 %6328
        %6332 = vset.pattern.permute.xlu0 0
        %6333 = vperm.xlu0 %6332, %v6325
        %v6334 = vpop.permute.xlu0 %6333
        %v6336 = vadd.f32 %v6320, %v6329
        %v6337 = vadd.f32 %v6321, %v6329
        %v6338 = vadd.f32 %v6322, %v6334
        %v6339 = vadd.f32 %v6323, %v6334
        %v6340 = vmax.f32 %v6336, 0.0
        %v6341 = vmax.f32 %v6337, 0.0
        %v6342 = vmax.f32 %v6338, 0.0
        %v6343 = vmax.f32 %v6339, 0.0
        %6348 = vrot.lane.b32.xlu0 %v6340, 127
        %v6349 = vpop.permute.xlu0 %6348
        %6350 = vrot.lane.b32.xlu0 %v6341, 127
        %v6351 = vpop.permute.xlu0 %6350
        %6352 = vrot.lane.b32.xlu0 %v6342, 127
        %v6353 = vpop.permute.xlu0 %6352
        %6354 = vrot.lane.b32.xlu0 %v6343, 127
        %v6355 = vpop.permute.xlu0 %6354
        %v6356 = vsel %vm3847, %v6349, %v6351
        %v6357 = vsel %vm3847, %v6353, %v6355
        %v6362 = vmax.f32 %v6340, %v6356
        %v6363 = vmax.f32 %v6341, %v6351
        %v6364 = vmax.f32 %v6342, %v6357
        %v6365 = vmax.f32 %v6343, %v6355
        %6370 = vrot.lane.b32.xlu0 %v6362, 113
        %v6371 = vpop.permute.xlu0 %6370
        %6372 = vrot.lane.b32.xlu0 %v6363, 113
        %v6373 = vpop.permute.xlu0 %6372
        %6374 = vrot.lane.b32.xlu0 %v6364, 113
        %v6375 = vpop.permute.xlu0 %6374
        %6376 = vrot.lane.b32.xlu0 %v6365, 113
        %v6377 = vpop.permute.xlu0 %6376
        %v6378 = vsel %vm4331, %v6371, %v6373
        %v6379 = vsel %vm4331, %v6375, %v6377
        %v6384 = vmax.f32 %v6362, %v6378
        %v6385 = vmax.f32 %v6363, %v6373
        %v6386 = vmax.f32 %v6364, %v6379
        %v6387 = vmax.f32 %v6365, %v6377
        %v6388 = vld [vmem:[%s7] sm:$0xff]
        %v6389 = vld [vmem:[%s7 + $0x8] sm:$0xff]
        %v6390 = vld [vmem:[%s7 + $0x10] sm:$0xff]
        %v6391 = vld [vmem:[%s7 + $0x18] sm:$0xff]
        %v6392 = vld [vmem:[%s7 + $0x20] sm:$0xff]
        %v6393 = vld [vmem:[%s7 + $0x28] sm:$0xff]
        %v6394 = vld [vmem:[%s7 + $0x30] sm:$0xff]
        %v6395 = vld [vmem:[%s7 + $0x38] sm:$0xff]
        %v6396 = vld [vmem:[%s7 + $0x40] sm:$0xff]
        %v6397 = vld [vmem:[%s7 + $0x48] sm:$0xff]
        %v6398 = vld [vmem:[%s7 + $0x50] sm:$0xff]
        %v6399 = vld [vmem:[%s7 + $0x58] sm:$0xff]
        %v6400 = vld [vmem:[%s7 + $0x60] sm:$0xff]
        %v6401 = vld [vmem:[%s7 + $0x68] sm:$0xff]
        %v6402 = vld [vmem:[%s7 + $0x70] sm:$0xff]
        %v6403 = vld [vmem:[%s7 + $0x78] sm:$0xff]
        %v6404 = vld [vmem:[%s7 + $0x80] sm:$0x1]
        %vm6405 = vcmask 7168
        %v6407 = vsel %vm6405, %v6385, 0
        %v6410 = vsel %vm6405, %v6387, 0
        %vm6412 = vcmask 1040384
        %v6414 = vsel %vm6412, %v6404, 0
        %6416 = vmatprep.subr.mxu0 0.0
        %6417 = vmatpush1.msra.mxu0 %v6388
        %6418 = vmatprep.subr.mxu0 0.0
        %6419 = vmatpush1.msra.mxu0 %v6389
        %6420 = vmatprep.subr.mxu0 0.0
        %6421 = vmatpush1.msra.mxu0 %v6390
        %6422 = vmatprep.subr.mxu0 0.0
        %6423 = vmatpush1.msra.mxu0 %v6391
        %6424 = vmatprep.subr.mxu0 0.0
        %6425 = vmatpush1.msra.mxu0 %v6392
        %6426 = vmatprep.subr.mxu0 0.0
        %6427 = vmatpush1.msra.mxu0 %v6393
        %6428 = vmatprep.subr.mxu0 0.0
        %6429 = vmatpush1.msra.mxu0 %v6394
        %6430 = vmatprep.subr.mxu0 0.0
        %6431 = vmatpush1.msra.mxu0 %v6395
        %6432 = vmatprep.subr.mxu0 0.0
        %6433 = vmatpush1.msra.mxu0 %v6396
        %6434 = vmatprep.subr.mxu0 0.0
        %6435 = vmatpush1.msra.mxu0 %v6397
        %6436 = vmatprep.subr.mxu0 0.0
        %6437 = vmatpush1.msra.mxu0 %v6398
        %6438 = vmatprep.subr.mxu0 0.0
        %6439 = vmatpush1.msra.mxu0 %v6399
        %6440 = vmatprep.subr.mxu0 0.0
        %6441 = vmatpush1.msra.mxu0 %v6400
        %6442 = vmatprep.subr.mxu0 0.0
        %6443 = vmatpush1.msra.mxu0 %v6401
        %6444 = vmatprep.subr.mxu0 0.0
        %6445 = vmatpush1.msra.mxu0 %v6402
        %6446 = vmatprep.subr.mxu0 0.0
        %6447 = vmatpush1.msra.mxu0 %v6403
        %6448 = vmatprep.subr.mxu0 0.0
        %6449 = vmatpush1.msra.mxu0 %v6414
        %6450 = vmatprep.subr.mxu0 0.0
        %6451 = vmatpush1.msra.mxu0 0.0
        %6452 = vmatprep.subr.mxu0 0.0
        %6453 = vmatpush1.msra.mxu0 0.0
        %6454 = vmatprep.subr.mxu0 0.0
        %6455 = vmatpush1.msra.mxu0 0.0
        %6456 = vmatprep.subr.mxu0 0.0
        %6457 = vmatpush1.msra.mxu0 0.0
        %6458 = vmatprep.subr.mxu0 0.0
        %6459 = vmatpush1.msra.mxu0 0.0
        %6460 = vmatprep.subr.mxu0 0.0
        %6461 = vmatpush1.msra.mxu0 0.0
        %6462 = vmatprep.subr.mxu0 0.0
        %6463 = vmatpush1.msra.mxu0 0.0
        %6464 = vmatprep.subr.mxu0 0.0
        %6465 = vmatpush1.msra.mxu0 0.0
        %6466 = vmatprep.subr.mxu0 0.0
        %6467 = vmatpush1.msra.mxu0 0.0
        %6468 = vmatprep.subr.mxu0 0.0
        %6469 = vmatpush1.msra.mxu0 0.0
        %6470 = vmatprep.subr.mxu0 0.0
        %6471 = vmatpush1.msra.mxu0 0.0
        %6472 = vmatprep.subr.mxu0 0.0
        %6473 = vmatpush1.msra.mxu0 0.0
        %6474 = vmatprep.subr.mxu0 0.0
        %6475 = vmatpush1.msra.mxu0 0.0
        %6476 = vmatprep.subr.mxu0 0.0
        %6477 = vmatpush1.msra.mxu0 0.0
        %6478 = vmatprep.subr.mxu0 0.0
        %6479 = vmatpush1.msra.mxu0 0.0
        %6480 = vmatprep.mubr.f32.mxu0 %v6407
        %6481 = vmatmul.mubr.f32.gmra.mrb[0].mxu0 %v6384
        %v6482 = vpop.f32.mrb[0].mxu0
        %v6483 = vadd.f32 0.0, %v6482
        %v6484 = vpop.f32.mrb[0].mxu0
        %6485 = vmatprep.mubr.f32.mxu0 %v6410
        %6486 = vmatmul.mubr.f32.gmra.mrb[0].mxu0 %v6386
        %v6487 = vpop.f32.mrb[0].mxu0
        %v6488 = vadd.f32 0.0, %v6487
        %v6489 = vpop.f32.mrb[0].mxu0
        %6490 = vdwg.mxu0
        %v6491 = vlaneseq
        %vm6492 = vcmp.ge.s32.totalorder %v6491, 0
        %vm6493 = vcmp.lt.s32.totalorder %v6491, 25
        %vm6494 = vmand %vm6492, %vm6493
        %6495 = vst.msk [vmem:[#allocation3] sm:$0x1] %vm6494, %v6483
        %v6498 = vunpack.c.l.s4 1966171168
        %v6499 = vunpack.c.0.s8 %v6498
        %v6500 = vlaneseq
        %v6501 = vshrl.u32 %v6500, 7
        %v6502 = vsub.s32 %v6499, %v6501
        %v6503 = vrot.slane %v6483, %v6502
        %v6504 = vcombine.high %v6503, %v6503
        %v6506 = vunpack.c.l.s4 1966171168
        %v6507 = vunpack.c.0.s8 %v6506
        %v6508 = vlaneseq
        %v6509 = vshrl.u32 %v6508, 7
        %v6510 = vsub.s32 %v6507, %v6509
        %v6511 = vrot.slane %v6503, %v6510
        %v6513 = vunpack.c.l.s4 1966171168
        %v6514 = vunpack.c.0.s8 %v6513
        %v6515 = vlaneseq
        %v6516 = vshrl.u32 %v6515, 7
        %v6517 = vsub.s32 %v6514, %v6516
        %v6518 = vrot.slane %v6504, %v6517
        %6519 = vrot.lane.b32.xlu0 %v6518, 25
        %v6520 = vpop.permute.xlu0 %6519
        %vm6522 = vcmp.ge.s32.totalorder %v6491, 25
        %vm6523 = vcmp.lt.s32.totalorder %v6491, 50
        %vm6524 = vmand %vm6522, %vm6523
        %6525 = vst.msk [vmem:[#allocation3] sm:$0x1] %vm6524, %v6520
        %v6526 = vcombine.high %v6511, %v6511
        %6527 = vrot.lane.b32.xlu0 %v6526, 50
        %v6528 = vpop.permute.xlu0 %6527
        %vm6530 = vcmp.ge.s32.totalorder %v6491, 50
        %vm6531 = vcmp.lt.s32.totalorder %v6491, 75
        %vm6532 = vmand %vm6530, %vm6531
        %6533 = vst.msk [vmem:[#allocation3] sm:$0x1] %vm6532, %v6528
        %v6534 = vcombine.high %v6518, %v6518
        %6535 = vrot.lane.b32.xlu0 %v6534, 75
        %v6536 = vpop.permute.xlu0 %6535
        %vm6538 = vcmp.ge.s32.totalorder %v6491, 75
        %vm6539 = vcmp.lt.s32.totalorder %v6491, 100
        %vm6540 = vmand %vm6538, %vm6539
        %6541 = vst.msk [vmem:[#allocation3] sm:$0x1] %vm6540, %v6536
        %v6542 = vcombine.high %v6483, %v6483
        %v6544 = vunpack.c.l.s4 1966171168
        %v6545 = vunpack.c.0.s8 %v6544
        %v6546 = vlaneseq
        %v6547 = vshrl.u32 %v6546, 7
        %v6548 = vsub.s32 %v6545, %v6547
        %v6549 = vrot.slane %v6542, %v6548
        %v6551 = vunpack.c.l.s4 1966171168
        %v6552 = vunpack.c.0.s8 %v6551
        %v6553 = vlaneseq
        %v6554 = vshrl.u32 %v6553, 7
        %v6555 = vsub.s32 %v6552, %v6554
        %v6556 = vrot.slane %v6549, %v6555
        %6557 = vrot.lane.b32.xlu0 %v6556, 100
        %v6558 = vpop.permute.xlu0 %6557
        %vm6560 = vcmp.ge.s32.totalorder %v6491, 100
        %vm6561 = vcmp.lt.s32.totalorder %v6491, 125
        %vm6562 = vmand %vm6560, %vm6561
        %6563 = vst.msk [vmem:[#allocation3] sm:$0x1] %vm6562, %v6558
        %v6564 = vcombine.high %v6549, %v6549
        %v6566 = vunpack.c.l.s4 1966171168
        %v6567 = vunpack.c.0.s8 %v6566
        %v6568 = vlaneseq
        %v6569 = vshrl.u32 %v6568, 7
        %v6570 = vsub.s32 %v6567, %v6569
        %v6571 = vrot.slane %v6564, %v6570
        %6572 = vrot.lane.b32.xlu0 %v6571, 125
        %v6573 = vpop.permute.xlu0 %6572
        %v6574 = vrot.slane %v6573, 7
        %v6575 = vsel %vm4131, %v6574, %v6573
        %vm6577 = vcmp.ge.s32.totalorder %v6491, 125
        %vm6578 = vcmp.lt.s32.totalorder %v6491, 150
        %vm6579 = vmand %vm6577, %vm6578
        %6580 = vst.msk [vmem:[#allocation3] sm:$0x3] %vm6579, %v6575
        %v6581 = vcombine.high %v6556, %v6556
        %6582 = vrot.lane.b32.xlu0 %v6581, 22
        %v6583 = vpop.permute.xlu0 %6582
        %vm6585 = vcmp.ge.s32.totalorder %v6491, 22
        %vm6586 = vcmp.lt.s32.totalorder %v6491, 47
        %vm6587 = vmand %vm6585, %vm6586
        %6588 = vst.msk [vmem:[#allocation3 + $0x1] sm:$0x1] %vm6587, %v6583
        %v6589 = vcombine.high %v6571, %v6571
        %6590 = vrot.lane.b32.xlu0 %v6589, 47
        %v6591 = vpop.permute.xlu0 %6590
        %vm6593 = vcmp.ge.s32.totalorder %v6491, 47
        %vm6594 = vcmp.lt.s32.totalorder %v6491, 72
        %vm6595 = vmand %vm6593, %vm6594
        %6596 = vst.msk [vmem:[#allocation3 + $0x1] sm:$0x1] %vm6595, %v6591
        %v6599 = vunpack.c.l.s4 1966171168
        %v6600 = vunpack.c.0.s8 %v6599
        %v6601 = vlaneseq
        %v6602 = vshrl.u32 %v6601, 7
        %v6603 = vsub.s32 %v6600, %v6602
        %v6604 = vrot.slane %v6488, %v6603
        %v6606 = vunpack.c.l.s4 1966171168
        %v6607 = vunpack.c.0.s8 %v6606
        %v6608 = vlaneseq
        %v6609 = vshrl.u32 %v6608, 7
        %v6610 = vsub.s32 %v6607, %v6609
        %v6611 = vrot.slane %v6604, %v6610
        %6612 = vrot.lane.b32.xlu0 %v6611, 72
        %v6613 = vpop.permute.xlu0 %6612
        %vm6615 = vcmp.ge.s32.totalorder %v6491, 72
        %vm6616 = vcmp.lt.s32.totalorder %v6491, 97
        %vm6617 = vmand %vm6615, %vm6616
        %6618 = vst.msk [vmem:[#allocation3 + $0x1] sm:$0x1] %vm6617, %v6613
        %v6619 = vcombine.high %v6604, %v6604
        %v6621 = vunpack.c.l.s4 1966171168
        %v6622 = vunpack.c.0.s8 %v6621
        %v6623 = vlaneseq
        %v6624 = vshrl.u32 %v6623, 7
        %v6625 = vsub.s32 %v6622, %v6624
        %v6626 = vrot.slane %v6619, %v6625
        %6627 = vrot.lane.b32.xlu0 %v6626, 97
        %v6628 = vpop.permute.xlu0 %6627
        %vm6630 = vcmp.ge.s32.totalorder %v6491, 97
        %vm6631 = vcmp.lt.s32.totalorder %v6491, 122
        %vm6632 = vmand %vm6630, %vm6631
        %6633 = vst.msk [vmem:[#allocation3 + $0x1] sm:$0x1] %vm6632, %v6628
        %v6634 = vcombine.high %v6611, %v6611
        %6635 = vrot.lane.b32.xlu0 %v6634, 122
        %v6636 = vpop.permute.xlu0 %6635
        %v6637 = vrot.slane %v6636, 7
        %vm6638 = vcmask 998400
        %v6639 = vsel %vm6638, %v6637, %v6636
        %vm6641 = vcmp.ge.s32.totalorder %v6491, 122
        %vm6642 = vcmp.lt.s32.totalorder %v6491, 147
        %vm6643 = vmand %vm6641, %vm6642
        %6644 = vst.msk [vmem:[#allocation3 + $0x1] sm:$0x3] %vm6643, %v6639
        %v6645 = vcombine.high %v6626, %v6626
        %6646 = vrot.lane.b32.xlu0 %v6645, 19
        %v6647 = vpop.permute.xlu0 %6646
        %vm6649 = vcmp.ge.s32.totalorder %v6491, 19
        %vm6650 = vcmp.lt.s32.totalorder %v6491, 44
        %vm6651 = vmand %vm6649, %vm6650
        %6652 = vst.msk [vmem:[#allocation3 + $0x2] sm:$0x1] %vm6651, %v6647
        %v6653 = vcombine.high %v6488, %v6488
        %v6655 = vunpack.c.l.s4 1966171168
        %v6656 = vunpack.c.0.s8 %v6655
        %v6657 = vlaneseq
        %v6658 = vshrl.u32 %v6657, 7
        %v6659 = vsub.s32 %v6656, %v6658
        %v6660 = vrot.slane %v6653, %v6659
        %v6662 = vunpack.c.l.s4 1966171168
        %v6663 = vunpack.c.0.s8 %v6662
        %v6664 = vlaneseq
        %v6665 = vshrl.u32 %v6664, 7
        %v6666 = vsub.s32 %v6663, %v6665
        %v6667 = vrot.slane %v6660, %v6666
        %6668 = vrot.lane.b32.xlu0 %v6667, 44
        %v6669 = vpop.permute.xlu0 %6668
        %vm6671 = vcmp.ge.s32.totalorder %v6491, 44
        %vm6672 = vcmp.lt.s32.totalorder %v6491, 69
        %vm6673 = vmand %vm6671, %vm6672
        %6674 = vst.msk [vmem:[#allocation3 + $0x2] sm:$0x1] %vm6673, %v6669
        %v6675 = vcombine.high %v6660, %v6660
        %v6677 = vunpack.c.l.s4 1966171168
        %v6678 = vunpack.c.0.s8 %v6677
        %v6679 = vlaneseq
        %v6680 = vshrl.u32 %v6679, 7
        %v6681 = vsub.s32 %v6678, %v6680
        %v6682 = vrot.slane %v6675, %v6681
        %6683 = vrot.lane.b32.xlu0 %v6682, 69
        %v6684 = vpop.permute.xlu0 %6683
        %vm6686 = vcmp.ge.s32.totalorder %v6491, 69
        %vm6687 = vcmp.lt.s32.totalorder %v6491, 94
        %vm6688 = vmand %vm6686, %vm6687
        %6689 = vst.msk [vmem:[#allocation3 + $0x2] sm:$0x1] %vm6688, %v6684
        %v6690 = vcombine.high %v6667, %v6667
        %6691 = vrot.lane.b32.xlu0 %v6690, 94
        %v6692 = vpop.permute.xlu0 %6691
        %vm6694 = vcmp.ge.s32.totalorder %v6491, 94
        %vm6695 = vcmp.lt.s32.totalorder %v6491, 119
        %vm6696 = vmand %vm6694, %vm6695
        %6697 = vst.msk [vmem:[#allocation3 + $0x2] sm:$0x1] %vm6696, %v6692
        %v6698 = vcombine.high %v6682, %v6682
        %6699 = vrot.lane.b32.xlu0 %v6698, 119
        %v6700 = vpop.permute.xlu0 %6699
        %v6701 = vrot.slane %v6700, 7
        %vm6702 = vcmask 973824
        %v6703 = vsel %vm6702, %v6701, %v6700
        %vm6705 = vcmp.ge.s32.totalorder %v6491, 119
        %vm6706 = vcmp.lt.s32.totalorder %v6491, 144
        %vm6707 = vmand %vm6705, %vm6706
        %6708 = vst.msk [vmem:[#allocation3 + $0x2] sm:$0x3] %vm6707, %v6703
        %v6709 = vld [vmem:[#allocation3] sm:$0xf]
        %v6710 = vld [vmem:[%s8] sm:$0xff]
        %v6711 = vld [vmem:[%s8 + $0x8] sm:$0xff]
        %v6712 = vld [vmem:[%s8 + $0x10] sm:$0xff]
        %v6713 = vld [vmem:[%s8 + $0x18] sm:$0xff]
        %v6714 = vld [vmem:[%s8 + $0x20] sm:$0xff]
        %v6715 = vld [vmem:[%s8 + $0x28] sm:$0xff]
        %v6716 = vld [vmem:[%s8 + $0x30] sm:$0xff]
        %v6717 = vld [vmem:[%s8 + $0x38] sm:$0xff]
        %v6718 = vld [vmem:[%s8 + $0x40] sm:$0xff]
        %v6719 = vld [vmem:[%s8 + $0x48] sm:$0xff]
        %v6720 = vld [vmem:[%s8 + $0x50] sm:$0xff]
        %v6721 = vld [vmem:[%s8 + $0x58] sm:$0xff]
        %v6722 = vld [vmem:[%s8 + $0x60] sm:$0xff]
        %v6723 = vld [vmem:[%s8 + $0x68] sm:$0xff]
        %v6724 = vld [vmem:[%s8 + $0x70] sm:$0xff]
        %v6725 = vld [vmem:[%s8 + $0x78] sm:$0xff]
        %v6726 = vld [vmem:[%s8 + $0x80] sm:$0xff]
        %v6727 = vld [vmem:[%s8 + $0x88] sm:$0xff]
        %v6728 = vld [vmem:[%s8 + $0x90] sm:$0xff]
        %v6729 = vld [vmem:[%s8 + $0x98] sm:$0xff]
        %v6730 = vld [vmem:[%s8 + $0xa0] sm:$0xff]
        %v6731 = vld [vmem:[%s8 + $0xa8] sm:$0xff]
        %v6732 = vld [vmem:[%s8 + $0xb0] sm:$0xff]
        %v6733 = vld [vmem:[%s8 + $0xb8] sm:$0xff]
        %v6734 = vld [vmem:[%s8 + $0xc0] sm:$0xff]
        %v6735 = vld [vmem:[%s8 + $0xc8] sm:$0xff]
        %v6736 = vld [vmem:[%s8 + $0xd0] sm:$0xff]
        %v6737 = vld [vmem:[%s8 + $0xd8] sm:$0xff]
        %v6738 = vld [vmem:[%s8 + $0xe0] sm:$0xff]
        %v6739 = vld [vmem:[%s8 + $0xe8] sm:$0xff]
        %v6740 = vld [vmem:[%s8 + $0xf0] sm:$0xff]
        %v6741 = vld [vmem:[%s8 + $0xf8] sm:$0xff]
        %v6742 = vld [vmem:[%s8 + $0x100] sm:$0xff]
        %v6743 = vld [vmem:[%s8 + $0x108] sm:$0xff]
        %v6744 = vld [vmem:[%s8 + $0x110] sm:$0xff]
        %v6745 = vld [vmem:[%s8 + $0x118] sm:$0xff]
        %v6746 = vld [vmem:[%s8 + $0x120] sm:$0xff]
        %v6747 = vld [vmem:[%s8 + $0x128] sm:$0xff]
        %v6748 = vld [vmem:[%s8 + $0x130] sm:$0xff]
        %v6749 = vld [vmem:[%s8 + $0x138] sm:$0xff]
        %v6750 = vld [vmem:[%s8 + $0x140] sm:$0xff]
        %v6751 = vld [vmem:[%s8 + $0x148] sm:$0xff]
        %v6752 = vld [vmem:[%s8 + $0x150] sm:$0xff]
        %v6753 = vld [vmem:[%s8 + $0x158] sm:$0xff]
        %v6754 = vld [vmem:[%s8 + $0x160] sm:$0xff]
        %v6755 = vld [vmem:[%s8 + $0x168] sm:$0xff]
        %v6756 = vld [vmem:[%s8 + $0x170] sm:$0xff]
        %v6757 = vld [vmem:[%s8 + $0x178] sm:$0xff]
        %v6758 = vld [vmem:[%s8 + $0x180] sm:$0xff]
        %v6759 = vld [vmem:[%s8 + $0x188] sm:$0xff]
        %v6760 = vld [vmem:[%s9] sm:$0x1]
        %v6762 = vlaneseq
        %v6763 = vshrl.u32 %v6762, 7
        %v6764 = vsub.s32 0, %v6763
        %v6765 = vrot.slane %v6709, %v6764
        %v6766 = vlaneseq
        %v6767 = vshrl.u32 %v6766, 7
        %v6768 = vsub.s32 1, %v6767
        %v6769 = vrot.slane %v6709, %v6768
        %v6770 = vlaneseq
        %v6771 = vshrl.u32 %v6770, 7
        %v6772 = vsub.s32 2, %v6771
        %v6773 = vrot.slane %v6709, %v6772
        %v6774 = vlaneseq
        %v6775 = vshrl.u32 %v6774, 7
        %v6776 = vsub.s32 3, %v6775
        %v6777 = vrot.slane %v6709, %v6776
        %vm6781 = vcmask 130048
        %v6782 = vsel %vm6781, %v6777, 0
        %6784 = vmatprep.subr.mxu0 0.0
        %6785 = vmatpush1.msra.mxu0 %v6710
        %6786 = vmatprep.subr.mxu0 0.0
        %6787 = vmatpush1.msra.mxu0 %v6711
        %6788 = vmatprep.subr.mxu0 0.0
        %6789 = vmatpush1.msra.mxu0 %v6712
        %6790 = vmatprep.subr.mxu0 0.0
        %6791 = vmatpush1.msra.mxu0 %v6713
        %6792 = vmatprep.subr.mxu0 0.0
        %6793 = vmatpush1.msra.mxu0 %v6714
        %6794 = vmatprep.subr.mxu0 0.0
        %6795 = vmatpush1.msra.mxu0 %v6715
        %6796 = vmatprep.subr.mxu0 0.0
        %6797 = vmatpush1.msra.mxu0 %v6716
        %6798 = vmatprep.subr.mxu0 0.0
        %6799 = vmatpush1.msra.mxu0 %v6717
        %6800 = vmatprep.subr.mxu0 0.0
        %6801 = vmatpush1.msra.mxu0 %v6718
        %6802 = vmatprep.subr.mxu0 0.0
        %6803 = vmatpush1.msra.mxu0 %v6719
        %6804 = vmatprep.subr.mxu0 0.0
        %6805 = vmatpush1.msra.mxu0 %v6720
        %6806 = vmatprep.subr.mxu0 0.0
        %6807 = vmatpush1.msra.mxu0 %v6721
        %6808 = vmatprep.subr.mxu0 0.0
        %6809 = vmatpush1.msra.mxu0 %v6722
        %6810 = vmatprep.subr.mxu0 0.0
        %6811 = vmatpush1.msra.mxu0 %v6723
        %6812 = vmatprep.subr.mxu0 0.0
        %6813 = vmatpush1.msra.mxu0 %v6724
        %6814 = vmatprep.subr.mxu0 0.0
        %6815 = vmatpush1.msra.mxu0 %v6725
        %6816 = vmatprep.subr.mxu0 0.0
        %6817 = vmatpush1.msra.mxu0 %v6726
        %6818 = vmatprep.subr.mxu0 0.0
        %6819 = vmatpush1.msra.mxu0 %v6727
        %6820 = vmatprep.subr.mxu0 0.0
        %6821 = vmatpush1.msra.mxu0 %v6728
        %6822 = vmatprep.subr.mxu0 0.0
        %6823 = vmatpush1.msra.mxu0 %v6729
        %6824 = vmatprep.subr.mxu0 0.0
        %6825 = vmatpush1.msra.mxu0 %v6730
        %6826 = vmatprep.subr.mxu0 0.0
        %6827 = vmatpush1.msra.mxu0 %v6731
        %6828 = vmatprep.subr.mxu0 0.0
        %6829 = vmatpush1.msra.mxu0 %v6732
        %6830 = vmatprep.subr.mxu0 0.0
        %6831 = vmatpush1.msra.mxu0 %v6733
        %6832 = vmatprep.subr.mxu0 0.0
        %6833 = vmatpush1.msra.mxu0 %v6734
        %6834 = vmatprep.subr.mxu0 0.0
        %6835 = vmatpush1.msra.mxu0 %v6735
        %6836 = vmatprep.subr.mxu0 0.0
        %6837 = vmatpush1.msra.mxu0 %v6736
        %6838 = vmatprep.subr.mxu0 0.0
        %6839 = vmatpush1.msra.mxu0 %v6737
        %6840 = vmatprep.subr.mxu0 0.0
        %6841 = vmatpush1.msra.mxu0 %v6738
        %6842 = vmatprep.subr.mxu0 0.0
        %6843 = vmatpush1.msra.mxu0 %v6739
        %6844 = vmatprep.subr.mxu0 0.0
        %6845 = vmatpush1.msra.mxu0 %v6740
        %6846 = vmatprep.subr.mxu0 0.0
        %6847 = vmatpush1.msra.mxu0 %v6741
        %6848 = vmatprep.mubr.f32.mxu0 %v6769
        %6849 = vmatmul.mubr.f32.gmra.mrb[0].mxu0 %v6765
        %v6850 = vpop.f32.mrb[0].mxu0
        %v6851 = vadd.f32 %v6760, %v6850
        %v6852 = vpop.f32.mrb[0].mxu0
        %6853 = vdwg.mxu0
        %6854 = vmatprep.subr.mxu0 0.0
        %6855 = vmatpush1.msra.mxu0 %v6742
        %6856 = vmatprep.subr.mxu0 0.0
        %6857 = vmatpush1.msra.mxu0 %v6743
        %6858 = vmatprep.subr.mxu0 0.0
        %6859 = vmatpush1.msra.mxu0 %v6744
        %6860 = vmatprep.subr.mxu0 0.0
        %6861 = vmatpush1.msra.mxu0 %v6745
        %6862 = vmatprep.subr.mxu0 0.0
        %6863 = vmatpush1.msra.mxu0 %v6746
        %6864 = vmatprep.subr.mxu0 0.0
        %6865 = vmatpush1.msra.mxu0 %v6747
        %6866 = vmatprep.subr.mxu0 0.0
        %6867 = vmatpush1.msra.mxu0 %v6748
        %6868 = vmatprep.subr.mxu0 0.0
        %6869 = vmatpush1.msra.mxu0 %v6749
        %6870 = vmatprep.subr.mxu0 0.0
        %6871 = vmatpush1.msra.mxu0 %v6750
        %6872 = vmatprep.subr.mxu0 0.0
        %6873 = vmatpush1.msra.mxu0 %v6751
        %6874 = vmatprep.subr.mxu0 0.0
        %6875 = vmatpush1.msra.mxu0 %v6752
        %6876 = vmatprep.subr.mxu0 0.0
        %6877 = vmatpush1.msra.mxu0 %v6753
        %6878 = vmatprep.subr.mxu0 0.0
        %6879 = vmatpush1.msra.mxu0 %v6754
        %6880 = vmatprep.subr.mxu0 0.0
        %6881 = vmatpush1.msra.mxu0 %v6755
        %6882 = vmatprep.subr.mxu0 0.0
        %6883 = vmatpush1.msra.mxu0 %v6756
        %6884 = vmatprep.subr.mxu0 0.0
        %6885 = vmatpush1.msra.mxu0 %v6757
        %6886 = vmatprep.subr.mxu0 0.0
        %6887 = vmatpush1.msra.mxu0 %v6758
        %6888 = vmatprep.subr.mxu0 0.0
        %6889 = vmatpush1.msra.mxu0 %v6759
        %6890 = vmatprep.subr.mxu0 0.0
        %6891 = vmatpush1.msra.mxu0 0.0
        %6892 = vmatprep.subr.mxu0 0.0
        %6893 = vmatpush1.msra.mxu0 0.0
        %6894 = vmatprep.subr.mxu0 0.0
        %6895 = vmatpush1.msra.mxu0 0.0
        %6896 = vmatprep.subr.mxu0 0.0
        %6897 = vmatpush1.msra.mxu0 0.0
        %6898 = vmatprep.subr.mxu0 0.0
        %6899 = vmatpush1.msra.mxu0 0.0
        %6900 = vmatprep.subr.mxu0 0.0
        %6901 = vmatpush1.msra.mxu0 0.0
        %6902 = vmatprep.subr.mxu0 0.0
        %6903 = vmatpush1.msra.mxu0 0.0
        %6904 = vmatprep.subr.mxu0 0.0
        %6905 = vmatpush1.msra.mxu0 0.0
        %6906 = vmatprep.subr.mxu0 0.0
        %6907 = vmatpush1.msra.mxu0 0.0
        %6908 = vmatprep.subr.mxu0 0.0
        %6909 = vmatpush1.msra.mxu0 0.0
        %6910 = vmatprep.subr.mxu0 0.0
        %6911 = vmatpush1.msra.mxu0 0.0
        %6912 = vmatprep.subr.mxu0 0.0
        %6913 = vmatpush1.msra.mxu0 0.0
        %6914 = vmatprep.subr.mxu0 0.0
        %6915 = vmatpush1.msra.mxu0 0.0
        %6916 = vmatprep.subr.mxu0 0.0
        %6917 = vmatpush1.msra.mxu0 0.0
        %6918 = vmatprep.mubr.f32.mxu0 %v6782
        %6919 = vmatmul.mubr.f32.gmra.mrb[0].mxu0 %v6773
        %v6920 = vpop.f32.mrb[0].mxu0
        %v6921 = vadd.f32 %v6851, %v6920
        %v6922 = vpop.f32.mrb[0].mxu0
        %6923 = vdwg.mxu0
        %v6924 = vld [vmem:[%s10] sm:$0xff]
        %v6925 = vld [vmem:[%s10 + $0x8] sm:$0xff]
        %v6926 = vld [vmem:[%s10 + $0x10] sm:$0xff]
        %v6927 = vld [vmem:[%s10 + $0x18] sm:$0xff]
        %v6928 = vld [vmem:[%s10 + $0x20] sm:$0xff]
        %v6929 = vld [vmem:[%s10 + $0x28] sm:$0xff]
        %v6930 = vld [vmem:[%s10 + $0x30] sm:$0xff]
        %v6931 = vld [vmem:[%s10 + $0x38] sm:$0xff]
        %v6932 = vld [vmem:[%s10 + $0x40] sm:$0xff]
        %v6933 = vld [vmem:[%s10 + $0x48] sm:$0xff]
        %v6934 = vld [vmem:[%s10 + $0x50] sm:$0xff]
        %v6935 = vld [vmem:[%s10 + $0x58] sm:$0xff]
        %v6936 = vld [vmem:[%s10 + $0x60] sm:$0xff]
        %v6937 = vld [vmem:[%s10 + $0x68] sm:$0xff]
        %v6938 = vld [vmem:[%s10 + $0x70] sm:$0xff]
        %v6939 = vld [vmem:[%s11] sm:$0x1]
        %vm6940 = vcmask 982016
        %v6942 = vsel %vm6940, %v6921, 0
        %6944 = vmatprep.subr.mxu0 0.0
        %6945 = vmatpush1.msra.mxu0 %v6924
        %6946 = vmatprep.subr.mxu0 0.0
        %6947 = vmatpush1.msra.mxu0 %v6925
        %6948 = vmatprep.subr.mxu0 0.0
        %6949 = vmatpush1.msra.mxu0 %v6926
        %6950 = vmatprep.subr.mxu0 0.0
        %6951 = vmatpush1.msra.mxu0 %v6927
        %6952 = vmatprep.subr.mxu0 0.0
        %6953 = vmatpush1.msra.mxu0 %v6928
        %6954 = vmatprep.subr.mxu0 0.0
        %6955 = vmatpush1.msra.mxu0 %v6929
        %6956 = vmatprep.subr.mxu0 0.0
        %6957 = vmatpush1.msra.mxu0 %v6930
        %6958 = vmatprep.subr.mxu0 0.0
        %6959 = vmatpush1.msra.mxu0 %v6931
        %6960 = vmatprep.subr.mxu0 0.0
        %6961 = vmatpush1.msra.mxu0 %v6932
        %6962 = vmatprep.subr.mxu0 0.0
        %6963 = vmatpush1.msra.mxu0 %v6933
        %6964 = vmatprep.subr.mxu0 0.0
        %6965 = vmatpush1.msra.mxu0 %v6934
        %6966 = vmatprep.subr.mxu0 0.0
        %6967 = vmatpush1.msra.mxu0 %v6935
        %6968 = vmatprep.subr.mxu0 0.0
        %6969 = vmatpush1.msra.mxu0 %v6936
        %6970 = vmatprep.subr.mxu0 0.0
        %6971 = vmatpush1.msra.mxu0 %v6937
        %6972 = vmatprep.subr.mxu0 0.0
        %6973 = vmatpush1.msra.mxu0 %v6938
        %6974 = vmatprep.subr.mxu0 0.0
        %6975 = vmatpush1.msra.mxu0 0.0
        %6976 = vmatprep.subr.mxu0 0.0
        %6977 = vmatpush1.msra.mxu0 0.0
        %6978 = vmatprep.subr.mxu0 0.0
        %6979 = vmatpush1.msra.mxu0 0.0
        %6980 = vmatprep.subr.mxu0 0.0
        %6981 = vmatpush1.msra.mxu0 0.0
        %6982 = vmatprep.subr.mxu0 0.0
        %6983 = vmatpush1.msra.mxu0 0.0
        %6984 = vmatprep.subr.mxu0 0.0
        %6985 = vmatpush1.msra.mxu0 0.0
        %6986 = vmatprep.subr.mxu0 0.0
        %6987 = vmatpush1.msra.mxu0 0.0
        %6988 = vmatprep.subr.mxu0 0.0
        %6989 = vmatpush1.msra.mxu0 0.0
        %6990 = vmatprep.subr.mxu0 0.0
        %6991 = vmatpush1.msra.mxu0 0.0
        %6992 = vmatprep.subr.mxu0 0.0
        %6993 = vmatpush1.msra.mxu0 0.0
        %6994 = vmatprep.subr.mxu0 0.0
        %6995 = vmatpush1.msra.mxu0 0.0
        %6996 = vmatprep.subr.mxu0 0.0
        %6997 = vmatpush1.msra.mxu0 0.0
        %6998 = vmatprep.subr.mxu0 0.0
        %6999 = vmatpush1.msra.mxu0 0.0
        %7000 = vmatprep.subr.mxu0 0.0
        %7001 = vmatpush1.msra.mxu0 0.0
        %7002 = vmatprep.subr.mxu0 0.0
        %7003 = vmatpush1.msra.mxu0 0.0
        %7004 = vmatprep.subr.mxu0 0.0
        %7005 = vmatpush1.msra.mxu0 0.0
        %7006 = vmatprep.subr.mxu0 0.0
        %7007 = vmatpush1.msra.mxu0 0.0
        %7008 = vmatprep.mubr.f32.mxu0 0.0
        %7009 = vmatmul.mubr.f32.gmra.mrb[0].mxu0 %v6942
        %v7010 = vpop.f32.mrb[0].mxu0
        %v7011 = vadd.f32 %v6939, %v7010
        %v7012 = vpop.f32.mrb[0].mxu0
        %7013 = vdwg.mxu0
        %v7014 = vld [vmem:[%s12] sm:$0xff]
        %v7015 = vld [vmem:[%s12 + $0x8] sm:$0xff]
        %v7016 = vld [vmem:[%s12 + $0x10] sm:$0xff]
        %v7017 = vld [vmem:[%s12 + $0x18] sm:$0xff]
        %v7018 = vld [vmem:[%s12 + $0x20] sm:$0xff]
        %v7019 = vld [vmem:[%s12 + $0x28] sm:$0xff]
        %v7020 = vld [vmem:[%s12 + $0x30] sm:$0xff]
        %v7021 = vld [vmem:[%s12 + $0x38] sm:$0xff]
        %v7022 = vld [vmem:[%s12 + $0x40] sm:$0xff]
        %v7023 = vld [vmem:[%s12 + $0x48] sm:$0xff]
        %v7024 = vld [vmem:[%s12 + $0x50] sm:$0xf]
        %v7025 = vld [vmem:[%s13] sm:$0x1]
        %vm7026 = vcmask 687104
        %v7028 = vsel %vm7026, %v7011, 0
        %vm7030 = vcmask 1043456
        %v7032 = vsel %vm7030, %v7024, 0
        %7034 = vmatprep.subr.mxu0 0.0
        %7035 = vmatpush1.msra.mxu0 %v7014
        %7036 = vmatprep.subr.mxu0 0.0
        %7037 = vmatpush1.msra.mxu0 %v7015
        %7038 = vmatprep.subr.mxu0 0.0
        %7039 = vmatpush1.msra.mxu0 %v7016
        %7040 = vmatprep.subr.mxu0 0.0
        %7041 = vmatpush1.msra.mxu0 %v7017
        %7042 = vmatprep.subr.mxu0 0.0
        %7043 = vmatpush1.msra.mxu0 %v7018
        %7044 = vmatprep.subr.mxu0 0.0
        %7045 = vmatpush1.msra.mxu0 %v7019
        %7046 = vmatprep.subr.mxu0 0.0
        %7047 = vmatpush1.msra.mxu0 %v7020
        %7048 = vmatprep.subr.mxu0 0.0
        %7049 = vmatpush1.msra.mxu0 %v7021
        %7050 = vmatprep.subr.mxu0 0.0
        %7051 = vmatpush1.msra.mxu0 %v7022
        %7052 = vmatprep.subr.mxu0 0.0
        %7053 = vmatpush1.msra.mxu0 %v7023
        %7054 = vmatprep.subr.mxu0 0.0
        %7055 = vmatpush1.msra.mxu0 %v7032
        %7056 = vmatprep.subr.mxu0 0.0
        %7057 = vmatpush1.msra.mxu0 0.0
        %7058 = vmatprep.subr.mxu0 0.0
        %7059 = vmatpush1.msra.mxu0 0.0
        %7060 = vmatprep.subr.mxu0 0.0
        %7061 = vmatpush1.msra.mxu0 0.0
        %7062 = vmatprep.subr.mxu0 0.0
        %7063 = vmatpush1.msra.mxu0 0.0
        %7064 = vmatprep.subr.mxu0 0.0
        %7065 = vmatpush1.msra.mxu0 0.0
        %7066 = vmatprep.subr.mxu0 0.0
        %7067 = vmatpush1.msra.mxu0 0.0
        %7068 = vmatprep.subr.mxu0 0.0
        %7069 = vmatpush1.msra.mxu0 0.0
        %7070 = vmatprep.subr.mxu0 0.0
        %7071 = vmatpush1.msra.mxu0 0.0
        %7072 = vmatprep.subr.mxu0 0.0
        %7073 = vmatpush1.msra.mxu0 0.0
        %7074 = vmatprep.subr.mxu0 0.0
        %7075 = vmatpush1.msra.mxu0 0.0
        %7076 = vmatprep.subr.mxu0 0.0
        %7077 = vmatpush1.msra.mxu0 0.0
        %7078 = vmatprep.subr.mxu0 0.0
        %7079 = vmatpush1.msra.mxu0 0.0
        %7080 = vmatprep.subr.mxu0 0.0
        %7081 = vmatpush1.msra.mxu0 0.0
        %7082 = vmatprep.subr.mxu0 0.0
        %7083 = vmatpush1.msra.mxu0 0.0
        %7084 = vmatprep.subr.mxu0 0.0
        %7085 = vmatpush1.msra.mxu0 0.0
        %7086 = vmatprep.subr.mxu0 0.0
        %7087 = vmatpush1.msra.mxu0 0.0
        %7088 = vmatprep.subr.mxu0 0.0
        %7089 = vmatpush1.msra.mxu0 0.0
        %7090 = vmatprep.subr.mxu0 0.0
        %7091 = vmatpush1.msra.mxu0 0.0
        %7092 = vmatprep.subr.mxu0 0.0
        %7093 = vmatpush1.msra.mxu0 0.0
        %7094 = vmatprep.subr.mxu0 0.0
        %7095 = vmatpush1.msra.mxu0 0.0
        %7096 = vmatprep.subr.mxu0 0.0
        %7097 = vmatpush1.msra.mxu0 0.0
        %7098 = vmatprep.mubr.f32.mxu0 0.0
        %7099 = vmatmul.mubr.f32.gmra.mrb[0].mxu0 %v7028
        %v7100 = vpop.f32.mrb[0].mxu0
        %v7101 = vadd.f32 %v7025, %v7100
        %v7102 = vpop.f32.mrb[0].mxu0
        %7103 = vdwg.mxu0
        %vm7104 = vcmask 73728
        %7105 = vst.msk [vmem:[%s459] sm:$0x1] %vm7104, %v7101
        %s7106 = sand.u32 %s335, 1
        %s7107 = scalar_lea.sflag [#allocation5], %s7106
        %s7108 = sand.u32 %s335, 1
        %s7109 = scalar_lea.vmem [#allocation4], %s7108
        // Predicated region
        $region77: #{lenet_forward.1} parent=75 // pred_check
          %p7110 = pneg %p345
        $region78: #{lenet_forward.1} parent=75 // pred_check_branch
          %7112 = sbr.rel (%p7110) target = $region80
        $region79: #{lenet_forward.1} parent=75 // pred_region
          %s7114 = ssub.s32 16, 16
          %7115 = vsyncadd %s7107, %s7114
          %s7116 = smul.addr %s28, 16
          %s7117 = scalar_lea.hbm %s14, %s7116
          %s7119 = sshll.u32 %s7109, 4
          %s7120 = int_to_ptr.vmem [resolvable:$true] %s7119
          %7122 = dma.vmem_to_hbm [thread:$0]  %s7120, 16, %s7117, %s7107
        $region80: #{lenet_forward.1} parent=75 // pred_fallthru
          _
      $region76: #{lenet_forward.1} parent=5 // pred_fallthru
        _
      %p7123 = scmp.le.s32.totalorder 2, %s23
      // Predicated region
      $region81: #{lenet_forward.1} parent=5 // pred_check
        %p7124 = pneg %p7123
      $region82: #{lenet_forward.1} parent=5 // pred_check_branch
        %7126 = sbr.rel (%p7124) target = $region84
      $region83: #{lenet_forward.1} parent=5 // pred_region
        %s7127 = ssub.s32 %s23, 2
        // Predicated region
        $region85: #{lenet_forward.1} parent=83 // pred_check
          %p7128 = pneg %p351
        $region86: #{lenet_forward.1} parent=83 // pred_check_branch
          %7130 = sbr.rel (%p7128) target = $region88
        $region87: #{lenet_forward.1} parent=83 // pred_region
          %s7131 = sand.u32 %s336, 1
          %s7132 = scalar_lea.sflag [#allocation5], %s7131
          %s7133 = sand.u32 %s336, 1
          %s7134 = scalar_lea.vmem [#allocation4], %s7133
          %7135 = dma.done %s7132, 16
        $region88: #{lenet_forward.1} parent=83 // pred_fallthru
          _
      $region84: #{lenet_forward.1} parent=5 // pred_fallthru
        _
    $region6: #{lenet_forward.1} parent=1 // loop_footer
      %s27 = sadd.s32 1, %s23
    $region7: #{lenet_forward.1} parent=1 // loop_footer_branch
      %22 = sbr.rel target = $region3
    $region8: #{lenet_forward.1} parent=1 // loop_exit
      _
    %7136 = vsyncpa [#allocation5], 1
    %s7137 = scalar_lea.sflag [#allocation5], 1
    %7138 = vsyncpa %s7137, 1

</llo_original>
